<compile_context>
chip_gen: v6e
topology: v6e:2x2x1
jax: 0.10.0
libtpu: 0.0.40
codegen_flags: <defaults>
</compile_context>

<pallas_src>
import functools

import jax
import jax.numpy as jnp
import numpy as np
from jax import lax
from jax.experimental import pallas as pl
from jax.experimental.pallas import tpu as pltpu

_VMEM_SPEC = pl.BlockSpec(memory_space=pltpu.MemorySpace.VMEM)


# ----------------------------------------------------------------------------
# Fused Pallas kernel: all GRU layers (fwd+bwd) + Linear
# ----------------------------------------------------------------------------
def _bigru_kernel(*refs, seq, batch, hidden, num_layers):
    """Inputs (in order):
         x2d (S*B, F)                               time-major flattened input
         per layer l: wih_l (Din_l, 6H), whhf_l (H, 3H), whhb_l (H, 3H),
                      brz_l (1, 6H),     bn_l (1, 2H)
         fc_w (2H, C), fc_b (1, C)
       Output:
         out (S*B, C)   rows in time-major (t, b) order (wrapper permutes)
       Scratch:
         gi_scr (S*B, 6H), h_scr_a (S*B, 2H), h_scr_b (S*B, 2H)
    """
    S, B, H, L = seq, batch, hidden, num_layers
    n_in = 1 + 5 * L + 2
    x_ref = refs[0]
    layer_refs = [refs[1 + 5 * l: 1 + 5 * (l + 1)] for l in range(L)]
    fcw_ref = refs[1 + 5 * L]
    fcb_ref = refs[2 + 5 * L]
    out_ref = refs[n_in]
    gi_scr, h_scr_a, h_scr_b = refs[n_in + 1:]

    def cell(gi_t, h_prev, whh_ref, bn_dir):
        # gi_t already holds x@W_ih + b_ih + b_hh(r,z); gh carries no bias.
        gh = jnp.dot(h_prev, whh_ref[...], preferred_element_type=jnp.float32)
        r = jax.nn.sigmoid(gi_t[:, :H] + gh[:, :H])
        z = jax.nn.sigmoid(gi_t[:, H:2 * H] + gh[:, H:2 * H])
        n = jnp.tanh(gi_t[:, 2 * H:] + r * (gh[:, 2 * H:] + bn_dir))
        return (1.0 - z) * n + z * h_prev

    def run_layer(x_val, wih_ref, whhf_ref, whhb_ref, brz_ref, bn_ref, out_scr):
        # Hoisted input projection for BOTH directions and ALL timesteps:
        # one (S*B, Din) @ (Din, 6H) matmul, entirely off the serial chain.
        gi_scr[...] = jnp.dot(x_val, wih_ref[...],
                              preferred_element_type=jnp.float32) + brz_ref[...]
        bn_f = bn_ref[:, :H]
        bn_b = bn_ref[:, H:]
        h_f = jnp.zeros((B, H), jnp.float32)
        h_b = jnp.zeros((B, H), jnp.float32)
        # Fully unrolled static time loop: h_f/h_b live in vregs; the two
        # independent K=H recurrent matmuls per step can overlap on the MXU.
        for t in range(S):
            tb = S - 1 - t
            gi_f = gi_scr[pl.ds(t * B, B), :3 * H]
            gi_b = gi_scr[pl.ds(tb * B, B), 3 * H:]
            h_f = cell(gi_f, h_f, whhf_ref, bn_f)
            h_b = cell(gi_b, h_b, whhb_ref, bn_b)
            out_scr[pl.ds(t * B, B), :H] = h_f
            out_scr[pl.ds(tb * B, B), H:] = h_b

    src = x_ref[...]
    scrs = (h_scr_a, h_scr_b)
    for l in range(L):
        dst = scrs[l % 2]
        run_layer(src, *layer_refs[l], dst)
        src = dst[...]

    # Fused Linear on the lane-dense (S*B, 2H) hidden output.
    out_ref[...] = (jnp.dot(src, fcw_ref[...],
                            preferred_element_type=jnp.float32) + fcb_ref[...])


# ----------------------------------------------------------------------------
# Wrapper: parameter packing + single pallas_call
# ----------------------------------------------------------------------------
def _fold_dir(p, H):
    # Fold b_ih + b_hh for the r/z gates into the hoisted projection bias;
    # keep b_hh_n separate (it must stay inside r*(W_hn h + b_hn)).
    bhh = p["bhh"]
    brz = p["bih"] + jnp.concatenate(
        [bhh[:, :2 * H], jnp.zeros_like(bhh[:, 2 * H:])], axis=1)
    return brz, bhh[:, 2 * H:]


def _pack_layer(layer_p, H):
    p_f, p_b = layer_p["fwd"], layer_p["bwd"]
    brz_f, bn_f = _fold_dir(p_f, H)
    brz_b, bn_b = _fold_dir(p_b, H)
    wih = jnp.concatenate([p_f["wih"], p_b["wih"]], axis=1)      # (Din, 6H)
    brz = jnp.concatenate([brz_f, brz_b], axis=1)                # (1, 6H)
    bn = jnp.concatenate([bn_f, bn_b], axis=1)                   # (1, 2H)
    return (wih, p_f["whh"], p_b["whh"], brz, bn)


@functools.partial(jax.jit, static_argnames=("num_layers",))
def bigru_forward(x, params, num_layers):
    """x: (batch, seq, input_size) -> (batch*seq, num_classes)."""
    B, S, F = x.shape
    H = params["gru"][0]["fwd"]["whh"].shape[0]
    C = params["fc_w"].shape[1]

    # time-major flattened input: row t*B + b  <->  x[b, t, :]
    x2d = jnp.transpose(x, (1, 0, 2)).reshape(S * B, F).astype(jnp.float32)

    flat_args = [x2d]
    for l in range(num_layers):
        flat_args.extend(_pack_layer(params["gru"][l], H))
    flat_args.append(params["fc_w"])
    flat_args.append(params["fc_b"].reshape(1, C))

    kernel = functools.partial(_bigru_kernel, seq=S, batch=B, hidden=H,
                               num_layers=num_layers)
    out_tm = pl.pallas_call(
        kernel,
        out_shape=jax.ShapeDtypeStruct((S * B, C), jnp.float32),
        in_specs=[_VMEM_SPEC] * len(flat_args),
        out_specs=_VMEM_SPEC,
        scratch_shapes=[pltpu.VMEM((S * B, 6 * H), jnp.float32),
                        pltpu.VMEM((S * B, 2 * H), jnp.float32),
                        pltpu.VMEM((S * B, 2 * H), jnp.float32)],
    )(*flat_args)

    # Kernel rows are time-major (t, b); PyTorch's out.view(s*b, h) after a
    # batch_first GRU is batch-major (b, t). Permute the tiny (S*B, C) result.
    return out_tm.reshape(S, B, C).transpose(1, 0, 2).reshape(B * S, C)


# ----------------------------------------------------------------------------
# Pure-JAX reference (unfused, original un-folded biases) for correctness
# ----------------------------------------------------------------------------
def _gru_dir_ref(x_sbf, wih, whh, bih, bhh):
    H = whh.shape[0]

    def step(h, x_t):
        gi = jnp.dot(x_t, wih) + bih
        gh = jnp.dot(h, whh) + bhh
        r = jax.nn.sigmoid(gi[:, :H] + gh[:, :H])
        z = jax.nn.sigmoid(gi[:, H:2 * H] + gh[:, H:2 * H])
        n = jnp.tanh(gi[:, 2 * H:] + r * gh[:, 2 * H:])
        h_new = (1.0 - z) * n + z * h
        return h_new, h_new

    h0 = jnp.zeros((x_sbf.shape[1], H), jnp.float32)
    _, ys = lax.scan(step, h0, x_sbf)
    return ys


def bigru_ref(x, params, num_layers):
    B, S, _ = x.shape
    h = jnp.transpose(x, (1, 0, 2)).astype(jnp.float32)
    for layer in range(num_layers):
        p_f = params["gru"][layer]["fwd"]
        p_b = params["gru"][layer]["bwd"]
        out_f = _gru_dir_ref(h, p_f["wih"], p_f["whh"], p_f["bih"], p_f["bhh"])
        out_b = _gru_dir_ref(h[::-1], p_b["wih"], p_b["whh"], p_b["bih"], p_b["bhh"])[::-1]
        h = jnp.concatenate([out_f, out_b], axis=-1)
    out = jnp.transpose(h, (1, 0, 2)).reshape(B * S, -1)
    return jnp.dot(out, params["fc_w"]) + params["fc_b"]


# ----------------------------------------------------------------------------
# Deterministic parameter init (PyTorch-style uniform(-1/sqrt(H), 1/sqrt(H)))
# ----------------------------------------------------------------------------
def init_params(key, input_size, hidden_size, num_layers, num_classes):
    k = 1.0 / np.sqrt(hidden_size)
    params = {"gru": []}
    for layer in range(num_layers):
        d_in = input_size if layer == 0 else 2 * hidden_size
        layer_p = {}
        for direction in ("fwd", "bwd"):
            key, k1, k2, k3, k4 = jax.random.split(key, 5)
            layer_p[direction] = {
                "wih": jax.random.uniform(k1, (d_in, 3 * hidden_size), jnp.float32, -k, k),
                "whh": jax.random.uniform(k2, (hidden_size, 3 * hidden_size), jnp.float32, -k, k),
                "bih": jax.random.uniform(k3, (1, 3 * hidden_size), jnp.float32, -k, k),
                "bhh": jax.random.uniform(k4, (1, 3 * hidden_size), jnp.float32, -k, k),
            }
        params["gru"].append(layer_p)
    key, kf1, kf2 = jax.random.split(key, 3)
    kfc = 1.0 / np.sqrt(2 * hidden_size)
    params["fc_w"] = jax.random.uniform(kf1, (2 * hidden_size, num_classes), jnp.float32, -kfc, kfc)
    params["fc_b"] = jax.random.uniform(kf2, (num_classes,), jnp.float32, -kfc, kfc)
    return params


# ----------------------------------------------------------------------------
if __name__ == "__main__":
    input_size = 32
    hidden_size = 128          # fc = nn.Linear(256, num_classes) => 2*H == 256
    num_layers = 2
    num_classes = 10
    batch, seq = 2, 8

    key = jax.random.PRNGKey(0)
    key, kx = jax.random.split(key)
    x = jax.random.normal(kx, (batch, seq, input_size), jnp.float32)

    params = init_params(key, input_size, hidden_size, num_layers, num_classes)

    out = jax.block_until_ready(bigru_forward(x, params, num_layers))
    assert out.shape == (batch * seq, num_classes), out.shape

    ref = jax.block_until_ready(bigru_ref(x, params, num_layers))
    np.testing.assert_allclose(np.asarray(out), np.asarray(ref), atol=2e-2, rtol=2e-2)

    print("KERNEL_OK")
</pallas_src>

<mosaic_0001>
module attributes {stable_mosaic.version = 11 : i64} {
  func.func @_bigru_kernel(%arg0: memref<16x32xf32, #tpu.memory_space<vmem>>, %arg1: memref<32x768xf32, #tpu.memory_space<vmem>>, %arg2: memref<128x384xf32, #tpu.memory_space<vmem>>, %arg3: memref<128x384xf32, #tpu.memory_space<vmem>>, %arg4: memref<1x768xf32, #tpu.memory_space<vmem>>, %arg5: memref<1x256xf32, #tpu.memory_space<vmem>>, %arg6: memref<256x768xf32, #tpu.memory_space<vmem>>, %arg7: memref<128x384xf32, #tpu.memory_space<vmem>>, %arg8: memref<128x384xf32, #tpu.memory_space<vmem>>, %arg9: memref<1x768xf32, #tpu.memory_space<vmem>>, %arg10: memref<1x256xf32, #tpu.memory_space<vmem>>, %arg11: memref<256x10xf32, #tpu.memory_space<vmem>>, %arg12: memref<1x10xf32, #tpu.memory_space<vmem>>, %arg13: memref<16x10xf32, #tpu.memory_space<vmem>>, %arg14: memref<16x768xf32, #tpu.memory_space<vmem>>, %arg15: memref<16x256xf32, #tpu.memory_space<vmem>>, %arg16: memref<16x256xf32, #tpu.memory_space<vmem>>) attributes {dimension_semantics = [], scalar_prefetch = 0 : i64, scratch_operands = 3 : i64, tpu.core_type = #tpu.core_type<tc>} {
    %c0 = arith.constant 0 : index
    %c0_0 = arith.constant 0 : index
    %0 = vector.load %arg0[%c0, %c0_0] : memref<16x32xf32, #tpu.memory_space<vmem>>, vector<16x32xf32>
    %c0_1 = arith.constant 0 : index
    %c0_2 = arith.constant 0 : index
    %1 = vector.load %arg1[%c0_1, %c0_2] : memref<32x768xf32, #tpu.memory_space<vmem>>, vector<32x768xf32>
    %cst = arith.constant dense<0.000000e+00> : vector<16x768xf32>
    %2 = tpu.matmul %0, %1, %cst {dimension_numbers = #tpu.dot_dimension_numbers<[1], [0], [0], [1], [0, 0, 1, 1], [], []>} : vector<16x32xf32>, vector<32x768xf32>, vector<16x768xf32> -> vector<16x768xf32>
    %c0_3 = arith.constant 0 : index
    %c0_4 = arith.constant 0 : index
    %3 = vector.load %arg4[%c0_3, %c0_4] : memref<1x768xf32, #tpu.memory_space<vmem>>, vector<1x768xf32>
    %4 = vector.broadcast %3 : vector<1x768xf32> to vector<16x768xf32>
    %5 = arith.addf %2, %4 : vector<16x768xf32>
    %c0_5 = arith.constant 0 : index
    %c0_6 = arith.constant 0 : index
    %6 = vector.load %arg14[%c0_5, %c0_6] : memref<16x768xf32, #tpu.memory_space<vmem>>, vector<16x768xf32>
    tpu.vector_store %arg14[%c0_5, %c0_6], %5 {strides = array<i32>} : memref<16x768xf32, #tpu.memory_space<vmem>>, vector<16x768xf32>,
    %c0_7 = arith.constant 0 : index
    %c0_8 = arith.constant 0 : index
    %7 = vector.load %arg5[%c0_7, %c0_8] : memref<1x256xf32, #tpu.memory_space<vmem>>, vector<1x128xf32>
    %c0_9 = arith.constant 0 : index
    %c128 = arith.constant 128 : index
    %8 = vector.load %arg5[%c0_9, %c128] : memref<1x256xf32, #tpu.memory_space<vmem>>, vector<1x128xf32>
    %cst_10 = arith.constant 0.000000e+00 : f32
    %9 = vector.broadcast %cst_10 : f32 to vector<2x128xf32>
    %cst_11 = arith.constant 0.000000e+00 : f32
    %10 = vector.broadcast %cst_11 : f32 to vector<2x128xf32>
    %c0_12 = arith.constant 0 : index
    %c0_13 = arith.constant 0 : index
    %11 = vector.load %arg14[%c0_12, %c0_13] : memref<16x768xf32, #tpu.memory_space<vmem>>, vector<2x384xf32>
    %c14 = arith.constant 14 : index
    %c384 = arith.constant 384 : index
    %12 = vector.load %arg14[%c14, %c384] : memref<16x768xf32, #tpu.memory_space<vmem>>, vector<2x384xf32>
    %c0_14 = arith.constant 0 : index
    %c0_15 = arith.constant 0 : index
    %13 = vector.load %arg2[%c0_14, %c0_15] : memref<128x384xf32, #tpu.memory_space<vmem>>, vector<128x384xf32>
    %cst_16 = arith.constant dense<0.000000e+00> : vector<2x384xf32>
    %14 = tpu.matmul %9, %13, %cst_16 {dimension_numbers = #tpu.dot_dimension_numbers<[1], [0], [0], [1], [0, 0, 1, 1], [], []>} : vector<2x128xf32>, vector<128x384xf32>, vector<2x384xf32> -> vector<2x384xf32>
    %15 = vector.extract_strided_slice %11 {offsets = [0, 0], sizes = [2, 128], strides = [1, 1]} : vector<2x384xf32> to vector<2x128xf32>
    %16 = vector.extract_strided_slice %14 {offsets = [0, 0], sizes = [2, 128], strides = [1, 1]} : vector<2x384xf32> to vector<2x128xf32>
    %17 = arith.addf %15, %16 : vector<2x128xf32>
    %18 = arith.negf %17 : vector<2x128xf32>
    %19 = math.exp %18 : vector<2x128xf32>
    %cst_17 = arith.constant 1.000000e+00 : f32
    %20 = vector.broadcast %cst_17 : f32 to vector<2x128xf32>
    %21 = arith.addf %20, %19 : vector<2x128xf32>
    %22 = arith.divf %20, %21 : vector<2x128xf32>
    %23 = vector.extract_strided_slice %11 {offsets = [0, 128], sizes = [2, 128], strides = [1, 1]} : vector<2x384xf32> to vector<2x128xf32>
    %24 = vector.extract_strided_slice %14 {offsets = [0, 128], sizes = [2, 128], strides = [1, 1]} : vector<2x384xf32> to vector<2x128xf32>
    %25 = arith.addf %23, %24 : vector<2x128xf32>
    %26 = arith.negf %25 : vector<2x128xf32>
    %27 = math.exp %26 : vector<2x128xf32>
    %cst_18 = arith.constant 1.000000e+00 : f32
    %28 = vector.broadcast %cst_18 : f32 to vector<2x128xf32>
    %29 = arith.addf %28, %27 : vector<2x128xf32>
    %30 = arith.divf %28, %29 : vector<2x128xf32>
    %31 = vector.extract_strided_slice %11 {offsets = [0, 256], sizes = [2, 128], strides = [1, 1]} : vector<2x384xf32> to vector<2x128xf32>
    %32 = vector.extract_strided_slice %14 {offsets = [0, 256], sizes = [2, 128], strides = [1, 1]} : vector<2x384xf32> to vector<2x128xf32>
    %33 = vector.broadcast %7 : vector<1x128xf32> to vector<2x128xf32>
    %34 = arith.addf %32, %33 : vector<2x128xf32>
    %35 = arith.mulf %22, %34 : vector<2x128xf32>
    %36 = arith.addf %31, %35 : vector<2x128xf32>
    %37 = math.tanh %36 : vector<2x128xf32>
    %cst_19 = arith.constant 1.000000e+00 : f32
    %38 = vector.broadcast %cst_19 : f32 to vector<2x128xf32>
    %39 = arith.subf %38, %30 : vector<2x128xf32>
    %40 = arith.mulf %39, %37 : vector<2x128xf32>
    %41 = arith.mulf %30, %9 : vector<2x128xf32>
    %42 = arith.addf %40, %41 : vector<2x128xf32>
    %c0_20 = arith.constant 0 : index
    %c0_21 = arith.constant 0 : index
    %43 = vector.load %arg3[%c0_20, %c0_21] : memref<128x384xf32, #tpu.memory_space<vmem>>, vector<128x384xf32>
    %cst_22 = arith.constant dense<0.000000e+00> : vector<2x384xf32>
    %44 = tpu.matmul %10, %43, %cst_22 {dimension_numbers = #tpu.dot_dimension_numbers<[1], [0], [0], [1], [0, 0, 1, 1], [], []>} : vector<2x128xf32>, vector<128x384xf32>, vector<2x384xf32> -> vector<2x384xf32>
    %45 = vector.extract_strided_slice %12 {offsets = [0, 0], sizes = [2, 128], strides = [1, 1]} : vector<2x384xf32> to vector<2x128xf32>
    %46 = vector.extract_strided_slice %44 {offsets = [0, 0], sizes = [2, 128], strides = [1, 1]} : vector<2x384xf32> to vector<2x128xf32>
    %47 = arith.addf %45, %46 : vector<2x128xf32>
    %48 = arith.negf %47 : vector<2x128xf32>
    %49 = math.exp %48 : vector<2x128xf32>
    %cst_23 = arith.constant 1.000000e+00 : f32
    %50 = vector.broadcast %cst_23 : f32 to vector<2x128xf32>
    %51 = arith.addf %50, %49 : vector<2x128xf32>
    %52 = arith.divf %50, %51 : vector<2x128xf32>
    %53 = vector.extract_strided_slice %12 {offsets = [0, 128], sizes = [2, 128], strides = [1, 1]} : vector<2x384xf32> to vector<2x128xf32>
    %54 = vector.extract_strided_slice %44 {offsets = [0, 128], sizes = [2, 128], strides = [1, 1]} : vector<2x384xf32> to vector<2x128xf32>
    %55 = arith.addf %53, %54 : vector<2x128xf32>
    %56 = arith.negf %55 : vector<2x128xf32>
    %57 = math.exp %56 : vector<2x128xf32>
    %cst_24 = arith.constant 1.000000e+00 : f32
    %58 = vector.broadcast %cst_24 : f32 to vector<2x128xf32>
    %59 = arith.addf %58, %57 : vector<2x128xf32>
    %60 = arith.divf %58, %59 : vector<2x128xf32>
    %61 = vector.extract_strided_slice %12 {offsets = [0, 256], sizes = [2, 128], strides = [1, 1]} : vector<2x384xf32> to vector<2x128xf32>
    %62 = vector.extract_strided_slice %44 {offsets = [0, 256], sizes = [2, 128], strides = [1, 1]} : vector<2x384xf32> to vector<2x128xf32>
    %63 = vector.broadcast %8 : vector<1x128xf32> to vector<2x128xf32>
    %64 = arith.addf %62, %63 : vector<2x128xf32>
    %65 = arith.mulf %52, %64 : vector<2x128xf32>
    %66 = arith.addf %61, %65 : vector<2x128xf32>
    %67 = math.tanh %66 : vector<2x128xf32>
    %cst_25 = arith.constant 1.000000e+00 : f32
    %68 = vector.broadcast %cst_25 : f32 to vector<2x128xf32>
    %69 = arith.subf %68, %60 : vector<2x128xf32>
    %70 = arith.mulf %69, %67 : vector<2x128xf32>
    %71 = arith.mulf %60, %10 : vector<2x128xf32>
    %72 = arith.addf %70, %71 : vector<2x128xf32>
    %c0_26 = arith.constant 0 : index
    %c0_27 = arith.constant 0 : index
    %73 = vector.load %arg15[%c0_26, %c0_27] : memref<16x256xf32, #tpu.memory_space<vmem>>, vector<2x128xf32>
    tpu.vector_store %arg15[%c0_26, %c0_27], %42 {strides = array<i32>} : memref<16x256xf32, #tpu.memory_space<vmem>>, vector<2x128xf32>,
    %c14_28 = arith.constant 14 : index
    %c128_29 = arith.constant 128 : index
    %74 = vector.load %arg15[%c14_28, %c128_29] : memref<16x256xf32, #tpu.memory_space<vmem>>, vector<2x128xf32>
    tpu.vector_store %arg15[%c14_28, %c128_29], %72 {strides = array<i32>} : memref<16x256xf32, #tpu.memory_space<vmem>>, vector<2x128xf32>,
    %c2 = arith.constant 2 : index
    %c0_30 = arith.constant 0 : index
    %75 = vector.load %arg14[%c2, %c0_30] : memref<16x768xf32, #tpu.memory_space<vmem>>, vector<2x384xf32>
    %c12 = arith.constant 12 : index
    %c384_31 = arith.constant 384 : index
    %76 = vector.load %arg14[%c12, %c384_31] : memref<16x768xf32, #tpu.memory_space<vmem>>, vector<2x384xf32>
    %c0_32 = arith.constant 0 : index
    %c0_33 = arith.constant 0 : index
    %77 = vector.load %arg2[%c0_32, %c0_33] : memref<128x384xf32, #tpu.memory_space<vmem>>, vector<128x384xf32>
    %cst_34 = arith.constant dense<0.000000e+00> : vector<2x384xf32>
    %78 = tpu.matmul %42, %77, %cst_34 {dimension_numbers = #tpu.dot_dimension_numbers<[1], [0], [0], [1], [0, 0, 1, 1], [], []>} : vector<2x128xf32>, vector<128x384xf32>, vector<2x384xf32> -> vector<2x384xf32>
    %79 = vector.extract_strided_slice %75 {offsets = [0, 0], sizes = [2, 128], strides = [1, 1]} : vector<2x384xf32> to vector<2x128xf32>
    %80 = vector.extract_strided_slice %78 {offsets = [0, 0], sizes = [2, 128], strides = [1, 1]} : vector<2x384xf32> to vector<2x128xf32>
    %81 = arith.addf %79, %80 : vector<2x128xf32>
    %82 = arith.negf %81 : vector<2x128xf32>
    %83 = math.exp %82 : vector<2x128xf32>
    %cst_35 = arith.constant 1.000000e+00 : f32
    %84 = vector.broadcast %cst_35 : f32 to vector<2x128xf32>
    %85 = arith.addf %84, %83 : vector<2x128xf32>
    %86 = arith.divf %84, %85 : vector<2x128xf32>
    %87 = vector.extract_strided_slice %75 {offsets = [0, 128], sizes = [2, 128], strides = [1, 1]} : vector<2x384xf32> to vector<2x128xf32>
    %88 = vector.extract_strided_slice %78 {offsets = [0, 128], sizes = [2, 128], strides = [1, 1]} : vector<2x384xf32> to vector<2x128xf32>
    %89 = arith.addf %87, %88 : vector<2x128xf32>
    %90 = arith.negf %89 : vector<2x128xf32>
    %91 = math.exp %90 : vector<2x128xf32>
    %cst_36 = arith.constant 1.000000e+00 : f32
    %92 = vector.broadcast %cst_36 : f32 to vector<2x128xf32>
    %93 = arith.addf %92, %91 : vector<2x128xf32>
    %94 = arith.divf %92, %93 : vector<2x128xf32>
    %95 = vector.extract_strided_slice %75 {offsets = [0, 256], sizes = [2, 128], strides = [1, 1]} : vector<2x384xf32> to vector<2x128xf32>
    %96 = vector.extract_strided_slice %78 {offsets = [0, 256], sizes = [2, 128], strides = [1, 1]} : vector<2x384xf32> to vector<2x128xf32>
    %97 = vector.broadcast %7 : vector<1x128xf32> to vector<2x128xf32>
    %98 = arith.addf %96, %97 : vector<2x128xf32>
    %99 = arith.mulf %86, %98 : vector<2x128xf32>
    %100 = arith.addf %95, %99 : vector<2x128xf32>
    %101 = math.tanh %100 : vector<2x128xf32>
    %cst_37 = arith.constant 1.000000e+00 : f32
    %102 = vector.broadcast %cst_37 : f32 to vector<2x128xf32>
    %103 = arith.subf %102, %94 : vector<2x128xf32>
    %104 = arith.mulf %103, %101 : vector<2x128xf32>
    %105 = arith.mulf %94, %42 : vector<2x128xf32>
    %106 = arith.addf %104, %105 : vector<2x128xf32>
    %c0_38 = arith.constant 0 : index
    %c0_39 = arith.constant 0 : index
    %107 = vector.load %arg3[%c0_38, %c0_39] : memref<128x384xf32, #tpu.memory_space<vmem>>, vector<128x384xf32>
    %cst_40 = arith.constant dense<0.000000e+00> : vector<2x384xf32>
    %108 = tpu.matmul %72, %107, %cst_40 {dimension_numbers = #tpu.dot_dimension_numbers<[1], [0], [0], [1], [0, 0, 1, 1], [], []>} : vector<2x128xf32>, vector<128x384xf32>, vector<2x384xf32> -> vector<2x384xf32>
    %109 = vector.extract_strided_slice %76 {offsets = [0, 0], sizes = [2, 128], strides = [1, 1]} : vector<2x384xf32> to vector<2x128xf32>
    %110 = vector.extract_strided_slice %108 {offsets = [0, 0], sizes = [2, 128], strides = [1, 1]} : vector<2x384xf32> to vector<2x128xf32>
    %111 = arith.addf %109, %110 : vector<2x128xf32>
    %112 = arith.negf %111 : vector<2x128xf32>
    %113 = math.exp %112 : vector<2x128xf32>
    %cst_41 = arith.constant 1.000000e+00 : f32
    %114 = vector.broadcast %cst_41 : f32 to vector<2x128xf32>
    %115 = arith.addf %114, %113 : vector<2x128xf32>
    %116 = arith.divf %114, %115 : vector<2x128xf32>
    %117 = vector.extract_strided_slice %76 {offsets = [0, 128], sizes = [2, 128], strides = [1, 1]} : vector<2x384xf32> to vector<2x128xf32>
    %118 = vector.extract_strided_slice %108 {offsets = [0, 128], sizes = [2, 128], strides = [1, 1]} : vector<2x384xf32> to vector<2x128xf32>
    %119 = arith.addf %117, %118 : vector<2x128xf32>
    %120 = arith.negf %119 : vector<2x128xf32>
    %121 = math.exp %120 : vector<2x128xf32>
    %cst_42 = arith.constant 1.000000e+00 : f32
    %122 = vector.broadcast %cst_42 : f32 to vector<2x128xf32>
    %123 = arith.addf %122, %121 : vector<2x128xf32>
    %124 = arith.divf %122, %123 : vector<2x128xf32>
    %125 = vector.extract_strided_slice %76 {offsets = [0, 256], sizes = [2, 128], strides = [1, 1]} : vector<2x384xf32> to vector<2x128xf32>
    %126 = vector.extract_strided_slice %108 {offsets = [0, 256], sizes = [2, 128], strides = [1, 1]} : vector<2x384xf32> to vector<2x128xf32>
    %127 = vector.broadcast %8 : vector<1x128xf32> to vector<2x128xf32>
    %128 = arith.addf %126, %127 : vector<2x128xf32>
    %129 = arith.mulf %116, %128 : vector<2x128xf32>
    %130 = arith.addf %125, %129 : vector<2x128xf32>
    %131 = math.tanh %130 : vector<2x128xf32>
    %cst_43 = arith.constant 1.000000e+00 : f32
    %132 = vector.broadcast %cst_43 : f32 to vector<2x128xf32>
    %133 = arith.subf %132, %124 : vector<2x128xf32>
    %134 = arith.mulf %133, %131 : vector<2x128xf32>
    %135 = arith.mulf %124, %72 : vector<2x128xf32>
    %136 = arith.addf %134, %135 : vector<2x128xf32>
    %c2_44 = arith.constant 2 : index
    %c0_45 = arith.constant 0 : index
    %137 = vector.load %arg15[%c2_44, %c0_45] : memref<16x256xf32, #tpu.memory_space<vmem>>, vector<2x128xf32>
    tpu.vector_store %arg15[%c2_44, %c0_45], %106 {strides = array<i32>} : memref<16x256xf32, #tpu.memory_space<vmem>>, vector<2x128xf32>,
    %c12_46 = arith.constant 12 : index
    %c128_47 = arith.constant 128 : index
    %138 = vector.load %arg15[%c12_46, %c128_47] : memref<16x256xf32, #tpu.memory_space<vmem>>, vector<2x128xf32>
    tpu.vector_store %arg15[%c12_46, %c128_47], %136 {strides = array<i32>} : memref<16x256xf32, #tpu.memory_space<vmem>>, vector<2x128xf32>,
    %c4 = arith.constant 4 : index
    %c0_48 = arith.constant 0 : index
    %139 = vector.load %arg14[%c4, %c0_48] : memref<16x768xf32, #tpu.memory_space<vmem>>, vector<2x384xf32>
    %c10 = arith.constant 10 : index
    %c384_49 = arith.constant 384 : index
    %140 = vector.load %arg14[%c10, %c384_49] : memref<16x768xf32, #tpu.memory_space<vmem>>, vector<2x384xf32>
    %c0_50 = arith.constant 0 : index
    %c0_51 = arith.constant 0 : index
    %141 = vector.load %arg2[%c0_50, %c0_51] : memref<128x384xf32, #tpu.memory_space<vmem>>, vector<128x384xf32>
    %cst_52 = arith.constant dense<0.000000e+00> : vector<2x384xf32>
    %142 = tpu.matmul %106, %141, %cst_52 {dimension_numbers = #tpu.dot_dimension_numbers<[1], [0], [0], [1], [0, 0, 1, 1], [], []>} : vector<2x128xf32>, vector<128x384xf32>, vector<2x384xf32> -> vector<2x384xf32>
    %143 = vector.extract_strided_slice %139 {offsets = [0, 0], sizes = [2, 128], strides = [1, 1]} : vector<2x384xf32> to vector<2x128xf32>
    %144 = vector.extract_strided_slice %142 {offsets = [0, 0], sizes = [2, 128], strides = [1, 1]} : vector<2x384xf32> to vector<2x128xf32>
    %145 = arith.addf %143, %144 : vector<2x128xf32>
    %146 = arith.negf %145 : vector<2x128xf32>
    %147 = math.exp %146 : vector<2x128xf32>
    %cst_53 = arith.constant 1.000000e+00 : f32
    %148 = vector.broadcast %cst_53 : f32 to vector<2x128xf32>
    %149 = arith.addf %148, %147 : vector<2x128xf32>
    %150 = arith.divf %148, %149 : vector<2x128xf32>
    %151 = vector.extract_strided_slice %139 {offsets = [0, 128], sizes = [2, 128], strides = [1, 1]} : vector<2x384xf32> to vector<2x128xf32>
    %152 = vector.extract_strided_slice %142 {offsets = [0, 128], sizes = [2, 128], strides = [1, 1]} : vector<2x384xf32> to vector<2x128xf32>
    %153 = arith.addf %151, %152 : vector<2x128xf32>
    %154 = arith.negf %153 : vector<2x128xf32>
    %155 = math.exp %154 : vector<2x128xf32>
    %cst_54 = arith.constant 1.000000e+00 : f32
    %156 = vector.broadcast %cst_54 : f32 to vector<2x128xf32>
    %157 = arith.addf %156, %155 : vector<2x128xf32>
    %158 = arith.divf %156, %157 : vector<2x128xf32>
    %159 = vector.extract_strided_slice %139 {offsets = [0, 256], sizes = [2, 128], strides = [1, 1]} : vector<2x384xf32> to vector<2x128xf32>
    %160 = vector.extract_strided_slice %142 {offsets = [0, 256], sizes = [2, 128], strides = [1, 1]} : vector<2x384xf32> to vector<2x128xf32>
    %161 = vector.broadcast %7 : vector<1x128xf32> to vector<2x128xf32>
    %162 = arith.addf %160, %161 : vector<2x128xf32>
    %163 = arith.mulf %150, %162 : vector<2x128xf32>
    %164 = arith.addf %159, %163 : vector<2x128xf32>
    %165 = math.tanh %164 : vector<2x128xf32>
    %cst_55 = arith.constant 1.000000e+00 : f32
    %166 = vector.broadcast %cst_55 : f32 to vector<2x128xf32>
    %167 = arith.subf %166, %158 : vector<2x128xf32>
    %168 = arith.mulf %167, %165 : vector<2x128xf32>
    %169 = arith.mulf %158, %106 : vector<2x128xf32>
    %170 = arith.addf %168, %169 : vector<2x128xf32>
    %c0_56 = arith.constant 0 : index
    %c0_57 = arith.constant 0 : index
    %171 = vector.load %arg3[%c0_56, %c0_57] : memref<128x384xf32, #tpu.memory_space<vmem>>, vector<128x384xf32>
    %cst_58 = arith.constant dense<0.000000e+00> : vector<2x384xf32>
    %172 = tpu.matmul %136, %171, %cst_58 {dimension_numbers = #tpu.dot_dimension_numbers<[1], [0], [0], [1], [0, 0, 1, 1], [], []>} : vector<2x128xf32>, vector<128x384xf32>, vector<2x384xf32> -> vector<2x384xf32>
    %173 = vector.extract_strided_slice %140 {offsets = [0, 0], sizes = [2, 128], strides = [1, 1]} : vector<2x384xf32> to vector<2x128xf32>
    %174 = vector.extract_strided_slice %172 {offsets = [0, 0], sizes = [2, 128], strides = [1, 1]} : vector<2x384xf32> to vector<2x128xf32>
    %175 = arith.addf %173, %174 : vector<2x128xf32>
    %176 = arith.negf %175 : vector<2x128xf32>
    %177 = math.exp %176 : vector<2x128xf32>
    %cst_59 = arith.constant 1.000000e+00 : f32
    %178 = vector.broadcast %cst_59 : f32 to vector<2x128xf32>
    %179 = arith.addf %178, %177 : vector<2x128xf32>
    %180 = arith.divf %178, %179 : vector<2x128xf32>
    %181 = vector.extract_strided_slice %140 {offsets = [0, 128], sizes = [2, 128], strides = [1, 1]} : vector<2x384xf32> to vector<2x128xf32>
    %182 = vector.extract_strided_slice %172 {offsets = [0, 128], sizes = [2, 128], strides = [1, 1]} : vector<2x384xf32> to vector<2x128xf32>
    %183 = arith.addf %181, %182 : vector<2x128xf32>
    %184 = arith.negf %183 : vector<2x128xf32>
    %185 = math.exp %184 : vector<2x128xf32>
    %cst_60 = arith.constant 1.000000e+00 : f32
    %186 = vector.broadcast %cst_60 : f32 to vector<2x128xf32>
    %187 = arith.addf %186, %185 : vector<2x128xf32>
    %188 = arith.divf %186, %187 : vector<2x128xf32>
    %189 = vector.extract_strided_slice %140 {offsets = [0, 256], sizes = [2, 128], strides = [1, 1]} : vector<2x384xf32> to vector<2x128xf32>
    %190 = vector.extract_strided_slice %172 {offsets = [0, 256], sizes = [2, 128], strides = [1, 1]} : vector<2x384xf32> to vector<2x128xf32>
    %191 = vector.broadcast %8 : vector<1x128xf32> to vector<2x128xf32>
    %192 = arith.addf %190, %191 : vector<2x128xf32>
    %193 = arith.mulf %180, %192 : vector<2x128xf32>
    %194 = arith.addf %189, %193 : vector<2x128xf32>
    %195 = math.tanh %194 : vector<2x128xf32>
    %cst_61 = arith.constant 1.000000e+00 : f32
    %196 = vector.broadcast %cst_61 : f32 to vector<2x128xf32>
    %197 = arith.subf %196, %188 : vector<2x128xf32>
    %198 = arith.mulf %197, %195 : vector<2x128xf32>
    %199 = arith.mulf %188, %136 : vector<2x128xf32>
    %200 = arith.addf %198, %199 : vector<2x128xf32>
    %c4_62 = arith.constant 4 : index
    %c0_63 = arith.constant 0 : index
    %201 = vector.load %arg15[%c4_62, %c0_63] : memref<16x256xf32, #tpu.memory_space<vmem>>, vector<2x128xf32>
    tpu.vector_store %arg15[%c4_62, %c0_63], %170 {strides = array<i32>} : memref<16x256xf32, #tpu.memory_space<vmem>>, vector<2x128xf32>,
    %c10_64 = arith.constant 10 : index
    %c128_65 = arith.constant 128 : index
    %202 = vector.load %arg15[%c10_64, %c128_65] : memref<16x256xf32, #tpu.memory_space<vmem>>, vector<2x128xf32>
    tpu.vector_store %arg15[%c10_64, %c128_65], %200 {strides = array<i32>} : memref<16x256xf32, #tpu.memory_space<vmem>>, vector<2x128xf32>,
    %c6 = arith.constant 6 : index
    %c0_66 = arith.constant 0 : index
    %203 = vector.load %arg14[%c6, %c0_66] : memref<16x768xf32, #tpu.memory_space<vmem>>, vector<2x384xf32>
    %c8 = arith.constant 8 : index
    %c384_67 = arith.constant 384 : index
    %204 = vector.load %arg14[%c8, %c384_67] : memref<16x768xf32, #tpu.memory_space<vmem>>, vector<2x384xf32>
    %c0_68 = arith.constant 0 : index
    %c0_69 = arith.constant 0 : index
    %205 = vector.load %arg2[%c0_68, %c0_69] : memref<128x384xf32, #tpu.memory_space<vmem>>, vector<128x384xf32>
    %cst_70 = arith.constant dense<0.000000e+00> : vector<2x384xf32>
    %206 = tpu.matmul %170, %205, %cst_70 {dimension_numbers = #tpu.dot_dimension_numbers<[1], [0], [0], [1], [0, 0, 1, 1], [], []>} : vector<2x128xf32>, vector<128x384xf32>, vector<2x384xf32> -> vector<2x384xf32>
    %207 = vector.extract_strided_slice %203 {offsets = [0, 0], sizes = [2, 128], strides = [1, 1]} : vector<2x384xf32> to vector<2x128xf32>
    %208 = vector.extract_strided_slice %206 {offsets = [0, 0], sizes = [2, 128], strides = [1, 1]} : vector<2x384xf32> to vector<2x128xf32>
    %209 = arith.addf %207, %208 : vector<2x128xf32>
    %210 = arith.negf %209 : vector<2x128xf32>
    %211 = math.exp %210 : vector<2x128xf32>
    %cst_71 = arith.constant 1.000000e+00 : f32
    %212 = vector.broadcast %cst_71 : f32 to vector<2x128xf32>
    %213 = arith.addf %212, %211 : vector<2x128xf32>
    %214 = arith.divf %212, %213 : vector<2x128xf32>
    %215 = vector.extract_strided_slice %203 {offsets = [0, 128], sizes = [2, 128], strides = [1, 1]} : vector<2x384xf32> to vector<2x128xf32>
    %216 = vector.extract_strided_slice %206 {offsets = [0, 128], sizes = [2, 128], strides = [1, 1]} : vector<2x384xf32> to vector<2x128xf32>
    %217 = arith.addf %215, %216 : vector<2x128xf32>
    %218 = arith.negf %217 : vector<2x128xf32>
    %219 = math.exp %218 : vector<2x128xf32>
    %cst_72 = arith.constant 1.000000e+00 : f32
    %220 = vector.broadcast %cst_72 : f32 to vector<2x128xf32>
    %221 = arith.addf %220, %219 : vector<2x128xf32>
    %222 = arith.divf %220, %221 : vector<2x128xf32>
    %223 = vector.extract_strided_slice %203 {offsets = [0, 256], sizes = [2, 128], strides = [1, 1]} : vector<2x384xf32> to vector<2x128xf32>
    %224 = vector.extract_strided_slice %206 {offsets = [0, 256], sizes = [2, 128], strides = [1, 1]} : vector<2x384xf32> to vector<2x128xf32>
    %225 = vector.broadcast %7 : vector<1x128xf32> to vector<2x128xf32>
    %226 = arith.addf %224, %225 : vector<2x128xf32>
    %227 = arith.mulf %214, %226 : vector<2x128xf32>
    %228 = arith.addf %223, %227 : vector<2x128xf32>
    %229 = math.tanh %228 : vector<2x128xf32>
    %cst_73 = arith.constant 1.000000e+00 : f32
    %230 = vector.broadcast %cst_73 : f32 to vector<2x128xf32>
    %231 = arith.subf %230, %222 : vector<2x128xf32>
    %232 = arith.mulf %231, %229 : vector<2x128xf32>
    %233 = arith.mulf %222, %170 : vector<2x128xf32>
    %234 = arith.addf %232, %233 : vector<2x128xf32>
    %c0_74 = arith.constant 0 : index
    %c0_75 = arith.constant 0 : index
    %235 = vector.load %arg3[%c0_74, %c0_75] : memref<128x384xf32, #tpu.memory_space<vmem>>, vector<128x384xf32>
    %cst_76 = arith.constant dense<0.000000e+00> : vector<2x384xf32>
    %236 = tpu.matmul %200, %235, %cst_76 {dimension_numbers = #tpu.dot_dimension_numbers<[1], [0], [0], [1], [0, 0, 1, 1], [], []>} : vector<2x128xf32>, vector<128x384xf32>, vector<2x384xf32> -> vector<2x384xf32>
    %237 = vector.extract_strided_slice %204 {offsets = [0, 0], sizes = [2, 128], strides = [1, 1]} : vector<2x384xf32> to vector<2x128xf32>
    %238 = vector.extract_strided_slice %236 {offsets = [0, 0], sizes = [2, 128], strides = [1, 1]} : vector<2x384xf32> to vector<2x128xf32>
    %239 = arith.addf %237, %238 : vector<2x128xf32>
    %240 = arith.negf %239 : vector<2x128xf32>
    %241 = math.exp %240 : vector<2x128xf32>
    %cst_77 = arith.constant 1.000000e+00 : f32
    %242 = vector.broadcast %cst_77 : f32 to vector<2x128xf32>
    %243 = arith.addf %242, %241 : vector<2x128xf32>
    %244 = arith.divf %242, %243 : vector<2x128xf32>
    %245 = vector.extract_strided_slice %204 {offsets = [0, 128], sizes = [2, 128], strides = [1, 1]} : vector<2x384xf32> to vector<2x128xf32>
    %246 = vector.extract_strided_slice %236 {offsets = [0, 128], sizes = [2, 128], strides = [1, 1]} : vector<2x384xf32> to vector<2x128xf32>
    %247 = arith.addf %245, %246 : vector<2x128xf32>
    %248 = arith.negf %247 : vector<2x128xf32>
    %249 = math.exp %248 : vector<2x128xf32>
    %cst_78 = arith.constant 1.000000e+00 : f32
    %250 = vector.broadcast %cst_78 : f32 to vector<2x128xf32>
    %251 = arith.addf %250, %249 : vector<2x128xf32>
    %252 = arith.divf %250, %251 : vector<2x128xf32>
    %253 = vector.extract_strided_slice %204 {offsets = [0, 256], sizes = [2, 128], strides = [1, 1]} : vector<2x384xf32> to vector<2x128xf32>
    %254 = vector.extract_strided_slice %236 {offsets = [0, 256], sizes = [2, 128], strides = [1, 1]} : vector<2x384xf32> to vector<2x128xf32>
    %255 = vector.broadcast %8 : vector<1x128xf32> to vector<2x128xf32>
    %256 = arith.addf %254, %255 : vector<2x128xf32>
    %257 = arith.mulf %244, %256 : vector<2x128xf32>
    %258 = arith.addf %253, %257 : vector<2x128xf32>
    %259 = math.tanh %258 : vector<2x128xf32>
    %cst_79 = arith.constant 1.000000e+00 : f32
    %260 = vector.broadcast %cst_79 : f32 to vector<2x128xf32>
    %261 = arith.subf %260, %252 : vector<2x128xf32>
    %262 = arith.mulf %261, %259 : vector<2x128xf32>
    %263 = arith.mulf %252, %200 : vector<2x128xf32>
    %264 = arith.addf %262, %263 : vector<2x128xf32>
    %c6_80 = arith.constant 6 : index
    %c0_81 = arith.constant 0 : index
    %265 = vector.load %arg15[%c6_80, %c0_81] : memref<16x256xf32, #tpu.memory_space<vmem>>, vector<2x128xf32>
    tpu.vector_store %arg15[%c6_80, %c0_81], %234 {strides = array<i32>} : memref<16x256xf32, #tpu.memory_space<vmem>>, vector<2x128xf32>,
    %c8_82 = arith.constant 8 : index
    %c128_83 = arith.constant 128 : index
    %266 = vector.load %arg15[%c8_82, %c128_83] : memref<16x256xf32, #tpu.memory_space<vmem>>, vector<2x128xf32>
    tpu.vector_store %arg15[%c8_82, %c128_83], %264 {strides = array<i32>} : memref<16x256xf32, #tpu.memory_space<vmem>>, vector<2x128xf32>,
    %c8_84 = arith.constant 8 : index
    %c0_85 = arith.constant 0 : index
    %267 = vector.load %arg14[%c8_84, %c0_85] : memref<16x768xf32, #tpu.memory_space<vmem>>, vector<2x384xf32>
    %c6_86 = arith.constant 6 : index
    %c384_87 = arith.constant 384 : index
    %268 = vector.load %arg14[%c6_86, %c384_87] : memref<16x768xf32, #tpu.memory_space<vmem>>, vector<2x384xf32>
    %c0_88 = arith.constant 0 : index
    %c0_89 = arith.constant 0 : index
    %269 = vector.load %arg2[%c0_88, %c0_89] : memref<128x384xf32, #tpu.memory_space<vmem>>, vector<128x384xf32>
    %cst_90 = arith.constant dense<0.000000e+00> : vector<2x384xf32>
    %270 = tpu.matmul %234, %269, %cst_90 {dimension_numbers = #tpu.dot_dimension_numbers<[1], [0], [0], [1], [0, 0, 1, 1], [], []>} : vector<2x128xf32>, vector<128x384xf32>, vector<2x384xf32> -> vector<2x384xf32>
    %271 = vector.extract_strided_slice %267 {offsets = [0, 0], sizes = [2, 128], strides = [1, 1]} : vector<2x384xf32> to vector<2x128xf32>
    %272 = vector.extract_strided_slice %270 {offsets = [0, 0], sizes = [2, 128], strides = [1, 1]} : vector<2x384xf32> to vector<2x128xf32>
    %273 = arith.addf %271, %272 : vector<2x128xf32>
    %274 = arith.negf %273 : vector<2x128xf32>
    %275 = math.exp %274 : vector<2x128xf32>
    %cst_91 = arith.constant 1.000000e+00 : f32
    %276 = vector.broadcast %cst_91 : f32 to vector<2x128xf32>
    %277 = arith.addf %276, %275 : vector<2x128xf32>
    %278 = arith.divf %276, %277 : vector<2x128xf32>
    %279 = vector.extract_strided_slice %267 {offsets = [0, 128], sizes = [2, 128], strides = [1, 1]} : vector<2x384xf32> to vector<2x128xf32>
    %280 = vector.extract_strided_slice %270 {offsets = [0, 128], sizes = [2, 128], strides = [1, 1]} : vector<2x384xf32> to vector<2x128xf32>
    %281 = arith.addf %279, %280 : vector<2x128xf32>
    %282 = arith.negf %281 : vector<2x128xf32>
    %283 = math.exp %282 : vector<2x128xf32>
    %cst_92 = arith.constant 1.000000e+00 : f32
    %284 = vector.broadcast %cst_92 : f32 to vector<2x128xf32>
    %285 = arith.addf %284, %283 : vector<2x128xf32>
    %286 = arith.divf %284, %285 : vector<2x128xf32>
    %287 = vector.extract_strided_slice %267 {offsets = [0, 256], sizes = [2, 128], strides = [1, 1]} : vector<2x384xf32> to vector<2x128xf32>
    %288 = vector.extract_strided_slice %270 {offsets = [0, 256], sizes = [2, 128], strides = [1, 1]} : vector<2x384xf32> to vector<2x128xf32>
    %289 = vector.broadcast %7 : vector<1x128xf32> to vector<2x128xf32>
    %290 = arith.addf %288, %289 : vector<2x128xf32>
    %291 = arith.mulf %278, %290 : vector<2x128xf32>
    %292 = arith.addf %287, %291 : vector<2x128xf32>
    %293 = math.tanh %292 : vector<2x128xf32>
    %cst_93 = arith.constant 1.000000e+00 : f32
    %294 = vector.broadcast %cst_93 : f32 to vector<2x128xf32>
    %295 = arith.subf %294, %286 : vector<2x128xf32>
    %296 = arith.mulf %295, %293 : vector<2x128xf32>
    %297 = arith.mulf %286, %234 : vector<2x128xf32>
    %298 = arith.addf %296, %297 : vector<2x128xf32>
    %c0_94 = arith.constant 0 : index
    %c0_95 = arith.constant 0 : index
    %299 = vector.load %arg3[%c0_94, %c0_95] : memref<128x384xf32, #tpu.memory_space<vmem>>, vector<128x384xf32>
    %cst_96 = arith.constant dense<0.000000e+00> : vector<2x384xf32>
    %300 = tpu.matmul %264, %299, %cst_96 {dimension_numbers = #tpu.dot_dimension_numbers<[1], [0], [0], [1], [0, 0, 1, 1], [], []>} : vector<2x128xf32>, vector<128x384xf32>, vector<2x384xf32> -> vector<2x384xf32>
    %301 = vector.extract_strided_slice %268 {offsets = [0, 0], sizes = [2, 128], strides = [1, 1]} : vector<2x384xf32> to vector<2x128xf32>
    %302 = vector.extract_strided_slice %300 {offsets = [0, 0], sizes = [2, 128], strides = [1, 1]} : vector<2x384xf32> to vector<2x128xf32>
    %303 = arith.addf %301, %302 : vector<2x128xf32>
    %304 = arith.negf %303 : vector<2x128xf32>
    %305 = math.exp %304 : vector<2x128xf32>
    %cst_97 = arith.constant 1.000000e+00 : f32
    %306 = vector.broadcast %cst_97 : f32 to vector<2x128xf32>
    %307 = arith.addf %306, %305 : vector<2x128xf32>
    %308 = arith.divf %306, %307 : vector<2x128xf32>
    %309 = vector.extract_strided_slice %268 {offsets = [0, 128], sizes = [2, 128], strides = [1, 1]} : vector<2x384xf32> to vector<2x128xf32>
    %310 = vector.extract_strided_slice %300 {offsets = [0, 128], sizes = [2, 128], strides = [1, 1]} : vector<2x384xf32> to vector<2x128xf32>
    %311 = arith.addf %309, %310 : vector<2x128xf32>
    %312 = arith.negf %311 : vector<2x128xf32>
    %313 = math.exp %312 : vector<2x128xf32>
    %cst_98 = arith.constant 1.000000e+00 : f32
    %314 = vector.broadcast %cst_98 : f32 to vector<2x128xf32>
    %315 = arith.addf %314, %313 : vector<2x128xf32>
    %316 = arith.divf %314, %315 : vector<2x128xf32>
    %317 = vector.extract_strided_slice %268 {offsets = [0, 256], sizes = [2, 128], strides = [1, 1]} : vector<2x384xf32> to vector<2x128xf32>
    %318 = vector.extract_strided_slice %300 {offsets = [0, 256], sizes = [2, 128], strides = [1, 1]} : vector<2x384xf32> to vector<2x128xf32>
    %319 = vector.broadcast %8 : vector<1x128xf32> to vector<2x128xf32>
    %320 = arith.addf %318, %319 : vector<2x128xf32>
    %321 = arith.mulf %308, %320 : vector<2x128xf32>
    %322 = arith.addf %317, %321 : vector<2x128xf32>
    %323 = math.tanh %322 : vector<2x128xf32>
    %cst_99 = arith.constant 1.000000e+00 : f32
    %324 = vector.broadcast %cst_99 : f32 to vector<2x128xf32>
    %325 = arith.subf %324, %316 : vector<2x128xf32>
    %326 = arith.mulf %325, %323 : vector<2x128xf32>
    %327 = arith.mulf %316, %264 : vector<2x128xf32>
    %328 = arith.addf %326, %327 : vector<2x128xf32>
    %c8_100 = arith.constant 8 : index
    %c0_101 = arith.constant 0 : index
    %329 = vector.load %arg15[%c8_100, %c0_101] : memref<16x256xf32, #tpu.memory_space<vmem>>, vector<2x128xf32>
    tpu.vector_store %arg15[%c8_100, %c0_101], %298 {strides = array<i32>} : memref<16x256xf32, #tpu.memory_space<vmem>>, vector<2x128xf32>,
    %c6_102 = arith.constant 6 : index
    %c128_103 = arith.constant 128 : index
    %330 = vector.load %arg15[%c6_102, %c128_103] : memref<16x256xf32, #tpu.memory_space<vmem>>, vector<2x128xf32>
    tpu.vector_store %arg15[%c6_102, %c128_103], %328 {strides = array<i32>} : memref<16x256xf32, #tpu.memory_space<vmem>>, vector<2x128xf32>,
    %c10_104 = arith.constant 10 : index
    %c0_105 = arith.constant 0 : index
    %331 = vector.load %arg14[%c10_104, %c0_105] : memref<16x768xf32, #tpu.memory_space<vmem>>, vector<2x384xf32>
    %c4_106 = arith.constant 4 : index
    %c384_107 = arith.constant 384 : index
    %332 = vector.load %arg14[%c4_106, %c384_107] : memref<16x768xf32, #tpu.memory_space<vmem>>, vector<2x384xf32>
    %c0_108 = arith.constant 0 : index
    %c0_109 = arith.constant 0 : index
    %333 = vector.load %arg2[%c0_108, %c0_109] : memref<128x384xf32, #tpu.memory_space<vmem>>, vector<128x384xf32>
    %cst_110 = arith.constant dense<0.000000e+00> : vector<2x384xf32>
    %334 = tpu.matmul %298, %333, %cst_110 {dimension_numbers = #tpu.dot_dimension_numbers<[1], [0], [0], [1], [0, 0, 1, 1], [], []>} : vector<2x128xf32>, vector<128x384xf32>, vector<2x384xf32> -> vector<2x384xf32>
    %335 = vector.extract_strided_slice %331 {offsets = [0, 0], sizes = [2, 128], strides = [1, 1]} : vector<2x384xf32> to vector<2x128xf32>
    %336 = vector.extract_strided_slice %334 {offsets = [0, 0], sizes = [2, 128], strides = [1, 1]} : vector<2x384xf32> to vector<2x128xf32>
    %337 = arith.addf %335, %336 : vector<2x128xf32>
    %338 = arith.negf %337 : vector<2x128xf32>
    %339 = math.exp %338 : vector<2x128xf32>
    %cst_111 = arith.constant 1.000000e+00 : f32
    %340 = vector.broadcast %cst_111 : f32 to vector<2x128xf32>
    %341 = arith.addf %340, %339 : vector<2x128xf32>
    %342 = arith.divf %340, %341 : vector<2x128xf32>
    %343 = vector.extract_strided_slice %331 {offsets = [0, 128], sizes = [2, 128], strides = [1, 1]} : vector<2x384xf32> to vector<2x128xf32>
    %344 = vector.extract_strided_slice %334 {offsets = [0, 128], sizes = [2, 128], strides = [1, 1]} : vector<2x384xf32> to vector<2x128xf32>
    %345 = arith.addf %343, %344 : vector<2x128xf32>
    %346 = arith.negf %345 : vector<2x128xf32>
    %347 = math.exp %346 : vector<2x128xf32>
    %cst_112 = arith.constant 1.000000e+00 : f32
    %348 = vector.broadcast %cst_112 : f32 to vector<2x128xf32>
    %349 = arith.addf %348, %347 : vector<2x128xf32>
    %350 = arith.divf %348, %349 : vector<2x128xf32>
    %351 = vector.extract_strided_slice %331 {offsets = [0, 256], sizes = [2, 128], strides = [1, 1]} : vector<2x384xf32> to vector<2x128xf32>
    %352 = vector.extract_strided_slice %334 {offsets = [0, 256], sizes = [2, 128], strides = [1, 1]} : vector<2x384xf32> to vector<2x128xf32>
    %353 = vector.broadcast %7 : vector<1x128xf32> to vector<2x128xf32>
    %354 = arith.addf %352, %353 : vector<2x128xf32>
    %355 = arith.mulf %342, %354 : vector<2x128xf32>
    %356 = arith.addf %351, %355 : vector<2x128xf32>
    %357 = math.tanh %356 : vector<2x128xf32>
    %cst_113 = arith.constant 1.000000e+00 : f32
    %358 = vector.broadcast %cst_113 : f32 to vector<2x128xf32>
    %359 = arith.subf %358, %350 : vector<2x128xf32>
    %360 = arith.mulf %359, %357 : vector<2x128xf32>
    %361 = arith.mulf %350, %298 : vector<2x128xf32>
    %362 = arith.addf %360, %361 : vector<2x128xf32>
    %c0_114 = arith.constant 0 : index
    %c0_115 = arith.constant 0 : index
    %363 = vector.load %arg3[%c0_114, %c0_115] : memref<128x384xf32, #tpu.memory_space<vmem>>, vector<128x384xf32>
    %cst_116 = arith.constant dense<0.000000e+00> : vector<2x384xf32>
    %364 = tpu.matmul %328, %363, %cst_116 {dimension_numbers = #tpu.dot_dimension_numbers<[1], [0], [0], [1], [0, 0, 1, 1], [], []>} : vector<2x128xf32>, vector<128x384xf32>, vector<2x384xf32> -> vector<2x384xf32>
    %365 = vector.extract_strided_slice %332 {offsets = [0, 0], sizes = [2, 128], strides = [1, 1]} : vector<2x384xf32> to vector<2x128xf32>
    %366 = vector.extract_strided_slice %364 {offsets = [0, 0], sizes = [2, 128], strides = [1, 1]} : vector<2x384xf32> to vector<2x128xf32>
    %367 = arith.addf %365, %366 : vector<2x128xf32>
    %368 = arith.negf %367 : vector<2x128xf32>
    %369 = math.exp %368 : vector<2x128xf32>
    %cst_117 = arith.constant 1.000000e+00 : f32
    %370 = vector.broadcast %cst_117 : f32 to vector<2x128xf32>
    %371 = arith.addf %370, %369 : vector<2x128xf32>
    %372 = arith.divf %370, %371 : vector<2x128xf32>
    %373 = vector.extract_strided_slice %332 {offsets = [0, 128], sizes = [2, 128], strides = [1, 1]} : vector<2x384xf32> to vector<2x128xf32>
    %374 = vector.extract_strided_slice %364 {offsets = [0, 128], sizes = [2, 128], strides = [1, 1]} : vector<2x384xf32> to vector<2x128xf32>
    %375 = arith.addf %373, %374 : vector<2x128xf32>
    %376 = arith.negf %375 : vector<2x128xf32>
    %377 = math.exp %376 : vector<2x128xf32>
    %cst_118 = arith.constant 1.000000e+00 : f32
    %378 = vector.broadcast %cst_118 : f32 to vector<2x128xf32>
    %379 = arith.addf %378, %377 : vector<2x128xf32>
    %380 = arith.divf %378, %379 : vector<2x128xf32>
    %381 = vector.extract_strided_slice %332 {offsets = [0, 256], sizes = [2, 128], strides = [1, 1]} : vector<2x384xf32> to vector<2x128xf32>
    %382 = vector.extract_strided_slice %364 {offsets = [0, 256], sizes = [2, 128], strides = [1, 1]} : vector<2x384xf32> to vector<2x128xf32>
    %383 = vector.broadcast %8 : vector<1x128xf32> to vector<2x128xf32>
    %384 = arith.addf %382, %383 : vector<2x128xf32>
    %385 = arith.mulf %372, %384 : vector<2x128xf32>
    %386 = arith.addf %381, %385 : vector<2x128xf32>
    %387 = math.tanh %386 : vector<2x128xf32>
    %cst_119 = arith.constant 1.000000e+00 : f32
    %388 = vector.broadcast %cst_119 : f32 to vector<2x128xf32>
    %389 = arith.subf %388, %380 : vector<2x128xf32>
    %390 = arith.mulf %389, %387 : vector<2x128xf32>
    %391 = arith.mulf %380, %328 : vector<2x128xf32>
    %392 = arith.addf %390, %391 : vector<2x128xf32>
    %c10_120 = arith.constant 10 : index
    %c0_121 = arith.constant 0 : index
    %393 = vector.load %arg15[%c10_120, %c0_121] : memref<16x256xf32, #tpu.memory_space<vmem>>, vector<2x128xf32>
    tpu.vector_store %arg15[%c10_120, %c0_121], %362 {strides = array<i32>} : memref<16x256xf32, #tpu.memory_space<vmem>>, vector<2x128xf32>,
    %c4_122 = arith.constant 4 : index
    %c128_123 = arith.constant 128 : index
    %394 = vector.load %arg15[%c4_122, %c128_123] : memref<16x256xf32, #tpu.memory_space<vmem>>, vector<2x128xf32>
    tpu.vector_store %arg15[%c4_122, %c128_123], %392 {strides = array<i32>} : memref<16x256xf32, #tpu.memory_space<vmem>>, vector<2x128xf32>,
    %c12_124 = arith.constant 12 : index
    %c0_125 = arith.constant 0 : index
    %395 = vector.load %arg14[%c12_124, %c0_125] : memref<16x768xf32, #tpu.memory_space<vmem>>, vector<2x384xf32>
    %c2_126 = arith.constant 2 : index
    %c384_127 = arith.constant 384 : index
    %396 = vector.load %arg14[%c2_126, %c384_127] : memref<16x768xf32, #tpu.memory_space<vmem>>, vector<2x384xf32>
    %c0_128 = arith.constant 0 : index
    %c0_129 = arith.constant 0 : index
    %397 = vector.load %arg2[%c0_128, %c0_129] : memref<128x384xf32, #tpu.memory_space<vmem>>, vector<128x384xf32>
    %cst_130 = arith.constant dense<0.000000e+00> : vector<2x384xf32>
    %398 = tpu.matmul %362, %397, %cst_130 {dimension_numbers = #tpu.dot_dimension_numbers<[1], [0], [0], [1], [0, 0, 1, 1], [], []>} : vector<2x128xf32>, vector<128x384xf32>, vector<2x384xf32> -> vector<2x384xf32>
    %399 = vector.extract_strided_slice %395 {offsets = [0, 0], sizes = [2, 128], strides = [1, 1]} : vector<2x384xf32> to vector<2x128xf32>
    %400 = vector.extract_strided_slice %398 {offsets = [0, 0], sizes = [2, 128], strides = [1, 1]} : vector<2x384xf32> to vector<2x128xf32>
    %401 = arith.addf %399, %400 : vector<2x128xf32>
    %402 = arith.negf %401 : vector<2x128xf32>
    %403 = math.exp %402 : vector<2x128xf32>
    %cst_131 = arith.constant 1.000000e+00 : f32
    %404 = vector.broadcast %cst_131 : f32 to vector<2x128xf32>
    %405 = arith.addf %404, %403 : vector<2x128xf32>
    %406 = arith.divf %404, %405 : vector<2x128xf32>
    %407 = vector.extract_strided_slice %395 {offsets = [0, 128], sizes = [2, 128], strides = [1, 1]} : vector<2x384xf32> to vector<2x128xf32>
    %408 = vector.extract_strided_slice %398 {offsets = [0, 128], sizes = [2, 128], strides = [1, 1]} : vector<2x384xf32> to vector<2x128xf32>
    %409 = arith.addf %407, %408 : vector<2x128xf32>
    %410 = arith.negf %409 : vector<2x128xf32>
    %411 = math.exp %410 : vector<2x128xf32>
    %cst_132 = arith.constant 1.000000e+00 : f32
    %412 = vector.broadcast %cst_132 : f32 to vector<2x128xf32>
    %413 = arith.addf %412, %411 : vector<2x128xf32>
    %414 = arith.divf %412, %413 : vector<2x128xf32>
    %415 = vector.extract_strided_slice %395 {offsets = [0, 256], sizes = [2, 128], strides = [1, 1]} : vector<2x384xf32> to vector<2x128xf32>
    %416 = vector.extract_strided_slice %398 {offsets = [0, 256], sizes = [2, 128], strides = [1, 1]} : vector<2x384xf32> to vector<2x128xf32>
    %417 = vector.broadcast %7 : vector<1x128xf32> to vector<2x128xf32>
    %418 = arith.addf %416, %417 : vector<2x128xf32>
    %419 = arith.mulf %406, %418 : vector<2x128xf32>
    %420 = arith.addf %415, %419 : vector<2x128xf32>
    %421 = math.tanh %420 : vector<2x128xf32>
    %cst_133 = arith.constant 1.000000e+00 : f32
    %422 = vector.broadcast %cst_133 : f32 to vector<2x128xf32>
    %423 = arith.subf %422, %414 : vector<2x128xf32>
    %424 = arith.mulf %423, %421 : vector<2x128xf32>
    %425 = arith.mulf %414, %362 : vector<2x128xf32>
    %426 = arith.addf %424, %425 : vector<2x128xf32>
    %c0_134 = arith.constant 0 : index
    %c0_135 = arith.constant 0 : index
    %427 = vector.load %arg3[%c0_134, %c0_135] : memref<128x384xf32, #tpu.memory_space<vmem>>, vector<128x384xf32>
    %cst_136 = arith.constant dense<0.000000e+00> : vector<2x384xf32>
    %428 = tpu.matmul %392, %427, %cst_136 {dimension_numbers = #tpu.dot_dimension_numbers<[1], [0], [0], [1], [0, 0, 1, 1], [], []>} : vector<2x128xf32>, vector<128x384xf32>, vector<2x384xf32> -> vector<2x384xf32>
    %429 = vector.extract_strided_slice %396 {offsets = [0, 0], sizes = [2, 128], strides = [1, 1]} : vector<2x384xf32> to vector<2x128xf32>
    %430 = vector.extract_strided_slice %428 {offsets = [0, 0], sizes = [2, 128], strides = [1, 1]} : vector<2x384xf32> to vector<2x128xf32>
    %431 = arith.addf %429, %430 : vector<2x128xf32>
    %432 = arith.negf %431 : vector<2x128xf32>
    %433 = math.exp %432 : vector<2x128xf32>
    %cst_137 = arith.constant 1.000000e+00 : f32
    %434 = vector.broadcast %cst_137 : f32 to vector<2x128xf32>
    %435 = arith.addf %434, %433 : vector<2x128xf32>
    %436 = arith.divf %434, %435 : vector<2x128xf32>
    %437 = vector.extract_strided_slice %396 {offsets = [0, 128], sizes = [2, 128], strides = [1, 1]} : vector<2x384xf32> to vector<2x128xf32>
    %438 = vector.extract_strided_slice %428 {offsets = [0, 128], sizes = [2, 128], strides = [1, 1]} : vector<2x384xf32> to vector<2x128xf32>
    %439 = arith.addf %437, %438 : vector<2x128xf32>
    %440 = arith.negf %439 : vector<2x128xf32>
    %441 = math.exp %440 : vector<2x128xf32>
    %cst_138 = arith.constant 1.000000e+00 : f32
    %442 = vector.broadcast %cst_138 : f32 to vector<2x128xf32>
    %443 = arith.addf %442, %441 : vector<2x128xf32>
    %444 = arith.divf %442, %443 : vector<2x128xf32>
    %445 = vector.extract_strided_slice %396 {offsets = [0, 256], sizes = [2, 128], strides = [1, 1]} : vector<2x384xf32> to vector<2x128xf32>
    %446 = vector.extract_strided_slice %428 {offsets = [0, 256], sizes = [2, 128], strides = [1, 1]} : vector<2x384xf32> to vector<2x128xf32>
    %447 = vector.broadcast %8 : vector<1x128xf32> to vector<2x128xf32>
    %448 = arith.addf %446, %447 : vector<2x128xf32>
    %449 = arith.mulf %436, %448 : vector<2x128xf32>
    %450 = arith.addf %445, %449 : vector<2x128xf32>
    %451 = math.tanh %450 : vector<2x128xf32>
    %cst_139 = arith.constant 1.000000e+00 : f32
    %452 = vector.broadcast %cst_139 : f32 to vector<2x128xf32>
    %453 = arith.subf %452, %444 : vector<2x128xf32>
    %454 = arith.mulf %453, %451 : vector<2x128xf32>
    %455 = arith.mulf %444, %392 : vector<2x128xf32>
    %456 = arith.addf %454, %455 : vector<2x128xf32>
    %c12_140 = arith.constant 12 : index
    %c0_141 = arith.constant 0 : index
    %457 = vector.load %arg15[%c12_140, %c0_141] : memref<16x256xf32, #tpu.memory_space<vmem>>, vector<2x128xf32>
    tpu.vector_store %arg15[%c12_140, %c0_141], %426 {strides = array<i32>} : memref<16x256xf32, #tpu.memory_space<vmem>>, vector<2x128xf32>,
    %c2_142 = arith.constant 2 : index
    %c128_143 = arith.constant 128 : index
    %458 = vector.load %arg15[%c2_142, %c128_143] : memref<16x256xf32, #tpu.memory_space<vmem>>, vector<2x128xf32>
    tpu.vector_store %arg15[%c2_142, %c128_143], %456 {strides = array<i32>} : memref<16x256xf32, #tpu.memory_space<vmem>>, vector<2x128xf32>,
    %c14_144 = arith.constant 14 : index
    %c0_145 = arith.constant 0 : index
    %459 = vector.load %arg14[%c14_144, %c0_145] : memref<16x768xf32, #tpu.memory_space<vmem>>, vector<2x384xf32>
    %c0_146 = arith.constant 0 : index
    %c384_147 = arith.constant 384 : index
    %460 = vector.load %arg14[%c0_146, %c384_147] : memref<16x768xf32, #tpu.memory_space<vmem>>, vector<2x384xf32>
    %c0_148 = arith.constant 0 : index
    %c0_149 = arith.constant 0 : index
    %461 = vector.load %arg2[%c0_148, %c0_149] : memref<128x384xf32, #tpu.memory_space<vmem>>, vector<128x384xf32>
    %cst_150 = arith.constant dense<0.000000e+00> : vector<2x384xf32>
    %462 = tpu.matmul %426, %461, %cst_150 {dimension_numbers = #tpu.dot_dimension_numbers<[1], [0], [0], [1], [0, 0, 1, 1], [], []>} : vector<2x128xf32>, vector<128x384xf32>, vector<2x384xf32> -> vector<2x384xf32>
    %463 = vector.extract_strided_slice %459 {offsets = [0, 0], sizes = [2, 128], strides = [1, 1]} : vector<2x384xf32> to vector<2x128xf32>
    %464 = vector.extract_strided_slice %462 {offsets = [0, 0], sizes = [2, 128], strides = [1, 1]} : vector<2x384xf32> to vector<2x128xf32>
    %465 = arith.addf %463, %464 : vector<2x128xf32>
    %466 = arith.negf %465 : vector<2x128xf32>
    %467 = math.exp %466 : vector<2x128xf32>
    %cst_151 = arith.constant 1.000000e+00 : f32
    %468 = vector.broadcast %cst_151 : f32 to vector<2x128xf32>
    %469 = arith.addf %468, %467 : vector<2x128xf32>
    %470 = arith.divf %468, %469 : vector<2x128xf32>
    %471 = vector.extract_strided_slice %459 {offsets = [0, 128], sizes = [2, 128], strides = [1, 1]} : vector<2x384xf32> to vector<2x128xf32>
    %472 = vector.extract_strided_slice %462 {offsets = [0, 128], sizes = [2, 128], strides = [1, 1]} : vector<2x384xf32> to vector<2x128xf32>
    %473 = arith.addf %471, %472 : vector<2x128xf32>
    %474 = arith.negf %473 : vector<2x128xf32>
    %475 = math.exp %474 : vector<2x128xf32>
    %cst_152 = arith.constant 1.000000e+00 : f32
    %476 = vector.broadcast %cst_152 : f32 to vector<2x128xf32>
    %477 = arith.addf %476, %475 : vector<2x128xf32>
    %478 = arith.divf %476, %477 : vector<2x128xf32>
    %479 = vector.extract_strided_slice %459 {offsets = [0, 256], sizes = [2, 128], strides = [1, 1]} : vector<2x384xf32> to vector<2x128xf32>
    %480 = vector.extract_strided_slice %462 {offsets = [0, 256], sizes = [2, 128], strides = [1, 1]} : vector<2x384xf32> to vector<2x128xf32>
    %481 = vector.broadcast %7 : vector<1x128xf32> to vector<2x128xf32>
    %482 = arith.addf %480, %481 : vector<2x128xf32>
    %483 = arith.mulf %470, %482 : vector<2x128xf32>
    %484 = arith.addf %479, %483 : vector<2x128xf32>
    %485 = math.tanh %484 : vector<2x128xf32>
    %cst_153 = arith.constant 1.000000e+00 : f32
    %486 = vector.broadcast %cst_153 : f32 to vector<2x128xf32>
    %487 = arith.subf %486, %478 : vector<2x128xf32>
    %488 = arith.mulf %487, %485 : vector<2x128xf32>
    %489 = arith.mulf %478, %426 : vector<2x128xf32>
    %490 = arith.addf %488, %489 : vector<2x128xf32>
    %c0_154 = arith.constant 0 : index
    %c0_155 = arith.constant 0 : index
    %491 = vector.load %arg3[%c0_154, %c0_155] : memref<128x384xf32, #tpu.memory_space<vmem>>, vector<128x384xf32>
    %cst_156 = arith.constant dense<0.000000e+00> : vector<2x384xf32>
    %492 = tpu.matmul %456, %491, %cst_156 {dimension_numbers = #tpu.dot_dimension_numbers<[1], [0], [0], [1], [0, 0, 1, 1], [], []>} : vector<2x128xf32>, vector<128x384xf32>, vector<2x384xf32> -> vector<2x384xf32>
    %493 = vector.extract_strided_slice %460 {offsets = [0, 0], sizes = [2, 128], strides = [1, 1]} : vector<2x384xf32> to vector<2x128xf32>
    %494 = vector.extract_strided_slice %492 {offsets = [0, 0], sizes = [2, 128], strides = [1, 1]} : vector<2x384xf32> to vector<2x128xf32>
    %495 = arith.addf %493, %494 : vector<2x128xf32>
    %496 = arith.negf %495 : vector<2x128xf32>
    %497 = math.exp %496 : vector<2x128xf32>
    %cst_157 = arith.constant 1.000000e+00 : f32
    %498 = vector.broadcast %cst_157 : f32 to vector<2x128xf32>
    %499 = arith.addf %498, %497 : vector<2x128xf32>
    %500 = arith.divf %498, %499 : vector<2x128xf32>
    %501 = vector.extract_strided_slice %460 {offsets = [0, 128], sizes = [2, 128], strides = [1, 1]} : vector<2x384xf32> to vector<2x128xf32>
    %502 = vector.extract_strided_slice %492 {offsets = [0, 128], sizes = [2, 128], strides = [1, 1]} : vector<2x384xf32> to vector<2x128xf32>
    %503 = arith.addf %501, %502 : vector<2x128xf32>
    %504 = arith.negf %503 : vector<2x128xf32>
    %505 = math.exp %504 : vector<2x128xf32>
    %cst_158 = arith.constant 1.000000e+00 : f32
    %506 = vector.broadcast %cst_158 : f32 to vector<2x128xf32>
    %507 = arith.addf %506, %505 : vector<2x128xf32>
    %508 = arith.divf %506, %507 : vector<2x128xf32>
    %509 = vector.extract_strided_slice %460 {offsets = [0, 256], sizes = [2, 128], strides = [1, 1]} : vector<2x384xf32> to vector<2x128xf32>
    %510 = vector.extract_strided_slice %492 {offsets = [0, 256], sizes = [2, 128], strides = [1, 1]} : vector<2x384xf32> to vector<2x128xf32>
    %511 = vector.broadcast %8 : vector<1x128xf32> to vector<2x128xf32>
    %512 = arith.addf %510, %511 : vector<2x128xf32>
    %513 = arith.mulf %500, %512 : vector<2x128xf32>
    %514 = arith.addf %509, %513 : vector<2x128xf32>
    %515 = math.tanh %514 : vector<2x128xf32>
    %cst_159 = arith.constant 1.000000e+00 : f32
    %516 = vector.broadcast %cst_159 : f32 to vector<2x128xf32>
    %517 = arith.subf %516, %508 : vector<2x128xf32>
    %518 = arith.mulf %517, %515 : vector<2x128xf32>
    %519 = arith.mulf %508, %456 : vector<2x128xf32>
    %520 = arith.addf %518, %519 : vector<2x128xf32>
    %c14_160 = arith.constant 14 : index
    %c0_161 = arith.constant 0 : index
    %521 = vector.load %arg15[%c14_160, %c0_161] : memref<16x256xf32, #tpu.memory_space<vmem>>, vector<2x128xf32>
    tpu.vector_store %arg15[%c14_160, %c0_161], %490 {strides = array<i32>} : memref<16x256xf32, #tpu.memory_space<vmem>>, vector<2x128xf32>,
    %c0_162 = arith.constant 0 : index
    %c128_163 = arith.constant 128 : index
    %522 = vector.load %arg15[%c0_162, %c128_163] : memref<16x256xf32, #tpu.memory_space<vmem>>, vector<2x128xf32>
    tpu.vector_store %arg15[%c0_162, %c128_163], %520 {strides = array<i32>} : memref<16x256xf32, #tpu.memory_space<vmem>>, vector<2x128xf32>,
    %c0_164 = arith.constant 0 : index
    %c0_165 = arith.constant 0 : index
    %523 = vector.load %arg15[%c0_164, %c0_165] : memref<16x256xf32, #tpu.memory_space<vmem>>, vector<16x256xf32>
    %c0_166 = arith.constant 0 : index
    %c0_167 = arith.constant 0 : index
    %524 = vector.load %arg6[%c0_166, %c0_167] : memref<256x768xf32, #tpu.memory_space<vmem>>, vector<256x768xf32>
    %cst_168 = arith.constant dense<0.000000e+00> : vector<16x768xf32>
    %525 = tpu.matmul %523, %524, %cst_168 {dimension_numbers = #tpu.dot_dimension_numbers<[1], [0], [0], [1], [0, 0, 1, 1], [], []>} : vector<16x256xf32>, vector<256x768xf32>, vector<16x768xf32> -> vector<16x768xf32>
    %c0_169 = arith.constant 0 : index
    %c0_170 = arith.constant 0 : index
    %526 = vector.load %arg9[%c0_169, %c0_170] : memref<1x768xf32, #tpu.memory_space<vmem>>, vector<1x768xf32>
    %527 = vector.broadcast %526 : vector<1x768xf32> to vector<16x768xf32>
    %528 = arith.addf %525, %527 : vector<16x768xf32>
    %c0_171 = arith.constant 0 : index
    %c0_172 = arith.constant 0 : index
    %529 = vector.load %arg14[%c0_171, %c0_172] : memref<16x768xf32, #tpu.memory_space<vmem>>, vector<16x768xf32>
    tpu.vector_store %arg14[%c0_171, %c0_172], %528 {strides = array<i32>} : memref<16x768xf32, #tpu.memory_space<vmem>>, vector<16x768xf32>,
    %c0_173 = arith.constant 0 : index
    %c0_174 = arith.constant 0 : index
    %530 = vector.load %arg10[%c0_173, %c0_174] : memref<1x256xf32, #tpu.memory_space<vmem>>, vector<1x128xf32>
    %c0_175 = arith.constant 0 : index
    %c128_176 = arith.constant 128 : index
    %531 = vector.load %arg10[%c0_175, %c128_176] : memref<1x256xf32, #tpu.memory_space<vmem>>, vector<1x128xf32>
    %cst_177 = arith.constant 0.000000e+00 : f32
    %532 = vector.broadcast %cst_177 : f32 to vector<2x128xf32>
    %cst_178 = arith.constant 0.000000e+00 : f32
    %533 = vector.broadcast %cst_178 : f32 to vector<2x128xf32>
    %c0_179 = arith.constant 0 : index
    %c0_180 = arith.constant 0 : index
    %534 = vector.load %arg14[%c0_179, %c0_180] : memref<16x768xf32, #tpu.memory_space<vmem>>, vector<2x384xf32>
    %c14_181 = arith.constant 14 : index
    %c384_182 = arith.constant 384 : index
    %535 = vector.load %arg14[%c14_181, %c384_182] : memref<16x768xf32, #tpu.memory_space<vmem>>, vector<2x384xf32>
    %c0_183 = arith.constant 0 : index
    %c0_184 = arith.constant 0 : index
    %536 = vector.load %arg7[%c0_183, %c0_184] : memref<128x384xf32, #tpu.memory_space<vmem>>, vector<128x384xf32>
    %cst_185 = arith.constant dense<0.000000e+00> : vector<2x384xf32>
    %537 = tpu.matmul %532, %536, %cst_185 {dimension_numbers = #tpu.dot_dimension_numbers<[1], [0], [0], [1], [0, 0, 1, 1], [], []>} : vector<2x128xf32>, vector<128x384xf32>, vector<2x384xf32> -> vector<2x384xf32>
    %538 = vector.extract_strided_slice %534 {offsets = [0, 0], sizes = [2, 128], strides = [1, 1]} : vector<2x384xf32> to vector<2x128xf32>
    %539 = vector.extract_strided_slice %537 {offsets = [0, 0], sizes = [2, 128], strides = [1, 1]} : vector<2x384xf32> to vector<2x128xf32>
    %540 = arith.addf %538, %539 : vector<2x128xf32>
    %541 = arith.negf %540 : vector<2x128xf32>
    %542 = math.exp %541 : vector<2x128xf32>
    %cst_186 = arith.constant 1.000000e+00 : f32
    %543 = vector.broadcast %cst_186 : f32 to vector<2x128xf32>
    %544 = arith.addf %543, %542 : vector<2x128xf32>
    %545 = arith.divf %543, %544 : vector<2x128xf32>
    %546 = vector.extract_strided_slice %534 {offsets = [0, 128], sizes = [2, 128], strides = [1, 1]} : vector<2x384xf32> to vector<2x128xf32>
    %547 = vector.extract_strided_slice %537 {offsets = [0, 128], sizes = [2, 128], strides = [1, 1]} : vector<2x384xf32> to vector<2x128xf32>
    %548 = arith.addf %546, %547 : vector<2x128xf32>
    %549 = arith.negf %548 : vector<2x128xf32>
    %550 = math.exp %549 : vector<2x128xf32>
    %cst_187 = arith.constant 1.000000e+00 : f32
    %551 = vector.broadcast %cst_187 : f32 to vector<2x128xf32>
    %552 = arith.addf %551, %550 : vector<2x128xf32>
    %553 = arith.divf %551, %552 : vector<2x128xf32>
    %554 = vector.extract_strided_slice %534 {offsets = [0, 256], sizes = [2, 128], strides = [1, 1]} : vector<2x384xf32> to vector<2x128xf32>
    %555 = vector.extract_strided_slice %537 {offsets = [0, 256], sizes = [2, 128], strides = [1, 1]} : vector<2x384xf32> to vector<2x128xf32>
    %556 = vector.broadcast %530 : vector<1x128xf32> to vector<2x128xf32>
    %557 = arith.addf %555, %556 : vector<2x128xf32>
    %558 = arith.mulf %545, %557 : vector<2x128xf32>
    %559 = arith.addf %554, %558 : vector<2x128xf32>
    %560 = math.tanh %559 : vector<2x128xf32>
    %cst_188 = arith.constant 1.000000e+00 : f32
    %561 = vector.broadcast %cst_188 : f32 to vector<2x128xf32>
    %562 = arith.subf %561, %553 : vector<2x128xf32>
    %563 = arith.mulf %562, %560 : vector<2x128xf32>
    %564 = arith.mulf %553, %532 : vector<2x128xf32>
    %565 = arith.addf %563, %564 : vector<2x128xf32>
    %c0_189 = arith.constant 0 : index
    %c0_190 = arith.constant 0 : index
    %566 = vector.load %arg8[%c0_189, %c0_190] : memref<128x384xf32, #tpu.memory_space<vmem>>, vector<128x384xf32>
    %cst_191 = arith.constant dense<0.000000e+00> : vector<2x384xf32>
    %567 = tpu.matmul %533, %566, %cst_191 {dimension_numbers = #tpu.dot_dimension_numbers<[1], [0], [0], [1], [0, 0, 1, 1], [], []>} : vector<2x128xf32>, vector<128x384xf32>, vector<2x384xf32> -> vector<2x384xf32>
    %568 = vector.extract_strided_slice %535 {offsets = [0, 0], sizes = [2, 128], strides = [1, 1]} : vector<2x384xf32> to vector<2x128xf32>
    %569 = vector.extract_strided_slice %567 {offsets = [0, 0], sizes = [2, 128], strides = [1, 1]} : vector<2x384xf32> to vector<2x128xf32>
    %570 = arith.addf %568, %569 : vector<2x128xf32>
    %571 = arith.negf %570 : vector<2x128xf32>
    %572 = math.exp %571 : vector<2x128xf32>
    %cst_192 = arith.constant 1.000000e+00 : f32
    %573 = vector.broadcast %cst_192 : f32 to vector<2x128xf32>
    %574 = arith.addf %573, %572 : vector<2x128xf32>
    %575 = arith.divf %573, %574 : vector<2x128xf32>
    %576 = vector.extract_strided_slice %535 {offsets = [0, 128], sizes = [2, 128], strides = [1, 1]} : vector<2x384xf32> to vector<2x128xf32>
    %577 = vector.extract_strided_slice %567 {offsets = [0, 128], sizes = [2, 128], strides = [1, 1]} : vector<2x384xf32> to vector<2x128xf32>
    %578 = arith.addf %576, %577 : vector<2x128xf32>
    %579 = arith.negf %578 : vector<2x128xf32>
    %580 = math.exp %579 : vector<2x128xf32>
    %cst_193 = arith.constant 1.000000e+00 : f32
    %581 = vector.broadcast %cst_193 : f32 to vector<2x128xf32>
    %582 = arith.addf %581, %580 : vector<2x128xf32>
    %583 = arith.divf %581, %582 : vector<2x128xf32>
    %584 = vector.extract_strided_slice %535 {offsets = [0, 256], sizes = [2, 128], strides = [1, 1]} : vector<2x384xf32> to vector<2x128xf32>
    %585 = vector.extract_strided_slice %567 {offsets = [0, 256], sizes = [2, 128], strides = [1, 1]} : vector<2x384xf32> to vector<2x128xf32>
    %586 = vector.broadcast %531 : vector<1x128xf32> to vector<2x128xf32>
    %587 = arith.addf %585, %586 : vector<2x128xf32>
    %588 = arith.mulf %575, %587 : vector<2x128xf32>
    %589 = arith.addf %584, %588 : vector<2x128xf32>
    %590 = math.tanh %589 : vector<2x128xf32>
    %cst_194 = arith.constant 1.000000e+00 : f32
    %591 = vector.broadcast %cst_194 : f32 to vector<2x128xf32>
    %592 = arith.subf %591, %583 : vector<2x128xf32>
    %593 = arith.mulf %592, %590 : vector<2x128xf32>
    %594 = arith.mulf %583, %533 : vector<2x128xf32>
    %595 = arith.addf %593, %594 : vector<2x128xf32>
    %c0_195 = arith.constant 0 : index
    %c0_196 = arith.constant 0 : index
    %596 = vector.load %arg16[%c0_195, %c0_196] : memref<16x256xf32, #tpu.memory_space<vmem>>, vector<2x128xf32>
    tpu.vector_store %arg16[%c0_195, %c0_196], %565 {strides = array<i32>} : memref<16x256xf32, #tpu.memory_space<vmem>>, vector<2x128xf32>,
    %c14_197 = arith.constant 14 : index
    %c128_198 = arith.constant 128 : index
    %597 = vector.load %arg16[%c14_197, %c128_198] : memref<16x256xf32, #tpu.memory_space<vmem>>, vector<2x128xf32>
    tpu.vector_store %arg16[%c14_197, %c128_198], %595 {strides = array<i32>} : memref<16x256xf32, #tpu.memory_space<vmem>>, vector<2x128xf32>,
    %c2_199 = arith.constant 2 : index
    %c0_200 = arith.constant 0 : index
    %598 = vector.load %arg14[%c2_199, %c0_200] : memref<16x768xf32, #tpu.memory_space<vmem>>, vector<2x384xf32>
    %c12_201 = arith.constant 12 : index
    %c384_202 = arith.constant 384 : index
    %599 = vector.load %arg14[%c12_201, %c384_202] : memref<16x768xf32, #tpu.memory_space<vmem>>, vector<2x384xf32>
    %c0_203 = arith.constant 0 : index
    %c0_204 = arith.constant 0 : index
    %600 = vector.load %arg7[%c0_203, %c0_204] : memref<128x384xf32, #tpu.memory_space<vmem>>, vector<128x384xf32>
    %cst_205 = arith.constant dense<0.000000e+00> : vector<2x384xf32>
    %601 = tpu.matmul %565, %600, %cst_205 {dimension_numbers = #tpu.dot_dimension_numbers<[1], [0], [0], [1], [0, 0, 1, 1], [], []>} : vector<2x128xf32>, vector<128x384xf32>, vector<2x384xf32> -> vector<2x384xf32>
    %602 = vector.extract_strided_slice %598 {offsets = [0, 0], sizes = [2, 128], strides = [1, 1]} : vector<2x384xf32> to vector<2x128xf32>
    %603 = vector.extract_strided_slice %601 {offsets = [0, 0], sizes = [2, 128], strides = [1, 1]} : vector<2x384xf32> to vector<2x128xf32>
    %604 = arith.addf %602, %603 : vector<2x128xf32>
    %605 = arith.negf %604 : vector<2x128xf32>
    %606 = math.exp %605 : vector<2x128xf32>
    %cst_206 = arith.constant 1.000000e+00 : f32
    %607 = vector.broadcast %cst_206 : f32 to vector<2x128xf32>
    %608 = arith.addf %607, %606 : vector<2x128xf32>
    %609 = arith.divf %607, %608 : vector<2x128xf32>
    %610 = vector.extract_strided_slice %598 {offsets = [0, 128], sizes = [2, 128], strides = [1, 1]} : vector<2x384xf32> to vector<2x128xf32>
    %611 = vector.extract_strided_slice %601 {offsets = [0, 128], sizes = [2, 128], strides = [1, 1]} : vector<2x384xf32> to vector<2x128xf32>
    %612 = arith.addf %610, %611 : vector<2x128xf32>
    %613 = arith.negf %612 : vector<2x128xf32>
    %614 = math.exp %613 : vector<2x128xf32>
    %cst_207 = arith.constant 1.000000e+00 : f32
    %615 = vector.broadcast %cst_207 : f32 to vector<2x128xf32>
    %616 = arith.addf %615, %614 : vector<2x128xf32>
    %617 = arith.divf %615, %616 : vector<2x128xf32>
    %618 = vector.extract_strided_slice %598 {offsets = [0, 256], sizes = [2, 128], strides = [1, 1]} : vector<2x384xf32> to vector<2x128xf32>
    %619 = vector.extract_strided_slice %601 {offsets = [0, 256], sizes = [2, 128], strides = [1, 1]} : vector<2x384xf32> to vector<2x128xf32>
    %620 = vector.broadcast %530 : vector<1x128xf32> to vector<2x128xf32>
    %621 = arith.addf %619, %620 : vector<2x128xf32>
    %622 = arith.mulf %609, %621 : vector<2x128xf32>
    %623 = arith.addf %618, %622 : vector<2x128xf32>
    %624 = math.tanh %623 : vector<2x128xf32>
    %cst_208 = arith.constant 1.000000e+00 : f32
    %625 = vector.broadcast %cst_208 : f32 to vector<2x128xf32>
    %626 = arith.subf %625, %617 : vector<2x128xf32>
    %627 = arith.mulf %626, %624 : vector<2x128xf32>
    %628 = arith.mulf %617, %565 : vector<2x128xf32>
    %629 = arith.addf %627, %628 : vector<2x128xf32>
    %c0_209 = arith.constant 0 : index
    %c0_210 = arith.constant 0 : index
    %630 = vector.load %arg8[%c0_209, %c0_210] : memref<128x384xf32, #tpu.memory_space<vmem>>, vector<128x384xf32>
    %cst_211 = arith.constant dense<0.000000e+00> : vector<2x384xf32>
    %631 = tpu.matmul %595, %630, %cst_211 {dimension_numbers = #tpu.dot_dimension_numbers<[1], [0], [0], [1], [0, 0, 1, 1], [], []>} : vector<2x128xf32>, vector<128x384xf32>, vector<2x384xf32> -> vector<2x384xf32>
    %632 = vector.extract_strided_slice %599 {offsets = [0, 0], sizes = [2, 128], strides = [1, 1]} : vector<2x384xf32> to vector<2x128xf32>
    %633 = vector.extract_strided_slice %631 {offsets = [0, 0], sizes = [2, 128], strides = [1, 1]} : vector<2x384xf32> to vector<2x128xf32>
    %634 = arith.addf %632, %633 : vector<2x128xf32>
    %635 = arith.negf %634 : vector<2x128xf32>
    %636 = math.exp %635 : vector<2x128xf32>
    %cst_212 = arith.constant 1.000000e+00 : f32
    %637 = vector.broadcast %cst_212 : f32 to vector<2x128xf32>
    %638 = arith.addf %637, %636 : vector<2x128xf32>
    %639 = arith.divf %637, %638 : vector<2x128xf32>
    %640 = vector.extract_strided_slice %599 {offsets = [0, 128], sizes = [2, 128], strides = [1, 1]} : vector<2x384xf32> to vector<2x128xf32>
    %641 = vector.extract_strided_slice %631 {offsets = [0, 128], sizes = [2, 128], strides = [1, 1]} : vector<2x384xf32> to vector<2x128xf32>
    %642 = arith.addf %640, %641 : vector<2x128xf32>
    %643 = arith.negf %642 : vector<2x128xf32>
    %644 = math.exp %643 : vector<2x128xf32>
    %cst_213 = arith.constant 1.000000e+00 : f32
    %645 = vector.broadcast %cst_213 : f32 to vector<2x128xf32>
    %646 = arith.addf %645, %644 : vector<2x128xf32>
    %647 = arith.divf %645, %646 : vector<2x128xf32>
    %648 = vector.extract_strided_slice %599 {offsets = [0, 256], sizes = [2, 128], strides = [1, 1]} : vector<2x384xf32> to vector<2x128xf32>
    %649 = vector.extract_strided_slice %631 {offsets = [0, 256], sizes = [2, 128], strides = [1, 1]} : vector<2x384xf32> to vector<2x128xf32>
    %650 = vector.broadcast %531 : vector<1x128xf32> to vector<2x128xf32>
    %651 = arith.addf %649, %650 : vector<2x128xf32>
    %652 = arith.mulf %639, %651 : vector<2x128xf32>
    %653 = arith.addf %648, %652 : vector<2x128xf32>
    %654 = math.tanh %653 : vector<2x128xf32>
    %cst_214 = arith.constant 1.000000e+00 : f32
    %655 = vector.broadcast %cst_214 : f32 to vector<2x128xf32>
    %656 = arith.subf %655, %647 : vector<2x128xf32>
    %657 = arith.mulf %656, %654 : vector<2x128xf32>
    %658 = arith.mulf %647, %595 : vector<2x128xf32>
    %659 = arith.addf %657, %658 : vector<2x128xf32>
    %c2_215 = arith.constant 2 : index
    %c0_216 = arith.constant 0 : index
    %660 = vector.load %arg16[%c2_215, %c0_216] : memref<16x256xf32, #tpu.memory_space<vmem>>, vector<2x128xf32>
    tpu.vector_store %arg16[%c2_215, %c0_216], %629 {strides = array<i32>} : memref<16x256xf32, #tpu.memory_space<vmem>>, vector<2x128xf32>,
    %c12_217 = arith.constant 12 : index
    %c128_218 = arith.constant 128 : index
    %661 = vector.load %arg16[%c12_217, %c128_218] : memref<16x256xf32, #tpu.memory_space<vmem>>, vector<2x128xf32>
    tpu.vector_store %arg16[%c12_217, %c128_218], %659 {strides = array<i32>} : memref<16x256xf32, #tpu.memory_space<vmem>>, vector<2x128xf32>,
    %c4_219 = arith.constant 4 : index
    %c0_220 = arith.constant 0 : index
    %662 = vector.load %arg14[%c4_219, %c0_220] : memref<16x768xf32, #tpu.memory_space<vmem>>, vector<2x384xf32>
    %c10_221 = arith.constant 10 : index
    %c384_222 = arith.constant 384 : index
    %663 = vector.load %arg14[%c10_221, %c384_222] : memref<16x768xf32, #tpu.memory_space<vmem>>, vector<2x384xf32>
    %c0_223 = arith.constant 0 : index
    %c0_224 = arith.constant 0 : index
    %664 = vector.load %arg7[%c0_223, %c0_224] : memref<128x384xf32, #tpu.memory_space<vmem>>, vector<128x384xf32>
    %cst_225 = arith.constant dense<0.000000e+00> : vector<2x384xf32>
    %665 = tpu.matmul %629, %664, %cst_225 {dimension_numbers = #tpu.dot_dimension_numbers<[1], [0], [0], [1], [0, 0, 1, 1], [], []>} : vector<2x128xf32>, vector<128x384xf32>, vector<2x384xf32> -> vector<2x384xf32>
    %666 = vector.extract_strided_slice %662 {offsets = [0, 0], sizes = [2, 128], strides = [1, 1]} : vector<2x384xf32> to vector<2x128xf32>
    %667 = vector.extract_strided_slice %665 {offsets = [0, 0], sizes = [2, 128], strides = [1, 1]} : vector<2x384xf32> to vector<2x128xf32>
    %668 = arith.addf %666, %667 : vector<2x128xf32>
    %669 = arith.negf %668 : vector<2x128xf32>
    %670 = math.exp %669 : vector<2x128xf32>
    %cst_226 = arith.constant 1.000000e+00 : f32
    %671 = vector.broadcast %cst_226 : f32 to vector<2x128xf32>
    %672 = arith.addf %671, %670 : vector<2x128xf32>
    %673 = arith.divf %671, %672 : vector<2x128xf32>
    %674 = vector.extract_strided_slice %662 {offsets = [0, 128], sizes = [2, 128], strides = [1, 1]} : vector<2x384xf32> to vector<2x128xf32>
    %675 = vector.extract_strided_slice %665 {offsets = [0, 128], sizes = [2, 128], strides = [1, 1]} : vector<2x384xf32> to vector<2x128xf32>
    %676 = arith.addf %674, %675 : vector<2x128xf32>
    %677 = arith.negf %676 : vector<2x128xf32>
    %678 = math.exp %677 : vector<2x128xf32>
    %cst_227 = arith.constant 1.000000e+00 : f32
    %679 = vector.broadcast %cst_227 : f32 to vector<2x128xf32>
    %680 = arith.addf %679, %678 : vector<2x128xf32>
    %681 = arith.divf %679, %680 : vector<2x128xf32>
    %682 = vector.extract_strided_slice %662 {offsets = [0, 256], sizes = [2, 128], strides = [1, 1]} : vector<2x384xf32> to vector<2x128xf32>
    %683 = vector.extract_strided_slice %665 {offsets = [0, 256], sizes = [2, 128], strides = [1, 1]} : vector<2x384xf32> to vector<2x128xf32>
    %684 = vector.broadcast %530 : vector<1x128xf32> to vector<2x128xf32>
    %685 = arith.addf %683, %684 : vector<2x128xf32>
    %686 = arith.mulf %673, %685 : vector<2x128xf32>
    %687 = arith.addf %682, %686 : vector<2x128xf32>
    %688 = math.tanh %687 : vector<2x128xf32>
    %cst_228 = arith.constant 1.000000e+00 : f32
    %689 = vector.broadcast %cst_228 : f32 to vector<2x128xf32>
    %690 = arith.subf %689, %681 : vector<2x128xf32>
    %691 = arith.mulf %690, %688 : vector<2x128xf32>
    %692 = arith.mulf %681, %629 : vector<2x128xf32>
    %693 = arith.addf %691, %692 : vector<2x128xf32>
    %c0_229 = arith.constant 0 : index
    %c0_230 = arith.constant 0 : index
    %694 = vector.load %arg8[%c0_229, %c0_230] : memref<128x384xf32, #tpu.memory_space<vmem>>, vector<128x384xf32>
    %cst_231 = arith.constant dense<0.000000e+00> : vector<2x384xf32>
    %695 = tpu.matmul %659, %694, %cst_231 {dimension_numbers = #tpu.dot_dimension_numbers<[1], [0], [0], [1], [0, 0, 1, 1], [], []>} : vector<2x128xf32>, vector<128x384xf32>, vector<2x384xf32> -> vector<2x384xf32>
    %696 = vector.extract_strided_slice %663 {offsets = [0, 0], sizes = [2, 128], strides = [1, 1]} : vector<2x384xf32> to vector<2x128xf32>
    %697 = vector.extract_strided_slice %695 {offsets = [0, 0], sizes = [2, 128], strides = [1, 1]} : vector<2x384xf32> to vector<2x128xf32>
    %698 = arith.addf %696, %697 : vector<2x128xf32>
    %699 = arith.negf %698 : vector<2x128xf32>
    %700 = math.exp %699 : vector<2x128xf32>
    %cst_232 = arith.constant 1.000000e+00 : f32
    %701 = vector.broadcast %cst_232 : f32 to vector<2x128xf32>
    %702 = arith.addf %701, %700 : vector<2x128xf32>
    %703 = arith.divf %701, %702 : vector<2x128xf32>
    %704 = vector.extract_strided_slice %663 {offsets = [0, 128], sizes = [2, 128], strides = [1, 1]} : vector<2x384xf32> to vector<2x128xf32>
    %705 = vector.extract_strided_slice %695 {offsets = [0, 128], sizes = [2, 128], strides = [1, 1]} : vector<2x384xf32> to vector<2x128xf32>
    %706 = arith.addf %704, %705 : vector<2x128xf32>
    %707 = arith.negf %706 : vector<2x128xf32>
    %708 = math.exp %707 : vector<2x128xf32>
    %cst_233 = arith.constant 1.000000e+00 : f32
    %709 = vector.broadcast %cst_233 : f32 to vector<2x128xf32>
    %710 = arith.addf %709, %708 : vector<2x128xf32>
    %711 = arith.divf %709, %710 : vector<2x128xf32>
    %712 = vector.extract_strided_slice %663 {offsets = [0, 256], sizes = [2, 128], strides = [1, 1]} : vector<2x384xf32> to vector<2x128xf32>
    %713 = vector.extract_strided_slice %695 {offsets = [0, 256], sizes = [2, 128], strides = [1, 1]} : vector<2x384xf32> to vector<2x128xf32>
    %714 = vector.broadcast %531 : vector<1x128xf32> to vector<2x128xf32>
    %715 = arith.addf %713, %714 : vector<2x128xf32>
    %716 = arith.mulf %703, %715 : vector<2x128xf32>
    %717 = arith.addf %712, %716 : vector<2x128xf32>
    %718 = math.tanh %717 : vector<2x128xf32>
    %cst_234 = arith.constant 1.000000e+00 : f32
    %719 = vector.broadcast %cst_234 : f32 to vector<2x128xf32>
    %720 = arith.subf %719, %711 : vector<2x128xf32>
    %721 = arith.mulf %720, %718 : vector<2x128xf32>
    %722 = arith.mulf %711, %659 : vector<2x128xf32>
    %723 = arith.addf %721, %722 : vector<2x128xf32>
    %c4_235 = arith.constant 4 : index
    %c0_236 = arith.constant 0 : index
    %724 = vector.load %arg16[%c4_235, %c0_236] : memref<16x256xf32, #tpu.memory_space<vmem>>, vector<2x128xf32>
    tpu.vector_store %arg16[%c4_235, %c0_236], %693 {strides = array<i32>} : memref<16x256xf32, #tpu.memory_space<vmem>>, vector<2x128xf32>,
    %c10_237 = arith.constant 10 : index
    %c128_238 = arith.constant 128 : index
    %725 = vector.load %arg16[%c10_237, %c128_238] : memref<16x256xf32, #tpu.memory_space<vmem>>, vector<2x128xf32>
    tpu.vector_store %arg16[%c10_237, %c128_238], %723 {strides = array<i32>} : memref<16x256xf32, #tpu.memory_space<vmem>>, vector<2x128xf32>,
    %c6_239 = arith.constant 6 : index
    %c0_240 = arith.constant 0 : index
    %726 = vector.load %arg14[%c6_239, %c0_240] : memref<16x768xf32, #tpu.memory_space<vmem>>, vector<2x384xf32>
    %c8_241 = arith.constant 8 : index
    %c384_242 = arith.constant 384 : index
    %727 = vector.load %arg14[%c8_241, %c384_242] : memref<16x768xf32, #tpu.memory_space<vmem>>, vector<2x384xf32>
    %c0_243 = arith.constant 0 : index
    %c0_244 = arith.constant 0 : index
    %728 = vector.load %arg7[%c0_243, %c0_244] : memref<128x384xf32, #tpu.memory_space<vmem>>, vector<128x384xf32>
    %cst_245 = arith.constant dense<0.000000e+00> : vector<2x384xf32>
    %729 = tpu.matmul %693, %728, %cst_245 {dimension_numbers = #tpu.dot_dimension_numbers<[1], [0], [0], [1], [0, 0, 1, 1], [], []>} : vector<2x128xf32>, vector<128x384xf32>, vector<2x384xf32> -> vector<2x384xf32>
    %730 = vector.extract_strided_slice %726 {offsets = [0, 0], sizes = [2, 128], strides = [1, 1]} : vector<2x384xf32> to vector<2x128xf32>
    %731 = vector.extract_strided_slice %729 {offsets = [0, 0], sizes = [2, 128], strides = [1, 1]} : vector<2x384xf32> to vector<2x128xf32>
    %732 = arith.addf %730, %731 : vector<2x128xf32>
    %733 = arith.negf %732 : vector<2x128xf32>
    %734 = math.exp %733 : vector<2x128xf32>
    %cst_246 = arith.constant 1.000000e+00 : f32
    %735 = vector.broadcast %cst_246 : f32 to vector<2x128xf32>
    %736 = arith.addf %735, %734 : vector<2x128xf32>
    %737 = arith.divf %735, %736 : vector<2x128xf32>
    %738 = vector.extract_strided_slice %726 {offsets = [0, 128], sizes = [2, 128], strides = [1, 1]} : vector<2x384xf32> to vector<2x128xf32>
    %739 = vector.extract_strided_slice %729 {offsets = [0, 128], sizes = [2, 128], strides = [1, 1]} : vector<2x384xf32> to vector<2x128xf32>
    %740 = arith.addf %738, %739 : vector<2x128xf32>
    %741 = arith.negf %740 : vector<2x128xf32>
    %742 = math.exp %741 : vector<2x128xf32>
    %cst_247 = arith.constant 1.000000e+00 : f32
    %743 = vector.broadcast %cst_247 : f32 to vector<2x128xf32>
    %744 = arith.addf %743, %742 : vector<2x128xf32>
    %745 = arith.divf %743, %744 : vector<2x128xf32>
    %746 = vector.extract_strided_slice %726 {offsets = [0, 256], sizes = [2, 128], strides = [1, 1]} : vector<2x384xf32> to vector<2x128xf32>
    %747 = vector.extract_strided_slice %729 {offsets = [0, 256], sizes = [2, 128], strides = [1, 1]} : vector<2x384xf32> to vector<2x128xf32>
    %748 = vector.broadcast %530 : vector<1x128xf32> to vector<2x128xf32>
    %749 = arith.addf %747, %748 : vector<2x128xf32>
    %750 = arith.mulf %737, %749 : vector<2x128xf32>
    %751 = arith.addf %746, %750 : vector<2x128xf32>
    %752 = math.tanh %751 : vector<2x128xf32>
    %cst_248 = arith.constant 1.000000e+00 : f32
    %753 = vector.broadcast %cst_248 : f32 to vector<2x128xf32>
    %754 = arith.subf %753, %745 : vector<2x128xf32>
    %755 = arith.mulf %754, %752 : vector<2x128xf32>
    %756 = arith.mulf %745, %693 : vector<2x128xf32>
    %757 = arith.addf %755, %756 : vector<2x128xf32>
    %c0_249 = arith.constant 0 : index
    %c0_250 = arith.constant 0 : index
    %758 = vector.load %arg8[%c0_249, %c0_250] : memref<128x384xf32, #tpu.memory_space<vmem>>, vector<128x384xf32>
    %cst_251 = arith.constant dense<0.000000e+00> : vector<2x384xf32>
    %759 = tpu.matmul %723, %758, %cst_251 {dimension_numbers = #tpu.dot_dimension_numbers<[1], [0], [0], [1], [0, 0, 1, 1], [], []>} : vector<2x128xf32>, vector<128x384xf32>, vector<2x384xf32> -> vector<2x384xf32>
    %760 = vector.extract_strided_slice %727 {offsets = [0, 0], sizes = [2, 128], strides = [1, 1]} : vector<2x384xf32> to vector<2x128xf32>
    %761 = vector.extract_strided_slice %759 {offsets = [0, 0], sizes = [2, 128], strides = [1, 1]} : vector<2x384xf32> to vector<2x128xf32>
    %762 = arith.addf %760, %761 : vector<2x128xf32>
    %763 = arith.negf %762 : vector<2x128xf32>
    %764 = math.exp %763 : vector<2x128xf32>
    %cst_252 = arith.constant 1.000000e+00 : f32
    %765 = vector.broadcast %cst_252 : f32 to vector<2x128xf32>
    %766 = arith.addf %765, %764 : vector<2x128xf32>
    %767 = arith.divf %765, %766 : vector<2x128xf32>
    %768 = vector.extract_strided_slice %727 {offsets = [0, 128], sizes = [2, 128], strides = [1, 1]} : vector<2x384xf32> to vector<2x128xf32>
    %769 = vector.extract_strided_slice %759 {offsets = [0, 128], sizes = [2, 128], strides = [1, 1]} : vector<2x384xf32> to vector<2x128xf32>
    %770 = arith.addf %768, %769 : vector<2x128xf32>
    %771 = arith.negf %770 : vector<2x128xf32>
    %772 = math.exp %771 : vector<2x128xf32>
    %cst_253 = arith.constant 1.000000e+00 : f32
    %773 = vector.broadcast %cst_253 : f32 to vector<2x128xf32>
    %774 = arith.addf %773, %772 : vector<2x128xf32>
    %775 = arith.divf %773, %774 : vector<2x128xf32>
    %776 = vector.extract_strided_slice %727 {offsets = [0, 256], sizes = [2, 128], strides = [1, 1]} : vector<2x384xf32> to vector<2x128xf32>
    %777 = vector.extract_strided_slice %759 {offsets = [0, 256], sizes = [2, 128], strides = [1, 1]} : vector<2x384xf32> to vector<2x128xf32>
    %778 = vector.broadcast %531 : vector<1x128xf32> to vector<2x128xf32>
    %779 = arith.addf %777, %778 : vector<2x128xf32>
    %780 = arith.mulf %767, %779 : vector<2x128xf32>
    %781 = arith.addf %776, %780 : vector<2x128xf32>
    %782 = math.tanh %781 : vector<2x128xf32>
    %cst_254 = arith.constant 1.000000e+00 : f32
    %783 = vector.broadcast %cst_254 : f32 to vector<2x128xf32>
    %784 = arith.subf %783, %775 : vector<2x128xf32>
    %785 = arith.mulf %784, %782 : vector<2x128xf32>
    %786 = arith.mulf %775, %723 : vector<2x128xf32>
    %787 = arith.addf %785, %786 : vector<2x128xf32>
    %c6_255 = arith.constant 6 : index
    %c0_256 = arith.constant 0 : index
    %788 = vector.load %arg16[%c6_255, %c0_256] : memref<16x256xf32, #tpu.memory_space<vmem>>, vector<2x128xf32>
    tpu.vector_store %arg16[%c6_255, %c0_256], %757 {strides = array<i32>} : memref<16x256xf32, #tpu.memory_space<vmem>>, vector<2x128xf32>,
    %c8_257 = arith.constant 8 : index
    %c128_258 = arith.constant 128 : index
    %789 = vector.load %arg16[%c8_257, %c128_258] : memref<16x256xf32, #tpu.memory_space<vmem>>, vector<2x128xf32>
    tpu.vector_store %arg16[%c8_257, %c128_258], %787 {strides = array<i32>} : memref<16x256xf32, #tpu.memory_space<vmem>>, vector<2x128xf32>,
    %c8_259 = arith.constant 8 : index
    %c0_260 = arith.constant 0 : index
    %790 = vector.load %arg14[%c8_259, %c0_260] : memref<16x768xf32, #tpu.memory_space<vmem>>, vector<2x384xf32>
    %c6_261 = arith.constant 6 : index
    %c384_262 = arith.constant 384 : index
    %791 = vector.load %arg14[%c6_261, %c384_262] : memref<16x768xf32, #tpu.memory_space<vmem>>, vector<2x384xf32>
    %c0_263 = arith.constant 0 : index
    %c0_264 = arith.constant 0 : index
    %792 = vector.load %arg7[%c0_263, %c0_264] : memref<128x384xf32, #tpu.memory_space<vmem>>, vector<128x384xf32>
    %cst_265 = arith.constant dense<0.000000e+00> : vector<2x384xf32>
    %793 = tpu.matmul %757, %792, %cst_265 {dimension_numbers = #tpu.dot_dimension_numbers<[1], [0], [0], [1], [0, 0, 1, 1], [], []>} : vector<2x128xf32>, vector<128x384xf32>, vector<2x384xf32> -> vector<2x384xf32>
    %794 = vector.extract_strided_slice %790 {offsets = [0, 0], sizes = [2, 128], strides = [1, 1]} : vector<2x384xf32> to vector<2x128xf32>
    %795 = vector.extract_strided_slice %793 {offsets = [0, 0], sizes = [2, 128], strides = [1, 1]} : vector<2x384xf32> to vector<2x128xf32>
    %796 = arith.addf %794, %795 : vector<2x128xf32>
    %797 = arith.negf %796 : vector<2x128xf32>
    %798 = math.exp %797 : vector<2x128xf32>
    %cst_266 = arith.constant 1.000000e+00 : f32
    %799 = vector.broadcast %cst_266 : f32 to vector<2x128xf32>
    %800 = arith.addf %799, %798 : vector<2x128xf32>
    %801 = arith.divf %799, %800 : vector<2x128xf32>
    %802 = vector.extract_strided_slice %790 {offsets = [0, 128], sizes = [2, 128], strides = [1, 1]} : vector<2x384xf32> to vector<2x128xf32>
    %803 = vector.extract_strided_slice %793 {offsets = [0, 128], sizes = [2, 128], strides = [1, 1]} : vector<2x384xf32> to vector<2x128xf32>
    %804 = arith.addf %802, %803 : vector<2x128xf32>
    %805 = arith.negf %804 : vector<2x128xf32>
    %806 = math.exp %805 : vector<2x128xf32>
    %cst_267 = arith.constant 1.000000e+00 : f32
    %807 = vector.broadcast %cst_267 : f32 to vector<2x128xf32>
    %808 = arith.addf %807, %806 : vector<2x128xf32>
    %809 = arith.divf %807, %808 : vector<2x128xf32>
    %810 = vector.extract_strided_slice %790 {offsets = [0, 256], sizes = [2, 128], strides = [1, 1]} : vector<2x384xf32> to vector<2x128xf32>
    %811 = vector.extract_strided_slice %793 {offsets = [0, 256], sizes = [2, 128], strides = [1, 1]} : vector<2x384xf32> to vector<2x128xf32>
    %812 = vector.broadcast %530 : vector<1x128xf32> to vector<2x128xf32>
    %813 = arith.addf %811, %812 : vector<2x128xf32>
    %814 = arith.mulf %801, %813 : vector<2x128xf32>
    %815 = arith.addf %810, %814 : vector<2x128xf32>
    %816 = math.tanh %815 : vector<2x128xf32>
    %cst_268 = arith.constant 1.000000e+00 : f32
    %817 = vector.broadcast %cst_268 : f32 to vector<2x128xf32>
    %818 = arith.subf %817, %809 : vector<2x128xf32>
    %819 = arith.mulf %818, %816 : vector<2x128xf32>
    %820 = arith.mulf %809, %757 : vector<2x128xf32>
    %821 = arith.addf %819, %820 : vector<2x128xf32>
    %c0_269 = arith.constant 0 : index
    %c0_270 = arith.constant 0 : index
    %822 = vector.load %arg8[%c0_269, %c0_270] : memref<128x384xf32, #tpu.memory_space<vmem>>, vector<128x384xf32>
    %cst_271 = arith.constant dense<0.000000e+00> : vector<2x384xf32>
    %823 = tpu.matmul %787, %822, %cst_271 {dimension_numbers = #tpu.dot_dimension_numbers<[1], [0], [0], [1], [0, 0, 1, 1], [], []>} : vector<2x128xf32>, vector<128x384xf32>, vector<2x384xf32> -> vector<2x384xf32>
    %824 = vector.extract_strided_slice %791 {offsets = [0, 0], sizes = [2, 128], strides = [1, 1]} : vector<2x384xf32> to vector<2x128xf32>
    %825 = vector.extract_strided_slice %823 {offsets = [0, 0], sizes = [2, 128], strides = [1, 1]} : vector<2x384xf32> to vector<2x128xf32>
    %826 = arith.addf %824, %825 : vector<2x128xf32>
    %827 = arith.negf %826 : vector<2x128xf32>
    %828 = math.exp %827 : vector<2x128xf32>
    %cst_272 = arith.constant 1.000000e+00 : f32
    %829 = vector.broadcast %cst_272 : f32 to vector<2x128xf32>
    %830 = arith.addf %829, %828 : vector<2x128xf32>
    %831 = arith.divf %829, %830 : vector<2x128xf32>
    %832 = vector.extract_strided_slice %791 {offsets = [0, 128], sizes = [2, 128], strides = [1, 1]} : vector<2x384xf32> to vector<2x128xf32>
    %833 = vector.extract_strided_slice %823 {offsets = [0, 128], sizes = [2, 128], strides = [1, 1]} : vector<2x384xf32> to vector<2x128xf32>
    %834 = arith.addf %832, %833 : vector<2x128xf32>
    %835 = arith.negf %834 : vector<2x128xf32>
    %836 = math.exp %835 : vector<2x128xf32>
    %cst_273 = arith.constant 1.000000e+00 : f32
    %837 = vector.broadcast %cst_273 : f32 to vector<2x128xf32>
    %838 = arith.addf %837, %836 : vector<2x128xf32>
    %839 = arith.divf %837, %838 : vector<2x128xf32>
    %840 = vector.extract_strided_slice %791 {offsets = [0, 256], sizes = [2, 128], strides = [1, 1]} : vector<2x384xf32> to vector<2x128xf32>
    %841 = vector.extract_strided_slice %823 {offsets = [0, 256], sizes = [2, 128], strides = [1, 1]} : vector<2x384xf32> to vector<2x128xf32>
    %842 = vector.broadcast %531 : vector<1x128xf32> to vector<2x128xf32>
    %843 = arith.addf %841, %842 : vector<2x128xf32>
    %844 = arith.mulf %831, %843 : vector<2x128xf32>
    %845 = arith.addf %840, %844 : vector<2x128xf32>
    %846 = math.tanh %845 : vector<2x128xf32>
    %cst_274 = arith.constant 1.000000e+00 : f32
    %847 = vector.broadcast %cst_274 : f32 to vector<2x128xf32>
    %848 = arith.subf %847, %839 : vector<2x128xf32>
    %849 = arith.mulf %848, %846 : vector<2x128xf32>
    %850 = arith.mulf %839, %787 : vector<2x128xf32>
    %851 = arith.addf %849, %850 : vector<2x128xf32>
    %c8_275 = arith.constant 8 : index
    %c0_276 = arith.constant 0 : index
    %852 = vector.load %arg16[%c8_275, %c0_276] : memref<16x256xf32, #tpu.memory_space<vmem>>, vector<2x128xf32>
    tpu.vector_store %arg16[%c8_275, %c0_276], %821 {strides = array<i32>} : memref<16x256xf32, #tpu.memory_space<vmem>>, vector<2x128xf32>,
    %c6_277 = arith.constant 6 : index
    %c128_278 = arith.constant 128 : index
    %853 = vector.load %arg16[%c6_277, %c128_278] : memref<16x256xf32, #tpu.memory_space<vmem>>, vector<2x128xf32>
    tpu.vector_store %arg16[%c6_277, %c128_278], %851 {strides = array<i32>} : memref<16x256xf32, #tpu.memory_space<vmem>>, vector<2x128xf32>,
    %c10_279 = arith.constant 10 : index
    %c0_280 = arith.constant 0 : index
    %854 = vector.load %arg14[%c10_279, %c0_280] : memref<16x768xf32, #tpu.memory_space<vmem>>, vector<2x384xf32>
    %c4_281 = arith.constant 4 : index
    %c384_282 = arith.constant 384 : index
    %855 = vector.load %arg14[%c4_281, %c384_282] : memref<16x768xf32, #tpu.memory_space<vmem>>, vector<2x384xf32>
    %c0_283 = arith.constant 0 : index
    %c0_284 = arith.constant 0 : index
    %856 = vector.load %arg7[%c0_283, %c0_284] : memref<128x384xf32, #tpu.memory_space<vmem>>, vector<128x384xf32>
    %cst_285 = arith.constant dense<0.000000e+00> : vector<2x384xf32>
    %857 = tpu.matmul %821, %856, %cst_285 {dimension_numbers = #tpu.dot_dimension_numbers<[1], [0], [0], [1], [0, 0, 1, 1], [], []>} : vector<2x128xf32>, vector<128x384xf32>, vector<2x384xf32> -> vector<2x384xf32>
    %858 = vector.extract_strided_slice %854 {offsets = [0, 0], sizes = [2, 128], strides = [1, 1]} : vector<2x384xf32> to vector<2x128xf32>
    %859 = vector.extract_strided_slice %857 {offsets = [0, 0], sizes = [2, 128], strides = [1, 1]} : vector<2x384xf32> to vector<2x128xf32>
    %860 = arith.addf %858, %859 : vector<2x128xf32>
    %861 = arith.negf %860 : vector<2x128xf32>
    %862 = math.exp %861 : vector<2x128xf32>
    %cst_286 = arith.constant 1.000000e+00 : f32
    %863 = vector.broadcast %cst_286 : f32 to vector<2x128xf32>
    %864 = arith.addf %863, %862 : vector<2x128xf32>
    %865 = arith.divf %863, %864 : vector<2x128xf32>
    %866 = vector.extract_strided_slice %854 {offsets = [0, 128], sizes = [2, 128], strides = [1, 1]} : vector<2x384xf32> to vector<2x128xf32>
    %867 = vector.extract_strided_slice %857 {offsets = [0, 128], sizes = [2, 128], strides = [1, 1]} : vector<2x384xf32> to vector<2x128xf32>
    %868 = arith.addf %866, %867 : vector<2x128xf32>
    %869 = arith.negf %868 : vector<2x128xf32>
    %870 = math.exp %869 : vector<2x128xf32>
    %cst_287 = arith.constant 1.000000e+00 : f32
    %871 = vector.broadcast %cst_287 : f32 to vector<2x128xf32>
    %872 = arith.addf %871, %870 : vector<2x128xf32>
    %873 = arith.divf %871, %872 : vector<2x128xf32>
    %874 = vector.extract_strided_slice %854 {offsets = [0, 256], sizes = [2, 128], strides = [1, 1]} : vector<2x384xf32> to vector<2x128xf32>
    %875 = vector.extract_strided_slice %857 {offsets = [0, 256], sizes = [2, 128], strides = [1, 1]} : vector<2x384xf32> to vector<2x128xf32>
    %876 = vector.broadcast %530 : vector<1x128xf32> to vector<2x128xf32>
    %877 = arith.addf %875, %876 : vector<2x128xf32>
    %878 = arith.mulf %865, %877 : vector<2x128xf32>
    %879 = arith.addf %874, %878 : vector<2x128xf32>
    %880 = math.tanh %879 : vector<2x128xf32>
    %cst_288 = arith.constant 1.000000e+00 : f32
    %881 = vector.broadcast %cst_288 : f32 to vector<2x128xf32>
    %882 = arith.subf %881, %873 : vector<2x128xf32>
    %883 = arith.mulf %882, %880 : vector<2x128xf32>
    %884 = arith.mulf %873, %821 : vector<2x128xf32>
    %885 = arith.addf %883, %884 : vector<2x128xf32>
    %c0_289 = arith.constant 0 : index
    %c0_290 = arith.constant 0 : index
    %886 = vector.load %arg8[%c0_289, %c0_290] : memref<128x384xf32, #tpu.memory_space<vmem>>, vector<128x384xf32>
    %cst_291 = arith.constant dense<0.000000e+00> : vector<2x384xf32>
    %887 = tpu.matmul %851, %886, %cst_291 {dimension_numbers = #tpu.dot_dimension_numbers<[1], [0], [0], [1], [0, 0, 1, 1], [], []>} : vector<2x128xf32>, vector<128x384xf32>, vector<2x384xf32> -> vector<2x384xf32>
    %888 = vector.extract_strided_slice %855 {offsets = [0, 0], sizes = [2, 128], strides = [1, 1]} : vector<2x384xf32> to vector<2x128xf32>
    %889 = vector.extract_strided_slice %887 {offsets = [0, 0], sizes = [2, 128], strides = [1, 1]} : vector<2x384xf32> to vector<2x128xf32>
    %890 = arith.addf %888, %889 : vector<2x128xf32>
    %891 = arith.negf %890 : vector<2x128xf32>
    %892 = math.exp %891 : vector<2x128xf32>
    %cst_292 = arith.constant 1.000000e+00 : f32
    %893 = vector.broadcast %cst_292 : f32 to vector<2x128xf32>
    %894 = arith.addf %893, %892 : vector<2x128xf32>
    %895 = arith.divf %893, %894 : vector<2x128xf32>
    %896 = vector.extract_strided_slice %855 {offsets = [0, 128], sizes = [2, 128], strides = [1, 1]} : vector<2x384xf32> to vector<2x128xf32>
    %897 = vector.extract_strided_slice %887 {offsets = [0, 128], sizes = [2, 128], strides = [1, 1]} : vector<2x384xf32> to vector<2x128xf32>
    %898 = arith.addf %896, %897 : vector<2x128xf32>
    %899 = arith.negf %898 : vector<2x128xf32>
    %900 = math.exp %899 : vector<2x128xf32>
    %cst_293 = arith.constant 1.000000e+00 : f32
    %901 = vector.broadcast %cst_293 : f32 to vector<2x128xf32>
    %902 = arith.addf %901, %900 : vector<2x128xf32>
    %903 = arith.divf %901, %902 : vector<2x128xf32>
    %904 = vector.extract_strided_slice %855 {offsets = [0, 256], sizes = [2, 128], strides = [1, 1]} : vector<2x384xf32> to vector<2x128xf32>
    %905 = vector.extract_strided_slice %887 {offsets = [0, 256], sizes = [2, 128], strides = [1, 1]} : vector<2x384xf32> to vector<2x128xf32>
    %906 = vector.broadcast %531 : vector<1x128xf32> to vector<2x128xf32>
    %907 = arith.addf %905, %906 : vector<2x128xf32>
    %908 = arith.mulf %895, %907 : vector<2x128xf32>
    %909 = arith.addf %904, %908 : vector<2x128xf32>
    %910 = math.tanh %909 : vector<2x128xf32>
    %cst_294 = arith.constant 1.000000e+00 : f32
    %911 = vector.broadcast %cst_294 : f32 to vector<2x128xf32>
    %912 = arith.subf %911, %903 : vector<2x128xf32>
    %913 = arith.mulf %912, %910 : vector<2x128xf32>
    %914 = arith.mulf %903, %851 : vector<2x128xf32>
    %915 = arith.addf %913, %914 : vector<2x128xf32>
    %c10_295 = arith.constant 10 : index
    %c0_296 = arith.constant 0 : index
    %916 = vector.load %arg16[%c10_295, %c0_296] : memref<16x256xf32, #tpu.memory_space<vmem>>, vector<2x128xf32>
    tpu.vector_store %arg16[%c10_295, %c0_296], %885 {strides = array<i32>} : memref<16x256xf32, #tpu.memory_space<vmem>>, vector<2x128xf32>,
    %c4_297 = arith.constant 4 : index
    %c128_298 = arith.constant 128 : index
    %917 = vector.load %arg16[%c4_297, %c128_298] : memref<16x256xf32, #tpu.memory_space<vmem>>, vector<2x128xf32>
    tpu.vector_store %arg16[%c4_297, %c128_298], %915 {strides = array<i32>} : memref<16x256xf32, #tpu.memory_space<vmem>>, vector<2x128xf32>,
    %c12_299 = arith.constant 12 : index
    %c0_300 = arith.constant 0 : index
    %918 = vector.load %arg14[%c12_299, %c0_300] : memref<16x768xf32, #tpu.memory_space<vmem>>, vector<2x384xf32>
    %c2_301 = arith.constant 2 : index
    %c384_302 = arith.constant 384 : index
    %919 = vector.load %arg14[%c2_301, %c384_302] : memref<16x768xf32, #tpu.memory_space<vmem>>, vector<2x384xf32>
    %c0_303 = arith.constant 0 : index
    %c0_304 = arith.constant 0 : index
    %920 = vector.load %arg7[%c0_303, %c0_304] : memref<128x384xf32, #tpu.memory_space<vmem>>, vector<128x384xf32>
    %cst_305 = arith.constant dense<0.000000e+00> : vector<2x384xf32>
    %921 = tpu.matmul %885, %920, %cst_305 {dimension_numbers = #tpu.dot_dimension_numbers<[1], [0], [0], [1], [0, 0, 1, 1], [], []>} : vector<2x128xf32>, vector<128x384xf32>, vector<2x384xf32> -> vector<2x384xf32>
    %922 = vector.extract_strided_slice %918 {offsets = [0, 0], sizes = [2, 128], strides = [1, 1]} : vector<2x384xf32> to vector<2x128xf32>
    %923 = vector.extract_strided_slice %921 {offsets = [0, 0], sizes = [2, 128], strides = [1, 1]} : vector<2x384xf32> to vector<2x128xf32>
    %924 = arith.addf %922, %923 : vector<2x128xf32>
    %925 = arith.negf %924 : vector<2x128xf32>
    %926 = math.exp %925 : vector<2x128xf32>
    %cst_306 = arith.constant 1.000000e+00 : f32
    %927 = vector.broadcast %cst_306 : f32 to vector<2x128xf32>
    %928 = arith.addf %927, %926 : vector<2x128xf32>
    %929 = arith.divf %927, %928 : vector<2x128xf32>
    %930 = vector.extract_strided_slice %918 {offsets = [0, 128], sizes = [2, 128], strides = [1, 1]} : vector<2x384xf32> to vector<2x128xf32>
    %931 = vector.extract_strided_slice %921 {offsets = [0, 128], sizes = [2, 128], strides = [1, 1]} : vector<2x384xf32> to vector<2x128xf32>
    %932 = arith.addf %930, %931 : vector<2x128xf32>
    %933 = arith.negf %932 : vector<2x128xf32>
    %934 = math.exp %933 : vector<2x128xf32>
    %cst_307 = arith.constant 1.000000e+00 : f32
    %935 = vector.broadcast %cst_307 : f32 to vector<2x128xf32>
    %936 = arith.addf %935, %934 : vector<2x128xf32>
    %937 = arith.divf %935, %936 : vector<2x128xf32>
    %938 = vector.extract_strided_slice %918 {offsets = [0, 256], sizes = [2, 128], strides = [1, 1]} : vector<2x384xf32> to vector<2x128xf32>
    %939 = vector.extract_strided_slice %921 {offsets = [0, 256], sizes = [2, 128], strides = [1, 1]} : vector<2x384xf32> to vector<2x128xf32>
    %940 = vector.broadcast %530 : vector<1x128xf32> to vector<2x128xf32>
    %941 = arith.addf %939, %940 : vector<2x128xf32>
    %942 = arith.mulf %929, %941 : vector<2x128xf32>
    %943 = arith.addf %938, %942 : vector<2x128xf32>
    %944 = math.tanh %943 : vector<2x128xf32>
    %cst_308 = arith.constant 1.000000e+00 : f32
    %945 = vector.broadcast %cst_308 : f32 to vector<2x128xf32>
    %946 = arith.subf %945, %937 : vector<2x128xf32>
    %947 = arith.mulf %946, %944 : vector<2x128xf32>
    %948 = arith.mulf %937, %885 : vector<2x128xf32>
    %949 = arith.addf %947, %948 : vector<2x128xf32>
    %c0_309 = arith.constant 0 : index
    %c0_310 = arith.constant 0 : index
    %950 = vector.load %arg8[%c0_309, %c0_310] : memref<128x384xf32, #tpu.memory_space<vmem>>, vector<128x384xf32>
    %cst_311 = arith.constant dense<0.000000e+00> : vector<2x384xf32>
    %951 = tpu.matmul %915, %950, %cst_311 {dimension_numbers = #tpu.dot_dimension_numbers<[1], [0], [0], [1], [0, 0, 1, 1], [], []>} : vector<2x128xf32>, vector<128x384xf32>, vector<2x384xf32> -> vector<2x384xf32>
    %952 = vector.extract_strided_slice %919 {offsets = [0, 0], sizes = [2, 128], strides = [1, 1]} : vector<2x384xf32> to vector<2x128xf32>
    %953 = vector.extract_strided_slice %951 {offsets = [0, 0], sizes = [2, 128], strides = [1, 1]} : vector<2x384xf32> to vector<2x128xf32>
    %954 = arith.addf %952, %953 : vector<2x128xf32>
    %955 = arith.negf %954 : vector<2x128xf32>
    %956 = math.exp %955 : vector<2x128xf32>
    %cst_312 = arith.constant 1.000000e+00 : f32
    %957 = vector.broadcast %cst_312 : f32 to vector<2x128xf32>
    %958 = arith.addf %957, %956 : vector<2x128xf32>
    %959 = arith.divf %957, %958 : vector<2x128xf32>
    %960 = vector.extract_strided_slice %919 {offsets = [0, 128], sizes = [2, 128], strides = [1, 1]} : vector<2x384xf32> to vector<2x128xf32>
    %961 = vector.extract_strided_slice %951 {offsets = [0, 128], sizes = [2, 128], strides = [1, 1]} : vector<2x384xf32> to vector<2x128xf32>
    %962 = arith.addf %960, %961 : vector<2x128xf32>
    %963 = arith.negf %962 : vector<2x128xf32>
    %964 = math.exp %963 : vector<2x128xf32>
    %cst_313 = arith.constant 1.000000e+00 : f32
    %965 = vector.broadcast %cst_313 : f32 to vector<2x128xf32>
    %966 = arith.addf %965, %964 : vector<2x128xf32>
    %967 = arith.divf %965, %966 : vector<2x128xf32>
    %968 = vector.extract_strided_slice %919 {offsets = [0, 256], sizes = [2, 128], strides = [1, 1]} : vector<2x384xf32> to vector<2x128xf32>
    %969 = vector.extract_strided_slice %951 {offsets = [0, 256], sizes = [2, 128], strides = [1, 1]} : vector<2x384xf32> to vector<2x128xf32>
    %970 = vector.broadcast %531 : vector<1x128xf32> to vector<2x128xf32>
    %971 = arith.addf %969, %970 : vector<2x128xf32>
    %972 = arith.mulf %959, %971 : vector<2x128xf32>
    %973 = arith.addf %968, %972 : vector<2x128xf32>
    %974 = math.tanh %973 : vector<2x128xf32>
    %cst_314 = arith.constant 1.000000e+00 : f32
    %975 = vector.broadcast %cst_314 : f32 to vector<2x128xf32>
    %976 = arith.subf %975, %967 : vector<2x128xf32>
    %977 = arith.mulf %976, %974 : vector<2x128xf32>
    %978 = arith.mulf %967, %915 : vector<2x128xf32>
    %979 = arith.addf %977, %978 : vector<2x128xf32>
    %c12_315 = arith.constant 12 : index
    %c0_316 = arith.constant 0 : index
    %980 = vector.load %arg16[%c12_315, %c0_316] : memref<16x256xf32, #tpu.memory_space<vmem>>, vector<2x128xf32>
    tpu.vector_store %arg16[%c12_315, %c0_316], %949 {strides = array<i32>} : memref<16x256xf32, #tpu.memory_space<vmem>>, vector<2x128xf32>,
    %c2_317 = arith.constant 2 : index
    %c128_318 = arith.constant 128 : index
    %981 = vector.load %arg16[%c2_317, %c128_318] : memref<16x256xf32, #tpu.memory_space<vmem>>, vector<2x128xf32>
    tpu.vector_store %arg16[%c2_317, %c128_318], %979 {strides = array<i32>} : memref<16x256xf32, #tpu.memory_space<vmem>>, vector<2x128xf32>,
    %c14_319 = arith.constant 14 : index
    %c0_320 = arith.constant 0 : index
    %982 = vector.load %arg14[%c14_319, %c0_320] : memref<16x768xf32, #tpu.memory_space<vmem>>, vector<2x384xf32>
    %c0_321 = arith.constant 0 : index
    %c384_322 = arith.constant 384 : index
    %983 = vector.load %arg14[%c0_321, %c384_322] : memref<16x768xf32, #tpu.memory_space<vmem>>, vector<2x384xf32>
    %c0_323 = arith.constant 0 : index
    %c0_324 = arith.constant 0 : index
    %984 = vector.load %arg7[%c0_323, %c0_324] : memref<128x384xf32, #tpu.memory_space<vmem>>, vector<128x384xf32>
    %cst_325 = arith.constant dense<0.000000e+00> : vector<2x384xf32>
    %985 = tpu.matmul %949, %984, %cst_325 {dimension_numbers = #tpu.dot_dimension_numbers<[1], [0], [0], [1], [0, 0, 1, 1], [], []>} : vector<2x128xf32>, vector<128x384xf32>, vector<2x384xf32> -> vector<2x384xf32>
    %986 = vector.extract_strided_slice %982 {offsets = [0, 0], sizes = [2, 128], strides = [1, 1]} : vector<2x384xf32> to vector<2x128xf32>
    %987 = vector.extract_strided_slice %985 {offsets = [0, 0], sizes = [2, 128], strides = [1, 1]} : vector<2x384xf32> to vector<2x128xf32>
    %988 = arith.addf %986, %987 : vector<2x128xf32>
    %989 = arith.negf %988 : vector<2x128xf32>
    %990 = math.exp %989 : vector<2x128xf32>
    %cst_326 = arith.constant 1.000000e+00 : f32
    %991 = vector.broadcast %cst_326 : f32 to vector<2x128xf32>
    %992 = arith.addf %991, %990 : vector<2x128xf32>
    %993 = arith.divf %991, %992 : vector<2x128xf32>
    %994 = vector.extract_strided_slice %982 {offsets = [0, 128], sizes = [2, 128], strides = [1, 1]} : vector<2x384xf32> to vector<2x128xf32>
    %995 = vector.extract_strided_slice %985 {offsets = [0, 128], sizes = [2, 128], strides = [1, 1]} : vector<2x384xf32> to vector<2x128xf32>
    %996 = arith.addf %994, %995 : vector<2x128xf32>
    %997 = arith.negf %996 : vector<2x128xf32>
    %998 = math.exp %997 : vector<2x128xf32>
    %cst_327 = arith.constant 1.000000e+00 : f32
    %999 = vector.broadcast %cst_327 : f32 to vector<2x128xf32>
    %1000 = arith.addf %999, %998 : vector<2x128xf32>
    %1001 = arith.divf %999, %1000 : vector<2x128xf32>
    %1002 = vector.extract_strided_slice %982 {offsets = [0, 256], sizes = [2, 128], strides = [1, 1]} : vector<2x384xf32> to vector<2x128xf32>
    %1003 = vector.extract_strided_slice %985 {offsets = [0, 256], sizes = [2, 128], strides = [1, 1]} : vector<2x384xf32> to vector<2x128xf32>
    %1004 = vector.broadcast %530 : vector<1x128xf32> to vector<2x128xf32>
    %1005 = arith.addf %1003, %1004 : vector<2x128xf32>
    %1006 = arith.mulf %993, %1005 : vector<2x128xf32>
    %1007 = arith.addf %1002, %1006 : vector<2x128xf32>
    %1008 = math.tanh %1007 : vector<2x128xf32>
    %cst_328 = arith.constant 1.000000e+00 : f32
    %1009 = vector.broadcast %cst_328 : f32 to vector<2x128xf32>
    %1010 = arith.subf %1009, %1001 : vector<2x128xf32>
    %1011 = arith.mulf %1010, %1008 : vector<2x128xf32>
    %1012 = arith.mulf %1001, %949 : vector<2x128xf32>
    %1013 = arith.addf %1011, %1012 : vector<2x128xf32>
    %c0_329 = arith.constant 0 : index
    %c0_330 = arith.constant 0 : index
    %1014 = vector.load %arg8[%c0_329, %c0_330] : memref<128x384xf32, #tpu.memory_space<vmem>>, vector<128x384xf32>
    %cst_331 = arith.constant dense<0.000000e+00> : vector<2x384xf32>
    %1015 = tpu.matmul %979, %1014, %cst_331 {dimension_numbers = #tpu.dot_dimension_numbers<[1], [0], [0], [1], [0, 0, 1, 1], [], []>} : vector<2x128xf32>, vector<128x384xf32>, vector<2x384xf32> -> vector<2x384xf32>
    %1016 = vector.extract_strided_slice %983 {offsets = [0, 0], sizes = [2, 128], strides = [1, 1]} : vector<2x384xf32> to vector<2x128xf32>
    %1017 = vector.extract_strided_slice %1015 {offsets = [0, 0], sizes = [2, 128], strides = [1, 1]} : vector<2x384xf32> to vector<2x128xf32>
    %1018 = arith.addf %1016, %1017 : vector<2x128xf32>
    %1019 = arith.negf %1018 : vector<2x128xf32>
    %1020 = math.exp %1019 : vector<2x128xf32>
    %cst_332 = arith.constant 1.000000e+00 : f32
    %1021 = vector.broadcast %cst_332 : f32 to vector<2x128xf32>
    %1022 = arith.addf %1021, %1020 : vector<2x128xf32>
    %1023 = arith.divf %1021, %1022 : vector<2x128xf32>
    %1024 = vector.extract_strided_slice %983 {offsets = [0, 128], sizes = [2, 128], strides = [1, 1]} : vector<2x384xf32> to vector<2x128xf32>
    %1025 = vector.extract_strided_slice %1015 {offsets = [0, 128], sizes = [2, 128], strides = [1, 1]} : vector<2x384xf32> to vector<2x128xf32>
    %1026 = arith.addf %1024, %1025 : vector<2x128xf32>
    %1027 = arith.negf %1026 : vector<2x128xf32>
    %1028 = math.exp %1027 : vector<2x128xf32>
    %cst_333 = arith.constant 1.000000e+00 : f32
    %1029 = vector.broadcast %cst_333 : f32 to vector<2x128xf32>
    %1030 = arith.addf %1029, %1028 : vector<2x128xf32>
    %1031 = arith.divf %1029, %1030 : vector<2x128xf32>
    %1032 = vector.extract_strided_slice %983 {offsets = [0, 256], sizes = [2, 128], strides = [1, 1]} : vector<2x384xf32> to vector<2x128xf32>
    %1033 = vector.extract_strided_slice %1015 {offsets = [0, 256], sizes = [2, 128], strides = [1, 1]} : vector<2x384xf32> to vector<2x128xf32>
    %1034 = vector.broadcast %531 : vector<1x128xf32> to vector<2x128xf32>
    %1035 = arith.addf %1033, %1034 : vector<2x128xf32>
    %1036 = arith.mulf %1023, %1035 : vector<2x128xf32>
    %1037 = arith.addf %1032, %1036 : vector<2x128xf32>
    %1038 = math.tanh %1037 : vector<2x128xf32>
    %cst_334 = arith.constant 1.000000e+00 : f32
    %1039 = vector.broadcast %cst_334 : f32 to vector<2x128xf32>
    %1040 = arith.subf %1039, %1031 : vector<2x128xf32>
    %1041 = arith.mulf %1040, %1038 : vector<2x128xf32>
    %1042 = arith.mulf %1031, %979 : vector<2x128xf32>
    %1043 = arith.addf %1041, %1042 : vector<2x128xf32>
    %c14_335 = arith.constant 14 : index
    %c0_336 = arith.constant 0 : index
    %1044 = vector.load %arg16[%c14_335, %c0_336] : memref<16x256xf32, #tpu.memory_space<vmem>>, vector<2x128xf32>
    tpu.vector_store %arg16[%c14_335, %c0_336], %1013 {strides = array<i32>} : memref<16x256xf32, #tpu.memory_space<vmem>>, vector<2x128xf32>,
    %c0_337 = arith.constant 0 : index
    %c128_338 = arith.constant 128 : index
    %1045 = vector.load %arg16[%c0_337, %c128_338] : memref<16x256xf32, #tpu.memory_space<vmem>>, vector<2x128xf32>
    tpu.vector_store %arg16[%c0_337, %c128_338], %1043 {strides = array<i32>} : memref<16x256xf32, #tpu.memory_space<vmem>>, vector<2x128xf32>,
    %c0_339 = arith.constant 0 : index
    %c0_340 = arith.constant 0 : index
    %1046 = vector.load %arg16[%c0_339, %c0_340] : memref<16x256xf32, #tpu.memory_space<vmem>>, vector<16x256xf32>
    %c0_341 = arith.constant 0 : index
    %c0_342 = arith.constant 0 : index
    %1047 = vector.load %arg11[%c0_341, %c0_342] : memref<256x10xf32, #tpu.memory_space<vmem>>, vector<256x10xf32>
    %cst_343 = arith.constant dense<0.000000e+00> : vector<16x10xf32>
    %1048 = tpu.matmul %1046, %1047, %cst_343 {dimension_numbers = #tpu.dot_dimension_numbers<[1], [0], [0], [1], [0, 0, 1, 1], [], []>} : vector<16x256xf32>, vector<256x10xf32>, vector<16x10xf32> -> vector<16x10xf32>
    %c0_344 = arith.constant 0 : index
    %c0_345 = arith.constant 0 : index
    %1049 = vector.load %arg12[%c0_344, %c0_345] : memref<1x10xf32, #tpu.memory_space<vmem>>, vector<1x10xf32>
    %1050 = vector.broadcast %1049 : vector<1x10xf32> to vector<16x10xf32>
    %1051 = arith.addf %1048, %1050 : vector<16x10xf32>
    %c0_346 = arith.constant 0 : index
    %c0_347 = arith.constant 0 : index
    %1052 = vector.load %arg13[%c0_346, %c0_347] : memref<16x10xf32, #tpu.memory_space<vmem>>, vector<16x10xf32>
    tpu.vector_store %arg13[%c0_346, %c0_347], %1051 {strides = array<i32>} : memref<16x10xf32, #tpu.memory_space<vmem>>, vector<16x10xf32>,
    return
  }
}

</mosaic_0001>

<llo_original>
// kernel: bigru_forward.1
$region0: #{bigru_forward.1}
  #allocation0 [shape = 'u32[]', space=smem, size = 0x4, offset = 0x4, fixed_abs, tag = 'smem constant byte address 0x4 - core index']
  #allocation1 [shape = 'u32[144,128]{1,0:T(1,128)}', space=vmem, size = 0x12000, scoped, tag = 'internal scratch']
  #allocation2 [shape = 'f32[16,768]{1,0:T(8,128)}', space=vmem, size = 0xc000, scoped, tag = 'scratch operand']
  #allocation3 [shape = 'f32[16,256]{1,0:T(8,128)}', space=vmem, size = 0x4000, scoped, tag = 'scratch operand']
  #allocation4 [shape = 'f32[16,256]{1,0:T(8,128)}', space=vmem, size = 0x4000, scoped, tag = 'scratch operand']
  %s0 = inlined_call_operand.vmem [shape: f32[16,32], index: 0, kind: input, shape index: {}]
  %s1 = inlined_call_operand.vmem [shape: f32[32,768], index: 1, kind: input, shape index: {}]
  %s2 = inlined_call_operand.vmem [shape: f32[128,384], index: 2, kind: input, shape index: {}]
  %s3 = inlined_call_operand.vmem [shape: f32[128,384], index: 3, kind: input, shape index: {}]
  %s4 = inlined_call_operand.vmem [shape: f32[1,768], index: 4, kind: input, shape index: {}]
  %s5 = inlined_call_operand.vmem [shape: f32[1,256], index: 5, kind: input, shape index: {}]
  %s6 = inlined_call_operand.vmem [shape: f32[256,768], index: 6, kind: input, shape index: {}]
  %s7 = inlined_call_operand.vmem [shape: f32[128,384], index: 7, kind: input, shape index: {}]
  %s8 = inlined_call_operand.vmem [shape: f32[128,384], index: 8, kind: input, shape index: {}]
  %s9 = inlined_call_operand.vmem [shape: f32[1,768], index: 9, kind: input, shape index: {}]
  %s10 = inlined_call_operand.vmem [shape: f32[1,256], index: 10, kind: input, shape index: {}]
  %s11 = inlined_call_operand.vmem [shape: f32[256,10], index: 11, kind: input, shape index: {}]
  %s12 = inlined_call_operand.vmem [shape: f32[1,10], index: 12, kind: input, shape index: {}]
  %s13 = inlined_call_operand.vmem [shape: f32[16,10], index: 13, kind: output, shape index: {}]
  %s14 = sld [smem:[#allocation0]]
  $region62: #{bigru_forward.1} parent=0
    _
  %s16 = ssub.s32 1, %s14
  %s17 = scalar_select 0, %s16, %s14
  // Predicated region
  $region2: #{bigru_forward.1} parent=0 // pred_check
    _
  $region3: #{bigru_forward.1} parent=0 // pred_check_branch
    %19 = sbr.rel (0) target = $region5
  $region4: #{bigru_forward.1} parent=0 // pred_region
    _
  $region5: #{bigru_forward.1} parent=0 // pred_fallthru
    _
  // Predicated region
  $region6: #{bigru_forward.1} parent=0 // pred_check
    _
  $region7: #{bigru_forward.1} parent=0 // pred_check_branch
    %21 = sbr.rel (0) target = $region9
  $region8: #{bigru_forward.1} parent=0 // pred_region
    _
  $region9: #{bigru_forward.1} parent=0 // pred_fallthru
    _
  // Predicated region
  $region10: #{bigru_forward.1} parent=0 // pred_check
    _
  $region11: #{bigru_forward.1} parent=0 // pred_check_branch
    %23 = sbr.rel (0) target = $region13
  $region12: #{bigru_forward.1} parent=0 // pred_region
    _
  $region13: #{bigru_forward.1} parent=0 // pred_fallthru
    _
  // Predicated region
  $region14: #{bigru_forward.1} parent=0 // pred_check
    _
  $region15: #{bigru_forward.1} parent=0 // pred_check_branch
    %25 = sbr.rel (0) target = $region17
  $region16: #{bigru_forward.1} parent=0 // pred_region
    _
  $region17: #{bigru_forward.1} parent=0 // pred_fallthru
    _
  // Predicated region
  $region18: #{bigru_forward.1} parent=0 // pred_check
    _
  $region19: #{bigru_forward.1} parent=0 // pred_check_branch
    %27 = sbr.rel (0) target = $region21
  $region20: #{bigru_forward.1} parent=0 // pred_region
    _
  $region21: #{bigru_forward.1} parent=0 // pred_fallthru
    _
  // Predicated region
  $region22: #{bigru_forward.1} parent=0 // pred_check
    _
  $region23: #{bigru_forward.1} parent=0 // pred_check_branch
    %29 = sbr.rel (0) target = $region25
  $region24: #{bigru_forward.1} parent=0 // pred_region
    _
  $region25: #{bigru_forward.1} parent=0 // pred_fallthru
    _
  // Predicated region
  $region26: #{bigru_forward.1} parent=0 // pred_check
    _
  $region27: #{bigru_forward.1} parent=0 // pred_check_branch
    %31 = sbr.rel (0) target = $region29
  $region28: #{bigru_forward.1} parent=0 // pred_region
    _
  $region29: #{bigru_forward.1} parent=0 // pred_fallthru
    _
  // Predicated region
  $region30: #{bigru_forward.1} parent=0 // pred_check
    _
  $region31: #{bigru_forward.1} parent=0 // pred_check_branch
    %33 = sbr.rel (0) target = $region33
  $region32: #{bigru_forward.1} parent=0 // pred_region
    _
  $region33: #{bigru_forward.1} parent=0 // pred_fallthru
    _
  // Predicated region
  $region34: #{bigru_forward.1} parent=0 // pred_check
    _
  $region35: #{bigru_forward.1} parent=0 // pred_check_branch
    %35 = sbr.rel (0) target = $region37
  $region36: #{bigru_forward.1} parent=0 // pred_region
    _
  $region37: #{bigru_forward.1} parent=0 // pred_fallthru
    _
  // Predicated region
  $region38: #{bigru_forward.1} parent=0 // pred_check
    _
  $region39: #{bigru_forward.1} parent=0 // pred_check_branch
    %37 = sbr.rel (0) target = $region41
  $region40: #{bigru_forward.1} parent=0 // pred_region
    _
  $region41: #{bigru_forward.1} parent=0 // pred_fallthru
    _
  // Predicated region
  $region42: #{bigru_forward.1} parent=0 // pred_check
    _
  $region43: #{bigru_forward.1} parent=0 // pred_check_branch
    %39 = sbr.rel (0) target = $region45
  $region44: #{bigru_forward.1} parent=0 // pred_region
    _
  $region45: #{bigru_forward.1} parent=0 // pred_fallthru
    _
  // Predicated region
  $region46: #{bigru_forward.1} parent=0 // pred_check
    _
  $region47: #{bigru_forward.1} parent=0 // pred_check_branch
    %41 = sbr.rel (0) target = $region49
  $region48: #{bigru_forward.1} parent=0 // pred_region
    _
  $region49: #{bigru_forward.1} parent=0 // pred_fallthru
    _
  // Predicated region
  $region50: #{bigru_forward.1} parent=0 // pred_check
    _
  $region51: #{bigru_forward.1} parent=0 // pred_check_branch
    %43 = sbr.rel (0) target = $region53
  $region52: #{bigru_forward.1} parent=0 // pred_region
    _
  $region53: #{bigru_forward.1} parent=0 // pred_fallthru
    _
  %v44 = vld [vmem:[%s0] sm:$0xff]
  %v45 = vld [vmem:[%s0 + $0x8] sm:$0xff]
  %v46 = vld [vmem:[%s1] sm:$0xff]
  %v47 = vld [vmem:[%s1 + $0x8] sm:$0xff]
  %v48 = vld [vmem:[%s1 + $0x10] sm:$0xff]
  %v49 = vld [vmem:[%s1 + $0x18] sm:$0xff]
  %v50 = vld [vmem:[%s1 + $0x20] sm:$0xff]
  %v51 = vld [vmem:[%s1 + $0x28] sm:$0xff]
  %v52 = vld [vmem:[%s1 + $0x30] sm:$0xff]
  %v53 = vld [vmem:[%s1 + $0x38] sm:$0xff]
  %v54 = vld [vmem:[%s1 + $0x40] sm:$0xff]
  %v55 = vld [vmem:[%s1 + $0x48] sm:$0xff]
  %v56 = vld [vmem:[%s1 + $0x50] sm:$0xff]
  %v57 = vld [vmem:[%s1 + $0x58] sm:$0xff]
  %v58 = vld [vmem:[%s1 + $0x60] sm:$0xff]
  %v59 = vld [vmem:[%s1 + $0x68] sm:$0xff]
  %v60 = vld [vmem:[%s1 + $0x70] sm:$0xff]
  %v61 = vld [vmem:[%s1 + $0x78] sm:$0xff]
  %v62 = vld [vmem:[%s1 + $0x80] sm:$0xff]
  %v63 = vld [vmem:[%s1 + $0x88] sm:$0xff]
  %v64 = vld [vmem:[%s1 + $0x90] sm:$0xff]
  %v65 = vld [vmem:[%s1 + $0x98] sm:$0xff]
  %v66 = vld [vmem:[%s1 + $0xa0] sm:$0xff]
  %v67 = vld [vmem:[%s1 + $0xa8] sm:$0xff]
  %v68 = vld [vmem:[%s1 + $0xb0] sm:$0xff]
  %v69 = vld [vmem:[%s1 + $0xb8] sm:$0xff]
  %v70 = vld [vmem:[%s4] sm:$0x3f]
  %v72 = vlaneseq
  %v73 = vshrl.u32 %v72, 7
  %v74 = vsub.s32 0, %v73
  %v75 = vrot.slane %v70, %v74
  %v76 = vlaneseq
  %v77 = vshrl.u32 %v76, 7
  %v78 = vsub.s32 1, %v77
  %v79 = vrot.slane %v70, %v78
  %v80 = vlaneseq
  %v81 = vshrl.u32 %v80, 7
  %v82 = vsub.s32 2, %v81
  %v83 = vrot.slane %v70, %v82
  %v84 = vlaneseq
  %v85 = vshrl.u32 %v84, 7
  %v86 = vsub.s32 3, %v85
  %v87 = vrot.slane %v70, %v86
  %v88 = vlaneseq
  %v89 = vshrl.u32 %v88, 7
  %v90 = vsub.s32 4, %v89
  %v91 = vrot.slane %v70, %v90
  %v92 = vlaneseq
  %v93 = vshrl.u32 %v92, 7
  %v94 = vsub.s32 5, %v93
  %v95 = vrot.slane %v70, %v94
  %vm102 = vcmask 261120
  %v104 = vsel %vm102, %v44, 0
  %v107 = vsel %vm102, %v45, 0
  %109 = vmatprep.subr.mxu0 0.0
  %110 = vmatpush1.msra.mxu0 0.0
  %111 = vmatprep.subr.mxu0 0.0
  %112 = vmatpush1.msra.mxu0 0.0
  %113 = vmatprep.subr.mxu0 0.0
  %114 = vmatpush1.msra.mxu0 0.0
  %115 = vmatprep.subr.mxu0 0.0
  %116 = vmatpush1.msra.mxu0 0.0
  %117 = vmatprep.subr.mxu0 0.0
  %118 = vmatpush1.msra.mxu0 0.0
  %119 = vmatprep.subr.mxu0 0.0
  %120 = vmatpush1.msra.mxu0 0.0
  %121 = vmatprep.subr.mxu0 0.0
  %122 = vmatpush1.msra.mxu0 0.0
  %123 = vmatprep.subr.mxu0 0.0
  %124 = vmatpush1.msra.mxu0 0.0
  %125 = vmatprep.subr.mxu0 0.0
  %126 = vmatpush1.msra.mxu0 0.0
  %127 = vmatprep.subr.mxu0 0.0
  %128 = vmatpush1.msra.mxu0 0.0
  %129 = vmatprep.subr.mxu0 0.0
  %130 = vmatpush1.msra.mxu0 0.0
  %131 = vmatprep.subr.mxu0 0.0
  %132 = vmatpush1.msra.mxu0 0.0
  %133 = vmatprep.subr.mxu0 %v65
  %134 = vmatpush1.msra.mxu0 %v64
  %135 = vmatprep.subr.mxu0 %v59
  %136 = vmatpush1.msra.mxu0 %v58
  %137 = vmatprep.subr.mxu0 %v53
  %138 = vmatpush1.msra.mxu0 %v52
  %139 = vmatprep.subr.mxu0 %v47
  %140 = vmatpush1.msra.mxu0 %v46
  %141 = vmatprep.subr.mxu0 0.0
  %142 = vmatpush2.msra.mxu0 0.0
  %143 = vmatprep.subr.mxu0 0.0
  %144 = vmatpush2.msra.mxu0 0.0
  %145 = vmatprep.subr.mxu0 0.0
  %146 = vmatpush2.msra.mxu0 0.0
  %147 = vmatprep.subr.mxu0 0.0
  %148 = vmatpush2.msra.mxu0 0.0
  %149 = vmatprep.subr.mxu0 0.0
  %150 = vmatpush2.msra.mxu0 0.0
  %151 = vmatprep.subr.mxu0 0.0
  %152 = vmatpush2.msra.mxu0 0.0
  %153 = vmatprep.subr.mxu0 0.0
  %154 = vmatpush2.msra.mxu0 0.0
  %155 = vmatprep.subr.mxu0 0.0
  %156 = vmatpush2.msra.mxu0 0.0
  %157 = vmatprep.subr.mxu0 0.0
  %158 = vmatpush2.msra.mxu0 0.0
  %159 = vmatprep.subr.mxu0 0.0
  %160 = vmatpush2.msra.mxu0 0.0
  %161 = vmatprep.subr.mxu0 0.0
  %162 = vmatpush2.msra.mxu0 0.0
  %163 = vmatprep.subr.mxu0 0.0
  %164 = vmatpush2.msra.mxu0 0.0
  %165 = vmatprep.subr.mxu0 0.0
  %166 = vmatpush2.msra.mxu0 0.0
  %167 = vmatprep.subr.mxu0 0.0
  %168 = vmatpush2.msra.mxu0 0.0
  %169 = vmatprep.subr.mxu0 0.0
  %170 = vmatpush2.msra.mxu0 0.0
  %171 = vmatprep.subr.mxu0 0.0
  %172 = vmatpush2.msra.mxu0 0.0
  %173 = vmatprep.mubr.f32.mxu0 0.0
  %174 = vmatmul.mubr.f32.gmra.mxu0 %v104
  %v175 = vpop.f32.mrf.mxu0
  %v176 = vadd.f32 %v75, %v175
  %v177 = vpop.f32.mrf.mxu0
  %v178 = vadd.f32 %v79, %v177
  %179 = vmatprep.mubr.f32.mxu0 0.0
  %180 = vmatmul.mubr.f32.gmra.mxu0 %v107
  %v181 = vpop.f32.mrf.mxu0
  %v182 = vadd.f32 %v75, %v181
  %v183 = vpop.f32.mrf.mxu0
  %v184 = vadd.f32 %v79, %v183
  %185 = vdwg.mxu0
  %186 = vmatprep.subr.mxu0 0.0
  %187 = vmatpush1.msra.mxu0 0.0
  %188 = vmatprep.subr.mxu0 0.0
  %189 = vmatpush1.msra.mxu0 0.0
  %190 = vmatprep.subr.mxu0 0.0
  %191 = vmatpush1.msra.mxu0 0.0
  %192 = vmatprep.subr.mxu0 0.0
  %193 = vmatpush1.msra.mxu0 0.0
  %194 = vmatprep.subr.mxu0 0.0
  %195 = vmatpush1.msra.mxu0 0.0
  %196 = vmatprep.subr.mxu0 0.0
  %197 = vmatpush1.msra.mxu0 0.0
  %198 = vmatprep.subr.mxu0 0.0
  %199 = vmatpush1.msra.mxu0 0.0
  %200 = vmatprep.subr.mxu0 0.0
  %201 = vmatpush1.msra.mxu0 0.0
  %202 = vmatprep.subr.mxu0 0.0
  %203 = vmatpush1.msra.mxu0 0.0
  %204 = vmatprep.subr.mxu0 0.0
  %205 = vmatpush1.msra.mxu0 0.0
  %206 = vmatprep.subr.mxu0 0.0
  %207 = vmatpush1.msra.mxu0 0.0
  %208 = vmatprep.subr.mxu0 0.0
  %209 = vmatpush1.msra.mxu0 0.0
  %210 = vmatprep.subr.mxu0 %v67
  %211 = vmatpush1.msra.mxu0 %v66
  %212 = vmatprep.subr.mxu0 %v61
  %213 = vmatpush1.msra.mxu0 %v60
  %214 = vmatprep.subr.mxu0 %v55
  %215 = vmatpush1.msra.mxu0 %v54
  %216 = vmatprep.subr.mxu0 %v49
  %217 = vmatpush1.msra.mxu0 %v48
  %218 = vmatprep.subr.mxu0 0.0
  %219 = vmatpush2.msra.mxu0 0.0
  %220 = vmatprep.subr.mxu0 0.0
  %221 = vmatpush2.msra.mxu0 0.0
  %222 = vmatprep.subr.mxu0 0.0
  %223 = vmatpush2.msra.mxu0 0.0
  %224 = vmatprep.subr.mxu0 0.0
  %225 = vmatpush2.msra.mxu0 0.0
  %226 = vmatprep.subr.mxu0 0.0
  %227 = vmatpush2.msra.mxu0 0.0
  %228 = vmatprep.subr.mxu0 0.0
  %229 = vmatpush2.msra.mxu0 0.0
  %230 = vmatprep.subr.mxu0 0.0
  %231 = vmatpush2.msra.mxu0 0.0
  %232 = vmatprep.subr.mxu0 0.0
  %233 = vmatpush2.msra.mxu0 0.0
  %234 = vmatprep.subr.mxu0 0.0
  %235 = vmatpush2.msra.mxu0 0.0
  %236 = vmatprep.subr.mxu0 0.0
  %237 = vmatpush2.msra.mxu0 0.0
  %238 = vmatprep.subr.mxu0 0.0
  %239 = vmatpush2.msra.mxu0 0.0
  %240 = vmatprep.subr.mxu0 0.0
  %241 = vmatpush2.msra.mxu0 0.0
  %242 = vmatprep.subr.mxu0 0.0
  %243 = vmatpush2.msra.mxu0 0.0
  %244 = vmatprep.subr.mxu0 0.0
  %245 = vmatpush2.msra.mxu0 0.0
  %246 = vmatprep.subr.mxu0 0.0
  %247 = vmatpush2.msra.mxu0 0.0
  %248 = vmatprep.subr.mxu0 0.0
  %249 = vmatpush2.msra.mxu0 0.0
  %250 = vmatprep.mubr.f32.mxu0 0.0
  %251 = vmatmul.mubr.f32.gmra.mxu0 %v104
  %v252 = vpop.f32.mrf.mxu0
  %v253 = vadd.f32 %v83, %v252
  %v254 = vpop.f32.mrf.mxu0
  %v255 = vadd.f32 %v87, %v254
  %256 = vmatprep.mubr.f32.mxu0 0.0
  %257 = vmatmul.mubr.f32.gmra.mxu0 %v107
  %v258 = vpop.f32.mrf.mxu0
  %v259 = vadd.f32 %v83, %v258
  %v260 = vpop.f32.mrf.mxu0
  %v261 = vadd.f32 %v87, %v260
  %262 = vdwg.mxu0
  %263 = vmatprep.subr.mxu0 0.0
  %264 = vmatpush1.msra.mxu0 0.0
  %265 = vmatprep.subr.mxu0 0.0
  %266 = vmatpush1.msra.mxu0 0.0
  %267 = vmatprep.subr.mxu0 0.0
  %268 = vmatpush1.msra.mxu0 0.0
  %269 = vmatprep.subr.mxu0 0.0
  %270 = vmatpush1.msra.mxu0 0.0
  %271 = vmatprep.subr.mxu0 0.0
  %272 = vmatpush1.msra.mxu0 0.0
  %273 = vmatprep.subr.mxu0 0.0
  %274 = vmatpush1.msra.mxu0 0.0
  %275 = vmatprep.subr.mxu0 0.0
  %276 = vmatpush1.msra.mxu0 0.0
  %277 = vmatprep.subr.mxu0 0.0
  %278 = vmatpush1.msra.mxu0 0.0
  %279 = vmatprep.subr.mxu0 0.0
  %280 = vmatpush1.msra.mxu0 0.0
  %281 = vmatprep.subr.mxu0 0.0
  %282 = vmatpush1.msra.mxu0 0.0
  %283 = vmatprep.subr.mxu0 0.0
  %284 = vmatpush1.msra.mxu0 0.0
  %285 = vmatprep.subr.mxu0 0.0
  %286 = vmatpush1.msra.mxu0 0.0
  %287 = vmatprep.subr.mxu0 %v69
  %288 = vmatpush1.msra.mxu0 %v68
  %289 = vmatprep.subr.mxu0 %v63
  %290 = vmatpush1.msra.mxu0 %v62
  %291 = vmatprep.subr.mxu0 %v57
  %292 = vmatpush1.msra.mxu0 %v56
  %293 = vmatprep.subr.mxu0 %v51
  %294 = vmatpush1.msra.mxu0 %v50
  %295 = vmatprep.subr.mxu0 0.0
  %296 = vmatpush2.msra.mxu0 0.0
  %297 = vmatprep.subr.mxu0 0.0
  %298 = vmatpush2.msra.mxu0 0.0
  %299 = vmatprep.subr.mxu0 0.0
  %300 = vmatpush2.msra.mxu0 0.0
  %301 = vmatprep.subr.mxu0 0.0
  %302 = vmatpush2.msra.mxu0 0.0
  %303 = vmatprep.subr.mxu0 0.0
  %304 = vmatpush2.msra.mxu0 0.0
  %305 = vmatprep.subr.mxu0 0.0
  %306 = vmatpush2.msra.mxu0 0.0
  %307 = vmatprep.subr.mxu0 0.0
  %308 = vmatpush2.msra.mxu0 0.0
  %309 = vmatprep.subr.mxu0 0.0
  %310 = vmatpush2.msra.mxu0 0.0
  %311 = vmatprep.subr.mxu0 0.0
  %312 = vmatpush2.msra.mxu0 0.0
  %313 = vmatprep.subr.mxu0 0.0
  %314 = vmatpush2.msra.mxu0 0.0
  %315 = vmatprep.subr.mxu0 0.0
  %316 = vmatpush2.msra.mxu0 0.0
  %317 = vmatprep.subr.mxu0 0.0
  %318 = vmatpush2.msra.mxu0 0.0
  %319 = vmatprep.subr.mxu0 0.0
  %320 = vmatpush2.msra.mxu0 0.0
  %321 = vmatprep.subr.mxu0 0.0
  %322 = vmatpush2.msra.mxu0 0.0
  %323 = vmatprep.subr.mxu0 0.0
  %324 = vmatpush2.msra.mxu0 0.0
  %325 = vmatprep.subr.mxu0 0.0
  %326 = vmatpush2.msra.mxu0 0.0
  %327 = vmatprep.mubr.f32.mxu0 0.0
  %328 = vmatmul.mubr.f32.gmra.mxu0 %v104
  %v329 = vpop.f32.mrf.mxu0
  %v330 = vadd.f32 %v91, %v329
  %v331 = vpop.f32.mrf.mxu0
  %v332 = vadd.f32 %v95, %v331
  %333 = vmatprep.mubr.f32.mxu0 0.0
  %334 = vmatmul.mubr.f32.gmra.mxu0 %v107
  %v335 = vpop.f32.mrf.mxu0
  %v336 = vadd.f32 %v91, %v335
  %v337 = vpop.f32.mrf.mxu0
  %v338 = vadd.f32 %v95, %v337
  %339 = vdwg.mxu0
  %340 = vst [vmem:[#allocation2] sm:$0xff] %v176
  %341 = vst [vmem:[#allocation2 + $0x8] sm:$0xff] %v178
  %342 = vst [vmem:[#allocation2 + $0x10] sm:$0xff] %v253
  %343 = vst [vmem:[#allocation2 + $0x18] sm:$0xff] %v255
  %344 = vst [vmem:[#allocation2 + $0x20] sm:$0xff] %v330
  %345 = vst [vmem:[#allocation2 + $0x28] sm:$0xff] %v332
  %346 = vst [vmem:[#allocation2 + $0x30] sm:$0xff] %v182
  %347 = vst [vmem:[#allocation2 + $0x38] sm:$0xff] %v184
  %348 = vst [vmem:[#allocation2 + $0x40] sm:$0xff] %v259
  %349 = vst [vmem:[#allocation2 + $0x48] sm:$0xff] %v261
  %350 = vst [vmem:[#allocation2 + $0x50] sm:$0xff] %v336
  %351 = vst [vmem:[#allocation2 + $0x58] sm:$0xff] %v338
  %v352 = vld [vmem:[%s5] sm:$0x1]
  %v353 = vld [vmem:[%s5 + $0x1] sm:$0x1]
  %v354 = vld [vmem:[#allocation2] sm:$0x3]
  %v355 = vld [vmem:[#allocation2 + $0x8] sm:$0x3]
  %v356 = vld [vmem:[#allocation2 + $0x10] sm:$0x3]
  %v357 = vld [vmem:[#allocation2 + $0x48] sm:$0xc0]
  %v358 = vld [vmem:[#allocation2 + $0x50] sm:$0xc0]
  %v359 = vld [vmem:[#allocation2 + $0x58] sm:$0xc0]
  %v360 = vld [vmem:[%s2] sm:$0xff]
  %v361 = vld [vmem:[%s2 + $0x8] sm:$0xff]
  %v362 = vld [vmem:[%s2 + $0x10] sm:$0xff]
  %v363 = vld [vmem:[%s2 + $0x18] sm:$0xff]
  %v364 = vld [vmem:[%s2 + $0x20] sm:$0xff]
  %v365 = vld [vmem:[%s2 + $0x28] sm:$0xff]
  %v366 = vld [vmem:[%s2 + $0x30] sm:$0xff]
  %v367 = vld [vmem:[%s2 + $0x38] sm:$0xff]
  %v368 = vld [vmem:[%s2 + $0x40] sm:$0xff]
  %v369 = vld [vmem:[%s2 + $0x48] sm:$0xff]
  %v370 = vld [vmem:[%s2 + $0x50] sm:$0xff]
  %v371 = vld [vmem:[%s2 + $0x58] sm:$0xff]
  %v372 = vld [vmem:[%s2 + $0x60] sm:$0xff]
  %v373 = vld [vmem:[%s2 + $0x68] sm:$0xff]
  %v374 = vld [vmem:[%s2 + $0x70] sm:$0xff]
  %v375 = vld [vmem:[%s2 + $0x78] sm:$0xff]
  %v376 = vld [vmem:[%s2 + $0x80] sm:$0xff]
  %v377 = vld [vmem:[%s2 + $0x88] sm:$0xff]
  %v378 = vld [vmem:[%s2 + $0x90] sm:$0xff]
  %v379 = vld [vmem:[%s2 + $0x98] sm:$0xff]
  %v380 = vld [vmem:[%s2 + $0xa0] sm:$0xff]
  %v381 = vld [vmem:[%s2 + $0xa8] sm:$0xff]
  %v382 = vld [vmem:[%s2 + $0xb0] sm:$0xff]
  %v383 = vld [vmem:[%s2 + $0xb8] sm:$0xff]
  %v384 = vld [vmem:[%s2 + $0xc0] sm:$0xff]
  %v385 = vld [vmem:[%s2 + $0xc8] sm:$0xff]
  %v386 = vld [vmem:[%s2 + $0xd0] sm:$0xff]
  %v387 = vld [vmem:[%s2 + $0xd8] sm:$0xff]
  %v388 = vld [vmem:[%s2 + $0xe0] sm:$0xff]
  %v389 = vld [vmem:[%s2 + $0xe8] sm:$0xff]
  %v390 = vld [vmem:[%s2 + $0xf0] sm:$0xff]
  %v391 = vld [vmem:[%s2 + $0xf8] sm:$0xff]
  %v392 = vld [vmem:[%s2 + $0x100] sm:$0xff]
  %v393 = vld [vmem:[%s2 + $0x108] sm:$0xff]
  %v394 = vld [vmem:[%s2 + $0x110] sm:$0xff]
  %v395 = vld [vmem:[%s2 + $0x118] sm:$0xff]
  %v396 = vld [vmem:[%s2 + $0x120] sm:$0xff]
  %v397 = vld [vmem:[%s2 + $0x128] sm:$0xff]
  %v398 = vld [vmem:[%s2 + $0x130] sm:$0xff]
  %v399 = vld [vmem:[%s2 + $0x138] sm:$0xff]
  %v400 = vld [vmem:[%s2 + $0x140] sm:$0xff]
  %v401 = vld [vmem:[%s2 + $0x148] sm:$0xff]
  %v402 = vld [vmem:[%s2 + $0x150] sm:$0xff]
  %v403 = vld [vmem:[%s2 + $0x158] sm:$0xff]
  %v404 = vld [vmem:[%s2 + $0x160] sm:$0xff]
  %v405 = vld [vmem:[%s2 + $0x168] sm:$0xff]
  %v406 = vld [vmem:[%s2 + $0x170] sm:$0xff]
  %v407 = vld [vmem:[%s2 + $0x178] sm:$0xff]
  %408 = vmatprep.subr.mxu0 %v406
  %409 = vmatpush1.msra.mxu0 %v405
  %410 = vmatprep.subr.mxu0 %v403
  %411 = vmatpush1.msra.mxu0 %v402
  %412 = vmatprep.subr.mxu0 %v400
  %413 = vmatpush1.msra.mxu0 %v399
  %414 = vmatprep.subr.mxu0 %v397
  %415 = vmatpush1.msra.mxu0 %v396
  %416 = vmatprep.subr.mxu0 %v394
  %417 = vmatpush1.msra.mxu0 %v393
  %418 = vmatprep.subr.mxu0 %v391
  %419 = vmatpush1.msra.mxu0 %v390
  %420 = vmatprep.subr.mxu0 %v388
  %421 = vmatpush1.msra.mxu0 %v387
  %422 = vmatprep.subr.mxu0 %v385
  %423 = vmatpush1.msra.mxu0 %v384
  %424 = vmatprep.subr.mxu0 %v382
  %425 = vmatpush1.msra.mxu0 %v381
  %426 = vmatprep.subr.mxu0 %v379
  %427 = vmatpush1.msra.mxu0 %v378
  %428 = vmatprep.subr.mxu0 %v376
  %429 = vmatpush1.msra.mxu0 %v375
  %430 = vmatprep.subr.mxu0 %v373
  %431 = vmatpush1.msra.mxu0 %v372
  %432 = vmatprep.subr.mxu0 %v370
  %433 = vmatpush1.msra.mxu0 %v369
  %434 = vmatprep.subr.mxu0 %v367
  %435 = vmatpush1.msra.mxu0 %v366
  %436 = vmatprep.subr.mxu0 %v364
  %437 = vmatpush1.msra.mxu0 %v363
  %438 = vmatprep.subr.mxu0 %v361
  %439 = vmatpush1.msra.mxu0 %v360
  %440 = vmatprep.subr.mxu0 0.0
  %441 = vmatpush2.msra.mxu0 0.0
  %442 = vmatprep.subr.mxu0 0.0
  %443 = vmatpush2.msra.mxu0 0.0
  %444 = vmatprep.subr.mxu0 0.0
  %445 = vmatpush2.msra.mxu0 0.0
  %446 = vmatprep.subr.mxu0 0.0
  %447 = vmatpush2.msra.mxu0 0.0
  %448 = vmatprep.subr.mxu0 0.0
  %449 = vmatpush2.msra.mxu0 0.0
  %450 = vmatprep.subr.mxu0 0.0
  %451 = vmatpush2.msra.mxu0 0.0
  %452 = vmatprep.subr.mxu0 0.0
  %453 = vmatpush2.msra.mxu0 0.0
  %454 = vmatprep.subr.mxu0 0.0
  %455 = vmatpush2.msra.mxu0 0.0
  %456 = vmatprep.subr.mxu0 0.0
  %457 = vmatpush2.msra.mxu0 0.0
  %458 = vmatprep.subr.mxu0 0.0
  %459 = vmatpush2.msra.mxu0 0.0
  %460 = vmatprep.subr.mxu0 0.0
  %461 = vmatpush2.msra.mxu0 0.0
  %462 = vmatprep.subr.mxu0 0.0
  %463 = vmatpush2.msra.mxu0 0.0
  %464 = vmatprep.subr.mxu0 0.0
  %465 = vmatpush2.msra.mxu0 0.0
  %466 = vmatprep.subr.mxu0 0.0
  %467 = vmatpush2.msra.mxu0 0.0
  %468 = vmatprep.subr.mxu0 0.0
  %469 = vmatpush2.msra.mxu0 0.0
  %470 = vmatprep.subr.mxu0 0.0
  %471 = vmatpush2.msra.mxu0 0.0
  %472 = vmatprep.mubr.f32.mxu0 0.0
  %473 = vmatmul.mubr.f32.gmra.mxu0 0.0
  %v474 = vpop.f32.mrf.mxu0
  %v475 = vadd.f32 0.0, %v474
  %v476 = vpop.f32.mrf.mxu0
  %v477 = vadd.f32 0.0, %v476
  %478 = vdwg.mxu0
  %479 = vmatprep.subr.mxu0 0.0
  %480 = vmatpush1.msra.mxu0 %v407
  %481 = vmatprep.subr.mxu0 0.0
  %482 = vmatpush1.msra.mxu0 %v404
  %483 = vmatprep.subr.mxu0 0.0
  %484 = vmatpush1.msra.mxu0 %v401
  %485 = vmatprep.subr.mxu0 0.0
  %486 = vmatpush1.msra.mxu0 %v398
  %487 = vmatprep.subr.mxu0 0.0
  %488 = vmatpush1.msra.mxu0 %v395
  %489 = vmatprep.subr.mxu0 0.0
  %490 = vmatpush1.msra.mxu0 %v392
  %491 = vmatprep.subr.mxu0 0.0
  %492 = vmatpush1.msra.mxu0 %v389
  %493 = vmatprep.subr.mxu0 0.0
  %494 = vmatpush1.msra.mxu0 %v386
  %495 = vmatprep.subr.mxu0 0.0
  %496 = vmatpush1.msra.mxu0 %v383
  %497 = vmatprep.subr.mxu0 0.0
  %498 = vmatpush1.msra.mxu0 %v380
  %499 = vmatprep.subr.mxu0 0.0
  %500 = vmatpush1.msra.mxu0 %v377
  %501 = vmatprep.subr.mxu0 0.0
  %502 = vmatpush1.msra.mxu0 %v374
  %503 = vmatprep.subr.mxu0 0.0
  %504 = vmatpush1.msra.mxu0 %v371
  %505 = vmatprep.subr.mxu0 0.0
  %506 = vmatpush1.msra.mxu0 %v368
  %507 = vmatprep.subr.mxu0 0.0
  %508 = vmatpush1.msra.mxu0 %v365
  %509 = vmatprep.subr.mxu0 0.0
  %510 = vmatpush1.msra.mxu0 %v362
  %511 = vmatprep.subr.mxu0 0.0
  %512 = vmatpush2.msra.mxu0 0.0
  %513 = vmatprep.subr.mxu0 0.0
  %514 = vmatpush2.msra.mxu0 0.0
  %515 = vmatprep.subr.mxu0 0.0
  %516 = vmatpush2.msra.mxu0 0.0
  %517 = vmatprep.subr.mxu0 0.0
  %518 = vmatpush2.msra.mxu0 0.0
  %519 = vmatprep.subr.mxu0 0.0
  %520 = vmatpush2.msra.mxu0 0.0
  %521 = vmatprep.subr.mxu0 0.0
  %522 = vmatpush2.msra.mxu0 0.0
  %523 = vmatprep.subr.mxu0 0.0
  %524 = vmatpush2.msra.mxu0 0.0
  %525 = vmatprep.subr.mxu0 0.0
  %526 = vmatpush2.msra.mxu0 0.0
  %527 = vmatprep.subr.mxu0 0.0
  %528 = vmatpush2.msra.mxu0 0.0
  %529 = vmatprep.subr.mxu0 0.0
  %530 = vmatpush2.msra.mxu0 0.0
  %531 = vmatprep.subr.mxu0 0.0
  %532 = vmatpush2.msra.mxu0 0.0
  %533 = vmatprep.subr.mxu0 0.0
  %534 = vmatpush2.msra.mxu0 0.0
  %535 = vmatprep.subr.mxu0 0.0
  %536 = vmatpush2.msra.mxu0 0.0
  %537 = vmatprep.subr.mxu0 0.0
  %538 = vmatpush2.msra.mxu0 0.0
  %539 = vmatprep.subr.mxu0 0.0
  %540 = vmatpush2.msra.mxu0 0.0
  %541 = vmatprep.subr.mxu0 0.0
  %542 = vmatpush2.msra.mxu0 0.0
  %543 = vmatprep.mubr.f32.mxu0 0.0
  %544 = vmatmul.mubr.f32.gmra.mxu0 0.0
  %v545 = vpop.f32.mrf.mxu0
  %v546 = vadd.f32 0.0, %v545
  %v547 = vpop.f32.mrf.mxu0
  %548 = vdwg.mxu0
  %v549 = vadd.f32 %v354, %v475
  %v550 = vxor.u32 %v549, 2147483648
  %v551 = vmul.f32 %v550, 1.442695
  %v552 = vpow.pop %v551
  %v553 = vadd.f32 %v552, 1.0
  %v554 = vrcp.pop %v553
  %v555 = vmul.f32 1.0, %v554
  %v556 = vadd.f32 %v355, %v477
  %v557 = vxor.u32 %v556, 2147483648
  %v558 = vmul.f32 %v557, 1.442695
  %v559 = vpow.pop %v558
  %v560 = vadd.f32 %v559, 1.0
  %v561 = vrcp.pop %v560
  %v562 = vmul.f32 1.0, %v561
  %v564 = vlaneseq
  %v565 = vshrl.u32 %v564, 7
  %v566 = vsub.s32 0, %v565
  %v567 = vrot.slane %v352, %v566
  %v569 = vadd.f32 %v546, %v567
  %v570 = vmul.f32 %v555, %v569
  %v571 = vadd.f32 %v356, %v570
  %v572 = vtanh.pop %v571
  %v573 = vsub.f32 1.0, %v562
  %v574 = vmul.f32 %v573, %v572
  %v575 = vmul.f32 %v562, 0.0
  %v576 = vadd.f32 %v574, %v575
  %v577 = vld [vmem:[%s3] sm:$0xff]
  %v578 = vld [vmem:[%s3 + $0x8] sm:$0xff]
  %v579 = vld [vmem:[%s3 + $0x10] sm:$0xff]
  %v580 = vld [vmem:[%s3 + $0x18] sm:$0xff]
  %v581 = vld [vmem:[%s3 + $0x20] sm:$0xff]
  %v582 = vld [vmem:[%s3 + $0x28] sm:$0xff]
  %v583 = vld [vmem:[%s3 + $0x30] sm:$0xff]
  %v584 = vld [vmem:[%s3 + $0x38] sm:$0xff]
  %v585 = vld [vmem:[%s3 + $0x40] sm:$0xff]
  %v586 = vld [vmem:[%s3 + $0x48] sm:$0xff]
  %v587 = vld [vmem:[%s3 + $0x50] sm:$0xff]
  %v588 = vld [vmem:[%s3 + $0x58] sm:$0xff]
  %v589 = vld [vmem:[%s3 + $0x60] sm:$0xff]
  %v590 = vld [vmem:[%s3 + $0x68] sm:$0xff]
  %v591 = vld [vmem:[%s3 + $0x70] sm:$0xff]
  %v592 = vld [vmem:[%s3 + $0x78] sm:$0xff]
  %v593 = vld [vmem:[%s3 + $0x80] sm:$0xff]
  %v594 = vld [vmem:[%s3 + $0x88] sm:$0xff]
  %v595 = vld [vmem:[%s3 + $0x90] sm:$0xff]
  %v596 = vld [vmem:[%s3 + $0x98] sm:$0xff]
  %v597 = vld [vmem:[%s3 + $0xa0] sm:$0xff]
  %v598 = vld [vmem:[%s3 + $0xa8] sm:$0xff]
  %v599 = vld [vmem:[%s3 + $0xb0] sm:$0xff]
  %v600 = vld [vmem:[%s3 + $0xb8] sm:$0xff]
  %v601 = vld [vmem:[%s3 + $0xc0] sm:$0xff]
  %v602 = vld [vmem:[%s3 + $0xc8] sm:$0xff]
  %v603 = vld [vmem:[%s3 + $0xd0] sm:$0xff]
  %v604 = vld [vmem:[%s3 + $0xd8] sm:$0xff]
  %v605 = vld [vmem:[%s3 + $0xe0] sm:$0xff]
  %v606 = vld [vmem:[%s3 + $0xe8] sm:$0xff]
  %v607 = vld [vmem:[%s3 + $0xf0] sm:$0xff]
  %v608 = vld [vmem:[%s3 + $0xf8] sm:$0xff]
  %v609 = vld [vmem:[%s3 + $0x100] sm:$0xff]
  %v610 = vld [vmem:[%s3 + $0x108] sm:$0xff]
  %v611 = vld [vmem:[%s3 + $0x110] sm:$0xff]
  %v612 = vld [vmem:[%s3 + $0x118] sm:$0xff]
  %v613 = vld [vmem:[%s3 + $0x120] sm:$0xff]
  %v614 = vld [vmem:[%s3 + $0x128] sm:$0xff]
  %v615 = vld [vmem:[%s3 + $0x130] sm:$0xff]
  %v616 = vld [vmem:[%s3 + $0x138] sm:$0xff]
  %v617 = vld [vmem:[%s3 + $0x140] sm:$0xff]
  %v618 = vld [vmem:[%s3 + $0x148] sm:$0xff]
  %v619 = vld [vmem:[%s3 + $0x150] sm:$0xff]
  %v620 = vld [vmem:[%s3 + $0x158] sm:$0xff]
  %v621 = vld [vmem:[%s3 + $0x160] sm:$0xff]
  %v622 = vld [vmem:[%s3 + $0x168] sm:$0xff]
  %v623 = vld [vmem:[%s3 + $0x170] sm:$0xff]
  %v624 = vld [vmem:[%s3 + $0x178] sm:$0xff]
  %625 = vmatprep.subr.mxu0 %v623
  %626 = vmatpush1.msra.mxu0 %v622
  %627 = vmatprep.subr.mxu0 %v620
  %628 = vmatpush1.msra.mxu0 %v619
  %629 = vmatprep.subr.mxu0 %v617
  %630 = vmatpush1.msra.mxu0 %v616
  %631 = vmatprep.subr.mxu0 %v614
  %632 = vmatpush1.msra.mxu0 %v613
  %633 = vmatprep.subr.mxu0 %v611
  %634 = vmatpush1.msra.mxu0 %v610
  %635 = vmatprep.subr.mxu0 %v608
  %636 = vmatpush1.msra.mxu0 %v607
  %637 = vmatprep.subr.mxu0 %v605
  %638 = vmatpush1.msra.mxu0 %v604
  %639 = vmatprep.subr.mxu0 %v602
  %640 = vmatpush1.msra.mxu0 %v601
  %641 = vmatprep.subr.mxu0 %v599
  %642 = vmatpush1.msra.mxu0 %v598
  %643 = vmatprep.subr.mxu0 %v596
  %644 = vmatpush1.msra.mxu0 %v595
  %645 = vmatprep.subr.mxu0 %v593
  %646 = vmatpush1.msra.mxu0 %v592
  %647 = vmatprep.subr.mxu0 %v590
  %648 = vmatpush1.msra.mxu0 %v589
  %649 = vmatprep.subr.mxu0 %v587
  %650 = vmatpush1.msra.mxu0 %v586
  %651 = vmatprep.subr.mxu0 %v584
  %652 = vmatpush1.msra.mxu0 %v583
  %653 = vmatprep.subr.mxu0 %v581
  %654 = vmatpush1.msra.mxu0 %v580
  %655 = vmatprep.subr.mxu0 %v578
  %656 = vmatpush1.msra.mxu0 %v577
  %657 = vmatprep.subr.mxu0 0.0
  %658 = vmatpush2.msra.mxu0 0.0
  %659 = vmatprep.subr.mxu0 0.0
  %660 = vmatpush2.msra.mxu0 0.0
  %661 = vmatprep.subr.mxu0 0.0
  %662 = vmatpush2.msra.mxu0 0.0
  %663 = vmatprep.subr.mxu0 0.0
  %664 = vmatpush2.msra.mxu0 0.0
  %665 = vmatprep.subr.mxu0 0.0
  %666 = vmatpush2.msra.mxu0 0.0
  %667 = vmatprep.subr.mxu0 0.0
  %668 = vmatpush2.msra.mxu0 0.0
  %669 = vmatprep.subr.mxu0 0.0
  %670 = vmatpush2.msra.mxu0 0.0
  %671 = vmatprep.subr.mxu0 0.0
  %672 = vmatpush2.msra.mxu0 0.0
  %673 = vmatprep.subr.mxu0 0.0
  %674 = vmatpush2.msra.mxu0 0.0
  %675 = vmatprep.subr.mxu0 0.0
  %676 = vmatpush2.msra.mxu0 0.0
  %677 = vmatprep.subr.mxu0 0.0
  %678 = vmatpush2.msra.mxu0 0.0
  %679 = vmatprep.subr.mxu0 0.0
  %680 = vmatpush2.msra.mxu0 0.0
  %681 = vmatprep.subr.mxu0 0.0
  %682 = vmatpush2.msra.mxu0 0.0
  %683 = vmatprep.subr.mxu0 0.0
  %684 = vmatpush2.msra.mxu0 0.0
  %685 = vmatprep.subr.mxu0 0.0
  %686 = vmatpush2.msra.mxu0 0.0
  %687 = vmatprep.subr.mxu0 0.0
  %688 = vmatpush2.msra.mxu0 0.0
  %689 = vmatprep.mubr.f32.mxu0 0.0
  %690 = vmatmul.mubr.f32.gmra.mxu0 0.0
  %v691 = vpop.f32.mrf.mxu0
  %v692 = vadd.f32 0.0, %v691
  %v693 = vpop.f32.mrf.mxu0
  %v694 = vadd.f32 0.0, %v693
  %695 = vdwg.mxu0
  %696 = vmatprep.subr.mxu0 0.0
  %697 = vmatpush1.msra.mxu0 %v624
  %698 = vmatprep.subr.mxu0 0.0
  %699 = vmatpush1.msra.mxu0 %v621
  %700 = vmatprep.subr.mxu0 0.0
  %701 = vmatpush1.msra.mxu0 %v618
  %702 = vmatprep.subr.mxu0 0.0
  %703 = vmatpush1.msra.mxu0 %v615
  %704 = vmatprep.subr.mxu0 0.0
  %705 = vmatpush1.msra.mxu0 %v612
  %706 = vmatprep.subr.mxu0 0.0
  %707 = vmatpush1.msra.mxu0 %v609
  %708 = vmatprep.subr.mxu0 0.0
  %709 = vmatpush1.msra.mxu0 %v606
  %710 = vmatprep.subr.mxu0 0.0
  %711 = vmatpush1.msra.mxu0 %v603
  %712 = vmatprep.subr.mxu0 0.0
  %713 = vmatpush1.msra.mxu0 %v600
  %714 = vmatprep.subr.mxu0 0.0
  %715 = vmatpush1.msra.mxu0 %v597
  %716 = vmatprep.subr.mxu0 0.0
  %717 = vmatpush1.msra.mxu0 %v594
  %718 = vmatprep.subr.mxu0 0.0
  %719 = vmatpush1.msra.mxu0 %v591
  %720 = vmatprep.subr.mxu0 0.0
  %721 = vmatpush1.msra.mxu0 %v588
  %722 = vmatprep.subr.mxu0 0.0
  %723 = vmatpush1.msra.mxu0 %v585
  %724 = vmatprep.subr.mxu0 0.0
  %725 = vmatpush1.msra.mxu0 %v582
  %726 = vmatprep.subr.mxu0 0.0
  %727 = vmatpush1.msra.mxu0 %v579
  %728 = vmatprep.subr.mxu0 0.0
  %729 = vmatpush2.msra.mxu0 0.0
  %730 = vmatprep.subr.mxu0 0.0
  %731 = vmatpush2.msra.mxu0 0.0
  %732 = vmatprep.subr.mxu0 0.0
  %733 = vmatpush2.msra.mxu0 0.0
  %734 = vmatprep.subr.mxu0 0.0
  %735 = vmatpush2.msra.mxu0 0.0
  %736 = vmatprep.subr.mxu0 0.0
  %737 = vmatpush2.msra.mxu0 0.0
  %738 = vmatprep.subr.mxu0 0.0
  %739 = vmatpush2.msra.mxu0 0.0
  %740 = vmatprep.subr.mxu0 0.0
  %741 = vmatpush2.msra.mxu0 0.0
  %742 = vmatprep.subr.mxu0 0.0
  %743 = vmatpush2.msra.mxu0 0.0
  %744 = vmatprep.subr.mxu0 0.0
  %745 = vmatpush2.msra.mxu0 0.0
  %746 = vmatprep.subr.mxu0 0.0
  %747 = vmatpush2.msra.mxu0 0.0
  %748 = vmatprep.subr.mxu0 0.0
  %749 = vmatpush2.msra.mxu0 0.0
  %750 = vmatprep.subr.mxu0 0.0
  %751 = vmatpush2.msra.mxu0 0.0
  %752 = vmatprep.subr.mxu0 0.0
  %753 = vmatpush2.msra.mxu0 0.0
  %754 = vmatprep.subr.mxu0 0.0
  %755 = vmatpush2.msra.mxu0 0.0
  %756 = vmatprep.subr.mxu0 0.0
  %757 = vmatpush2.msra.mxu0 0.0
  %758 = vmatprep.subr.mxu0 0.0
  %759 = vmatpush2.msra.mxu0 0.0
  %760 = vmatprep.mubr.f32.mxu0 0.0
  %761 = vmatmul.mubr.f32.gmra.mxu0 0.0
  %v762 = vpop.f32.mrf.mxu0
  %v763 = vadd.f32 0.0, %v762
  %v764 = vpop.f32.mrf.mxu0
  %765 = vdwg.mxu0
  %v767 = vrot.slane %v692, 2
  %v769 = vadd.f32 %v357, %v767
  %v770 = vxor.u32 %v769, 2147483648
  %v771 = vmul.f32 %v770, 1.442695
  %v772 = vpow.pop %v771
  %v773 = vadd.f32 %v772, 1.0
  %v774 = vrcp.pop %v773
  %v775 = vmul.f32 1.0, %v774
  %v777 = vrot.slane %v694, 2
  %v779 = vadd.f32 %v358, %v777
  %v780 = vxor.u32 %v779, 2147483648
  %v781 = vmul.f32 %v780, 1.442695
  %v782 = vpow.pop %v781
  %v783 = vadd.f32 %v782, 1.0
  %v784 = vrcp.pop %v783
  %v785 = vmul.f32 1.0, %v784
  %v787 = vlaneseq
  %v788 = vshrl.u32 %v787, 7
  %v789 = vsub.s32 0, %v788
  %v790 = vrot.slane %v353, %v789
  %v792 = vadd.f32 %v763, %v790
  %v794 = vrot.slane %v792, 2
  %v796 = vmul.f32 %v775, %v794
  %v797 = vadd.f32 %v359, %v796
  %v798 = vtanh.pop %v797
  %v799 = vsub.f32 1.0, %v785
  %v800 = vmul.f32 %v799, %v798
  %v801 = vmul.f32 %v785, 0.0
  %v802 = vadd.f32 %v800, %v801
  %803 = vst [vmem:[#allocation3] sm:$0x3] %v576
  %804 = vst [vmem:[#allocation3 + $0x18] sm:$0xc0] %v802
  %v805 = vld [vmem:[#allocation2] sm:$0xc]
  %v806 = vld [vmem:[#allocation2 + $0x8] sm:$0xc]
  %v807 = vld [vmem:[#allocation2 + $0x10] sm:$0xc]
  %v808 = vld [vmem:[#allocation2 + $0x48] sm:$0x30]
  %v809 = vld [vmem:[#allocation2 + $0x50] sm:$0x30]
  %v810 = vld [vmem:[#allocation2 + $0x58] sm:$0x30]
  %v811 = vld [vmem:[%s2] sm:$0xff]
  %v812 = vld [vmem:[%s2 + $0x8] sm:$0xff]
  %v813 = vld [vmem:[%s2 + $0x10] sm:$0xff]
  %v814 = vld [vmem:[%s2 + $0x18] sm:$0xff]
  %v815 = vld [vmem:[%s2 + $0x20] sm:$0xff]
  %v816 = vld [vmem:[%s2 + $0x28] sm:$0xff]
  %v817 = vld [vmem:[%s2 + $0x30] sm:$0xff]
  %v818 = vld [vmem:[%s2 + $0x38] sm:$0xff]
  %v819 = vld [vmem:[%s2 + $0x40] sm:$0xff]
  %v820 = vld [vmem:[%s2 + $0x48] sm:$0xff]
  %v821 = vld [vmem:[%s2 + $0x50] sm:$0xff]
  %v822 = vld [vmem:[%s2 + $0x58] sm:$0xff]
  %v823 = vld [vmem:[%s2 + $0x60] sm:$0xff]
  %v824 = vld [vmem:[%s2 + $0x68] sm:$0xff]
  %v825 = vld [vmem:[%s2 + $0x70] sm:$0xff]
  %v826 = vld [vmem:[%s2 + $0x78] sm:$0xff]
  %v827 = vld [vmem:[%s2 + $0x80] sm:$0xff]
  %v828 = vld [vmem:[%s2 + $0x88] sm:$0xff]
  %v829 = vld [vmem:[%s2 + $0x90] sm:$0xff]
  %v830 = vld [vmem:[%s2 + $0x98] sm:$0xff]
  %v831 = vld [vmem:[%s2 + $0xa0] sm:$0xff]
  %v832 = vld [vmem:[%s2 + $0xa8] sm:$0xff]
  %v833 = vld [vmem:[%s2 + $0xb0] sm:$0xff]
  %v834 = vld [vmem:[%s2 + $0xb8] sm:$0xff]
  %v835 = vld [vmem:[%s2 + $0xc0] sm:$0xff]
  %v836 = vld [vmem:[%s2 + $0xc8] sm:$0xff]
  %v837 = vld [vmem:[%s2 + $0xd0] sm:$0xff]
  %v838 = vld [vmem:[%s2 + $0xd8] sm:$0xff]
  %v839 = vld [vmem:[%s2 + $0xe0] sm:$0xff]
  %v840 = vld [vmem:[%s2 + $0xe8] sm:$0xff]
  %v841 = vld [vmem:[%s2 + $0xf0] sm:$0xff]
  %v842 = vld [vmem:[%s2 + $0xf8] sm:$0xff]
  %v843 = vld [vmem:[%s2 + $0x100] sm:$0xff]
  %v844 = vld [vmem:[%s2 + $0x108] sm:$0xff]
  %v845 = vld [vmem:[%s2 + $0x110] sm:$0xff]
  %v846 = vld [vmem:[%s2 + $0x118] sm:$0xff]
  %v847 = vld [vmem:[%s2 + $0x120] sm:$0xff]
  %v848 = vld [vmem:[%s2 + $0x128] sm:$0xff]
  %v849 = vld [vmem:[%s2 + $0x130] sm:$0xff]
  %v850 = vld [vmem:[%s2 + $0x138] sm:$0xff]
  %v851 = vld [vmem:[%s2 + $0x140] sm:$0xff]
  %v852 = vld [vmem:[%s2 + $0x148] sm:$0xff]
  %v853 = vld [vmem:[%s2 + $0x150] sm:$0xff]
  %v854 = vld [vmem:[%s2 + $0x158] sm:$0xff]
  %v855 = vld [vmem:[%s2 + $0x160] sm:$0xff]
  %v856 = vld [vmem:[%s2 + $0x168] sm:$0xff]
  %v857 = vld [vmem:[%s2 + $0x170] sm:$0xff]
  %v858 = vld [vmem:[%s2 + $0x178] sm:$0xff]
  %859 = vmatprep.subr.mxu0 %v857
  %860 = vmatpush1.msra.mxu0 %v856
  %861 = vmatprep.subr.mxu0 %v854
  %862 = vmatpush1.msra.mxu0 %v853
  %863 = vmatprep.subr.mxu0 %v851
  %864 = vmatpush1.msra.mxu0 %v850
  %865 = vmatprep.subr.mxu0 %v848
  %866 = vmatpush1.msra.mxu0 %v847
  %867 = vmatprep.subr.mxu0 %v845
  %868 = vmatpush1.msra.mxu0 %v844
  %869 = vmatprep.subr.mxu0 %v842
  %870 = vmatpush1.msra.mxu0 %v841
  %871 = vmatprep.subr.mxu0 %v839
  %872 = vmatpush1.msra.mxu0 %v838
  %873 = vmatprep.subr.mxu0 %v836
  %874 = vmatpush1.msra.mxu0 %v835
  %875 = vmatprep.subr.mxu0 %v833
  %876 = vmatpush1.msra.mxu0 %v832
  %877 = vmatprep.subr.mxu0 %v830
  %878 = vmatpush1.msra.mxu0 %v829
  %879 = vmatprep.subr.mxu0 %v827
  %880 = vmatpush1.msra.mxu0 %v826
  %881 = vmatprep.subr.mxu0 %v824
  %882 = vmatpush1.msra.mxu0 %v823
  %883 = vmatprep.subr.mxu0 %v821
  %884 = vmatpush1.msra.mxu0 %v820
  %885 = vmatprep.subr.mxu0 %v818
  %886 = vmatpush1.msra.mxu0 %v817
  %887 = vmatprep.subr.mxu0 %v815
  %888 = vmatpush1.msra.mxu0 %v814
  %889 = vmatprep.subr.mxu0 %v812
  %890 = vmatpush1.msra.mxu0 %v811
  %891 = vmatprep.subr.mxu0 0.0
  %892 = vmatpush2.msra.mxu0 0.0
  %893 = vmatprep.subr.mxu0 0.0
  %894 = vmatpush2.msra.mxu0 0.0
  %895 = vmatprep.subr.mxu0 0.0
  %896 = vmatpush2.msra.mxu0 0.0
  %897 = vmatprep.subr.mxu0 0.0
  %898 = vmatpush2.msra.mxu0 0.0
  %899 = vmatprep.subr.mxu0 0.0
  %900 = vmatpush2.msra.mxu0 0.0
  %901 = vmatprep.subr.mxu0 0.0
  %902 = vmatpush2.msra.mxu0 0.0
  %903 = vmatprep.subr.mxu0 0.0
  %904 = vmatpush2.msra.mxu0 0.0
  %905 = vmatprep.subr.mxu0 0.0
  %906 = vmatpush2.msra.mxu0 0.0
  %907 = vmatprep.subr.mxu0 0.0
  %908 = vmatpush2.msra.mxu0 0.0
  %909 = vmatprep.subr.mxu0 0.0
  %910 = vmatpush2.msra.mxu0 0.0
  %911 = vmatprep.subr.mxu0 0.0
  %912 = vmatpush2.msra.mxu0 0.0
  %913 = vmatprep.subr.mxu0 0.0
  %914 = vmatpush2.msra.mxu0 0.0
  %915 = vmatprep.subr.mxu0 0.0
  %916 = vmatpush2.msra.mxu0 0.0
  %917 = vmatprep.subr.mxu0 0.0
  %918 = vmatpush2.msra.mxu0 0.0
  %919 = vmatprep.subr.mxu0 0.0
  %920 = vmatpush2.msra.mxu0 0.0
  %921 = vmatprep.subr.mxu0 0.0
  %922 = vmatpush2.msra.mxu0 0.0
  %923 = vmatprep.mubr.f32.mxu0 0.0
  %924 = vmatmul.mubr.f32.gmra.mxu0 %v576
  %v925 = vpop.f32.mrf.mxu0
  %v926 = vadd.f32 0.0, %v925
  %v927 = vpop.f32.mrf.mxu0
  %v928 = vadd.f32 0.0, %v927
  %929 = vdwg.mxu0
  %930 = vmatprep.subr.mxu0 0.0
  %931 = vmatpush1.msra.mxu0 %v858
  %932 = vmatprep.subr.mxu0 0.0
  %933 = vmatpush1.msra.mxu0 %v855
  %934 = vmatprep.subr.mxu0 0.0
  %935 = vmatpush1.msra.mxu0 %v852
  %936 = vmatprep.subr.mxu0 0.0
  %937 = vmatpush1.msra.mxu0 %v849
  %938 = vmatprep.subr.mxu0 0.0
  %939 = vmatpush1.msra.mxu0 %v846
  %940 = vmatprep.subr.mxu0 0.0
  %941 = vmatpush1.msra.mxu0 %v843
  %942 = vmatprep.subr.mxu0 0.0
  %943 = vmatpush1.msra.mxu0 %v840
  %944 = vmatprep.subr.mxu0 0.0
  %945 = vmatpush1.msra.mxu0 %v837
  %946 = vmatprep.subr.mxu0 0.0
  %947 = vmatpush1.msra.mxu0 %v834
  %948 = vmatprep.subr.mxu0 0.0
  %949 = vmatpush1.msra.mxu0 %v831
  %950 = vmatprep.subr.mxu0 0.0
  %951 = vmatpush1.msra.mxu0 %v828
  %952 = vmatprep.subr.mxu0 0.0
  %953 = vmatpush1.msra.mxu0 %v825
  %954 = vmatprep.subr.mxu0 0.0
  %955 = vmatpush1.msra.mxu0 %v822
  %956 = vmatprep.subr.mxu0 0.0
  %957 = vmatpush1.msra.mxu0 %v819
  %958 = vmatprep.subr.mxu0 0.0
  %959 = vmatpush1.msra.mxu0 %v816
  %960 = vmatprep.subr.mxu0 0.0
  %961 = vmatpush1.msra.mxu0 %v813
  %962 = vmatprep.subr.mxu0 0.0
  %963 = vmatpush2.msra.mxu0 0.0
  %964 = vmatprep.subr.mxu0 0.0
  %965 = vmatpush2.msra.mxu0 0.0
  %966 = vmatprep.subr.mxu0 0.0
  %967 = vmatpush2.msra.mxu0 0.0
  %968 = vmatprep.subr.mxu0 0.0
  %969 = vmatpush2.msra.mxu0 0.0
  %970 = vmatprep.subr.mxu0 0.0
  %971 = vmatpush2.msra.mxu0 0.0
  %972 = vmatprep.subr.mxu0 0.0
  %973 = vmatpush2.msra.mxu0 0.0
  %974 = vmatprep.subr.mxu0 0.0
  %975 = vmatpush2.msra.mxu0 0.0
  %976 = vmatprep.subr.mxu0 0.0
  %977 = vmatpush2.msra.mxu0 0.0
  %978 = vmatprep.subr.mxu0 0.0
  %979 = vmatpush2.msra.mxu0 0.0
  %980 = vmatprep.subr.mxu0 0.0
  %981 = vmatpush2.msra.mxu0 0.0
  %982 = vmatprep.subr.mxu0 0.0
  %983 = vmatpush2.msra.mxu0 0.0
  %984 = vmatprep.subr.mxu0 0.0
  %985 = vmatpush2.msra.mxu0 0.0
  %986 = vmatprep.subr.mxu0 0.0
  %987 = vmatpush2.msra.mxu0 0.0
  %988 = vmatprep.subr.mxu0 0.0
  %989 = vmatpush2.msra.mxu0 0.0
  %990 = vmatprep.subr.mxu0 0.0
  %991 = vmatpush2.msra.mxu0 0.0
  %992 = vmatprep.subr.mxu0 0.0
  %993 = vmatpush2.msra.mxu0 0.0
  %994 = vmatprep.mubr.f32.mxu0 0.0
  %995 = vmatmul.mubr.f32.gmra.mxu0 %v576
  %v996 = vpop.f32.mrf.mxu0
  %v997 = vadd.f32 0.0, %v996
  %v998 = vpop.f32.mrf.mxu0
  %999 = vdwg.mxu0
  %v1001 = vrot.slane %v926, 6
  %v1003 = vadd.f32 %v805, %v1001
  %v1004 = vxor.u32 %v1003, 2147483648
  %v1005 = vmul.f32 %v1004, 1.442695
  %v1006 = vpow.pop %v1005
  %v1007 = vadd.f32 %v1006, 1.0
  %v1008 = vrcp.pop %v1007
  %v1009 = vmul.f32 1.0, %v1008
  %v1011 = vrot.slane %v928, 6
  %v1013 = vadd.f32 %v806, %v1011
  %v1014 = vxor.u32 %v1013, 2147483648
  %v1015 = vmul.f32 %v1014, 1.442695
  %v1016 = vpow.pop %v1015
  %v1017 = vadd.f32 %v1016, 1.0
  %v1018 = vrcp.pop %v1017
  %v1019 = vmul.f32 1.0, %v1018
  %v1020 = vadd.f32 %v997, %v567
  %v1022 = vrot.slane %v1020, 6
  %v1024 = vmul.f32 %v1009, %v1022
  %v1025 = vadd.f32 %v807, %v1024
  %v1026 = vtanh.pop %v1025
  %v1027 = vsub.f32 1.0, %v1019
  %v1028 = vmul.f32 %v1027, %v1026
  %v1030 = vrot.slane %v576, 6
  %v1032 = vmul.f32 %v1019, %v1030
  %v1033 = vadd.f32 %v1028, %v1032
  %v1034 = vld [vmem:[%s3] sm:$0xff]
  %v1035 = vld [vmem:[%s3 + $0x8] sm:$0xff]
  %v1036 = vld [vmem:[%s3 + $0x10] sm:$0xff]
  %v1037 = vld [vmem:[%s3 + $0x18] sm:$0xff]
  %v1038 = vld [vmem:[%s3 + $0x20] sm:$0xff]
  %v1039 = vld [vmem:[%s3 + $0x28] sm:$0xff]
  %v1040 = vld [vmem:[%s3 + $0x30] sm:$0xff]
  %v1041 = vld [vmem:[%s3 + $0x38] sm:$0xff]
  %v1042 = vld [vmem:[%s3 + $0x40] sm:$0xff]
  %v1043 = vld [vmem:[%s3 + $0x48] sm:$0xff]
  %v1044 = vld [vmem:[%s3 + $0x50] sm:$0xff]
  %v1045 = vld [vmem:[%s3 + $0x58] sm:$0xff]
  %v1046 = vld [vmem:[%s3 + $0x60] sm:$0xff]
  %v1047 = vld [vmem:[%s3 + $0x68] sm:$0xff]
  %v1048 = vld [vmem:[%s3 + $0x70] sm:$0xff]
  %v1049 = vld [vmem:[%s3 + $0x78] sm:$0xff]
  %v1050 = vld [vmem:[%s3 + $0x80] sm:$0xff]
  %v1051 = vld [vmem:[%s3 + $0x88] sm:$0xff]
  %v1052 = vld [vmem:[%s3 + $0x90] sm:$0xff]
  %v1053 = vld [vmem:[%s3 + $0x98] sm:$0xff]
  %v1054 = vld [vmem:[%s3 + $0xa0] sm:$0xff]
  %v1055 = vld [vmem:[%s3 + $0xa8] sm:$0xff]
  %v1056 = vld [vmem:[%s3 + $0xb0] sm:$0xff]
  %v1057 = vld [vmem:[%s3 + $0xb8] sm:$0xff]
  %v1058 = vld [vmem:[%s3 + $0xc0] sm:$0xff]
  %v1059 = vld [vmem:[%s3 + $0xc8] sm:$0xff]
  %v1060 = vld [vmem:[%s3 + $0xd0] sm:$0xff]
  %v1061 = vld [vmem:[%s3 + $0xd8] sm:$0xff]
  %v1062 = vld [vmem:[%s3 + $0xe0] sm:$0xff]
  %v1063 = vld [vmem:[%s3 + $0xe8] sm:$0xff]
  %v1064 = vld [vmem:[%s3 + $0xf0] sm:$0xff]
  %v1065 = vld [vmem:[%s3 + $0xf8] sm:$0xff]
  %v1066 = vld [vmem:[%s3 + $0x100] sm:$0xff]
  %v1067 = vld [vmem:[%s3 + $0x108] sm:$0xff]
  %v1068 = vld [vmem:[%s3 + $0x110] sm:$0xff]
  %v1069 = vld [vmem:[%s3 + $0x118] sm:$0xff]
  %v1070 = vld [vmem:[%s3 + $0x120] sm:$0xff]
  %v1071 = vld [vmem:[%s3 + $0x128] sm:$0xff]
  %v1072 = vld [vmem:[%s3 + $0x130] sm:$0xff]
  %v1073 = vld [vmem:[%s3 + $0x138] sm:$0xff]
  %v1074 = vld [vmem:[%s3 + $0x140] sm:$0xff]
  %v1075 = vld [vmem:[%s3 + $0x148] sm:$0xff]
  %v1076 = vld [vmem:[%s3 + $0x150] sm:$0xff]
  %v1077 = vld [vmem:[%s3 + $0x158] sm:$0xff]
  %v1078 = vld [vmem:[%s3 + $0x160] sm:$0xff]
  %v1079 = vld [vmem:[%s3 + $0x168] sm:$0xff]
  %v1080 = vld [vmem:[%s3 + $0x170] sm:$0xff]
  %v1081 = vld [vmem:[%s3 + $0x178] sm:$0xff]
  %v1083 = vrot.slane %v802, 6
  %1085 = vmatprep.subr.mxu0 %v1080
  %1086 = vmatpush1.msra.mxu0 %v1079
  %1087 = vmatprep.subr.mxu0 %v1077
  %1088 = vmatpush1.msra.mxu0 %v1076
  %1089 = vmatprep.subr.mxu0 %v1074
  %1090 = vmatpush1.msra.mxu0 %v1073
  %1091 = vmatprep.subr.mxu0 %v1071
  %1092 = vmatpush1.msra.mxu0 %v1070
  %1093 = vmatprep.subr.mxu0 %v1068
  %1094 = vmatpush1.msra.mxu0 %v1067
  %1095 = vmatprep.subr.mxu0 %v1065
  %1096 = vmatpush1.msra.mxu0 %v1064
  %1097 = vmatprep.subr.mxu0 %v1062
  %1098 = vmatpush1.msra.mxu0 %v1061
  %1099 = vmatprep.subr.mxu0 %v1059
  %1100 = vmatpush1.msra.mxu0 %v1058
  %1101 = vmatprep.subr.mxu0 %v1056
  %1102 = vmatpush1.msra.mxu0 %v1055
  %1103 = vmatprep.subr.mxu0 %v1053
  %1104 = vmatpush1.msra.mxu0 %v1052
  %1105 = vmatprep.subr.mxu0 %v1050
  %1106 = vmatpush1.msra.mxu0 %v1049
  %1107 = vmatprep.subr.mxu0 %v1047
  %1108 = vmatpush1.msra.mxu0 %v1046
  %1109 = vmatprep.subr.mxu0 %v1044
  %1110 = vmatpush1.msra.mxu0 %v1043
  %1111 = vmatprep.subr.mxu0 %v1041
  %1112 = vmatpush1.msra.mxu0 %v1040
  %1113 = vmatprep.subr.mxu0 %v1038
  %1114 = vmatpush1.msra.mxu0 %v1037
  %1115 = vmatprep.subr.mxu0 %v1035
  %1116 = vmatpush1.msra.mxu0 %v1034
  %1117 = vmatprep.subr.mxu0 0.0
  %1118 = vmatpush2.msra.mxu0 0.0
  %1119 = vmatprep.subr.mxu0 0.0
  %1120 = vmatpush2.msra.mxu0 0.0
  %1121 = vmatprep.subr.mxu0 0.0
  %1122 = vmatpush2.msra.mxu0 0.0
  %1123 = vmatprep.subr.mxu0 0.0
  %1124 = vmatpush2.msra.mxu0 0.0
  %1125 = vmatprep.subr.mxu0 0.0
  %1126 = vmatpush2.msra.mxu0 0.0
  %1127 = vmatprep.subr.mxu0 0.0
  %1128 = vmatpush2.msra.mxu0 0.0
  %1129 = vmatprep.subr.mxu0 0.0
  %1130 = vmatpush2.msra.mxu0 0.0
  %1131 = vmatprep.subr.mxu0 0.0
  %1132 = vmatpush2.msra.mxu0 0.0
  %1133 = vmatprep.subr.mxu0 0.0
  %1134 = vmatpush2.msra.mxu0 0.0
  %1135 = vmatprep.subr.mxu0 0.0
  %1136 = vmatpush2.msra.mxu0 0.0
  %1137 = vmatprep.subr.mxu0 0.0
  %1138 = vmatpush2.msra.mxu0 0.0
  %1139 = vmatprep.subr.mxu0 0.0
  %1140 = vmatpush2.msra.mxu0 0.0
  %1141 = vmatprep.subr.mxu0 0.0
  %1142 = vmatpush2.msra.mxu0 0.0
  %1143 = vmatprep.subr.mxu0 0.0
  %1144 = vmatpush2.msra.mxu0 0.0
  %1145 = vmatprep.subr.mxu0 0.0
  %1146 = vmatpush2.msra.mxu0 0.0
  %1147 = vmatprep.subr.mxu0 0.0
  %1148 = vmatpush2.msra.mxu0 0.0
  %1149 = vmatprep.mubr.f32.mxu0 0.0
  %1150 = vmatmul.mubr.f32.gmra.mxu0 %v1083
  %v1151 = vpop.f32.mrf.mxu0
  %v1152 = vadd.f32 0.0, %v1151
  %v1153 = vpop.f32.mrf.mxu0
  %v1154 = vadd.f32 0.0, %v1153
  %1155 = vdwg.mxu0
  %1156 = vmatprep.subr.mxu0 0.0
  %1157 = vmatpush1.msra.mxu0 %v1081
  %1158 = vmatprep.subr.mxu0 0.0
  %1159 = vmatpush1.msra.mxu0 %v1078
  %1160 = vmatprep.subr.mxu0 0.0
  %1161 = vmatpush1.msra.mxu0 %v1075
  %1162 = vmatprep.subr.mxu0 0.0
  %1163 = vmatpush1.msra.mxu0 %v1072
  %1164 = vmatprep.subr.mxu0 0.0
  %1165 = vmatpush1.msra.mxu0 %v1069
  %1166 = vmatprep.subr.mxu0 0.0
  %1167 = vmatpush1.msra.mxu0 %v1066
  %1168 = vmatprep.subr.mxu0 0.0
  %1169 = vmatpush1.msra.mxu0 %v1063
  %1170 = vmatprep.subr.mxu0 0.0
  %1171 = vmatpush1.msra.mxu0 %v1060
  %1172 = vmatprep.subr.mxu0 0.0
  %1173 = vmatpush1.msra.mxu0 %v1057
  %1174 = vmatprep.subr.mxu0 0.0
  %1175 = vmatpush1.msra.mxu0 %v1054
  %1176 = vmatprep.subr.mxu0 0.0
  %1177 = vmatpush1.msra.mxu0 %v1051
  %1178 = vmatprep.subr.mxu0 0.0
  %1179 = vmatpush1.msra.mxu0 %v1048
  %1180 = vmatprep.subr.mxu0 0.0
  %1181 = vmatpush1.msra.mxu0 %v1045
  %1182 = vmatprep.subr.mxu0 0.0
  %1183 = vmatpush1.msra.mxu0 %v1042
  %1184 = vmatprep.subr.mxu0 0.0
  %1185 = vmatpush1.msra.mxu0 %v1039
  %1186 = vmatprep.subr.mxu0 0.0
  %1187 = vmatpush1.msra.mxu0 %v1036
  %1188 = vmatprep.subr.mxu0 0.0
  %1189 = vmatpush2.msra.mxu0 0.0
  %1190 = vmatprep.subr.mxu0 0.0
  %1191 = vmatpush2.msra.mxu0 0.0
  %1192 = vmatprep.subr.mxu0 0.0
  %1193 = vmatpush2.msra.mxu0 0.0
  %1194 = vmatprep.subr.mxu0 0.0
  %1195 = vmatpush2.msra.mxu0 0.0
  %1196 = vmatprep.subr.mxu0 0.0
  %1197 = vmatpush2.msra.mxu0 0.0
  %1198 = vmatprep.subr.mxu0 0.0
  %1199 = vmatpush2.msra.mxu0 0.0
  %1200 = vmatprep.subr.mxu0 0.0
  %1201 = vmatpush2.msra.mxu0 0.0
  %1202 = vmatprep.subr.mxu0 0.0
  %1203 = vmatpush2.msra.mxu0 0.0
  %1204 = vmatprep.subr.mxu0 0.0
  %1205 = vmatpush2.msra.mxu0 0.0
  %1206 = vmatprep.subr.mxu0 0.0
  %1207 = vmatpush2.msra.mxu0 0.0
  %1208 = vmatprep.subr.mxu0 0.0
  %1209 = vmatpush2.msra.mxu0 0.0
  %1210 = vmatprep.subr.mxu0 0.0
  %1211 = vmatpush2.msra.mxu0 0.0
  %1212 = vmatprep.subr.mxu0 0.0
  %1213 = vmatpush2.msra.mxu0 0.0
  %1214 = vmatprep.subr.mxu0 0.0
  %1215 = vmatpush2.msra.mxu0 0.0
  %1216 = vmatprep.subr.mxu0 0.0
  %1217 = vmatpush2.msra.mxu0 0.0
  %1218 = vmatprep.subr.mxu0 0.0
  %1219 = vmatpush2.msra.mxu0 0.0
  %1220 = vmatprep.mubr.f32.mxu0 0.0
  %1221 = vmatmul.mubr.f32.gmra.mxu0 %v1083
  %v1222 = vpop.f32.mrf.mxu0
  %v1223 = vadd.f32 0.0, %v1222
  %v1224 = vpop.f32.mrf.mxu0
  %1225 = vdwg.mxu0
  %v1227 = vrot.slane %v1152, 4
  %v1229 = vadd.f32 %v808, %v1227
  %v1230 = vxor.u32 %v1229, 2147483648
  %v1231 = vmul.f32 %v1230, 1.442695
  %v1232 = vpow.pop %v1231
  %v1233 = vadd.f32 %v1232, 1.0
  %v1234 = vrcp.pop %v1233
  %v1235 = vmul.f32 1.0, %v1234
  %v1237 = vrot.slane %v1154, 4
  %v1239 = vadd.f32 %v809, %v1237
  %v1240 = vxor.u32 %v1239, 2147483648
  %v1241 = vmul.f32 %v1240, 1.442695
  %v1242 = vpow.pop %v1241
  %v1243 = vadd.f32 %v1242, 1.0
  %v1244 = vrcp.pop %v1243
  %v1245 = vmul.f32 1.0, %v1244
  %v1246 = vadd.f32 %v1223, %v790
  %v1248 = vrot.slane %v1246, 4
  %v1250 = vmul.f32 %v1235, %v1248
  %v1251 = vadd.f32 %v810, %v1250
  %v1252 = vtanh.pop %v1251
  %v1253 = vsub.f32 1.0, %v1245
  %v1254 = vmul.f32 %v1253, %v1252
  %v1255 = vrot.slane %v802, 2
  %v1257 = vmul.f32 %v1245, %v1255
  %v1258 = vadd.f32 %v1254, %v1257
  %1259 = vst [vmem:[#allocation3] sm:$0xc] %v1033
  %1260 = vst [vmem:[#allocation3 + $0x18] sm:$0x30] %v1258
  %v1261 = vld [vmem:[#allocation2] sm:$0x30]
  %v1262 = vld [vmem:[#allocation2 + $0x8] sm:$0x30]
  %v1263 = vld [vmem:[#allocation2 + $0x10] sm:$0x30]
  %v1264 = vld [vmem:[#allocation2 + $0x48] sm:$0xc]
  %v1265 = vld [vmem:[#allocation2 + $0x50] sm:$0xc]
  %v1266 = vld [vmem:[#allocation2 + $0x58] sm:$0xc]
  %v1267 = vld [vmem:[%s2] sm:$0xff]
  %v1268 = vld [vmem:[%s2 + $0x8] sm:$0xff]
  %v1269 = vld [vmem:[%s2 + $0x10] sm:$0xff]
  %v1270 = vld [vmem:[%s2 + $0x18] sm:$0xff]
  %v1271 = vld [vmem:[%s2 + $0x20] sm:$0xff]
  %v1272 = vld [vmem:[%s2 + $0x28] sm:$0xff]
  %v1273 = vld [vmem:[%s2 + $0x30] sm:$0xff]
  %v1274 = vld [vmem:[%s2 + $0x38] sm:$0xff]
  %v1275 = vld [vmem:[%s2 + $0x40] sm:$0xff]
  %v1276 = vld [vmem:[%s2 + $0x48] sm:$0xff]
  %v1277 = vld [vmem:[%s2 + $0x50] sm:$0xff]
  %v1278 = vld [vmem:[%s2 + $0x58] sm:$0xff]
  %v1279 = vld [vmem:[%s2 + $0x60] sm:$0xff]
  %v1280 = vld [vmem:[%s2 + $0x68] sm:$0xff]
  %v1281 = vld [vmem:[%s2 + $0x70] sm:$0xff]
  %v1282 = vld [vmem:[%s2 + $0x78] sm:$0xff]
  %v1283 = vld [vmem:[%s2 + $0x80] sm:$0xff]
  %v1284 = vld [vmem:[%s2 + $0x88] sm:$0xff]
  %v1285 = vld [vmem:[%s2 + $0x90] sm:$0xff]
  %v1286 = vld [vmem:[%s2 + $0x98] sm:$0xff]
  %v1287 = vld [vmem:[%s2 + $0xa0] sm:$0xff]
  %v1288 = vld [vmem:[%s2 + $0xa8] sm:$0xff]
  %v1289 = vld [vmem:[%s2 + $0xb0] sm:$0xff]
  %v1290 = vld [vmem:[%s2 + $0xb8] sm:$0xff]
  %v1291 = vld [vmem:[%s2 + $0xc0] sm:$0xff]
  %v1292 = vld [vmem:[%s2 + $0xc8] sm:$0xff]
  %v1293 = vld [vmem:[%s2 + $0xd0] sm:$0xff]
  %v1294 = vld [vmem:[%s2 + $0xd8] sm:$0xff]
  %v1295 = vld [vmem:[%s2 + $0xe0] sm:$0xff]
  %v1296 = vld [vmem:[%s2 + $0xe8] sm:$0xff]
  %v1297 = vld [vmem:[%s2 + $0xf0] sm:$0xff]
  %v1298 = vld [vmem:[%s2 + $0xf8] sm:$0xff]
  %v1299 = vld [vmem:[%s2 + $0x100] sm:$0xff]
  %v1300 = vld [vmem:[%s2 + $0x108] sm:$0xff]
  %v1301 = vld [vmem:[%s2 + $0x110] sm:$0xff]
  %v1302 = vld [vmem:[%s2 + $0x118] sm:$0xff]
  %v1303 = vld [vmem:[%s2 + $0x120] sm:$0xff]
  %v1304 = vld [vmem:[%s2 + $0x128] sm:$0xff]
  %v1305 = vld [vmem:[%s2 + $0x130] sm:$0xff]
  %v1306 = vld [vmem:[%s2 + $0x138] sm:$0xff]
  %v1307 = vld [vmem:[%s2 + $0x140] sm:$0xff]
  %v1308 = vld [vmem:[%s2 + $0x148] sm:$0xff]
  %v1309 = vld [vmem:[%s2 + $0x150] sm:$0xff]
  %v1310 = vld [vmem:[%s2 + $0x158] sm:$0xff]
  %v1311 = vld [vmem:[%s2 + $0x160] sm:$0xff]
  %v1312 = vld [vmem:[%s2 + $0x168] sm:$0xff]
  %v1313 = vld [vmem:[%s2 + $0x170] sm:$0xff]
  %v1314 = vld [vmem:[%s2 + $0x178] sm:$0xff]
  %v1316 = vrot.slane %v1033, 2
  %1318 = vmatprep.subr.mxu0 %v1313
  %1319 = vmatpush1.msra.mxu0 %v1312
  %1320 = vmatprep.subr.mxu0 %v1310
  %1321 = vmatpush1.msra.mxu0 %v1309
  %1322 = vmatprep.subr.mxu0 %v1307
  %1323 = vmatpush1.msra.mxu0 %v1306
  %1324 = vmatprep.subr.mxu0 %v1304
  %1325 = vmatpush1.msra.mxu0 %v1303
  %1326 = vmatprep.subr.mxu0 %v1301
  %1327 = vmatpush1.msra.mxu0 %v1300
  %1328 = vmatprep.subr.mxu0 %v1298
  %1329 = vmatpush1.msra.mxu0 %v1297
  %1330 = vmatprep.subr.mxu0 %v1295
  %1331 = vmatpush1.msra.mxu0 %v1294
  %1332 = vmatprep.subr.mxu0 %v1292
  %1333 = vmatpush1.msra.mxu0 %v1291
  %1334 = vmatprep.subr.mxu0 %v1289
  %1335 = vmatpush1.msra.mxu0 %v1288
  %1336 = vmatprep.subr.mxu0 %v1286
  %1337 = vmatpush1.msra.mxu0 %v1285
  %1338 = vmatprep.subr.mxu0 %v1283
  %1339 = vmatpush1.msra.mxu0 %v1282
  %1340 = vmatprep.subr.mxu0 %v1280
  %1341 = vmatpush1.msra.mxu0 %v1279
  %1342 = vmatprep.subr.mxu0 %v1277
  %1343 = vmatpush1.msra.mxu0 %v1276
  %1344 = vmatprep.subr.mxu0 %v1274
  %1345 = vmatpush1.msra.mxu0 %v1273
  %1346 = vmatprep.subr.mxu0 %v1271
  %1347 = vmatpush1.msra.mxu0 %v1270
  %1348 = vmatprep.subr.mxu0 %v1268
  %1349 = vmatpush1.msra.mxu0 %v1267
  %1350 = vmatprep.subr.mxu0 0.0
  %1351 = vmatpush2.msra.mxu0 0.0
  %1352 = vmatprep.subr.mxu0 0.0
  %1353 = vmatpush2.msra.mxu0 0.0
  %1354 = vmatprep.subr.mxu0 0.0
  %1355 = vmatpush2.msra.mxu0 0.0
  %1356 = vmatprep.subr.mxu0 0.0
  %1357 = vmatpush2.msra.mxu0 0.0
  %1358 = vmatprep.subr.mxu0 0.0
  %1359 = vmatpush2.msra.mxu0 0.0
  %1360 = vmatprep.subr.mxu0 0.0
  %1361 = vmatpush2.msra.mxu0 0.0
  %1362 = vmatprep.subr.mxu0 0.0
  %1363 = vmatpush2.msra.mxu0 0.0
  %1364 = vmatprep.subr.mxu0 0.0
  %1365 = vmatpush2.msra.mxu0 0.0
  %1366 = vmatprep.subr.mxu0 0.0
  %1367 = vmatpush2.msra.mxu0 0.0
  %1368 = vmatprep.subr.mxu0 0.0
  %1369 = vmatpush2.msra.mxu0 0.0
  %1370 = vmatprep.subr.mxu0 0.0
  %1371 = vmatpush2.msra.mxu0 0.0
  %1372 = vmatprep.subr.mxu0 0.0
  %1373 = vmatpush2.msra.mxu0 0.0
  %1374 = vmatprep.subr.mxu0 0.0
  %1375 = vmatpush2.msra.mxu0 0.0
  %1376 = vmatprep.subr.mxu0 0.0
  %1377 = vmatpush2.msra.mxu0 0.0
  %1378 = vmatprep.subr.mxu0 0.0
  %1379 = vmatpush2.msra.mxu0 0.0
  %1380 = vmatprep.subr.mxu0 0.0
  %1381 = vmatpush2.msra.mxu0 0.0
  %1382 = vmatprep.mubr.f32.mxu0 0.0
  %1383 = vmatmul.mubr.f32.gmra.mxu0 %v1316
  %v1384 = vpop.f32.mrf.mxu0
  %v1385 = vadd.f32 0.0, %v1384
  %v1386 = vpop.f32.mrf.mxu0
  %v1387 = vadd.f32 0.0, %v1386
  %1388 = vdwg.mxu0
  %1389 = vmatprep.subr.mxu0 0.0
  %1390 = vmatpush1.msra.mxu0 %v1314
  %1391 = vmatprep.subr.mxu0 0.0
  %1392 = vmatpush1.msra.mxu0 %v1311
  %1393 = vmatprep.subr.mxu0 0.0
  %1394 = vmatpush1.msra.mxu0 %v1308
  %1395 = vmatprep.subr.mxu0 0.0
  %1396 = vmatpush1.msra.mxu0 %v1305
  %1397 = vmatprep.subr.mxu0 0.0
  %1398 = vmatpush1.msra.mxu0 %v1302
  %1399 = vmatprep.subr.mxu0 0.0
  %1400 = vmatpush1.msra.mxu0 %v1299
  %1401 = vmatprep.subr.mxu0 0.0
  %1402 = vmatpush1.msra.mxu0 %v1296
  %1403 = vmatprep.subr.mxu0 0.0
  %1404 = vmatpush1.msra.mxu0 %v1293
  %1405 = vmatprep.subr.mxu0 0.0
  %1406 = vmatpush1.msra.mxu0 %v1290
  %1407 = vmatprep.subr.mxu0 0.0
  %1408 = vmatpush1.msra.mxu0 %v1287
  %1409 = vmatprep.subr.mxu0 0.0
  %1410 = vmatpush1.msra.mxu0 %v1284
  %1411 = vmatprep.subr.mxu0 0.0
  %1412 = vmatpush1.msra.mxu0 %v1281
  %1413 = vmatprep.subr.mxu0 0.0
  %1414 = vmatpush1.msra.mxu0 %v1278
  %1415 = vmatprep.subr.mxu0 0.0
  %1416 = vmatpush1.msra.mxu0 %v1275
  %1417 = vmatprep.subr.mxu0 0.0
  %1418 = vmatpush1.msra.mxu0 %v1272
  %1419 = vmatprep.subr.mxu0 0.0
  %1420 = vmatpush1.msra.mxu0 %v1269
  %1421 = vmatprep.subr.mxu0 0.0
  %1422 = vmatpush2.msra.mxu0 0.0
  %1423 = vmatprep.subr.mxu0 0.0
  %1424 = vmatpush2.msra.mxu0 0.0
  %1425 = vmatprep.subr.mxu0 0.0
  %1426 = vmatpush2.msra.mxu0 0.0
  %1427 = vmatprep.subr.mxu0 0.0
  %1428 = vmatpush2.msra.mxu0 0.0
  %1429 = vmatprep.subr.mxu0 0.0
  %1430 = vmatpush2.msra.mxu0 0.0
  %1431 = vmatprep.subr.mxu0 0.0
  %1432 = vmatpush2.msra.mxu0 0.0
  %1433 = vmatprep.subr.mxu0 0.0
  %1434 = vmatpush2.msra.mxu0 0.0
  %1435 = vmatprep.subr.mxu0 0.0
  %1436 = vmatpush2.msra.mxu0 0.0
  %1437 = vmatprep.subr.mxu0 0.0
  %1438 = vmatpush2.msra.mxu0 0.0
  %1439 = vmatprep.subr.mxu0 0.0
  %1440 = vmatpush2.msra.mxu0 0.0
  %1441 = vmatprep.subr.mxu0 0.0
  %1442 = vmatpush2.msra.mxu0 0.0
  %1443 = vmatprep.subr.mxu0 0.0
  %1444 = vmatpush2.msra.mxu0 0.0
  %1445 = vmatprep.subr.mxu0 0.0
  %1446 = vmatpush2.msra.mxu0 0.0
  %1447 = vmatprep.subr.mxu0 0.0
  %1448 = vmatpush2.msra.mxu0 0.0
  %1449 = vmatprep.subr.mxu0 0.0
  %1450 = vmatpush2.msra.mxu0 0.0
  %1451 = vmatprep.subr.mxu0 0.0
  %1452 = vmatpush2.msra.mxu0 0.0
  %1453 = vmatprep.mubr.f32.mxu0 0.0
  %1454 = vmatmul.mubr.f32.gmra.mxu0 %v1316
  %v1455 = vpop.f32.mrf.mxu0
  %v1456 = vadd.f32 0.0, %v1455
  %v1457 = vpop.f32.mrf.mxu0
  %1458 = vdwg.mxu0
  %v1460 = vrot.slane %v1385, 4
  %v1462 = vadd.f32 %v1261, %v1460
  %v1463 = vxor.u32 %v1462, 2147483648
  %v1464 = vmul.f32 %v1463, 1.442695
  %v1465 = vpow.pop %v1464
  %v1466 = vadd.f32 %v1465, 1.0
  %v1467 = vrcp.pop %v1466
  %v1468 = vmul.f32 1.0, %v1467
  %v1470 = vrot.slane %v1387, 4
  %v1472 = vadd.f32 %v1262, %v1470
  %v1473 = vxor.u32 %v1472, 2147483648
  %v1474 = vmul.f32 %v1473, 1.442695
  %v1475 = vpow.pop %v1474
  %v1476 = vadd.f32 %v1475, 1.0
  %v1477 = vrcp.pop %v1476
  %v1478 = vmul.f32 1.0, %v1477
  %v1479 = vadd.f32 %v1456, %v567
  %v1481 = vrot.slane %v1479, 4
  %v1483 = vmul.f32 %v1468, %v1481
  %v1484 = vadd.f32 %v1263, %v1483
  %v1485 = vtanh.pop %v1484
  %v1486 = vsub.f32 1.0, %v1478
  %v1487 = vmul.f32 %v1486, %v1485
  %v1488 = vrot.slane %v1033, 6
  %v1490 = vmul.f32 %v1478, %v1488
  %v1491 = vadd.f32 %v1487, %v1490
  %v1492 = vld [vmem:[%s3] sm:$0xff]
  %v1493 = vld [vmem:[%s3 + $0x8] sm:$0xff]
  %v1494 = vld [vmem:[%s3 + $0x10] sm:$0xff]
  %v1495 = vld [vmem:[%s3 + $0x18] sm:$0xff]
  %v1496 = vld [vmem:[%s3 + $0x20] sm:$0xff]
  %v1497 = vld [vmem:[%s3 + $0x28] sm:$0xff]
  %v1498 = vld [vmem:[%s3 + $0x30] sm:$0xff]
  %v1499 = vld [vmem:[%s3 + $0x38] sm:$0xff]
  %v1500 = vld [vmem:[%s3 + $0x40] sm:$0xff]
  %v1501 = vld [vmem:[%s3 + $0x48] sm:$0xff]
  %v1502 = vld [vmem:[%s3 + $0x50] sm:$0xff]
  %v1503 = vld [vmem:[%s3 + $0x58] sm:$0xff]
  %v1504 = vld [vmem:[%s3 + $0x60] sm:$0xff]
  %v1505 = vld [vmem:[%s3 + $0x68] sm:$0xff]
  %v1506 = vld [vmem:[%s3 + $0x70] sm:$0xff]
  %v1507 = vld [vmem:[%s3 + $0x78] sm:$0xff]
  %v1508 = vld [vmem:[%s3 + $0x80] sm:$0xff]
  %v1509 = vld [vmem:[%s3 + $0x88] sm:$0xff]
  %v1510 = vld [vmem:[%s3 + $0x90] sm:$0xff]
  %v1511 = vld [vmem:[%s3 + $0x98] sm:$0xff]
  %v1512 = vld [vmem:[%s3 + $0xa0] sm:$0xff]
  %v1513 = vld [vmem:[%s3 + $0xa8] sm:$0xff]
  %v1514 = vld [vmem:[%s3 + $0xb0] sm:$0xff]
  %v1515 = vld [vmem:[%s3 + $0xb8] sm:$0xff]
  %v1516 = vld [vmem:[%s3 + $0xc0] sm:$0xff]
  %v1517 = vld [vmem:[%s3 + $0xc8] sm:$0xff]
  %v1518 = vld [vmem:[%s3 + $0xd0] sm:$0xff]
  %v1519 = vld [vmem:[%s3 + $0xd8] sm:$0xff]
  %v1520 = vld [vmem:[%s3 + $0xe0] sm:$0xff]
  %v1521 = vld [vmem:[%s3 + $0xe8] sm:$0xff]
  %v1522 = vld [vmem:[%s3 + $0xf0] sm:$0xff]
  %v1523 = vld [vmem:[%s3 + $0xf8] sm:$0xff]
  %v1524 = vld [vmem:[%s3 + $0x100] sm:$0xff]
  %v1525 = vld [vmem:[%s3 + $0x108] sm:$0xff]
  %v1526 = vld [vmem:[%s3 + $0x110] sm:$0xff]
  %v1527 = vld [vmem:[%s3 + $0x118] sm:$0xff]
  %v1528 = vld [vmem:[%s3 + $0x120] sm:$0xff]
  %v1529 = vld [vmem:[%s3 + $0x128] sm:$0xff]
  %v1530 = vld [vmem:[%s3 + $0x130] sm:$0xff]
  %v1531 = vld [vmem:[%s3 + $0x138] sm:$0xff]
  %v1532 = vld [vmem:[%s3 + $0x140] sm:$0xff]
  %v1533 = vld [vmem:[%s3 + $0x148] sm:$0xff]
  %v1534 = vld [vmem:[%s3 + $0x150] sm:$0xff]
  %v1535 = vld [vmem:[%s3 + $0x158] sm:$0xff]
  %v1536 = vld [vmem:[%s3 + $0x160] sm:$0xff]
  %v1537 = vld [vmem:[%s3 + $0x168] sm:$0xff]
  %v1538 = vld [vmem:[%s3 + $0x170] sm:$0xff]
  %v1539 = vld [vmem:[%s3 + $0x178] sm:$0xff]
  %v1541 = vrot.slane %v1258, 4
  %1543 = vmatprep.subr.mxu0 %v1538
  %1544 = vmatpush1.msra.mxu0 %v1537
  %1545 = vmatprep.subr.mxu0 %v1535
  %1546 = vmatpush1.msra.mxu0 %v1534
  %1547 = vmatprep.subr.mxu0 %v1532
  %1548 = vmatpush1.msra.mxu0 %v1531
  %1549 = vmatprep.subr.mxu0 %v1529
  %1550 = vmatpush1.msra.mxu0 %v1528
  %1551 = vmatprep.subr.mxu0 %v1526
  %1552 = vmatpush1.msra.mxu0 %v1525
  %1553 = vmatprep.subr.mxu0 %v1523
  %1554 = vmatpush1.msra.mxu0 %v1522
  %1555 = vmatprep.subr.mxu0 %v1520
  %1556 = vmatpush1.msra.mxu0 %v1519
  %1557 = vmatprep.subr.mxu0 %v1517
  %1558 = vmatpush1.msra.mxu0 %v1516
  %1559 = vmatprep.subr.mxu0 %v1514
  %1560 = vmatpush1.msra.mxu0 %v1513
  %1561 = vmatprep.subr.mxu0 %v1511
  %1562 = vmatpush1.msra.mxu0 %v1510
  %1563 = vmatprep.subr.mxu0 %v1508
  %1564 = vmatpush1.msra.mxu0 %v1507
  %1565 = vmatprep.subr.mxu0 %v1505
  %1566 = vmatpush1.msra.mxu0 %v1504
  %1567 = vmatprep.subr.mxu0 %v1502
  %1568 = vmatpush1.msra.mxu0 %v1501
  %1569 = vmatprep.subr.mxu0 %v1499
  %1570 = vmatpush1.msra.mxu0 %v1498
  %1571 = vmatprep.subr.mxu0 %v1496
  %1572 = vmatpush1.msra.mxu0 %v1495
  %1573 = vmatprep.subr.mxu0 %v1493
  %1574 = vmatpush1.msra.mxu0 %v1492
  %1575 = vmatprep.subr.mxu0 0.0
  %1576 = vmatpush2.msra.mxu0 0.0
  %1577 = vmatprep.subr.mxu0 0.0
  %1578 = vmatpush2.msra.mxu0 0.0
  %1579 = vmatprep.subr.mxu0 0.0
  %1580 = vmatpush2.msra.mxu0 0.0
  %1581 = vmatprep.subr.mxu0 0.0
  %1582 = vmatpush2.msra.mxu0 0.0
  %1583 = vmatprep.subr.mxu0 0.0
  %1584 = vmatpush2.msra.mxu0 0.0
  %1585 = vmatprep.subr.mxu0 0.0
  %1586 = vmatpush2.msra.mxu0 0.0
  %1587 = vmatprep.subr.mxu0 0.0
  %1588 = vmatpush2.msra.mxu0 0.0
  %1589 = vmatprep.subr.mxu0 0.0
  %1590 = vmatpush2.msra.mxu0 0.0
  %1591 = vmatprep.subr.mxu0 0.0
  %1592 = vmatpush2.msra.mxu0 0.0
  %1593 = vmatprep.subr.mxu0 0.0
  %1594 = vmatpush2.msra.mxu0 0.0
  %1595 = vmatprep.subr.mxu0 0.0
  %1596 = vmatpush2.msra.mxu0 0.0
  %1597 = vmatprep.subr.mxu0 0.0
  %1598 = vmatpush2.msra.mxu0 0.0
  %1599 = vmatprep.subr.mxu0 0.0
  %1600 = vmatpush2.msra.mxu0 0.0
  %1601 = vmatprep.subr.mxu0 0.0
  %1602 = vmatpush2.msra.mxu0 0.0
  %1603 = vmatprep.subr.mxu0 0.0
  %1604 = vmatpush2.msra.mxu0 0.0
  %1605 = vmatprep.subr.mxu0 0.0
  %1606 = vmatpush2.msra.mxu0 0.0
  %1607 = vmatprep.mubr.f32.mxu0 0.0
  %1608 = vmatmul.mubr.f32.gmra.mxu0 %v1541
  %v1609 = vpop.f32.mrf.mxu0
  %v1610 = vadd.f32 0.0, %v1609
  %v1611 = vpop.f32.mrf.mxu0
  %v1612 = vadd.f32 0.0, %v1611
  %1613 = vdwg.mxu0
  %1614 = vmatprep.subr.mxu0 0.0
  %1615 = vmatpush1.msra.mxu0 %v1539
  %1616 = vmatprep.subr.mxu0 0.0
  %1617 = vmatpush1.msra.mxu0 %v1536
  %1618 = vmatprep.subr.mxu0 0.0
  %1619 = vmatpush1.msra.mxu0 %v1533
  %1620 = vmatprep.subr.mxu0 0.0
  %1621 = vmatpush1.msra.mxu0 %v1530
  %1622 = vmatprep.subr.mxu0 0.0
  %1623 = vmatpush1.msra.mxu0 %v1527
  %1624 = vmatprep.subr.mxu0 0.0
  %1625 = vmatpush1.msra.mxu0 %v1524
  %1626 = vmatprep.subr.mxu0 0.0
  %1627 = vmatpush1.msra.mxu0 %v1521
  %1628 = vmatprep.subr.mxu0 0.0
  %1629 = vmatpush1.msra.mxu0 %v1518
  %1630 = vmatprep.subr.mxu0 0.0
  %1631 = vmatpush1.msra.mxu0 %v1515
  %1632 = vmatprep.subr.mxu0 0.0
  %1633 = vmatpush1.msra.mxu0 %v1512
  %1634 = vmatprep.subr.mxu0 0.0
  %1635 = vmatpush1.msra.mxu0 %v1509
  %1636 = vmatprep.subr.mxu0 0.0
  %1637 = vmatpush1.msra.mxu0 %v1506
  %1638 = vmatprep.subr.mxu0 0.0
  %1639 = vmatpush1.msra.mxu0 %v1503
  %1640 = vmatprep.subr.mxu0 0.0
  %1641 = vmatpush1.msra.mxu0 %v1500
  %1642 = vmatprep.subr.mxu0 0.0
  %1643 = vmatpush1.msra.mxu0 %v1497
  %1644 = vmatprep.subr.mxu0 0.0
  %1645 = vmatpush1.msra.mxu0 %v1494
  %1646 = vmatprep.subr.mxu0 0.0
  %1647 = vmatpush2.msra.mxu0 0.0
  %1648 = vmatprep.subr.mxu0 0.0
  %1649 = vmatpush2.msra.mxu0 0.0
  %1650 = vmatprep.subr.mxu0 0.0
  %1651 = vmatpush2.msra.mxu0 0.0
  %1652 = vmatprep.subr.mxu0 0.0
  %1653 = vmatpush2.msra.mxu0 0.0
  %1654 = vmatprep.subr.mxu0 0.0
  %1655 = vmatpush2.msra.mxu0 0.0
  %1656 = vmatprep.subr.mxu0 0.0
  %1657 = vmatpush2.msra.mxu0 0.0
  %1658 = vmatprep.subr.mxu0 0.0
  %1659 = vmatpush2.msra.mxu0 0.0
  %1660 = vmatprep.subr.mxu0 0.0
  %1661 = vmatpush2.msra.mxu0 0.0
  %1662 = vmatprep.subr.mxu0 0.0
  %1663 = vmatpush2.msra.mxu0 0.0
  %1664 = vmatprep.subr.mxu0 0.0
  %1665 = vmatpush2.msra.mxu0 0.0
  %1666 = vmatprep.subr.mxu0 0.0
  %1667 = vmatpush2.msra.mxu0 0.0
  %1668 = vmatprep.subr.mxu0 0.0
  %1669 = vmatpush2.msra.mxu0 0.0
  %1670 = vmatprep.subr.mxu0 0.0
  %1671 = vmatpush2.msra.mxu0 0.0
  %1672 = vmatprep.subr.mxu0 0.0
  %1673 = vmatpush2.msra.mxu0 0.0
  %1674 = vmatprep.subr.mxu0 0.0
  %1675 = vmatpush2.msra.mxu0 0.0
  %1676 = vmatprep.subr.mxu0 0.0
  %1677 = vmatpush2.msra.mxu0 0.0
  %1678 = vmatprep.mubr.f32.mxu0 0.0
  %1679 = vmatmul.mubr.f32.gmra.mxu0 %v1541
  %v1680 = vpop.f32.mrf.mxu0
  %v1681 = vadd.f32 0.0, %v1680
  %v1682 = vpop.f32.mrf.mxu0
  %1683 = vdwg.mxu0
  %v1685 = vrot.slane %v1610, 6
  %v1687 = vadd.f32 %v1264, %v1685
  %v1688 = vxor.u32 %v1687, 2147483648
  %v1689 = vmul.f32 %v1688, 1.442695
  %v1690 = vpow.pop %v1689
  %v1691 = vadd.f32 %v1690, 1.0
  %v1692 = vrcp.pop %v1691
  %v1693 = vmul.f32 1.0, %v1692
  %v1695 = vrot.slane %v1612, 6
  %v1697 = vadd.f32 %v1265, %v1695
  %v1698 = vxor.u32 %v1697, 2147483648
  %v1699 = vmul.f32 %v1698, 1.442695
  %v1700 = vpow.pop %v1699
  %v1701 = vadd.f32 %v1700, 1.0
  %v1702 = vrcp.pop %v1701
  %v1703 = vmul.f32 1.0, %v1702
  %v1704 = vadd.f32 %v1681, %v790
  %v1706 = vrot.slane %v1704, 6
  %v1708 = vmul.f32 %v1693, %v1706
  %v1709 = vadd.f32 %v1266, %v1708
  %v1710 = vtanh.pop %v1709
  %v1711 = vsub.f32 1.0, %v1703
  %v1712 = vmul.f32 %v1711, %v1710
  %v1713 = vrot.slane %v1258, 2
  %v1715 = vmul.f32 %v1703, %v1713
  %v1716 = vadd.f32 %v1712, %v1715
  %1717 = vst [vmem:[#allocation3] sm:$0x30] %v1491
  %1718 = vst [vmem:[#allocation3 + $0x18] sm:$0xc] %v1716
  %v1719 = vld [vmem:[#allocation2] sm:$0xc0]
  %v1720 = vld [vmem:[#allocation2 + $0x8] sm:$0xc0]
  %v1721 = vld [vmem:[#allocation2 + $0x10] sm:$0xc0]
  %v1722 = vld [vmem:[#allocation2 + $0x48] sm:$0x3]
  %v1723 = vld [vmem:[#allocation2 + $0x50] sm:$0x3]
  %v1724 = vld [vmem:[#allocation2 + $0x58] sm:$0x3]
  %v1725 = vld [vmem:[%s2] sm:$0xff]
  %v1726 = vld [vmem:[%s2 + $0x8] sm:$0xff]
  %v1727 = vld [vmem:[%s2 + $0x10] sm:$0xff]
  %v1728 = vld [vmem:[%s2 + $0x18] sm:$0xff]
  %v1729 = vld [vmem:[%s2 + $0x20] sm:$0xff]
  %v1730 = vld [vmem:[%s2 + $0x28] sm:$0xff]
  %v1731 = vld [vmem:[%s2 + $0x30] sm:$0xff]
  %v1732 = vld [vmem:[%s2 + $0x38] sm:$0xff]
  %v1733 = vld [vmem:[%s2 + $0x40] sm:$0xff]
  %v1734 = vld [vmem:[%s2 + $0x48] sm:$0xff]
  %v1735 = vld [vmem:[%s2 + $0x50] sm:$0xff]
  %v1736 = vld [vmem:[%s2 + $0x58] sm:$0xff]
  %v1737 = vld [vmem:[%s2 + $0x60] sm:$0xff]
  %v1738 = vld [vmem:[%s2 + $0x68] sm:$0xff]
  %v1739 = vld [vmem:[%s2 + $0x70] sm:$0xff]
  %v1740 = vld [vmem:[%s2 + $0x78] sm:$0xff]
  %v1741 = vld [vmem:[%s2 + $0x80] sm:$0xff]
  %v1742 = vld [vmem:[%s2 + $0x88] sm:$0xff]
  %v1743 = vld [vmem:[%s2 + $0x90] sm:$0xff]
  %v1744 = vld [vmem:[%s2 + $0x98] sm:$0xff]
  %v1745 = vld [vmem:[%s2 + $0xa0] sm:$0xff]
  %v1746 = vld [vmem:[%s2 + $0xa8] sm:$0xff]
  %v1747 = vld [vmem:[%s2 + $0xb0] sm:$0xff]
  %v1748 = vld [vmem:[%s2 + $0xb8] sm:$0xff]
  %v1749 = vld [vmem:[%s2 + $0xc0] sm:$0xff]
  %v1750 = vld [vmem:[%s2 + $0xc8] sm:$0xff]
  %v1751 = vld [vmem:[%s2 + $0xd0] sm:$0xff]
  %v1752 = vld [vmem:[%s2 + $0xd8] sm:$0xff]
  %v1753 = vld [vmem:[%s2 + $0xe0] sm:$0xff]
  %v1754 = vld [vmem:[%s2 + $0xe8] sm:$0xff]
  %v1755 = vld [vmem:[%s2 + $0xf0] sm:$0xff]
  %v1756 = vld [vmem:[%s2 + $0xf8] sm:$0xff]
  %v1757 = vld [vmem:[%s2 + $0x100] sm:$0xff]
  %v1758 = vld [vmem:[%s2 + $0x108] sm:$0xff]
  %v1759 = vld [vmem:[%s2 + $0x110] sm:$0xff]
  %v1760 = vld [vmem:[%s2 + $0x118] sm:$0xff]
  %v1761 = vld [vmem:[%s2 + $0x120] sm:$0xff]
  %v1762 = vld [vmem:[%s2 + $0x128] sm:$0xff]
  %v1763 = vld [vmem:[%s2 + $0x130] sm:$0xff]
  %v1764 = vld [vmem:[%s2 + $0x138] sm:$0xff]
  %v1765 = vld [vmem:[%s2 + $0x140] sm:$0xff]
  %v1766 = vld [vmem:[%s2 + $0x148] sm:$0xff]
  %v1767 = vld [vmem:[%s2 + $0x150] sm:$0xff]
  %v1768 = vld [vmem:[%s2 + $0x158] sm:$0xff]
  %v1769 = vld [vmem:[%s2 + $0x160] sm:$0xff]
  %v1770 = vld [vmem:[%s2 + $0x168] sm:$0xff]
  %v1771 = vld [vmem:[%s2 + $0x170] sm:$0xff]
  %v1772 = vld [vmem:[%s2 + $0x178] sm:$0xff]
  %v1774 = vrot.slane %v1491, 4
  %1776 = vmatprep.subr.mxu0 %v1771
  %1777 = vmatpush1.msra.mxu0 %v1770
  %1778 = vmatprep.subr.mxu0 %v1768
  %1779 = vmatpush1.msra.mxu0 %v1767
  %1780 = vmatprep.subr.mxu0 %v1765
  %1781 = vmatpush1.msra.mxu0 %v1764
  %1782 = vmatprep.subr.mxu0 %v1762
  %1783 = vmatpush1.msra.mxu0 %v1761
  %1784 = vmatprep.subr.mxu0 %v1759
  %1785 = vmatpush1.msra.mxu0 %v1758
  %1786 = vmatprep.subr.mxu0 %v1756
  %1787 = vmatpush1.msra.mxu0 %v1755
  %1788 = vmatprep.subr.mxu0 %v1753
  %1789 = vmatpush1.msra.mxu0 %v1752
  %1790 = vmatprep.subr.mxu0 %v1750
  %1791 = vmatpush1.msra.mxu0 %v1749
  %1792 = vmatprep.subr.mxu0 %v1747
  %1793 = vmatpush1.msra.mxu0 %v1746
  %1794 = vmatprep.subr.mxu0 %v1744
  %1795 = vmatpush1.msra.mxu0 %v1743
  %1796 = vmatprep.subr.mxu0 %v1741
  %1797 = vmatpush1.msra.mxu0 %v1740
  %1798 = vmatprep.subr.mxu0 %v1738
  %1799 = vmatpush1.msra.mxu0 %v1737
  %1800 = vmatprep.subr.mxu0 %v1735
  %1801 = vmatpush1.msra.mxu0 %v1734
  %1802 = vmatprep.subr.mxu0 %v1732
  %1803 = vmatpush1.msra.mxu0 %v1731
  %1804 = vmatprep.subr.mxu0 %v1729
  %1805 = vmatpush1.msra.mxu0 %v1728
  %1806 = vmatprep.subr.mxu0 %v1726
  %1807 = vmatpush1.msra.mxu0 %v1725
  %1808 = vmatprep.subr.mxu0 0.0
  %1809 = vmatpush2.msra.mxu0 0.0
  %1810 = vmatprep.subr.mxu0 0.0
  %1811 = vmatpush2.msra.mxu0 0.0
  %1812 = vmatprep.subr.mxu0 0.0
  %1813 = vmatpush2.msra.mxu0 0.0
  %1814 = vmatprep.subr.mxu0 0.0
  %1815 = vmatpush2.msra.mxu0 0.0
  %1816 = vmatprep.subr.mxu0 0.0
  %1817 = vmatpush2.msra.mxu0 0.0
  %1818 = vmatprep.subr.mxu0 0.0
  %1819 = vmatpush2.msra.mxu0 0.0
  %1820 = vmatprep.subr.mxu0 0.0
  %1821 = vmatpush2.msra.mxu0 0.0
  %1822 = vmatprep.subr.mxu0 0.0
  %1823 = vmatpush2.msra.mxu0 0.0
  %1824 = vmatprep.subr.mxu0 0.0
  %1825 = vmatpush2.msra.mxu0 0.0
  %1826 = vmatprep.subr.mxu0 0.0
  %1827 = vmatpush2.msra.mxu0 0.0
  %1828 = vmatprep.subr.mxu0 0.0
  %1829 = vmatpush2.msra.mxu0 0.0
  %1830 = vmatprep.subr.mxu0 0.0
  %1831 = vmatpush2.msra.mxu0 0.0
  %1832 = vmatprep.subr.mxu0 0.0
  %1833 = vmatpush2.msra.mxu0 0.0
  %1834 = vmatprep.subr.mxu0 0.0
  %1835 = vmatpush2.msra.mxu0 0.0
  %1836 = vmatprep.subr.mxu0 0.0
  %1837 = vmatpush2.msra.mxu0 0.0
  %1838 = vmatprep.subr.mxu0 0.0
  %1839 = vmatpush2.msra.mxu0 0.0
  %1840 = vmatprep.mubr.f32.mxu0 0.0
  %1841 = vmatmul.mubr.f32.gmra.mxu0 %v1774
  %v1842 = vpop.f32.mrf.mxu0
  %v1843 = vadd.f32 0.0, %v1842
  %v1844 = vpop.f32.mrf.mxu0
  %v1845 = vadd.f32 0.0, %v1844
  %1846 = vdwg.mxu0
  %1847 = vmatprep.subr.mxu0 0.0
  %1848 = vmatpush1.msra.mxu0 %v1772
  %1849 = vmatprep.subr.mxu0 0.0
  %1850 = vmatpush1.msra.mxu0 %v1769
  %1851 = vmatprep.subr.mxu0 0.0
  %1852 = vmatpush1.msra.mxu0 %v1766
  %1853 = vmatprep.subr.mxu0 0.0
  %1854 = vmatpush1.msra.mxu0 %v1763
  %1855 = vmatprep.subr.mxu0 0.0
  %1856 = vmatpush1.msra.mxu0 %v1760
  %1857 = vmatprep.subr.mxu0 0.0
  %1858 = vmatpush1.msra.mxu0 %v1757
  %1859 = vmatprep.subr.mxu0 0.0
  %1860 = vmatpush1.msra.mxu0 %v1754
  %1861 = vmatprep.subr.mxu0 0.0
  %1862 = vmatpush1.msra.mxu0 %v1751
  %1863 = vmatprep.subr.mxu0 0.0
  %1864 = vmatpush1.msra.mxu0 %v1748
  %1865 = vmatprep.subr.mxu0 0.0
  %1866 = vmatpush1.msra.mxu0 %v1745
  %1867 = vmatprep.subr.mxu0 0.0
  %1868 = vmatpush1.msra.mxu0 %v1742
  %1869 = vmatprep.subr.mxu0 0.0
  %1870 = vmatpush1.msra.mxu0 %v1739
  %1871 = vmatprep.subr.mxu0 0.0
  %1872 = vmatpush1.msra.mxu0 %v1736
  %1873 = vmatprep.subr.mxu0 0.0
  %1874 = vmatpush1.msra.mxu0 %v1733
  %1875 = vmatprep.subr.mxu0 0.0
  %1876 = vmatpush1.msra.mxu0 %v1730
  %1877 = vmatprep.subr.mxu0 0.0
  %1878 = vmatpush1.msra.mxu0 %v1727
  %1879 = vmatprep.subr.mxu0 0.0
  %1880 = vmatpush2.msra.mxu0 0.0
  %1881 = vmatprep.subr.mxu0 0.0
  %1882 = vmatpush2.msra.mxu0 0.0
  %1883 = vmatprep.subr.mxu0 0.0
  %1884 = vmatpush2.msra.mxu0 0.0
  %1885 = vmatprep.subr.mxu0 0.0
  %1886 = vmatpush2.msra.mxu0 0.0
  %1887 = vmatprep.subr.mxu0 0.0
  %1888 = vmatpush2.msra.mxu0 0.0
  %1889 = vmatprep.subr.mxu0 0.0
  %1890 = vmatpush2.msra.mxu0 0.0
  %1891 = vmatprep.subr.mxu0 0.0
  %1892 = vmatpush2.msra.mxu0 0.0
  %1893 = vmatprep.subr.mxu0 0.0
  %1894 = vmatpush2.msra.mxu0 0.0
  %1895 = vmatprep.subr.mxu0 0.0
  %1896 = vmatpush2.msra.mxu0 0.0
  %1897 = vmatprep.subr.mxu0 0.0
  %1898 = vmatpush2.msra.mxu0 0.0
  %1899 = vmatprep.subr.mxu0 0.0
  %1900 = vmatpush2.msra.mxu0 0.0
  %1901 = vmatprep.subr.mxu0 0.0
  %1902 = vmatpush2.msra.mxu0 0.0
  %1903 = vmatprep.subr.mxu0 0.0
  %1904 = vmatpush2.msra.mxu0 0.0
  %1905 = vmatprep.subr.mxu0 0.0
  %1906 = vmatpush2.msra.mxu0 0.0
  %1907 = vmatprep.subr.mxu0 0.0
  %1908 = vmatpush2.msra.mxu0 0.0
  %1909 = vmatprep.subr.mxu0 0.0
  %1910 = vmatpush2.msra.mxu0 0.0
  %1911 = vmatprep.mubr.f32.mxu0 0.0
  %1912 = vmatmul.mubr.f32.gmra.mxu0 %v1774
  %v1913 = vpop.f32.mrf.mxu0
  %v1914 = vadd.f32 0.0, %v1913
  %v1915 = vpop.f32.mrf.mxu0
  %1916 = vdwg.mxu0
  %v1918 = vrot.slane %v1843, 2
  %v1920 = vadd.f32 %v1719, %v1918
  %v1921 = vxor.u32 %v1920, 2147483648
  %v1922 = vmul.f32 %v1921, 1.442695
  %v1923 = vpow.pop %v1922
  %v1924 = vadd.f32 %v1923, 1.0
  %v1925 = vrcp.pop %v1924
  %v1926 = vmul.f32 1.0, %v1925
  %v1928 = vrot.slane %v1845, 2
  %v1930 = vadd.f32 %v1720, %v1928
  %v1931 = vxor.u32 %v1930, 2147483648
  %v1932 = vmul.f32 %v1931, 1.442695
  %v1933 = vpow.pop %v1932
  %v1934 = vadd.f32 %v1933, 1.0
  %v1935 = vrcp.pop %v1934
  %v1936 = vmul.f32 1.0, %v1935
  %v1937 = vadd.f32 %v1914, %v567
  %v1939 = vrot.slane %v1937, 2
  %v1941 = vmul.f32 %v1926, %v1939
  %v1942 = vadd.f32 %v1721, %v1941
  %v1943 = vtanh.pop %v1942
  %v1944 = vsub.f32 1.0, %v1936
  %v1945 = vmul.f32 %v1944, %v1943
  %v1946 = vrot.slane %v1491, 6
  %v1948 = vmul.f32 %v1936, %v1946
  %v1949 = vadd.f32 %v1945, %v1948
  %v1950 = vld [vmem:[%s3] sm:$0xff]
  %v1951 = vld [vmem:[%s3 + $0x8] sm:$0xff]
  %v1952 = vld [vmem:[%s3 + $0x10] sm:$0xff]
  %v1953 = vld [vmem:[%s3 + $0x18] sm:$0xff]
  %v1954 = vld [vmem:[%s3 + $0x20] sm:$0xff]
  %v1955 = vld [vmem:[%s3 + $0x28] sm:$0xff]
  %v1956 = vld [vmem:[%s3 + $0x30] sm:$0xff]
  %v1957 = vld [vmem:[%s3 + $0x38] sm:$0xff]
  %v1958 = vld [vmem:[%s3 + $0x40] sm:$0xff]
  %v1959 = vld [vmem:[%s3 + $0x48] sm:$0xff]
  %v1960 = vld [vmem:[%s3 + $0x50] sm:$0xff]
  %v1961 = vld [vmem:[%s3 + $0x58] sm:$0xff]
  %v1962 = vld [vmem:[%s3 + $0x60] sm:$0xff]
  %v1963 = vld [vmem:[%s3 + $0x68] sm:$0xff]
  %v1964 = vld [vmem:[%s3 + $0x70] sm:$0xff]
  %v1965 = vld [vmem:[%s3 + $0x78] sm:$0xff]
  %v1966 = vld [vmem:[%s3 + $0x80] sm:$0xff]
  %v1967 = vld [vmem:[%s3 + $0x88] sm:$0xff]
  %v1968 = vld [vmem:[%s3 + $0x90] sm:$0xff]
  %v1969 = vld [vmem:[%s3 + $0x98] sm:$0xff]
  %v1970 = vld [vmem:[%s3 + $0xa0] sm:$0xff]
  %v1971 = vld [vmem:[%s3 + $0xa8] sm:$0xff]
  %v1972 = vld [vmem:[%s3 + $0xb0] sm:$0xff]
  %v1973 = vld [vmem:[%s3 + $0xb8] sm:$0xff]
  %v1974 = vld [vmem:[%s3 + $0xc0] sm:$0xff]
  %v1975 = vld [vmem:[%s3 + $0xc8] sm:$0xff]
  %v1976 = vld [vmem:[%s3 + $0xd0] sm:$0xff]
  %v1977 = vld [vmem:[%s3 + $0xd8] sm:$0xff]
  %v1978 = vld [vmem:[%s3 + $0xe0] sm:$0xff]
  %v1979 = vld [vmem:[%s3 + $0xe8] sm:$0xff]
  %v1980 = vld [vmem:[%s3 + $0xf0] sm:$0xff]
  %v1981 = vld [vmem:[%s3 + $0xf8] sm:$0xff]
  %v1982 = vld [vmem:[%s3 + $0x100] sm:$0xff]
  %v1983 = vld [vmem:[%s3 + $0x108] sm:$0xff]
  %v1984 = vld [vmem:[%s3 + $0x110] sm:$0xff]
  %v1985 = vld [vmem:[%s3 + $0x118] sm:$0xff]
  %v1986 = vld [vmem:[%s3 + $0x120] sm:$0xff]
  %v1987 = vld [vmem:[%s3 + $0x128] sm:$0xff]
  %v1988 = vld [vmem:[%s3 + $0x130] sm:$0xff]
  %v1989 = vld [vmem:[%s3 + $0x138] sm:$0xff]
  %v1990 = vld [vmem:[%s3 + $0x140] sm:$0xff]
  %v1991 = vld [vmem:[%s3 + $0x148] sm:$0xff]
  %v1992 = vld [vmem:[%s3 + $0x150] sm:$0xff]
  %v1993 = vld [vmem:[%s3 + $0x158] sm:$0xff]
  %v1994 = vld [vmem:[%s3 + $0x160] sm:$0xff]
  %v1995 = vld [vmem:[%s3 + $0x168] sm:$0xff]
  %v1996 = vld [vmem:[%s3 + $0x170] sm:$0xff]
  %v1997 = vld [vmem:[%s3 + $0x178] sm:$0xff]
  %v1999 = vrot.slane %v1716, 2
  %2001 = vmatprep.subr.mxu0 %v1996
  %2002 = vmatpush1.msra.mxu0 %v1995
  %2003 = vmatprep.subr.mxu0 %v1993
  %2004 = vmatpush1.msra.mxu0 %v1992
  %2005 = vmatprep.subr.mxu0 %v1990
  %2006 = vmatpush1.msra.mxu0 %v1989
  %2007 = vmatprep.subr.mxu0 %v1987
  %2008 = vmatpush1.msra.mxu0 %v1986
  %2009 = vmatprep.subr.mxu0 %v1984
  %2010 = vmatpush1.msra.mxu0 %v1983
  %2011 = vmatprep.subr.mxu0 %v1981
  %2012 = vmatpush1.msra.mxu0 %v1980
  %2013 = vmatprep.subr.mxu0 %v1978
  %2014 = vmatpush1.msra.mxu0 %v1977
  %2015 = vmatprep.subr.mxu0 %v1975
  %2016 = vmatpush1.msra.mxu0 %v1974
  %2017 = vmatprep.subr.mxu0 %v1972
  %2018 = vmatpush1.msra.mxu0 %v1971
  %2019 = vmatprep.subr.mxu0 %v1969
  %2020 = vmatpush1.msra.mxu0 %v1968
  %2021 = vmatprep.subr.mxu0 %v1966
  %2022 = vmatpush1.msra.mxu0 %v1965
  %2023 = vmatprep.subr.mxu0 %v1963
  %2024 = vmatpush1.msra.mxu0 %v1962
  %2025 = vmatprep.subr.mxu0 %v1960
  %2026 = vmatpush1.msra.mxu0 %v1959
  %2027 = vmatprep.subr.mxu0 %v1957
  %2028 = vmatpush1.msra.mxu0 %v1956
  %2029 = vmatprep.subr.mxu0 %v1954
  %2030 = vmatpush1.msra.mxu0 %v1953
  %2031 = vmatprep.subr.mxu0 %v1951
  %2032 = vmatpush1.msra.mxu0 %v1950
  %2033 = vmatprep.subr.mxu0 0.0
  %2034 = vmatpush2.msra.mxu0 0.0
  %2035 = vmatprep.subr.mxu0 0.0
  %2036 = vmatpush2.msra.mxu0 0.0
  %2037 = vmatprep.subr.mxu0 0.0
  %2038 = vmatpush2.msra.mxu0 0.0
  %2039 = vmatprep.subr.mxu0 0.0
  %2040 = vmatpush2.msra.mxu0 0.0
  %2041 = vmatprep.subr.mxu0 0.0
  %2042 = vmatpush2.msra.mxu0 0.0
  %2043 = vmatprep.subr.mxu0 0.0
  %2044 = vmatpush2.msra.mxu0 0.0
  %2045 = vmatprep.subr.mxu0 0.0
  %2046 = vmatpush2.msra.mxu0 0.0
  %2047 = vmatprep.subr.mxu0 0.0
  %2048 = vmatpush2.msra.mxu0 0.0
  %2049 = vmatprep.subr.mxu0 0.0
  %2050 = vmatpush2.msra.mxu0 0.0
  %2051 = vmatprep.subr.mxu0 0.0
  %2052 = vmatpush2.msra.mxu0 0.0
  %2053 = vmatprep.subr.mxu0 0.0
  %2054 = vmatpush2.msra.mxu0 0.0
  %2055 = vmatprep.subr.mxu0 0.0
  %2056 = vmatpush2.msra.mxu0 0.0
  %2057 = vmatprep.subr.mxu0 0.0
  %2058 = vmatpush2.msra.mxu0 0.0
  %2059 = vmatprep.subr.mxu0 0.0
  %2060 = vmatpush2.msra.mxu0 0.0
  %2061 = vmatprep.subr.mxu0 0.0
  %2062 = vmatpush2.msra.mxu0 0.0
  %2063 = vmatprep.subr.mxu0 0.0
  %2064 = vmatpush2.msra.mxu0 0.0
  %2065 = vmatprep.mubr.f32.mxu0 0.0
  %2066 = vmatmul.mubr.f32.gmra.mxu0 %v1999
  %v2067 = vpop.f32.mrf.mxu0
  %v2068 = vadd.f32 0.0, %v2067
  %v2069 = vpop.f32.mrf.mxu0
  %v2070 = vadd.f32 0.0, %v2069
  %2071 = vdwg.mxu0
  %2072 = vmatprep.subr.mxu0 0.0
  %2073 = vmatpush1.msra.mxu0 %v1997
  %2074 = vmatprep.subr.mxu0 0.0
  %2075 = vmatpush1.msra.mxu0 %v1994
  %2076 = vmatprep.subr.mxu0 0.0
  %2077 = vmatpush1.msra.mxu0 %v1991
  %2078 = vmatprep.subr.mxu0 0.0
  %2079 = vmatpush1.msra.mxu0 %v1988
  %2080 = vmatprep.subr.mxu0 0.0
  %2081 = vmatpush1.msra.mxu0 %v1985
  %2082 = vmatprep.subr.mxu0 0.0
  %2083 = vmatpush1.msra.mxu0 %v1982
  %2084 = vmatprep.subr.mxu0 0.0
  %2085 = vmatpush1.msra.mxu0 %v1979
  %2086 = vmatprep.subr.mxu0 0.0
  %2087 = vmatpush1.msra.mxu0 %v1976
  %2088 = vmatprep.subr.mxu0 0.0
  %2089 = vmatpush1.msra.mxu0 %v1973
  %2090 = vmatprep.subr.mxu0 0.0
  %2091 = vmatpush1.msra.mxu0 %v1970
  %2092 = vmatprep.subr.mxu0 0.0
  %2093 = vmatpush1.msra.mxu0 %v1967
  %2094 = vmatprep.subr.mxu0 0.0
  %2095 = vmatpush1.msra.mxu0 %v1964
  %2096 = vmatprep.subr.mxu0 0.0
  %2097 = vmatpush1.msra.mxu0 %v1961
  %2098 = vmatprep.subr.mxu0 0.0
  %2099 = vmatpush1.msra.mxu0 %v1958
  %2100 = vmatprep.subr.mxu0 0.0
  %2101 = vmatpush1.msra.mxu0 %v1955
  %2102 = vmatprep.subr.mxu0 0.0
  %2103 = vmatpush1.msra.mxu0 %v1952
  %2104 = vmatprep.subr.mxu0 0.0
  %2105 = vmatpush2.msra.mxu0 0.0
  %2106 = vmatprep.subr.mxu0 0.0
  %2107 = vmatpush2.msra.mxu0 0.0
  %2108 = vmatprep.subr.mxu0 0.0
  %2109 = vmatpush2.msra.mxu0 0.0
  %2110 = vmatprep.subr.mxu0 0.0
  %2111 = vmatpush2.msra.mxu0 0.0
  %2112 = vmatprep.subr.mxu0 0.0
  %2113 = vmatpush2.msra.mxu0 0.0
  %2114 = vmatprep.subr.mxu0 0.0
  %2115 = vmatpush2.msra.mxu0 0.0
  %2116 = vmatprep.subr.mxu0 0.0
  %2117 = vmatpush2.msra.mxu0 0.0
  %2118 = vmatprep.subr.mxu0 0.0
  %2119 = vmatpush2.msra.mxu0 0.0
  %2120 = vmatprep.subr.mxu0 0.0
  %2121 = vmatpush2.msra.mxu0 0.0
  %2122 = vmatprep.subr.mxu0 0.0
  %2123 = vmatpush2.msra.mxu0 0.0
  %2124 = vmatprep.subr.mxu0 0.0
  %2125 = vmatpush2.msra.mxu0 0.0
  %2126 = vmatprep.subr.mxu0 0.0
  %2127 = vmatpush2.msra.mxu0 0.0
  %2128 = vmatprep.subr.mxu0 0.0
  %2129 = vmatpush2.msra.mxu0 0.0
  %2130 = vmatprep.subr.mxu0 0.0
  %2131 = vmatpush2.msra.mxu0 0.0
  %2132 = vmatprep.subr.mxu0 0.0
  %2133 = vmatpush2.msra.mxu0 0.0
  %2134 = vmatprep.subr.mxu0 0.0
  %2135 = vmatpush2.msra.mxu0 0.0
  %2136 = vmatprep.mubr.f32.mxu0 0.0
  %2137 = vmatmul.mubr.f32.gmra.mxu0 %v1999
  %v2138 = vpop.f32.mrf.mxu0
  %v2139 = vadd.f32 0.0, %v2138
  %v2140 = vpop.f32.mrf.mxu0
  %2141 = vdwg.mxu0
  %v2142 = vadd.f32 %v1722, %v2068
  %v2143 = vxor.u32 %v2142, 2147483648
  %v2144 = vmul.f32 %v2143, 1.442695
  %v2145 = vpow.pop %v2144
  %v2146 = vadd.f32 %v2145, 1.0
  %v2147 = vrcp.pop %v2146
  %v2148 = vmul.f32 1.0, %v2147
  %v2149 = vadd.f32 %v1723, %v2070
  %v2150 = vxor.u32 %v2149, 2147483648
  %v2151 = vmul.f32 %v2150, 1.442695
  %v2152 = vpow.pop %v2151
  %v2153 = vadd.f32 %v2152, 1.0
  %v2154 = vrcp.pop %v2153
  %v2155 = vmul.f32 1.0, %v2154
  %v2156 = vadd.f32 %v2139, %v790
  %v2157 = vmul.f32 %v2148, %v2156
  %v2158 = vadd.f32 %v1724, %v2157
  %v2159 = vtanh.pop %v2158
  %v2160 = vsub.f32 1.0, %v2155
  %v2161 = vmul.f32 %v2160, %v2159
  %v2162 = vmul.f32 %v2155, %v1999
  %v2163 = vadd.f32 %v2161, %v2162
  %2164 = vst [vmem:[#allocation3] sm:$0xc0] %v1949
  %2165 = vst [vmem:[#allocation3 + $0x18] sm:$0x3] %v2163
  %v2166 = vld [vmem:[#allocation2 + $0x30] sm:$0x3]
  %v2167 = vld [vmem:[#allocation2 + $0x38] sm:$0x3]
  %v2168 = vld [vmem:[#allocation2 + $0x40] sm:$0x3]
  %v2169 = vld [vmem:[#allocation2 + $0x18] sm:$0xc0]
  %v2170 = vld [vmem:[#allocation2 + $0x20] sm:$0xc0]
  %v2171 = vld [vmem:[#allocation2 + $0x28] sm:$0xc0]
  %v2172 = vld [vmem:[%s2] sm:$0xff]
  %v2173 = vld [vmem:[%s2 + $0x8] sm:$0xff]
  %v2174 = vld [vmem:[%s2 + $0x10] sm:$0xff]
  %v2175 = vld [vmem:[%s2 + $0x18] sm:$0xff]
  %v2176 = vld [vmem:[%s2 + $0x20] sm:$0xff]
  %v2177 = vld [vmem:[%s2 + $0x28] sm:$0xff]
  %v2178 = vld [vmem:[%s2 + $0x30] sm:$0xff]
  %v2179 = vld [vmem:[%s2 + $0x38] sm:$0xff]
  %v2180 = vld [vmem:[%s2 + $0x40] sm:$0xff]
  %v2181 = vld [vmem:[%s2 + $0x48] sm:$0xff]
  %v2182 = vld [vmem:[%s2 + $0x50] sm:$0xff]
  %v2183 = vld [vmem:[%s2 + $0x58] sm:$0xff]
  %v2184 = vld [vmem:[%s2 + $0x60] sm:$0xff]
  %v2185 = vld [vmem:[%s2 + $0x68] sm:$0xff]
  %v2186 = vld [vmem:[%s2 + $0x70] sm:$0xff]
  %v2187 = vld [vmem:[%s2 + $0x78] sm:$0xff]
  %v2188 = vld [vmem:[%s2 + $0x80] sm:$0xff]
  %v2189 = vld [vmem:[%s2 + $0x88] sm:$0xff]
  %v2190 = vld [vmem:[%s2 + $0x90] sm:$0xff]
  %v2191 = vld [vmem:[%s2 + $0x98] sm:$0xff]
  %v2192 = vld [vmem:[%s2 + $0xa0] sm:$0xff]
  %v2193 = vld [vmem:[%s2 + $0xa8] sm:$0xff]
  %v2194 = vld [vmem:[%s2 + $0xb0] sm:$0xff]
  %v2195 = vld [vmem:[%s2 + $0xb8] sm:$0xff]
  %v2196 = vld [vmem:[%s2 + $0xc0] sm:$0xff]
  %v2197 = vld [vmem:[%s2 + $0xc8] sm:$0xff]
  %v2198 = vld [vmem:[%s2 + $0xd0] sm:$0xff]
  %v2199 = vld [vmem:[%s2 + $0xd8] sm:$0xff]
  %v2200 = vld [vmem:[%s2 + $0xe0] sm:$0xff]
  %v2201 = vld [vmem:[%s2 + $0xe8] sm:$0xff]
  %v2202 = vld [vmem:[%s2 + $0xf0] sm:$0xff]
  %v2203 = vld [vmem:[%s2 + $0xf8] sm:$0xff]
  %v2204 = vld [vmem:[%s2 + $0x100] sm:$0xff]
  %v2205 = vld [vmem:[%s2 + $0x108] sm:$0xff]
  %v2206 = vld [vmem:[%s2 + $0x110] sm:$0xff]
  %v2207 = vld [vmem:[%s2 + $0x118] sm:$0xff]
  %v2208 = vld [vmem:[%s2 + $0x120] sm:$0xff]
  %v2209 = vld [vmem:[%s2 + $0x128] sm:$0xff]
  %v2210 = vld [vmem:[%s2 + $0x130] sm:$0xff]
  %v2211 = vld [vmem:[%s2 + $0x138] sm:$0xff]
  %v2212 = vld [vmem:[%s2 + $0x140] sm:$0xff]
  %v2213 = vld [vmem:[%s2 + $0x148] sm:$0xff]
  %v2214 = vld [vmem:[%s2 + $0x150] sm:$0xff]
  %v2215 = vld [vmem:[%s2 + $0x158] sm:$0xff]
  %v2216 = vld [vmem:[%s2 + $0x160] sm:$0xff]
  %v2217 = vld [vmem:[%s2 + $0x168] sm:$0xff]
  %v2218 = vld [vmem:[%s2 + $0x170] sm:$0xff]
  %v2219 = vld [vmem:[%s2 + $0x178] sm:$0xff]
  %v2221 = vrot.slane %v1949, 6
  %2223 = vmatprep.subr.mxu0 %v2218
  %2224 = vmatpush1.msra.mxu0 %v2217
  %2225 = vmatprep.subr.mxu0 %v2215
  %2226 = vmatpush1.msra.mxu0 %v2214
  %2227 = vmatprep.subr.mxu0 %v2212
  %2228 = vmatpush1.msra.mxu0 %v2211
  %2229 = vmatprep.subr.mxu0 %v2209
  %2230 = vmatpush1.msra.mxu0 %v2208
  %2231 = vmatprep.subr.mxu0 %v2206
  %2232 = vmatpush1.msra.mxu0 %v2205
  %2233 = vmatprep.subr.mxu0 %v2203
  %2234 = vmatpush1.msra.mxu0 %v2202
  %2235 = vmatprep.subr.mxu0 %v2200
  %2236 = vmatpush1.msra.mxu0 %v2199
  %2237 = vmatprep.subr.mxu0 %v2197
  %2238 = vmatpush1.msra.mxu0 %v2196
  %2239 = vmatprep.subr.mxu0 %v2194
  %2240 = vmatpush1.msra.mxu0 %v2193
  %2241 = vmatprep.subr.mxu0 %v2191
  %2242 = vmatpush1.msra.mxu0 %v2190
  %2243 = vmatprep.subr.mxu0 %v2188
  %2244 = vmatpush1.msra.mxu0 %v2187
  %2245 = vmatprep.subr.mxu0 %v2185
  %2246 = vmatpush1.msra.mxu0 %v2184
  %2247 = vmatprep.subr.mxu0 %v2182
  %2248 = vmatpush1.msra.mxu0 %v2181
  %2249 = vmatprep.subr.mxu0 %v2179
  %2250 = vmatpush1.msra.mxu0 %v2178
  %2251 = vmatprep.subr.mxu0 %v2176
  %2252 = vmatpush1.msra.mxu0 %v2175
  %2253 = vmatprep.subr.mxu0 %v2173
  %2254 = vmatpush1.msra.mxu0 %v2172
  %2255 = vmatprep.subr.mxu0 0.0
  %2256 = vmatpush2.msra.mxu0 0.0
  %2257 = vmatprep.subr.mxu0 0.0
  %2258 = vmatpush2.msra.mxu0 0.0
  %2259 = vmatprep.subr.mxu0 0.0
  %2260 = vmatpush2.msra.mxu0 0.0
  %2261 = vmatprep.subr.mxu0 0.0
  %2262 = vmatpush2.msra.mxu0 0.0
  %2263 = vmatprep.subr.mxu0 0.0
  %2264 = vmatpush2.msra.mxu0 0.0
  %2265 = vmatprep.subr.mxu0 0.0
  %2266 = vmatpush2.msra.mxu0 0.0
  %2267 = vmatprep.subr.mxu0 0.0
  %2268 = vmatpush2.msra.mxu0 0.0
  %2269 = vmatprep.subr.mxu0 0.0
  %2270 = vmatpush2.msra.mxu0 0.0
  %2271 = vmatprep.subr.mxu0 0.0
  %2272 = vmatpush2.msra.mxu0 0.0
  %2273 = vmatprep.subr.mxu0 0.0
  %2274 = vmatpush2.msra.mxu0 0.0
  %2275 = vmatprep.subr.mxu0 0.0
  %2276 = vmatpush2.msra.mxu0 0.0
  %2277 = vmatprep.subr.mxu0 0.0
  %2278 = vmatpush2.msra.mxu0 0.0
  %2279 = vmatprep.subr.mxu0 0.0
  %2280 = vmatpush2.msra.mxu0 0.0
  %2281 = vmatprep.subr.mxu0 0.0
  %2282 = vmatpush2.msra.mxu0 0.0
  %2283 = vmatprep.subr.mxu0 0.0
  %2284 = vmatpush2.msra.mxu0 0.0
  %2285 = vmatprep.subr.mxu0 0.0
  %2286 = vmatpush2.msra.mxu0 0.0
  %2287 = vmatprep.mubr.f32.mxu0 0.0
  %2288 = vmatmul.mubr.f32.gmra.mxu0 %v2221
  %v2289 = vpop.f32.mrf.mxu0
  %v2290 = vadd.f32 0.0, %v2289
  %v2291 = vpop.f32.mrf.mxu0
  %v2292 = vadd.f32 0.0, %v2291
  %2293 = vdwg.mxu0
  %2294 = vmatprep.subr.mxu0 0.0
  %2295 = vmatpush1.msra.mxu0 %v2219
  %2296 = vmatprep.subr.mxu0 0.0
  %2297 = vmatpush1.msra.mxu0 %v2216
  %2298 = vmatprep.subr.mxu0 0.0
  %2299 = vmatpush1.msra.mxu0 %v2213
  %2300 = vmatprep.subr.mxu0 0.0
  %2301 = vmatpush1.msra.mxu0 %v2210
  %2302 = vmatprep.subr.mxu0 0.0
  %2303 = vmatpush1.msra.mxu0 %v2207
  %2304 = vmatprep.subr.mxu0 0.0
  %2305 = vmatpush1.msra.mxu0 %v2204
  %2306 = vmatprep.subr.mxu0 0.0
  %2307 = vmatpush1.msra.mxu0 %v2201
  %2308 = vmatprep.subr.mxu0 0.0
  %2309 = vmatpush1.msra.mxu0 %v2198
  %2310 = vmatprep.subr.mxu0 0.0
  %2311 = vmatpush1.msra.mxu0 %v2195
  %2312 = vmatprep.subr.mxu0 0.0
  %2313 = vmatpush1.msra.mxu0 %v2192
  %2314 = vmatprep.subr.mxu0 0.0
  %2315 = vmatpush1.msra.mxu0 %v2189
  %2316 = vmatprep.subr.mxu0 0.0
  %2317 = vmatpush1.msra.mxu0 %v2186
  %2318 = vmatprep.subr.mxu0 0.0
  %2319 = vmatpush1.msra.mxu0 %v2183
  %2320 = vmatprep.subr.mxu0 0.0
  %2321 = vmatpush1.msra.mxu0 %v2180
  %2322 = vmatprep.subr.mxu0 0.0
  %2323 = vmatpush1.msra.mxu0 %v2177
  %2324 = vmatprep.subr.mxu0 0.0
  %2325 = vmatpush1.msra.mxu0 %v2174
  %2326 = vmatprep.subr.mxu0 0.0
  %2327 = vmatpush2.msra.mxu0 0.0
  %2328 = vmatprep.subr.mxu0 0.0
  %2329 = vmatpush2.msra.mxu0 0.0
  %2330 = vmatprep.subr.mxu0 0.0
  %2331 = vmatpush2.msra.mxu0 0.0
  %2332 = vmatprep.subr.mxu0 0.0
  %2333 = vmatpush2.msra.mxu0 0.0
  %2334 = vmatprep.subr.mxu0 0.0
  %2335 = vmatpush2.msra.mxu0 0.0
  %2336 = vmatprep.subr.mxu0 0.0
  %2337 = vmatpush2.msra.mxu0 0.0
  %2338 = vmatprep.subr.mxu0 0.0
  %2339 = vmatpush2.msra.mxu0 0.0
  %2340 = vmatprep.subr.mxu0 0.0
  %2341 = vmatpush2.msra.mxu0 0.0
  %2342 = vmatprep.subr.mxu0 0.0
  %2343 = vmatpush2.msra.mxu0 0.0
  %2344 = vmatprep.subr.mxu0 0.0
  %2345 = vmatpush2.msra.mxu0 0.0
  %2346 = vmatprep.subr.mxu0 0.0
  %2347 = vmatpush2.msra.mxu0 0.0
  %2348 = vmatprep.subr.mxu0 0.0
  %2349 = vmatpush2.msra.mxu0 0.0
  %2350 = vmatprep.subr.mxu0 0.0
  %2351 = vmatpush2.msra.mxu0 0.0
  %2352 = vmatprep.subr.mxu0 0.0
  %2353 = vmatpush2.msra.mxu0 0.0
  %2354 = vmatprep.subr.mxu0 0.0
  %2355 = vmatpush2.msra.mxu0 0.0
  %2356 = vmatprep.subr.mxu0 0.0
  %2357 = vmatpush2.msra.mxu0 0.0
  %2358 = vmatprep.mubr.f32.mxu0 0.0
  %2359 = vmatmul.mubr.f32.gmra.mxu0 %v2221
  %v2360 = vpop.f32.mrf.mxu0
  %v2361 = vadd.f32 0.0, %v2360
  %v2362 = vpop.f32.mrf.mxu0
  %2363 = vdwg.mxu0
  %v2364 = vadd.f32 %v2166, %v2290
  %v2365 = vxor.u32 %v2364, 2147483648
  %v2366 = vmul.f32 %v2365, 1.442695
  %v2367 = vpow.pop %v2366
  %v2368 = vadd.f32 %v2367, 1.0
  %v2369 = vrcp.pop %v2368
  %v2370 = vmul.f32 1.0, %v2369
  %v2371 = vadd.f32 %v2167, %v2292
  %v2372 = vxor.u32 %v2371, 2147483648
  %v2373 = vmul.f32 %v2372, 1.442695
  %v2374 = vpow.pop %v2373
  %v2375 = vadd.f32 %v2374, 1.0
  %v2376 = vrcp.pop %v2375
  %v2377 = vmul.f32 1.0, %v2376
  %v2378 = vadd.f32 %v2361, %v567
  %v2379 = vmul.f32 %v2370, %v2378
  %v2380 = vadd.f32 %v2168, %v2379
  %v2381 = vtanh.pop %v2380
  %v2382 = vsub.f32 1.0, %v2377
  %v2383 = vmul.f32 %v2382, %v2381
  %v2384 = vmul.f32 %v2377, %v2221
  %v2385 = vadd.f32 %v2383, %v2384
  %v2386 = vld [vmem:[%s3] sm:$0xff]
  %v2387 = vld [vmem:[%s3 + $0x8] sm:$0xff]
  %v2388 = vld [vmem:[%s3 + $0x10] sm:$0xff]
  %v2389 = vld [vmem:[%s3 + $0x18] sm:$0xff]
  %v2390 = vld [vmem:[%s3 + $0x20] sm:$0xff]
  %v2391 = vld [vmem:[%s3 + $0x28] sm:$0xff]
  %v2392 = vld [vmem:[%s3 + $0x30] sm:$0xff]
  %v2393 = vld [vmem:[%s3 + $0x38] sm:$0xff]
  %v2394 = vld [vmem:[%s3 + $0x40] sm:$0xff]
  %v2395 = vld [vmem:[%s3 + $0x48] sm:$0xff]
  %v2396 = vld [vmem:[%s3 + $0x50] sm:$0xff]
  %v2397 = vld [vmem:[%s3 + $0x58] sm:$0xff]
  %v2398 = vld [vmem:[%s3 + $0x60] sm:$0xff]
  %v2399 = vld [vmem:[%s3 + $0x68] sm:$0xff]
  %v2400 = vld [vmem:[%s3 + $0x70] sm:$0xff]
  %v2401 = vld [vmem:[%s3 + $0x78] sm:$0xff]
  %v2402 = vld [vmem:[%s3 + $0x80] sm:$0xff]
  %v2403 = vld [vmem:[%s3 + $0x88] sm:$0xff]
  %v2404 = vld [vmem:[%s3 + $0x90] sm:$0xff]
  %v2405 = vld [vmem:[%s3 + $0x98] sm:$0xff]
  %v2406 = vld [vmem:[%s3 + $0xa0] sm:$0xff]
  %v2407 = vld [vmem:[%s3 + $0xa8] sm:$0xff]
  %v2408 = vld [vmem:[%s3 + $0xb0] sm:$0xff]
  %v2409 = vld [vmem:[%s3 + $0xb8] sm:$0xff]
  %v2410 = vld [vmem:[%s3 + $0xc0] sm:$0xff]
  %v2411 = vld [vmem:[%s3 + $0xc8] sm:$0xff]
  %v2412 = vld [vmem:[%s3 + $0xd0] sm:$0xff]
  %v2413 = vld [vmem:[%s3 + $0xd8] sm:$0xff]
  %v2414 = vld [vmem:[%s3 + $0xe0] sm:$0xff]
  %v2415 = vld [vmem:[%s3 + $0xe8] sm:$0xff]
  %v2416 = vld [vmem:[%s3 + $0xf0] sm:$0xff]
  %v2417 = vld [vmem:[%s3 + $0xf8] sm:$0xff]
  %v2418 = vld [vmem:[%s3 + $0x100] sm:$0xff]
  %v2419 = vld [vmem:[%s3 + $0x108] sm:$0xff]
  %v2420 = vld [vmem:[%s3 + $0x110] sm:$0xff]
  %v2421 = vld [vmem:[%s3 + $0x118] sm:$0xff]
  %v2422 = vld [vmem:[%s3 + $0x120] sm:$0xff]
  %v2423 = vld [vmem:[%s3 + $0x128] sm:$0xff]
  %v2424 = vld [vmem:[%s3 + $0x130] sm:$0xff]
  %v2425 = vld [vmem:[%s3 + $0x138] sm:$0xff]
  %v2426 = vld [vmem:[%s3 + $0x140] sm:$0xff]
  %v2427 = vld [vmem:[%s3 + $0x148] sm:$0xff]
  %v2428 = vld [vmem:[%s3 + $0x150] sm:$0xff]
  %v2429 = vld [vmem:[%s3 + $0x158] sm:$0xff]
  %v2430 = vld [vmem:[%s3 + $0x160] sm:$0xff]
  %v2431 = vld [vmem:[%s3 + $0x168] sm:$0xff]
  %v2432 = vld [vmem:[%s3 + $0x170] sm:$0xff]
  %v2433 = vld [vmem:[%s3 + $0x178] sm:$0xff]
  %2434 = vmatprep.subr.mxu0 %v2432
  %2435 = vmatpush1.msra.mxu0 %v2431
  %2436 = vmatprep.subr.mxu0 %v2429
  %2437 = vmatpush1.msra.mxu0 %v2428
  %2438 = vmatprep.subr.mxu0 %v2426
  %2439 = vmatpush1.msra.mxu0 %v2425
  %2440 = vmatprep.subr.mxu0 %v2423
  %2441 = vmatpush1.msra.mxu0 %v2422
  %2442 = vmatprep.subr.mxu0 %v2420
  %2443 = vmatpush1.msra.mxu0 %v2419
  %2444 = vmatprep.subr.mxu0 %v2417
  %2445 = vmatpush1.msra.mxu0 %v2416
  %2446 = vmatprep.subr.mxu0 %v2414
  %2447 = vmatpush1.msra.mxu0 %v2413
  %2448 = vmatprep.subr.mxu0 %v2411
  %2449 = vmatpush1.msra.mxu0 %v2410
  %2450 = vmatprep.subr.mxu0 %v2408
  %2451 = vmatpush1.msra.mxu0 %v2407
  %2452 = vmatprep.subr.mxu0 %v2405
  %2453 = vmatpush1.msra.mxu0 %v2404
  %2454 = vmatprep.subr.mxu0 %v2402
  %2455 = vmatpush1.msra.mxu0 %v2401
  %2456 = vmatprep.subr.mxu0 %v2399
  %2457 = vmatpush1.msra.mxu0 %v2398
  %2458 = vmatprep.subr.mxu0 %v2396
  %2459 = vmatpush1.msra.mxu0 %v2395
  %2460 = vmatprep.subr.mxu0 %v2393
  %2461 = vmatpush1.msra.mxu0 %v2392
  %2462 = vmatprep.subr.mxu0 %v2390
  %2463 = vmatpush1.msra.mxu0 %v2389
  %2464 = vmatprep.subr.mxu0 %v2387
  %2465 = vmatpush1.msra.mxu0 %v2386
  %2466 = vmatprep.subr.mxu0 0.0
  %2467 = vmatpush2.msra.mxu0 0.0
  %2468 = vmatprep.subr.mxu0 0.0
  %2469 = vmatpush2.msra.mxu0 0.0
  %2470 = vmatprep.subr.mxu0 0.0
  %2471 = vmatpush2.msra.mxu0 0.0
  %2472 = vmatprep.subr.mxu0 0.0
  %2473 = vmatpush2.msra.mxu0 0.0
  %2474 = vmatprep.subr.mxu0 0.0
  %2475 = vmatpush2.msra.mxu0 0.0
  %2476 = vmatprep.subr.mxu0 0.0
  %2477 = vmatpush2.msra.mxu0 0.0
  %2478 = vmatprep.subr.mxu0 0.0
  %2479 = vmatpush2.msra.mxu0 0.0
  %2480 = vmatprep.subr.mxu0 0.0
  %2481 = vmatpush2.msra.mxu0 0.0
  %2482 = vmatprep.subr.mxu0 0.0
  %2483 = vmatpush2.msra.mxu0 0.0
  %2484 = vmatprep.subr.mxu0 0.0
  %2485 = vmatpush2.msra.mxu0 0.0
  %2486 = vmatprep.subr.mxu0 0.0
  %2487 = vmatpush2.msra.mxu0 0.0
  %2488 = vmatprep.subr.mxu0 0.0
  %2489 = vmatpush2.msra.mxu0 0.0
  %2490 = vmatprep.subr.mxu0 0.0
  %2491 = vmatpush2.msra.mxu0 0.0
  %2492 = vmatprep.subr.mxu0 0.0
  %2493 = vmatpush2.msra.mxu0 0.0
  %2494 = vmatprep.subr.mxu0 0.0
  %2495 = vmatpush2.msra.mxu0 0.0
  %2496 = vmatprep.subr.mxu0 0.0
  %2497 = vmatpush2.msra.mxu0 0.0
  %2498 = vmatprep.mubr.f32.mxu0 0.0
  %2499 = vmatmul.mubr.f32.gmra.mxu0 %v2163
  %v2500 = vpop.f32.mrf.mxu0
  %v2501 = vadd.f32 0.0, %v2500
  %v2502 = vpop.f32.mrf.mxu0
  %v2503 = vadd.f32 0.0, %v2502
  %2504 = vdwg.mxu0
  %2505 = vmatprep.subr.mxu0 0.0
  %2506 = vmatpush1.msra.mxu0 %v2433
  %2507 = vmatprep.subr.mxu0 0.0
  %2508 = vmatpush1.msra.mxu0 %v2430
  %2509 = vmatprep.subr.mxu0 0.0
  %2510 = vmatpush1.msra.mxu0 %v2427
  %2511 = vmatprep.subr.mxu0 0.0
  %2512 = vmatpush1.msra.mxu0 %v2424
  %2513 = vmatprep.subr.mxu0 0.0
  %2514 = vmatpush1.msra.mxu0 %v2421
  %2515 = vmatprep.subr.mxu0 0.0
  %2516 = vmatpush1.msra.mxu0 %v2418
  %2517 = vmatprep.subr.mxu0 0.0
  %2518 = vmatpush1.msra.mxu0 %v2415
  %2519 = vmatprep.subr.mxu0 0.0
  %2520 = vmatpush1.msra.mxu0 %v2412
  %2521 = vmatprep.subr.mxu0 0.0
  %2522 = vmatpush1.msra.mxu0 %v2409
  %2523 = vmatprep.subr.mxu0 0.0
  %2524 = vmatpush1.msra.mxu0 %v2406
  %2525 = vmatprep.subr.mxu0 0.0
  %2526 = vmatpush1.msra.mxu0 %v2403
  %2527 = vmatprep.subr.mxu0 0.0
  %2528 = vmatpush1.msra.mxu0 %v2400
  %2529 = vmatprep.subr.mxu0 0.0
  %2530 = vmatpush1.msra.mxu0 %v2397
  %2531 = vmatprep.subr.mxu0 0.0
  %2532 = vmatpush1.msra.mxu0 %v2394
  %2533 = vmatprep.subr.mxu0 0.0
  %2534 = vmatpush1.msra.mxu0 %v2391
  %2535 = vmatprep.subr.mxu0 0.0
  %2536 = vmatpush1.msra.mxu0 %v2388
  %2537 = vmatprep.subr.mxu0 0.0
  %2538 = vmatpush2.msra.mxu0 0.0
  %2539 = vmatprep.subr.mxu0 0.0
  %2540 = vmatpush2.msra.mxu0 0.0
  %2541 = vmatprep.subr.mxu0 0.0
  %2542 = vmatpush2.msra.mxu0 0.0
  %2543 = vmatprep.subr.mxu0 0.0
  %2544 = vmatpush2.msra.mxu0 0.0
  %2545 = vmatprep.subr.mxu0 0.0
  %2546 = vmatpush2.msra.mxu0 0.0
  %2547 = vmatprep.subr.mxu0 0.0
  %2548 = vmatpush2.msra.mxu0 0.0
  %2549 = vmatprep.subr.mxu0 0.0
  %2550 = vmatpush2.msra.mxu0 0.0
  %2551 = vmatprep.subr.mxu0 0.0
  %2552 = vmatpush2.msra.mxu0 0.0
  %2553 = vmatprep.subr.mxu0 0.0
  %2554 = vmatpush2.msra.mxu0 0.0
  %2555 = vmatprep.subr.mxu0 0.0
  %2556 = vmatpush2.msra.mxu0 0.0
  %2557 = vmatprep.subr.mxu0 0.0
  %2558 = vmatpush2.msra.mxu0 0.0
  %2559 = vmatprep.subr.mxu0 0.0
  %2560 = vmatpush2.msra.mxu0 0.0
  %2561 = vmatprep.subr.mxu0 0.0
  %2562 = vmatpush2.msra.mxu0 0.0
  %2563 = vmatprep.subr.mxu0 0.0
  %2564 = vmatpush2.msra.mxu0 0.0
  %2565 = vmatprep.subr.mxu0 0.0
  %2566 = vmatpush2.msra.mxu0 0.0
  %2567 = vmatprep.subr.mxu0 0.0
  %2568 = vmatpush2.msra.mxu0 0.0
  %2569 = vmatprep.mubr.f32.mxu0 0.0
  %2570 = vmatmul.mubr.f32.gmra.mxu0 %v2163
  %v2571 = vpop.f32.mrf.mxu0
  %v2572 = vadd.f32 0.0, %v2571
  %v2573 = vpop.f32.mrf.mxu0
  %2574 = vdwg.mxu0
  %v2576 = vrot.slane %v2501, 2
  %v2578 = vadd.f32 %v2169, %v2576
  %v2579 = vxor.u32 %v2578, 2147483648
  %v2580 = vmul.f32 %v2579, 1.442695
  %v2581 = vpow.pop %v2580
  %v2582 = vadd.f32 %v2581, 1.0
  %v2583 = vrcp.pop %v2582
  %v2584 = vmul.f32 1.0, %v2583
  %v2586 = vrot.slane %v2503, 2
  %v2588 = vadd.f32 %v2170, %v2586
  %v2589 = vxor.u32 %v2588, 2147483648
  %v2590 = vmul.f32 %v2589, 1.442695
  %v2591 = vpow.pop %v2590
  %v2592 = vadd.f32 %v2591, 1.0
  %v2593 = vrcp.pop %v2592
  %v2594 = vmul.f32 1.0, %v2593
  %v2595 = vadd.f32 %v2572, %v790
  %v2597 = vrot.slane %v2595, 2
  %v2599 = vmul.f32 %v2584, %v2597
  %v2600 = vadd.f32 %v2171, %v2599
  %v2601 = vtanh.pop %v2600
  %v2602 = vsub.f32 1.0, %v2594
  %v2603 = vmul.f32 %v2602, %v2601
  %v2605 = vrot.slane %v2163, 2
  %v2607 = vmul.f32 %v2594, %v2605
  %v2608 = vadd.f32 %v2603, %v2607
  %2609 = vst [vmem:[#allocation3 + $0x10] sm:$0x3] %v2385
  %2610 = vst [vmem:[#allocation3 + $0x8] sm:$0xc0] %v2608
  %v2611 = vld [vmem:[#allocation2 + $0x30] sm:$0xc]
  %v2612 = vld [vmem:[#allocation2 + $0x38] sm:$0xc]
  %v2613 = vld [vmem:[#allocation2 + $0x40] sm:$0xc]
  %v2614 = vld [vmem:[#allocation2 + $0x18] sm:$0x30]
  %v2615 = vld [vmem:[#allocation2 + $0x20] sm:$0x30]
  %v2616 = vld [vmem:[#allocation2 + $0x28] sm:$0x30]
  %v2617 = vld [vmem:[%s2] sm:$0xff]
  %v2618 = vld [vmem:[%s2 + $0x8] sm:$0xff]
  %v2619 = vld [vmem:[%s2 + $0x10] sm:$0xff]
  %v2620 = vld [vmem:[%s2 + $0x18] sm:$0xff]
  %v2621 = vld [vmem:[%s2 + $0x20] sm:$0xff]
  %v2622 = vld [vmem:[%s2 + $0x28] sm:$0xff]
  %v2623 = vld [vmem:[%s2 + $0x30] sm:$0xff]
  %v2624 = vld [vmem:[%s2 + $0x38] sm:$0xff]
  %v2625 = vld [vmem:[%s2 + $0x40] sm:$0xff]
  %v2626 = vld [vmem:[%s2 + $0x48] sm:$0xff]
  %v2627 = vld [vmem:[%s2 + $0x50] sm:$0xff]
  %v2628 = vld [vmem:[%s2 + $0x58] sm:$0xff]
  %v2629 = vld [vmem:[%s2 + $0x60] sm:$0xff]
  %v2630 = vld [vmem:[%s2 + $0x68] sm:$0xff]
  %v2631 = vld [vmem:[%s2 + $0x70] sm:$0xff]
  %v2632 = vld [vmem:[%s2 + $0x78] sm:$0xff]
  %v2633 = vld [vmem:[%s2 + $0x80] sm:$0xff]
  %v2634 = vld [vmem:[%s2 + $0x88] sm:$0xff]
  %v2635 = vld [vmem:[%s2 + $0x90] sm:$0xff]
  %v2636 = vld [vmem:[%s2 + $0x98] sm:$0xff]
  %v2637 = vld [vmem:[%s2 + $0xa0] sm:$0xff]
  %v2638 = vld [vmem:[%s2 + $0xa8] sm:$0xff]
  %v2639 = vld [vmem:[%s2 + $0xb0] sm:$0xff]
  %v2640 = vld [vmem:[%s2 + $0xb8] sm:$0xff]
  %v2641 = vld [vmem:[%s2 + $0xc0] sm:$0xff]
  %v2642 = vld [vmem:[%s2 + $0xc8] sm:$0xff]
  %v2643 = vld [vmem:[%s2 + $0xd0] sm:$0xff]
  %v2644 = vld [vmem:[%s2 + $0xd8] sm:$0xff]
  %v2645 = vld [vmem:[%s2 + $0xe0] sm:$0xff]
  %v2646 = vld [vmem:[%s2 + $0xe8] sm:$0xff]
  %v2647 = vld [vmem:[%s2 + $0xf0] sm:$0xff]
  %v2648 = vld [vmem:[%s2 + $0xf8] sm:$0xff]
  %v2649 = vld [vmem:[%s2 + $0x100] sm:$0xff]
  %v2650 = vld [vmem:[%s2 + $0x108] sm:$0xff]
  %v2651 = vld [vmem:[%s2 + $0x110] sm:$0xff]
  %v2652 = vld [vmem:[%s2 + $0x118] sm:$0xff]
  %v2653 = vld [vmem:[%s2 + $0x120] sm:$0xff]
  %v2654 = vld [vmem:[%s2 + $0x128] sm:$0xff]
  %v2655 = vld [vmem:[%s2 + $0x130] sm:$0xff]
  %v2656 = vld [vmem:[%s2 + $0x138] sm:$0xff]
  %v2657 = vld [vmem:[%s2 + $0x140] sm:$0xff]
  %v2658 = vld [vmem:[%s2 + $0x148] sm:$0xff]
  %v2659 = vld [vmem:[%s2 + $0x150] sm:$0xff]
  %v2660 = vld [vmem:[%s2 + $0x158] sm:$0xff]
  %v2661 = vld [vmem:[%s2 + $0x160] sm:$0xff]
  %v2662 = vld [vmem:[%s2 + $0x168] sm:$0xff]
  %v2663 = vld [vmem:[%s2 + $0x170] sm:$0xff]
  %v2664 = vld [vmem:[%s2 + $0x178] sm:$0xff]
  %2665 = vmatprep.subr.mxu0 %v2663
  %2666 = vmatpush1.msra.mxu0 %v2662
  %2667 = vmatprep.subr.mxu0 %v2660
  %2668 = vmatpush1.msra.mxu0 %v2659
  %2669 = vmatprep.subr.mxu0 %v2657
  %2670 = vmatpush1.msra.mxu0 %v2656
  %2671 = vmatprep.subr.mxu0 %v2654
  %2672 = vmatpush1.msra.mxu0 %v2653
  %2673 = vmatprep.subr.mxu0 %v2651
  %2674 = vmatpush1.msra.mxu0 %v2650
  %2675 = vmatprep.subr.mxu0 %v2648
  %2676 = vmatpush1.msra.mxu0 %v2647
  %2677 = vmatprep.subr.mxu0 %v2645
  %2678 = vmatpush1.msra.mxu0 %v2644
  %2679 = vmatprep.subr.mxu0 %v2642
  %2680 = vmatpush1.msra.mxu0 %v2641
  %2681 = vmatprep.subr.mxu0 %v2639
  %2682 = vmatpush1.msra.mxu0 %v2638
  %2683 = vmatprep.subr.mxu0 %v2636
  %2684 = vmatpush1.msra.mxu0 %v2635
  %2685 = vmatprep.subr.mxu0 %v2633
  %2686 = vmatpush1.msra.mxu0 %v2632
  %2687 = vmatprep.subr.mxu0 %v2630
  %2688 = vmatpush1.msra.mxu0 %v2629
  %2689 = vmatprep.subr.mxu0 %v2627
  %2690 = vmatpush1.msra.mxu0 %v2626
  %2691 = vmatprep.subr.mxu0 %v2624
  %2692 = vmatpush1.msra.mxu0 %v2623
  %2693 = vmatprep.subr.mxu0 %v2621
  %2694 = vmatpush1.msra.mxu0 %v2620
  %2695 = vmatprep.subr.mxu0 %v2618
  %2696 = vmatpush1.msra.mxu0 %v2617
  %2697 = vmatprep.subr.mxu0 0.0
  %2698 = vmatpush2.msra.mxu0 0.0
  %2699 = vmatprep.subr.mxu0 0.0
  %2700 = vmatpush2.msra.mxu0 0.0
  %2701 = vmatprep.subr.mxu0 0.0
  %2702 = vmatpush2.msra.mxu0 0.0
  %2703 = vmatprep.subr.mxu0 0.0
  %2704 = vmatpush2.msra.mxu0 0.0
  %2705 = vmatprep.subr.mxu0 0.0
  %2706 = vmatpush2.msra.mxu0 0.0
  %2707 = vmatprep.subr.mxu0 0.0
  %2708 = vmatpush2.msra.mxu0 0.0
  %2709 = vmatprep.subr.mxu0 0.0
  %2710 = vmatpush2.msra.mxu0 0.0
  %2711 = vmatprep.subr.mxu0 0.0
  %2712 = vmatpush2.msra.mxu0 0.0
  %2713 = vmatprep.subr.mxu0 0.0
  %2714 = vmatpush2.msra.mxu0 0.0
  %2715 = vmatprep.subr.mxu0 0.0
  %2716 = vmatpush2.msra.mxu0 0.0
  %2717 = vmatprep.subr.mxu0 0.0
  %2718 = vmatpush2.msra.mxu0 0.0
  %2719 = vmatprep.subr.mxu0 0.0
  %2720 = vmatpush2.msra.mxu0 0.0
  %2721 = vmatprep.subr.mxu0 0.0
  %2722 = vmatpush2.msra.mxu0 0.0
  %2723 = vmatprep.subr.mxu0 0.0
  %2724 = vmatpush2.msra.mxu0 0.0
  %2725 = vmatprep.subr.mxu0 0.0
  %2726 = vmatpush2.msra.mxu0 0.0
  %2727 = vmatprep.subr.mxu0 0.0
  %2728 = vmatpush2.msra.mxu0 0.0
  %2729 = vmatprep.mubr.f32.mxu0 0.0
  %2730 = vmatmul.mubr.f32.gmra.mxu0 %v2385
  %v2731 = vpop.f32.mrf.mxu0
  %v2732 = vadd.f32 0.0, %v2731
  %v2733 = vpop.f32.mrf.mxu0
  %v2734 = vadd.f32 0.0, %v2733
  %2735 = vdwg.mxu0
  %2736 = vmatprep.subr.mxu0 0.0
  %2737 = vmatpush1.msra.mxu0 %v2664
  %2738 = vmatprep.subr.mxu0 0.0
  %2739 = vmatpush1.msra.mxu0 %v2661
  %2740 = vmatprep.subr.mxu0 0.0
  %2741 = vmatpush1.msra.mxu0 %v2658
  %2742 = vmatprep.subr.mxu0 0.0
  %2743 = vmatpush1.msra.mxu0 %v2655
  %2744 = vmatprep.subr.mxu0 0.0
  %2745 = vmatpush1.msra.mxu0 %v2652
  %2746 = vmatprep.subr.mxu0 0.0
  %2747 = vmatpush1.msra.mxu0 %v2649
  %2748 = vmatprep.subr.mxu0 0.0
  %2749 = vmatpush1.msra.mxu0 %v2646
  %2750 = vmatprep.subr.mxu0 0.0
  %2751 = vmatpush1.msra.mxu0 %v2643
  %2752 = vmatprep.subr.mxu0 0.0
  %2753 = vmatpush1.msra.mxu0 %v2640
  %2754 = vmatprep.subr.mxu0 0.0
  %2755 = vmatpush1.msra.mxu0 %v2637
  %2756 = vmatprep.subr.mxu0 0.0
  %2757 = vmatpush1.msra.mxu0 %v2634
  %2758 = vmatprep.subr.mxu0 0.0
  %2759 = vmatpush1.msra.mxu0 %v2631
  %2760 = vmatprep.subr.mxu0 0.0
  %2761 = vmatpush1.msra.mxu0 %v2628
  %2762 = vmatprep.subr.mxu0 0.0
  %2763 = vmatpush1.msra.mxu0 %v2625
  %2764 = vmatprep.subr.mxu0 0.0
  %2765 = vmatpush1.msra.mxu0 %v2622
  %2766 = vmatprep.subr.mxu0 0.0
  %2767 = vmatpush1.msra.mxu0 %v2619
  %2768 = vmatprep.subr.mxu0 0.0
  %2769 = vmatpush2.msra.mxu0 0.0
  %2770 = vmatprep.subr.mxu0 0.0
  %2771 = vmatpush2.msra.mxu0 0.0
  %2772 = vmatprep.subr.mxu0 0.0
  %2773 = vmatpush2.msra.mxu0 0.0
  %2774 = vmatprep.subr.mxu0 0.0
  %2775 = vmatpush2.msra.mxu0 0.0
  %2776 = vmatprep.subr.mxu0 0.0
  %2777 = vmatpush2.msra.mxu0 0.0
  %2778 = vmatprep.subr.mxu0 0.0
  %2779 = vmatpush2.msra.mxu0 0.0
  %2780 = vmatprep.subr.mxu0 0.0
  %2781 = vmatpush2.msra.mxu0 0.0
  %2782 = vmatprep.subr.mxu0 0.0
  %2783 = vmatpush2.msra.mxu0 0.0
  %2784 = vmatprep.subr.mxu0 0.0
  %2785 = vmatpush2.msra.mxu0 0.0
  %2786 = vmatprep.subr.mxu0 0.0
  %2787 = vmatpush2.msra.mxu0 0.0
  %2788 = vmatprep.subr.mxu0 0.0
  %2789 = vmatpush2.msra.mxu0 0.0
  %2790 = vmatprep.subr.mxu0 0.0
  %2791 = vmatpush2.msra.mxu0 0.0
  %2792 = vmatprep.subr.mxu0 0.0
  %2793 = vmatpush2.msra.mxu0 0.0
  %2794 = vmatprep.subr.mxu0 0.0
  %2795 = vmatpush2.msra.mxu0 0.0
  %2796 = vmatprep.subr.mxu0 0.0
  %2797 = vmatpush2.msra.mxu0 0.0
  %2798 = vmatprep.subr.mxu0 0.0
  %2799 = vmatpush2.msra.mxu0 0.0
  %2800 = vmatprep.mubr.f32.mxu0 0.0
  %2801 = vmatmul.mubr.f32.gmra.mxu0 %v2385
  %v2802 = vpop.f32.mrf.mxu0
  %v2803 = vadd.f32 0.0, %v2802
  %v2804 = vpop.f32.mrf.mxu0
  %2805 = vdwg.mxu0
  %v2807 = vrot.slane %v2732, 6
  %v2809 = vadd.f32 %v2611, %v2807
  %v2810 = vxor.u32 %v2809, 2147483648
  %v2811 = vmul.f32 %v2810, 1.442695
  %v2812 = vpow.pop %v2811
  %v2813 = vadd.f32 %v2812, 1.0
  %v2814 = vrcp.pop %v2813
  %v2815 = vmul.f32 1.0, %v2814
  %v2817 = vrot.slane %v2734, 6
  %v2819 = vadd.f32 %v2612, %v2817
  %v2820 = vxor.u32 %v2819, 2147483648
  %v2821 = vmul.f32 %v2820, 1.442695
  %v2822 = vpow.pop %v2821
  %v2823 = vadd.f32 %v2822, 1.0
  %v2824 = vrcp.pop %v2823
  %v2825 = vmul.f32 1.0, %v2824
  %v2826 = vadd.f32 %v2803, %v567
  %v2828 = vrot.slane %v2826, 6
  %v2830 = vmul.f32 %v2815, %v2828
  %v2831 = vadd.f32 %v2613, %v2830
  %v2832 = vtanh.pop %v2831
  %v2833 = vsub.f32 1.0, %v2825
  %v2834 = vmul.f32 %v2833, %v2832
  %v2836 = vrot.slane %v2385, 6
  %v2838 = vmul.f32 %v2825, %v2836
  %v2839 = vadd.f32 %v2834, %v2838
  %v2840 = vld [vmem:[%s3] sm:$0xff]
  %v2841 = vld [vmem:[%s3 + $0x8] sm:$0xff]
  %v2842 = vld [vmem:[%s3 + $0x10] sm:$0xff]
  %v2843 = vld [vmem:[%s3 + $0x18] sm:$0xff]
  %v2844 = vld [vmem:[%s3 + $0x20] sm:$0xff]
  %v2845 = vld [vmem:[%s3 + $0x28] sm:$0xff]
  %v2846 = vld [vmem:[%s3 + $0x30] sm:$0xff]
  %v2847 = vld [vmem:[%s3 + $0x38] sm:$0xff]
  %v2848 = vld [vmem:[%s3 + $0x40] sm:$0xff]
  %v2849 = vld [vmem:[%s3 + $0x48] sm:$0xff]
  %v2850 = vld [vmem:[%s3 + $0x50] sm:$0xff]
  %v2851 = vld [vmem:[%s3 + $0x58] sm:$0xff]
  %v2852 = vld [vmem:[%s3 + $0x60] sm:$0xff]
  %v2853 = vld [vmem:[%s3 + $0x68] sm:$0xff]
  %v2854 = vld [vmem:[%s3 + $0x70] sm:$0xff]
  %v2855 = vld [vmem:[%s3 + $0x78] sm:$0xff]
  %v2856 = vld [vmem:[%s3 + $0x80] sm:$0xff]
  %v2857 = vld [vmem:[%s3 + $0x88] sm:$0xff]
  %v2858 = vld [vmem:[%s3 + $0x90] sm:$0xff]
  %v2859 = vld [vmem:[%s3 + $0x98] sm:$0xff]
  %v2860 = vld [vmem:[%s3 + $0xa0] sm:$0xff]
  %v2861 = vld [vmem:[%s3 + $0xa8] sm:$0xff]
  %v2862 = vld [vmem:[%s3 + $0xb0] sm:$0xff]
  %v2863 = vld [vmem:[%s3 + $0xb8] sm:$0xff]
  %v2864 = vld [vmem:[%s3 + $0xc0] sm:$0xff]
  %v2865 = vld [vmem:[%s3 + $0xc8] sm:$0xff]
  %v2866 = vld [vmem:[%s3 + $0xd0] sm:$0xff]
  %v2867 = vld [vmem:[%s3 + $0xd8] sm:$0xff]
  %v2868 = vld [vmem:[%s3 + $0xe0] sm:$0xff]
  %v2869 = vld [vmem:[%s3 + $0xe8] sm:$0xff]
  %v2870 = vld [vmem:[%s3 + $0xf0] sm:$0xff]
  %v2871 = vld [vmem:[%s3 + $0xf8] sm:$0xff]
  %v2872 = vld [vmem:[%s3 + $0x100] sm:$0xff]
  %v2873 = vld [vmem:[%s3 + $0x108] sm:$0xff]
  %v2874 = vld [vmem:[%s3 + $0x110] sm:$0xff]
  %v2875 = vld [vmem:[%s3 + $0x118] sm:$0xff]
  %v2876 = vld [vmem:[%s3 + $0x120] sm:$0xff]
  %v2877 = vld [vmem:[%s3 + $0x128] sm:$0xff]
  %v2878 = vld [vmem:[%s3 + $0x130] sm:$0xff]
  %v2879 = vld [vmem:[%s3 + $0x138] sm:$0xff]
  %v2880 = vld [vmem:[%s3 + $0x140] sm:$0xff]
  %v2881 = vld [vmem:[%s3 + $0x148] sm:$0xff]
  %v2882 = vld [vmem:[%s3 + $0x150] sm:$0xff]
  %v2883 = vld [vmem:[%s3 + $0x158] sm:$0xff]
  %v2884 = vld [vmem:[%s3 + $0x160] sm:$0xff]
  %v2885 = vld [vmem:[%s3 + $0x168] sm:$0xff]
  %v2886 = vld [vmem:[%s3 + $0x170] sm:$0xff]
  %v2887 = vld [vmem:[%s3 + $0x178] sm:$0xff]
  %v2889 = vrot.slane %v2608, 6
  %2891 = vmatprep.subr.mxu0 %v2886
  %2892 = vmatpush1.msra.mxu0 %v2885
  %2893 = vmatprep.subr.mxu0 %v2883
  %2894 = vmatpush1.msra.mxu0 %v2882
  %2895 = vmatprep.subr.mxu0 %v2880
  %2896 = vmatpush1.msra.mxu0 %v2879
  %2897 = vmatprep.subr.mxu0 %v2877
  %2898 = vmatpush1.msra.mxu0 %v2876
  %2899 = vmatprep.subr.mxu0 %v2874
  %2900 = vmatpush1.msra.mxu0 %v2873
  %2901 = vmatprep.subr.mxu0 %v2871
  %2902 = vmatpush1.msra.mxu0 %v2870
  %2903 = vmatprep.subr.mxu0 %v2868
  %2904 = vmatpush1.msra.mxu0 %v2867
  %2905 = vmatprep.subr.mxu0 %v2865
  %2906 = vmatpush1.msra.mxu0 %v2864
  %2907 = vmatprep.subr.mxu0 %v2862
  %2908 = vmatpush1.msra.mxu0 %v2861
  %2909 = vmatprep.subr.mxu0 %v2859
  %2910 = vmatpush1.msra.mxu0 %v2858
  %2911 = vmatprep.subr.mxu0 %v2856
  %2912 = vmatpush1.msra.mxu0 %v2855
  %2913 = vmatprep.subr.mxu0 %v2853
  %2914 = vmatpush1.msra.mxu0 %v2852
  %2915 = vmatprep.subr.mxu0 %v2850
  %2916 = vmatpush1.msra.mxu0 %v2849
  %2917 = vmatprep.subr.mxu0 %v2847
  %2918 = vmatpush1.msra.mxu0 %v2846
  %2919 = vmatprep.subr.mxu0 %v2844
  %2920 = vmatpush1.msra.mxu0 %v2843
  %2921 = vmatprep.subr.mxu0 %v2841
  %2922 = vmatpush1.msra.mxu0 %v2840
  %2923 = vmatprep.subr.mxu0 0.0
  %2924 = vmatpush2.msra.mxu0 0.0
  %2925 = vmatprep.subr.mxu0 0.0
  %2926 = vmatpush2.msra.mxu0 0.0
  %2927 = vmatprep.subr.mxu0 0.0
  %2928 = vmatpush2.msra.mxu0 0.0
  %2929 = vmatprep.subr.mxu0 0.0
  %2930 = vmatpush2.msra.mxu0 0.0
  %2931 = vmatprep.subr.mxu0 0.0
  %2932 = vmatpush2.msra.mxu0 0.0
  %2933 = vmatprep.subr.mxu0 0.0
  %2934 = vmatpush2.msra.mxu0 0.0
  %2935 = vmatprep.subr.mxu0 0.0
  %2936 = vmatpush2.msra.mxu0 0.0
  %2937 = vmatprep.subr.mxu0 0.0
  %2938 = vmatpush2.msra.mxu0 0.0
  %2939 = vmatprep.subr.mxu0 0.0
  %2940 = vmatpush2.msra.mxu0 0.0
  %2941 = vmatprep.subr.mxu0 0.0
  %2942 = vmatpush2.msra.mxu0 0.0
  %2943 = vmatprep.subr.mxu0 0.0
  %2944 = vmatpush2.msra.mxu0 0.0
  %2945 = vmatprep.subr.mxu0 0.0
  %2946 = vmatpush2.msra.mxu0 0.0
  %2947 = vmatprep.subr.mxu0 0.0
  %2948 = vmatpush2.msra.mxu0 0.0
  %2949 = vmatprep.subr.mxu0 0.0
  %2950 = vmatpush2.msra.mxu0 0.0
  %2951 = vmatprep.subr.mxu0 0.0
  %2952 = vmatpush2.msra.mxu0 0.0
  %2953 = vmatprep.subr.mxu0 0.0
  %2954 = vmatpush2.msra.mxu0 0.0
  %2955 = vmatprep.mubr.f32.mxu0 0.0
  %2956 = vmatmul.mubr.f32.gmra.mxu0 %v2889
  %v2957 = vpop.f32.mrf.mxu0
  %v2958 = vadd.f32 0.0, %v2957
  %v2959 = vpop.f32.mrf.mxu0
  %v2960 = vadd.f32 0.0, %v2959
  %2961 = vdwg.mxu0
  %2962 = vmatprep.subr.mxu0 0.0
  %2963 = vmatpush1.msra.mxu0 %v2887
  %2964 = vmatprep.subr.mxu0 0.0
  %2965 = vmatpush1.msra.mxu0 %v2884
  %2966 = vmatprep.subr.mxu0 0.0
  %2967 = vmatpush1.msra.mxu0 %v2881
  %2968 = vmatprep.subr.mxu0 0.0
  %2969 = vmatpush1.msra.mxu0 %v2878
  %2970 = vmatprep.subr.mxu0 0.0
  %2971 = vmatpush1.msra.mxu0 %v2875
  %2972 = vmatprep.subr.mxu0 0.0
  %2973 = vmatpush1.msra.mxu0 %v2872
  %2974 = vmatprep.subr.mxu0 0.0
  %2975 = vmatpush1.msra.mxu0 %v2869
  %2976 = vmatprep.subr.mxu0 0.0
  %2977 = vmatpush1.msra.mxu0 %v2866
  %2978 = vmatprep.subr.mxu0 0.0
  %2979 = vmatpush1.msra.mxu0 %v2863
  %2980 = vmatprep.subr.mxu0 0.0
  %2981 = vmatpush1.msra.mxu0 %v2860
  %2982 = vmatprep.subr.mxu0 0.0
  %2983 = vmatpush1.msra.mxu0 %v2857
  %2984 = vmatprep.subr.mxu0 0.0
  %2985 = vmatpush1.msra.mxu0 %v2854
  %2986 = vmatprep.subr.mxu0 0.0
  %2987 = vmatpush1.msra.mxu0 %v2851
  %2988 = vmatprep.subr.mxu0 0.0
  %2989 = vmatpush1.msra.mxu0 %v2848
  %2990 = vmatprep.subr.mxu0 0.0
  %2991 = vmatpush1.msra.mxu0 %v2845
  %2992 = vmatprep.subr.mxu0 0.0
  %2993 = vmatpush1.msra.mxu0 %v2842
  %2994 = vmatprep.subr.mxu0 0.0
  %2995 = vmatpush2.msra.mxu0 0.0
  %2996 = vmatprep.subr.mxu0 0.0
  %2997 = vmatpush2.msra.mxu0 0.0
  %2998 = vmatprep.subr.mxu0 0.0
  %2999 = vmatpush2.msra.mxu0 0.0
  %3000 = vmatprep.subr.mxu0 0.0
  %3001 = vmatpush2.msra.mxu0 0.0
  %3002 = vmatprep.subr.mxu0 0.0
  %3003 = vmatpush2.msra.mxu0 0.0
  %3004 = vmatprep.subr.mxu0 0.0
  %3005 = vmatpush2.msra.mxu0 0.0
  %3006 = vmatprep.subr.mxu0 0.0
  %3007 = vmatpush2.msra.mxu0 0.0
  %3008 = vmatprep.subr.mxu0 0.0
  %3009 = vmatpush2.msra.mxu0 0.0
  %3010 = vmatprep.subr.mxu0 0.0
  %3011 = vmatpush2.msra.mxu0 0.0
  %3012 = vmatprep.subr.mxu0 0.0
  %3013 = vmatpush2.msra.mxu0 0.0
  %3014 = vmatprep.subr.mxu0 0.0
  %3015 = vmatpush2.msra.mxu0 0.0
  %3016 = vmatprep.subr.mxu0 0.0
  %3017 = vmatpush2.msra.mxu0 0.0
  %3018 = vmatprep.subr.mxu0 0.0
  %3019 = vmatpush2.msra.mxu0 0.0
  %3020 = vmatprep.subr.mxu0 0.0
  %3021 = vmatpush2.msra.mxu0 0.0
  %3022 = vmatprep.subr.mxu0 0.0
  %3023 = vmatpush2.msra.mxu0 0.0
  %3024 = vmatprep.subr.mxu0 0.0
  %3025 = vmatpush2.msra.mxu0 0.0
  %3026 = vmatprep.mubr.f32.mxu0 0.0
  %3027 = vmatmul.mubr.f32.gmra.mxu0 %v2889
  %v3028 = vpop.f32.mrf.mxu0
  %v3029 = vadd.f32 0.0, %v3028
  %v3030 = vpop.f32.mrf.mxu0
  %3031 = vdwg.mxu0
  %v3033 = vrot.slane %v2958, 4
  %v3035 = vadd.f32 %v2614, %v3033
  %v3036 = vxor.u32 %v3035, 2147483648
  %v3037 = vmul.f32 %v3036, 1.442695
  %v3038 = vpow.pop %v3037
  %v3039 = vadd.f32 %v3038, 1.0
  %v3040 = vrcp.pop %v3039
  %v3041 = vmul.f32 1.0, %v3040
  %v3043 = vrot.slane %v2960, 4
  %v3045 = vadd.f32 %v2615, %v3043
  %v3046 = vxor.u32 %v3045, 2147483648
  %v3047 = vmul.f32 %v3046, 1.442695
  %v3048 = vpow.pop %v3047
  %v3049 = vadd.f32 %v3048, 1.0
  %v3050 = vrcp.pop %v3049
  %v3051 = vmul.f32 1.0, %v3050
  %v3052 = vadd.f32 %v3029, %v790
  %v3054 = vrot.slane %v3052, 4
  %v3056 = vmul.f32 %v3041, %v3054
  %v3057 = vadd.f32 %v2616, %v3056
  %v3058 = vtanh.pop %v3057
  %v3059 = vsub.f32 1.0, %v3051
  %v3060 = vmul.f32 %v3059, %v3058
  %v3061 = vrot.slane %v2608, 2
  %v3063 = vmul.f32 %v3051, %v3061
  %v3064 = vadd.f32 %v3060, %v3063
  %3065 = vst [vmem:[#allocation3 + $0x10] sm:$0xc] %v2839
  %3066 = vst [vmem:[#allocation3 + $0x8] sm:$0x30] %v3064
  %v3067 = vld [vmem:[#allocation2 + $0x30] sm:$0x30]
  %v3068 = vld [vmem:[#allocation2 + $0x38] sm:$0x30]
  %v3069 = vld [vmem:[#allocation2 + $0x40] sm:$0x30]
  %v3070 = vld [vmem:[#allocation2 + $0x18] sm:$0xc]
  %v3071 = vld [vmem:[#allocation2 + $0x20] sm:$0xc]
  %v3072 = vld [vmem:[#allocation2 + $0x28] sm:$0xc]
  %v3073 = vld [vmem:[%s2] sm:$0xff]
  %v3074 = vld [vmem:[%s2 + $0x8] sm:$0xff]
  %v3075 = vld [vmem:[%s2 + $0x10] sm:$0xff]
  %v3076 = vld [vmem:[%s2 + $0x18] sm:$0xff]
  %v3077 = vld [vmem:[%s2 + $0x20] sm:$0xff]
  %v3078 = vld [vmem:[%s2 + $0x28] sm:$0xff]
  %v3079 = vld [vmem:[%s2 + $0x30] sm:$0xff]
  %v3080 = vld [vmem:[%s2 + $0x38] sm:$0xff]
  %v3081 = vld [vmem:[%s2 + $0x40] sm:$0xff]
  %v3082 = vld [vmem:[%s2 + $0x48] sm:$0xff]
  %v3083 = vld [vmem:[%s2 + $0x50] sm:$0xff]
  %v3084 = vld [vmem:[%s2 + $0x58] sm:$0xff]
  %v3085 = vld [vmem:[%s2 + $0x60] sm:$0xff]
  %v3086 = vld [vmem:[%s2 + $0x68] sm:$0xff]
  %v3087 = vld [vmem:[%s2 + $0x70] sm:$0xff]
  %v3088 = vld [vmem:[%s2 + $0x78] sm:$0xff]
  %v3089 = vld [vmem:[%s2 + $0x80] sm:$0xff]
  %v3090 = vld [vmem:[%s2 + $0x88] sm:$0xff]
  %v3091 = vld [vmem:[%s2 + $0x90] sm:$0xff]
  %v3092 = vld [vmem:[%s2 + $0x98] sm:$0xff]
  %v3093 = vld [vmem:[%s2 + $0xa0] sm:$0xff]
  %v3094 = vld [vmem:[%s2 + $0xa8] sm:$0xff]
  %v3095 = vld [vmem:[%s2 + $0xb0] sm:$0xff]
  %v3096 = vld [vmem:[%s2 + $0xb8] sm:$0xff]
  %v3097 = vld [vmem:[%s2 + $0xc0] sm:$0xff]
  %v3098 = vld [vmem:[%s2 + $0xc8] sm:$0xff]
  %v3099 = vld [vmem:[%s2 + $0xd0] sm:$0xff]
  %v3100 = vld [vmem:[%s2 + $0xd8] sm:$0xff]
  %v3101 = vld [vmem:[%s2 + $0xe0] sm:$0xff]
  %v3102 = vld [vmem:[%s2 + $0xe8] sm:$0xff]
  %v3103 = vld [vmem:[%s2 + $0xf0] sm:$0xff]
  %v3104 = vld [vmem:[%s2 + $0xf8] sm:$0xff]
  %v3105 = vld [vmem:[%s2 + $0x100] sm:$0xff]
  %v3106 = vld [vmem:[%s2 + $0x108] sm:$0xff]
  %v3107 = vld [vmem:[%s2 + $0x110] sm:$0xff]
  %v3108 = vld [vmem:[%s2 + $0x118] sm:$0xff]
  %v3109 = vld [vmem:[%s2 + $0x120] sm:$0xff]
  %v3110 = vld [vmem:[%s2 + $0x128] sm:$0xff]
  %v3111 = vld [vmem:[%s2 + $0x130] sm:$0xff]
  %v3112 = vld [vmem:[%s2 + $0x138] sm:$0xff]
  %v3113 = vld [vmem:[%s2 + $0x140] sm:$0xff]
  %v3114 = vld [vmem:[%s2 + $0x148] sm:$0xff]
  %v3115 = vld [vmem:[%s2 + $0x150] sm:$0xff]
  %v3116 = vld [vmem:[%s2 + $0x158] sm:$0xff]
  %v3117 = vld [vmem:[%s2 + $0x160] sm:$0xff]
  %v3118 = vld [vmem:[%s2 + $0x168] sm:$0xff]
  %v3119 = vld [vmem:[%s2 + $0x170] sm:$0xff]
  %v3120 = vld [vmem:[%s2 + $0x178] sm:$0xff]
  %v3122 = vrot.slane %v2839, 2
  %3124 = vmatprep.subr.mxu0 %v3119
  %3125 = vmatpush1.msra.mxu0 %v3118
  %3126 = vmatprep.subr.mxu0 %v3116
  %3127 = vmatpush1.msra.mxu0 %v3115
  %3128 = vmatprep.subr.mxu0 %v3113
  %3129 = vmatpush1.msra.mxu0 %v3112
  %3130 = vmatprep.subr.mxu0 %v3110
  %3131 = vmatpush1.msra.mxu0 %v3109
  %3132 = vmatprep.subr.mxu0 %v3107
  %3133 = vmatpush1.msra.mxu0 %v3106
  %3134 = vmatprep.subr.mxu0 %v3104
  %3135 = vmatpush1.msra.mxu0 %v3103
  %3136 = vmatprep.subr.mxu0 %v3101
  %3137 = vmatpush1.msra.mxu0 %v3100
  %3138 = vmatprep.subr.mxu0 %v3098
  %3139 = vmatpush1.msra.mxu0 %v3097
  %3140 = vmatprep.subr.mxu0 %v3095
  %3141 = vmatpush1.msra.mxu0 %v3094
  %3142 = vmatprep.subr.mxu0 %v3092
  %3143 = vmatpush1.msra.mxu0 %v3091
  %3144 = vmatprep.subr.mxu0 %v3089
  %3145 = vmatpush1.msra.mxu0 %v3088
  %3146 = vmatprep.subr.mxu0 %v3086
  %3147 = vmatpush1.msra.mxu0 %v3085
  %3148 = vmatprep.subr.mxu0 %v3083
  %3149 = vmatpush1.msra.mxu0 %v3082
  %3150 = vmatprep.subr.mxu0 %v3080
  %3151 = vmatpush1.msra.mxu0 %v3079
  %3152 = vmatprep.subr.mxu0 %v3077
  %3153 = vmatpush1.msra.mxu0 %v3076
  %3154 = vmatprep.subr.mxu0 %v3074
  %3155 = vmatpush1.msra.mxu0 %v3073
  %3156 = vmatprep.subr.mxu0 0.0
  %3157 = vmatpush2.msra.mxu0 0.0
  %3158 = vmatprep.subr.mxu0 0.0
  %3159 = vmatpush2.msra.mxu0 0.0
  %3160 = vmatprep.subr.mxu0 0.0
  %3161 = vmatpush2.msra.mxu0 0.0
  %3162 = vmatprep.subr.mxu0 0.0
  %3163 = vmatpush2.msra.mxu0 0.0
  %3164 = vmatprep.subr.mxu0 0.0
  %3165 = vmatpush2.msra.mxu0 0.0
  %3166 = vmatprep.subr.mxu0 0.0
  %3167 = vmatpush2.msra.mxu0 0.0
  %3168 = vmatprep.subr.mxu0 0.0
  %3169 = vmatpush2.msra.mxu0 0.0
  %3170 = vmatprep.subr.mxu0 0.0
  %3171 = vmatpush2.msra.mxu0 0.0
  %3172 = vmatprep.subr.mxu0 0.0
  %3173 = vmatpush2.msra.mxu0 0.0
  %3174 = vmatprep.subr.mxu0 0.0
  %3175 = vmatpush2.msra.mxu0 0.0
  %3176 = vmatprep.subr.mxu0 0.0
  %3177 = vmatpush2.msra.mxu0 0.0
  %3178 = vmatprep.subr.mxu0 0.0
  %3179 = vmatpush2.msra.mxu0 0.0
  %3180 = vmatprep.subr.mxu0 0.0
  %3181 = vmatpush2.msra.mxu0 0.0
  %3182 = vmatprep.subr.mxu0 0.0
  %3183 = vmatpush2.msra.mxu0 0.0
  %3184 = vmatprep.subr.mxu0 0.0
  %3185 = vmatpush2.msra.mxu0 0.0
  %3186 = vmatprep.subr.mxu0 0.0
  %3187 = vmatpush2.msra.mxu0 0.0
  %3188 = vmatprep.mubr.f32.mxu0 0.0
  %3189 = vmatmul.mubr.f32.gmra.mxu0 %v3122
  %v3190 = vpop.f32.mrf.mxu0
  %v3191 = vadd.f32 0.0, %v3190
  %v3192 = vpop.f32.mrf.mxu0
  %v3193 = vadd.f32 0.0, %v3192
  %3194 = vdwg.mxu0
  %3195 = vmatprep.subr.mxu0 0.0
  %3196 = vmatpush1.msra.mxu0 %v3120
  %3197 = vmatprep.subr.mxu0 0.0
  %3198 = vmatpush1.msra.mxu0 %v3117
  %3199 = vmatprep.subr.mxu0 0.0
  %3200 = vmatpush1.msra.mxu0 %v3114
  %3201 = vmatprep.subr.mxu0 0.0
  %3202 = vmatpush1.msra.mxu0 %v3111
  %3203 = vmatprep.subr.mxu0 0.0
  %3204 = vmatpush1.msra.mxu0 %v3108
  %3205 = vmatprep.subr.mxu0 0.0
  %3206 = vmatpush1.msra.mxu0 %v3105
  %3207 = vmatprep.subr.mxu0 0.0
  %3208 = vmatpush1.msra.mxu0 %v3102
  %3209 = vmatprep.subr.mxu0 0.0
  %3210 = vmatpush1.msra.mxu0 %v3099
  %3211 = vmatprep.subr.mxu0 0.0
  %3212 = vmatpush1.msra.mxu0 %v3096
  %3213 = vmatprep.subr.mxu0 0.0
  %3214 = vmatpush1.msra.mxu0 %v3093
  %3215 = vmatprep.subr.mxu0 0.0
  %3216 = vmatpush1.msra.mxu0 %v3090
  %3217 = vmatprep.subr.mxu0 0.0
  %3218 = vmatpush1.msra.mxu0 %v3087
  %3219 = vmatprep.subr.mxu0 0.0
  %3220 = vmatpush1.msra.mxu0 %v3084
  %3221 = vmatprep.subr.mxu0 0.0
  %3222 = vmatpush1.msra.mxu0 %v3081
  %3223 = vmatprep.subr.mxu0 0.0
  %3224 = vmatpush1.msra.mxu0 %v3078
  %3225 = vmatprep.subr.mxu0 0.0
  %3226 = vmatpush1.msra.mxu0 %v3075
  %3227 = vmatprep.subr.mxu0 0.0
  %3228 = vmatpush2.msra.mxu0 0.0
  %3229 = vmatprep.subr.mxu0 0.0
  %3230 = vmatpush2.msra.mxu0 0.0
  %3231 = vmatprep.subr.mxu0 0.0
  %3232 = vmatpush2.msra.mxu0 0.0
  %3233 = vmatprep.subr.mxu0 0.0
  %3234 = vmatpush2.msra.mxu0 0.0
  %3235 = vmatprep.subr.mxu0 0.0
  %3236 = vmatpush2.msra.mxu0 0.0
  %3237 = vmatprep.subr.mxu0 0.0
  %3238 = vmatpush2.msra.mxu0 0.0
  %3239 = vmatprep.subr.mxu0 0.0
  %3240 = vmatpush2.msra.mxu0 0.0
  %3241 = vmatprep.subr.mxu0 0.0
  %3242 = vmatpush2.msra.mxu0 0.0
  %3243 = vmatprep.subr.mxu0 0.0
  %3244 = vmatpush2.msra.mxu0 0.0
  %3245 = vmatprep.subr.mxu0 0.0
  %3246 = vmatpush2.msra.mxu0 0.0
  %3247 = vmatprep.subr.mxu0 0.0
  %3248 = vmatpush2.msra.mxu0 0.0
  %3249 = vmatprep.subr.mxu0 0.0
  %3250 = vmatpush2.msra.mxu0 0.0
  %3251 = vmatprep.subr.mxu0 0.0
  %3252 = vmatpush2.msra.mxu0 0.0
  %3253 = vmatprep.subr.mxu0 0.0
  %3254 = vmatpush2.msra.mxu0 0.0
  %3255 = vmatprep.subr.mxu0 0.0
  %3256 = vmatpush2.msra.mxu0 0.0
  %3257 = vmatprep.subr.mxu0 0.0
  %3258 = vmatpush2.msra.mxu0 0.0
  %3259 = vmatprep.mubr.f32.mxu0 0.0
  %3260 = vmatmul.mubr.f32.gmra.mxu0 %v3122
  %v3261 = vpop.f32.mrf.mxu0
  %v3262 = vadd.f32 0.0, %v3261
  %v3263 = vpop.f32.mrf.mxu0
  %3264 = vdwg.mxu0
  %v3266 = vrot.slane %v3191, 4
  %v3268 = vadd.f32 %v3067, %v3266
  %v3269 = vxor.u32 %v3268, 2147483648
  %v3270 = vmul.f32 %v3269, 1.442695
  %v3271 = vpow.pop %v3270
  %v3272 = vadd.f32 %v3271, 1.0
  %v3273 = vrcp.pop %v3272
  %v3274 = vmul.f32 1.0, %v3273
  %v3276 = vrot.slane %v3193, 4
  %v3278 = vadd.f32 %v3068, %v3276
  %v3279 = vxor.u32 %v3278, 2147483648
  %v3280 = vmul.f32 %v3279, 1.442695
  %v3281 = vpow.pop %v3280
  %v3282 = vadd.f32 %v3281, 1.0
  %v3283 = vrcp.pop %v3282
  %v3284 = vmul.f32 1.0, %v3283
  %v3285 = vadd.f32 %v3262, %v567
  %v3287 = vrot.slane %v3285, 4
  %v3289 = vmul.f32 %v3274, %v3287
  %v3290 = vadd.f32 %v3069, %v3289
  %v3291 = vtanh.pop %v3290
  %v3292 = vsub.f32 1.0, %v3284
  %v3293 = vmul.f32 %v3292, %v3291
  %v3294 = vrot.slane %v2839, 6
  %v3296 = vmul.f32 %v3284, %v3294
  %v3297 = vadd.f32 %v3293, %v3296
  %v3298 = vld [vmem:[%s3] sm:$0xff]
  %v3299 = vld [vmem:[%s3 + $0x8] sm:$0xff]
  %v3300 = vld [vmem:[%s3 + $0x10] sm:$0xff]
  %v3301 = vld [vmem:[%s3 + $0x18] sm:$0xff]
  %v3302 = vld [vmem:[%s3 + $0x20] sm:$0xff]
  %v3303 = vld [vmem:[%s3 + $0x28] sm:$0xff]
  %v3304 = vld [vmem:[%s3 + $0x30] sm:$0xff]
  %v3305 = vld [vmem:[%s3 + $0x38] sm:$0xff]
  %v3306 = vld [vmem:[%s3 + $0x40] sm:$0xff]
  %v3307 = vld [vmem:[%s3 + $0x48] sm:$0xff]
  %v3308 = vld [vmem:[%s3 + $0x50] sm:$0xff]
  %v3309 = vld [vmem:[%s3 + $0x58] sm:$0xff]
  %v3310 = vld [vmem:[%s3 + $0x60] sm:$0xff]
  %v3311 = vld [vmem:[%s3 + $0x68] sm:$0xff]
  %v3312 = vld [vmem:[%s3 + $0x70] sm:$0xff]
  %v3313 = vld [vmem:[%s3 + $0x78] sm:$0xff]
  %v3314 = vld [vmem:[%s3 + $0x80] sm:$0xff]
  %v3315 = vld [vmem:[%s3 + $0x88] sm:$0xff]
  %v3316 = vld [vmem:[%s3 + $0x90] sm:$0xff]
  %v3317 = vld [vmem:[%s3 + $0x98] sm:$0xff]
  %v3318 = vld [vmem:[%s3 + $0xa0] sm:$0xff]
  %v3319 = vld [vmem:[%s3 + $0xa8] sm:$0xff]
  %v3320 = vld [vmem:[%s3 + $0xb0] sm:$0xff]
  %v3321 = vld [vmem:[%s3 + $0xb8] sm:$0xff]
  %v3322 = vld [vmem:[%s3 + $0xc0] sm:$0xff]
  %v3323 = vld [vmem:[%s3 + $0xc8] sm:$0xff]
  %v3324 = vld [vmem:[%s3 + $0xd0] sm:$0xff]
  %v3325 = vld [vmem:[%s3 + $0xd8] sm:$0xff]
  %v3326 = vld [vmem:[%s3 + $0xe0] sm:$0xff]
  %v3327 = vld [vmem:[%s3 + $0xe8] sm:$0xff]
  %v3328 = vld [vmem:[%s3 + $0xf0] sm:$0xff]
  %v3329 = vld [vmem:[%s3 + $0xf8] sm:$0xff]
  %v3330 = vld [vmem:[%s3 + $0x100] sm:$0xff]
  %v3331 = vld [vmem:[%s3 + $0x108] sm:$0xff]
  %v3332 = vld [vmem:[%s3 + $0x110] sm:$0xff]
  %v3333 = vld [vmem:[%s3 + $0x118] sm:$0xff]
  %v3334 = vld [vmem:[%s3 + $0x120] sm:$0xff]
  %v3335 = vld [vmem:[%s3 + $0x128] sm:$0xff]
  %v3336 = vld [vmem:[%s3 + $0x130] sm:$0xff]
  %v3337 = vld [vmem:[%s3 + $0x138] sm:$0xff]
  %v3338 = vld [vmem:[%s3 + $0x140] sm:$0xff]
  %v3339 = vld [vmem:[%s3 + $0x148] sm:$0xff]
  %v3340 = vld [vmem:[%s3 + $0x150] sm:$0xff]
  %v3341 = vld [vmem:[%s3 + $0x158] sm:$0xff]
  %v3342 = vld [vmem:[%s3 + $0x160] sm:$0xff]
  %v3343 = vld [vmem:[%s3 + $0x168] sm:$0xff]
  %v3344 = vld [vmem:[%s3 + $0x170] sm:$0xff]
  %v3345 = vld [vmem:[%s3 + $0x178] sm:$0xff]
  %v3347 = vrot.slane %v3064, 4
  %3349 = vmatprep.subr.mxu0 %v3344
  %3350 = vmatpush1.msra.mxu0 %v3343
  %3351 = vmatprep.subr.mxu0 %v3341
  %3352 = vmatpush1.msra.mxu0 %v3340
  %3353 = vmatprep.subr.mxu0 %v3338
  %3354 = vmatpush1.msra.mxu0 %v3337
  %3355 = vmatprep.subr.mxu0 %v3335
  %3356 = vmatpush1.msra.mxu0 %v3334
  %3357 = vmatprep.subr.mxu0 %v3332
  %3358 = vmatpush1.msra.mxu0 %v3331
  %3359 = vmatprep.subr.mxu0 %v3329
  %3360 = vmatpush1.msra.mxu0 %v3328
  %3361 = vmatprep.subr.mxu0 %v3326
  %3362 = vmatpush1.msra.mxu0 %v3325
  %3363 = vmatprep.subr.mxu0 %v3323
  %3364 = vmatpush1.msra.mxu0 %v3322
  %3365 = vmatprep.subr.mxu0 %v3320
  %3366 = vmatpush1.msra.mxu0 %v3319
  %3367 = vmatprep.subr.mxu0 %v3317
  %3368 = vmatpush1.msra.mxu0 %v3316
  %3369 = vmatprep.subr.mxu0 %v3314
  %3370 = vmatpush1.msra.mxu0 %v3313
  %3371 = vmatprep.subr.mxu0 %v3311
  %3372 = vmatpush1.msra.mxu0 %v3310
  %3373 = vmatprep.subr.mxu0 %v3308
  %3374 = vmatpush1.msra.mxu0 %v3307
  %3375 = vmatprep.subr.mxu0 %v3305
  %3376 = vmatpush1.msra.mxu0 %v3304
  %3377 = vmatprep.subr.mxu0 %v3302
  %3378 = vmatpush1.msra.mxu0 %v3301
  %3379 = vmatprep.subr.mxu0 %v3299
  %3380 = vmatpush1.msra.mxu0 %v3298
  %3381 = vmatprep.subr.mxu0 0.0
  %3382 = vmatpush2.msra.mxu0 0.0
  %3383 = vmatprep.subr.mxu0 0.0
  %3384 = vmatpush2.msra.mxu0 0.0
  %3385 = vmatprep.subr.mxu0 0.0
  %3386 = vmatpush2.msra.mxu0 0.0
  %3387 = vmatprep.subr.mxu0 0.0
  %3388 = vmatpush2.msra.mxu0 0.0
  %3389 = vmatprep.subr.mxu0 0.0
  %3390 = vmatpush2.msra.mxu0 0.0
  %3391 = vmatprep.subr.mxu0 0.0
  %3392 = vmatpush2.msra.mxu0 0.0
  %3393 = vmatprep.subr.mxu0 0.0
  %3394 = vmatpush2.msra.mxu0 0.0
  %3395 = vmatprep.subr.mxu0 0.0
  %3396 = vmatpush2.msra.mxu0 0.0
  %3397 = vmatprep.subr.mxu0 0.0
  %3398 = vmatpush2.msra.mxu0 0.0
  %3399 = vmatprep.subr.mxu0 0.0
  %3400 = vmatpush2.msra.mxu0 0.0
  %3401 = vmatprep.subr.mxu0 0.0
  %3402 = vmatpush2.msra.mxu0 0.0
  %3403 = vmatprep.subr.mxu0 0.0
  %3404 = vmatpush2.msra.mxu0 0.0
  %3405 = vmatprep.subr.mxu0 0.0
  %3406 = vmatpush2.msra.mxu0 0.0
  %3407 = vmatprep.subr.mxu0 0.0
  %3408 = vmatpush2.msra.mxu0 0.0
  %3409 = vmatprep.subr.mxu0 0.0
  %3410 = vmatpush2.msra.mxu0 0.0
  %3411 = vmatprep.subr.mxu0 0.0
  %3412 = vmatpush2.msra.mxu0 0.0
  %3413 = vmatprep.mubr.f32.mxu0 0.0
  %3414 = vmatmul.mubr.f32.gmra.mxu0 %v3347
  %v3415 = vpop.f32.mrf.mxu0
  %v3416 = vadd.f32 0.0, %v3415
  %v3417 = vpop.f32.mrf.mxu0
  %v3418 = vadd.f32 0.0, %v3417
  %3419 = vdwg.mxu0
  %3420 = vmatprep.subr.mxu0 0.0
  %3421 = vmatpush1.msra.mxu0 %v3345
  %3422 = vmatprep.subr.mxu0 0.0
  %3423 = vmatpush1.msra.mxu0 %v3342
  %3424 = vmatprep.subr.mxu0 0.0
  %3425 = vmatpush1.msra.mxu0 %v3339
  %3426 = vmatprep.subr.mxu0 0.0
  %3427 = vmatpush1.msra.mxu0 %v3336
  %3428 = vmatprep.subr.mxu0 0.0
  %3429 = vmatpush1.msra.mxu0 %v3333
  %3430 = vmatprep.subr.mxu0 0.0
  %3431 = vmatpush1.msra.mxu0 %v3330
  %3432 = vmatprep.subr.mxu0 0.0
  %3433 = vmatpush1.msra.mxu0 %v3327
  %3434 = vmatprep.subr.mxu0 0.0
  %3435 = vmatpush1.msra.mxu0 %v3324
  %3436 = vmatprep.subr.mxu0 0.0
  %3437 = vmatpush1.msra.mxu0 %v3321
  %3438 = vmatprep.subr.mxu0 0.0
  %3439 = vmatpush1.msra.mxu0 %v3318
  %3440 = vmatprep.subr.mxu0 0.0
  %3441 = vmatpush1.msra.mxu0 %v3315
  %3442 = vmatprep.subr.mxu0 0.0
  %3443 = vmatpush1.msra.mxu0 %v3312
  %3444 = vmatprep.subr.mxu0 0.0
  %3445 = vmatpush1.msra.mxu0 %v3309
  %3446 = vmatprep.subr.mxu0 0.0
  %3447 = vmatpush1.msra.mxu0 %v3306
  %3448 = vmatprep.subr.mxu0 0.0
  %3449 = vmatpush1.msra.mxu0 %v3303
  %3450 = vmatprep.subr.mxu0 0.0
  %3451 = vmatpush1.msra.mxu0 %v3300
  %3452 = vmatprep.subr.mxu0 0.0
  %3453 = vmatpush2.msra.mxu0 0.0
  %3454 = vmatprep.subr.mxu0 0.0
  %3455 = vmatpush2.msra.mxu0 0.0
  %3456 = vmatprep.subr.mxu0 0.0
  %3457 = vmatpush2.msra.mxu0 0.0
  %3458 = vmatprep.subr.mxu0 0.0
  %3459 = vmatpush2.msra.mxu0 0.0
  %3460 = vmatprep.subr.mxu0 0.0
  %3461 = vmatpush2.msra.mxu0 0.0
  %3462 = vmatprep.subr.mxu0 0.0
  %3463 = vmatpush2.msra.mxu0 0.0
  %3464 = vmatprep.subr.mxu0 0.0
  %3465 = vmatpush2.msra.mxu0 0.0
  %3466 = vmatprep.subr.mxu0 0.0
  %3467 = vmatpush2.msra.mxu0 0.0
  %3468 = vmatprep.subr.mxu0 0.0
  %3469 = vmatpush2.msra.mxu0 0.0
  %3470 = vmatprep.subr.mxu0 0.0
  %3471 = vmatpush2.msra.mxu0 0.0
  %3472 = vmatprep.subr.mxu0 0.0
  %3473 = vmatpush2.msra.mxu0 0.0
  %3474 = vmatprep.subr.mxu0 0.0
  %3475 = vmatpush2.msra.mxu0 0.0
  %3476 = vmatprep.subr.mxu0 0.0
  %3477 = vmatpush2.msra.mxu0 0.0
  %3478 = vmatprep.subr.mxu0 0.0
  %3479 = vmatpush2.msra.mxu0 0.0
  %3480 = vmatprep.subr.mxu0 0.0
  %3481 = vmatpush2.msra.mxu0 0.0
  %3482 = vmatprep.subr.mxu0 0.0
  %3483 = vmatpush2.msra.mxu0 0.0
  %3484 = vmatprep.mubr.f32.mxu0 0.0
  %3485 = vmatmul.mubr.f32.gmra.mxu0 %v3347
  %v3486 = vpop.f32.mrf.mxu0
  %v3487 = vadd.f32 0.0, %v3486
  %v3488 = vpop.f32.mrf.mxu0
  %3489 = vdwg.mxu0
  %v3491 = vrot.slane %v3416, 6
  %v3493 = vadd.f32 %v3070, %v3491
  %v3494 = vxor.u32 %v3493, 2147483648
  %v3495 = vmul.f32 %v3494, 1.442695
  %v3496 = vpow.pop %v3495
  %v3497 = vadd.f32 %v3496, 1.0
  %v3498 = vrcp.pop %v3497
  %v3499 = vmul.f32 1.0, %v3498
  %v3501 = vrot.slane %v3418, 6
  %v3503 = vadd.f32 %v3071, %v3501
  %v3504 = vxor.u32 %v3503, 2147483648
  %v3505 = vmul.f32 %v3504, 1.442695
  %v3506 = vpow.pop %v3505
  %v3507 = vadd.f32 %v3506, 1.0
  %v3508 = vrcp.pop %v3507
  %v3509 = vmul.f32 1.0, %v3508
  %v3510 = vadd.f32 %v3487, %v790
  %v3512 = vrot.slane %v3510, 6
  %v3514 = vmul.f32 %v3499, %v3512
  %v3515 = vadd.f32 %v3072, %v3514
  %v3516 = vtanh.pop %v3515
  %v3517 = vsub.f32 1.0, %v3509
  %v3518 = vmul.f32 %v3517, %v3516
  %v3519 = vrot.slane %v3064, 2
  %v3521 = vmul.f32 %v3509, %v3519
  %v3522 = vadd.f32 %v3518, %v3521
  %3523 = vst [vmem:[#allocation3 + $0x10] sm:$0x30] %v3297
  %3524 = vst [vmem:[#allocation3 + $0x8] sm:$0xc] %v3522
  %v3525 = vld [vmem:[#allocation2 + $0x30] sm:$0xc0]
  %v3526 = vld [vmem:[#allocation2 + $0x38] sm:$0xc0]
  %v3527 = vld [vmem:[#allocation2 + $0x40] sm:$0xc0]
  %v3528 = vld [vmem:[#allocation2 + $0x18] sm:$0x3]
  %v3529 = vld [vmem:[#allocation2 + $0x20] sm:$0x3]
  %v3530 = vld [vmem:[#allocation2 + $0x28] sm:$0x3]
  %v3531 = vld [vmem:[%s2] sm:$0xff]
  %v3532 = vld [vmem:[%s2 + $0x8] sm:$0xff]
  %v3533 = vld [vmem:[%s2 + $0x10] sm:$0xff]
  %v3534 = vld [vmem:[%s2 + $0x18] sm:$0xff]
  %v3535 = vld [vmem:[%s2 + $0x20] sm:$0xff]
  %v3536 = vld [vmem:[%s2 + $0x28] sm:$0xff]
  %v3537 = vld [vmem:[%s2 + $0x30] sm:$0xff]
  %v3538 = vld [vmem:[%s2 + $0x38] sm:$0xff]
  %v3539 = vld [vmem:[%s2 + $0x40] sm:$0xff]
  %v3540 = vld [vmem:[%s2 + $0x48] sm:$0xff]
  %v3541 = vld [vmem:[%s2 + $0x50] sm:$0xff]
  %v3542 = vld [vmem:[%s2 + $0x58] sm:$0xff]
  %v3543 = vld [vmem:[%s2 + $0x60] sm:$0xff]
  %v3544 = vld [vmem:[%s2 + $0x68] sm:$0xff]
  %v3545 = vld [vmem:[%s2 + $0x70] sm:$0xff]
  %v3546 = vld [vmem:[%s2 + $0x78] sm:$0xff]
  %v3547 = vld [vmem:[%s2 + $0x80] sm:$0xff]
  %v3548 = vld [vmem:[%s2 + $0x88] sm:$0xff]
  %v3549 = vld [vmem:[%s2 + $0x90] sm:$0xff]
  %v3550 = vld [vmem:[%s2 + $0x98] sm:$0xff]
  %v3551 = vld [vmem:[%s2 + $0xa0] sm:$0xff]
  %v3552 = vld [vmem:[%s2 + $0xa8] sm:$0xff]
  %v3553 = vld [vmem:[%s2 + $0xb0] sm:$0xff]
  %v3554 = vld [vmem:[%s2 + $0xb8] sm:$0xff]
  %v3555 = vld [vmem:[%s2 + $0xc0] sm:$0xff]
  %v3556 = vld [vmem:[%s2 + $0xc8] sm:$0xff]
  %v3557 = vld [vmem:[%s2 + $0xd0] sm:$0xff]
  %v3558 = vld [vmem:[%s2 + $0xd8] sm:$0xff]
  %v3559 = vld [vmem:[%s2 + $0xe0] sm:$0xff]
  %v3560 = vld [vmem:[%s2 + $0xe8] sm:$0xff]
  %v3561 = vld [vmem:[%s2 + $0xf0] sm:$0xff]
  %v3562 = vld [vmem:[%s2 + $0xf8] sm:$0xff]
  %v3563 = vld [vmem:[%s2 + $0x100] sm:$0xff]
  %v3564 = vld [vmem:[%s2 + $0x108] sm:$0xff]
  %v3565 = vld [vmem:[%s2 + $0x110] sm:$0xff]
  %v3566 = vld [vmem:[%s2 + $0x118] sm:$0xff]
  %v3567 = vld [vmem:[%s2 + $0x120] sm:$0xff]
  %v3568 = vld [vmem:[%s2 + $0x128] sm:$0xff]
  %v3569 = vld [vmem:[%s2 + $0x130] sm:$0xff]
  %v3570 = vld [vmem:[%s2 + $0x138] sm:$0xff]
  %v3571 = vld [vmem:[%s2 + $0x140] sm:$0xff]
  %v3572 = vld [vmem:[%s2 + $0x148] sm:$0xff]
  %v3573 = vld [vmem:[%s2 + $0x150] sm:$0xff]
  %v3574 = vld [vmem:[%s2 + $0x158] sm:$0xff]
  %v3575 = vld [vmem:[%s2 + $0x160] sm:$0xff]
  %v3576 = vld [vmem:[%s2 + $0x168] sm:$0xff]
  %v3577 = vld [vmem:[%s2 + $0x170] sm:$0xff]
  %v3578 = vld [vmem:[%s2 + $0x178] sm:$0xff]
  %v3580 = vrot.slane %v3297, 4
  %3582 = vmatprep.subr.mxu0 %v3577
  %3583 = vmatpush1.msra.mxu0 %v3576
  %3584 = vmatprep.subr.mxu0 %v3574
  %3585 = vmatpush1.msra.mxu0 %v3573
  %3586 = vmatprep.subr.mxu0 %v3571
  %3587 = vmatpush1.msra.mxu0 %v3570
  %3588 = vmatprep.subr.mxu0 %v3568
  %3589 = vmatpush1.msra.mxu0 %v3567
  %3590 = vmatprep.subr.mxu0 %v3565
  %3591 = vmatpush1.msra.mxu0 %v3564
  %3592 = vmatprep.subr.mxu0 %v3562
  %3593 = vmatpush1.msra.mxu0 %v3561
  %3594 = vmatprep.subr.mxu0 %v3559
  %3595 = vmatpush1.msra.mxu0 %v3558
  %3596 = vmatprep.subr.mxu0 %v3556
  %3597 = vmatpush1.msra.mxu0 %v3555
  %3598 = vmatprep.subr.mxu0 %v3553
  %3599 = vmatpush1.msra.mxu0 %v3552
  %3600 = vmatprep.subr.mxu0 %v3550
  %3601 = vmatpush1.msra.mxu0 %v3549
  %3602 = vmatprep.subr.mxu0 %v3547
  %3603 = vmatpush1.msra.mxu0 %v3546
  %3604 = vmatprep.subr.mxu0 %v3544
  %3605 = vmatpush1.msra.mxu0 %v3543
  %3606 = vmatprep.subr.mxu0 %v3541
  %3607 = vmatpush1.msra.mxu0 %v3540
  %3608 = vmatprep.subr.mxu0 %v3538
  %3609 = vmatpush1.msra.mxu0 %v3537
  %3610 = vmatprep.subr.mxu0 %v3535
  %3611 = vmatpush1.msra.mxu0 %v3534
  %3612 = vmatprep.subr.mxu0 %v3532
  %3613 = vmatpush1.msra.mxu0 %v3531
  %3614 = vmatprep.subr.mxu0 0.0
  %3615 = vmatpush2.msra.mxu0 0.0
  %3616 = vmatprep.subr.mxu0 0.0
  %3617 = vmatpush2.msra.mxu0 0.0
  %3618 = vmatprep.subr.mxu0 0.0
  %3619 = vmatpush2.msra.mxu0 0.0
  %3620 = vmatprep.subr.mxu0 0.0
  %3621 = vmatpush2.msra.mxu0 0.0
  %3622 = vmatprep.subr.mxu0 0.0
  %3623 = vmatpush2.msra.mxu0 0.0
  %3624 = vmatprep.subr.mxu0 0.0
  %3625 = vmatpush2.msra.mxu0 0.0
  %3626 = vmatprep.subr.mxu0 0.0
  %3627 = vmatpush2.msra.mxu0 0.0
  %3628 = vmatprep.subr.mxu0 0.0
  %3629 = vmatpush2.msra.mxu0 0.0
  %3630 = vmatprep.subr.mxu0 0.0
  %3631 = vmatpush2.msra.mxu0 0.0
  %3632 = vmatprep.subr.mxu0 0.0
  %3633 = vmatpush2.msra.mxu0 0.0
  %3634 = vmatprep.subr.mxu0 0.0
  %3635 = vmatpush2.msra.mxu0 0.0
  %3636 = vmatprep.subr.mxu0 0.0
  %3637 = vmatpush2.msra.mxu0 0.0
  %3638 = vmatprep.subr.mxu0 0.0
  %3639 = vmatpush2.msra.mxu0 0.0
  %3640 = vmatprep.subr.mxu0 0.0
  %3641 = vmatpush2.msra.mxu0 0.0
  %3642 = vmatprep.subr.mxu0 0.0
  %3643 = vmatpush2.msra.mxu0 0.0
  %3644 = vmatprep.subr.mxu0 0.0
  %3645 = vmatpush2.msra.mxu0 0.0
  %3646 = vmatprep.mubr.f32.mxu0 0.0
  %3647 = vmatmul.mubr.f32.gmra.mxu0 %v3580
  %v3648 = vpop.f32.mrf.mxu0
  %v3649 = vadd.f32 0.0, %v3648
  %v3650 = vpop.f32.mrf.mxu0
  %v3651 = vadd.f32 0.0, %v3650
  %3652 = vdwg.mxu0
  %3653 = vmatprep.subr.mxu0 0.0
  %3654 = vmatpush1.msra.mxu0 %v3578
  %3655 = vmatprep.subr.mxu0 0.0
  %3656 = vmatpush1.msra.mxu0 %v3575
  %3657 = vmatprep.subr.mxu0 0.0
  %3658 = vmatpush1.msra.mxu0 %v3572
  %3659 = vmatprep.subr.mxu0 0.0
  %3660 = vmatpush1.msra.mxu0 %v3569
  %3661 = vmatprep.subr.mxu0 0.0
  %3662 = vmatpush1.msra.mxu0 %v3566
  %3663 = vmatprep.subr.mxu0 0.0
  %3664 = vmatpush1.msra.mxu0 %v3563
  %3665 = vmatprep.subr.mxu0 0.0
  %3666 = vmatpush1.msra.mxu0 %v3560
  %3667 = vmatprep.subr.mxu0 0.0
  %3668 = vmatpush1.msra.mxu0 %v3557
  %3669 = vmatprep.subr.mxu0 0.0
  %3670 = vmatpush1.msra.mxu0 %v3554
  %3671 = vmatprep.subr.mxu0 0.0
  %3672 = vmatpush1.msra.mxu0 %v3551
  %3673 = vmatprep.subr.mxu0 0.0
  %3674 = vmatpush1.msra.mxu0 %v3548
  %3675 = vmatprep.subr.mxu0 0.0
  %3676 = vmatpush1.msra.mxu0 %v3545
  %3677 = vmatprep.subr.mxu0 0.0
  %3678 = vmatpush1.msra.mxu0 %v3542
  %3679 = vmatprep.subr.mxu0 0.0
  %3680 = vmatpush1.msra.mxu0 %v3539
  %3681 = vmatprep.subr.mxu0 0.0
  %3682 = vmatpush1.msra.mxu0 %v3536
  %3683 = vmatprep.subr.mxu0 0.0
  %3684 = vmatpush1.msra.mxu0 %v3533
  %3685 = vmatprep.subr.mxu0 0.0
  %3686 = vmatpush2.msra.mxu0 0.0
  %3687 = vmatprep.subr.mxu0 0.0
  %3688 = vmatpush2.msra.mxu0 0.0
  %3689 = vmatprep.subr.mxu0 0.0
  %3690 = vmatpush2.msra.mxu0 0.0
  %3691 = vmatprep.subr.mxu0 0.0
  %3692 = vmatpush2.msra.mxu0 0.0
  %3693 = vmatprep.subr.mxu0 0.0
  %3694 = vmatpush2.msra.mxu0 0.0
  %3695 = vmatprep.subr.mxu0 0.0
  %3696 = vmatpush2.msra.mxu0 0.0
  %3697 = vmatprep.subr.mxu0 0.0
  %3698 = vmatpush2.msra.mxu0 0.0
  %3699 = vmatprep.subr.mxu0 0.0
  %3700 = vmatpush2.msra.mxu0 0.0
  %3701 = vmatprep.subr.mxu0 0.0
  %3702 = vmatpush2.msra.mxu0 0.0
  %3703 = vmatprep.subr.mxu0 0.0
  %3704 = vmatpush2.msra.mxu0 0.0
  %3705 = vmatprep.subr.mxu0 0.0
  %3706 = vmatpush2.msra.mxu0 0.0
  %3707 = vmatprep.subr.mxu0 0.0
  %3708 = vmatpush2.msra.mxu0 0.0
  %3709 = vmatprep.subr.mxu0 0.0
  %3710 = vmatpush2.msra.mxu0 0.0
  %3711 = vmatprep.subr.mxu0 0.0
  %3712 = vmatpush2.msra.mxu0 0.0
  %3713 = vmatprep.subr.mxu0 0.0
  %3714 = vmatpush2.msra.mxu0 0.0
  %3715 = vmatprep.subr.mxu0 0.0
  %3716 = vmatpush2.msra.mxu0 0.0
  %3717 = vmatprep.mubr.f32.mxu0 0.0
  %3718 = vmatmul.mubr.f32.gmra.mxu0 %v3580
  %v3719 = vpop.f32.mrf.mxu0
  %v3720 = vadd.f32 0.0, %v3719
  %v3721 = vpop.f32.mrf.mxu0
  %3722 = vdwg.mxu0
  %v3724 = vrot.slane %v3649, 2
  %v3726 = vadd.f32 %v3525, %v3724
  %v3727 = vxor.u32 %v3726, 2147483648
  %v3728 = vmul.f32 %v3727, 1.442695
  %v3729 = vpow.pop %v3728
  %v3730 = vadd.f32 %v3729, 1.0
  %v3731 = vrcp.pop %v3730
  %v3732 = vmul.f32 1.0, %v3731
  %v3734 = vrot.slane %v3651, 2
  %v3736 = vadd.f32 %v3526, %v3734
  %v3737 = vxor.u32 %v3736, 2147483648
  %v3738 = vmul.f32 %v3737, 1.442695
  %v3739 = vpow.pop %v3738
  %v3740 = vadd.f32 %v3739, 1.0
  %v3741 = vrcp.pop %v3740
  %v3742 = vmul.f32 1.0, %v3741
  %v3743 = vadd.f32 %v3720, %v567
  %v3745 = vrot.slane %v3743, 2
  %v3747 = vmul.f32 %v3732, %v3745
  %v3748 = vadd.f32 %v3527, %v3747
  %v3749 = vtanh.pop %v3748
  %v3750 = vsub.f32 1.0, %v3742
  %v3751 = vmul.f32 %v3750, %v3749
  %v3752 = vrot.slane %v3297, 6
  %v3754 = vmul.f32 %v3742, %v3752
  %v3755 = vadd.f32 %v3751, %v3754
  %v3756 = vld [vmem:[%s3] sm:$0xff]
  %v3757 = vld [vmem:[%s3 + $0x8] sm:$0xff]
  %v3758 = vld [vmem:[%s3 + $0x10] sm:$0xff]
  %v3759 = vld [vmem:[%s3 + $0x18] sm:$0xff]
  %v3760 = vld [vmem:[%s3 + $0x20] sm:$0xff]
  %v3761 = vld [vmem:[%s3 + $0x28] sm:$0xff]
  %v3762 = vld [vmem:[%s3 + $0x30] sm:$0xff]
  %v3763 = vld [vmem:[%s3 + $0x38] sm:$0xff]
  %v3764 = vld [vmem:[%s3 + $0x40] sm:$0xff]
  %v3765 = vld [vmem:[%s3 + $0x48] sm:$0xff]
  %v3766 = vld [vmem:[%s3 + $0x50] sm:$0xff]
  %v3767 = vld [vmem:[%s3 + $0x58] sm:$0xff]
  %v3768 = vld [vmem:[%s3 + $0x60] sm:$0xff]
  %v3769 = vld [vmem:[%s3 + $0x68] sm:$0xff]
  %v3770 = vld [vmem:[%s3 + $0x70] sm:$0xff]
  %v3771 = vld [vmem:[%s3 + $0x78] sm:$0xff]
  %v3772 = vld [vmem:[%s3 + $0x80] sm:$0xff]
  %v3773 = vld [vmem:[%s3 + $0x88] sm:$0xff]
  %v3774 = vld [vmem:[%s3 + $0x90] sm:$0xff]
  %v3775 = vld [vmem:[%s3 + $0x98] sm:$0xff]
  %v3776 = vld [vmem:[%s3 + $0xa0] sm:$0xff]
  %v3777 = vld [vmem:[%s3 + $0xa8] sm:$0xff]
  %v3778 = vld [vmem:[%s3 + $0xb0] sm:$0xff]
  %v3779 = vld [vmem:[%s3 + $0xb8] sm:$0xff]
  %v3780 = vld [vmem:[%s3 + $0xc0] sm:$0xff]
  %v3781 = vld [vmem:[%s3 + $0xc8] sm:$0xff]
  %v3782 = vld [vmem:[%s3 + $0xd0] sm:$0xff]
  %v3783 = vld [vmem:[%s3 + $0xd8] sm:$0xff]
  %v3784 = vld [vmem:[%s3 + $0xe0] sm:$0xff]
  %v3785 = vld [vmem:[%s3 + $0xe8] sm:$0xff]
  %v3786 = vld [vmem:[%s3 + $0xf0] sm:$0xff]
  %v3787 = vld [vmem:[%s3 + $0xf8] sm:$0xff]
  %v3788 = vld [vmem:[%s3 + $0x100] sm:$0xff]
  %v3789 = vld [vmem:[%s3 + $0x108] sm:$0xff]
  %v3790 = vld [vmem:[%s3 + $0x110] sm:$0xff]
  %v3791 = vld [vmem:[%s3 + $0x118] sm:$0xff]
  %v3792 = vld [vmem:[%s3 + $0x120] sm:$0xff]
  %v3793 = vld [vmem:[%s3 + $0x128] sm:$0xff]
  %v3794 = vld [vmem:[%s3 + $0x130] sm:$0xff]
  %v3795 = vld [vmem:[%s3 + $0x138] sm:$0xff]
  %v3796 = vld [vmem:[%s3 + $0x140] sm:$0xff]
  %v3797 = vld [vmem:[%s3 + $0x148] sm:$0xff]
  %v3798 = vld [vmem:[%s3 + $0x150] sm:$0xff]
  %v3799 = vld [vmem:[%s3 + $0x158] sm:$0xff]
  %v3800 = vld [vmem:[%s3 + $0x160] sm:$0xff]
  %v3801 = vld [vmem:[%s3 + $0x168] sm:$0xff]
  %v3802 = vld [vmem:[%s3 + $0x170] sm:$0xff]
  %v3803 = vld [vmem:[%s3 + $0x178] sm:$0xff]
  %v3805 = vrot.slane %v3522, 2
  %3807 = vmatprep.subr.mxu0 %v3802
  %3808 = vmatpush1.msra.mxu0 %v3801
  %3809 = vmatprep.subr.mxu0 %v3799
  %3810 = vmatpush1.msra.mxu0 %v3798
  %3811 = vmatprep.subr.mxu0 %v3796
  %3812 = vmatpush1.msra.mxu0 %v3795
  %3813 = vmatprep.subr.mxu0 %v3793
  %3814 = vmatpush1.msra.mxu0 %v3792
  %3815 = vmatprep.subr.mxu0 %v3790
  %3816 = vmatpush1.msra.mxu0 %v3789
  %3817 = vmatprep.subr.mxu0 %v3787
  %3818 = vmatpush1.msra.mxu0 %v3786
  %3819 = vmatprep.subr.mxu0 %v3784
  %3820 = vmatpush1.msra.mxu0 %v3783
  %3821 = vmatprep.subr.mxu0 %v3781
  %3822 = vmatpush1.msra.mxu0 %v3780
  %3823 = vmatprep.subr.mxu0 %v3778
  %3824 = vmatpush1.msra.mxu0 %v3777
  %3825 = vmatprep.subr.mxu0 %v3775
  %3826 = vmatpush1.msra.mxu0 %v3774
  %3827 = vmatprep.subr.mxu0 %v3772
  %3828 = vmatpush1.msra.mxu0 %v3771
  %3829 = vmatprep.subr.mxu0 %v3769
  %3830 = vmatpush1.msra.mxu0 %v3768
  %3831 = vmatprep.subr.mxu0 %v3766
  %3832 = vmatpush1.msra.mxu0 %v3765
  %3833 = vmatprep.subr.mxu0 %v3763
  %3834 = vmatpush1.msra.mxu0 %v3762
  %3835 = vmatprep.subr.mxu0 %v3760
  %3836 = vmatpush1.msra.mxu0 %v3759
  %3837 = vmatprep.subr.mxu0 %v3757
  %3838 = vmatpush1.msra.mxu0 %v3756
  %3839 = vmatprep.subr.mxu0 0.0
  %3840 = vmatpush2.msra.mxu0 0.0
  %3841 = vmatprep.subr.mxu0 0.0
  %3842 = vmatpush2.msra.mxu0 0.0
  %3843 = vmatprep.subr.mxu0 0.0
  %3844 = vmatpush2.msra.mxu0 0.0
  %3845 = vmatprep.subr.mxu0 0.0
  %3846 = vmatpush2.msra.mxu0 0.0
  %3847 = vmatprep.subr.mxu0 0.0
  %3848 = vmatpush2.msra.mxu0 0.0
  %3849 = vmatprep.subr.mxu0 0.0
  %3850 = vmatpush2.msra.mxu0 0.0
  %3851 = vmatprep.subr.mxu0 0.0
  %3852 = vmatpush2.msra.mxu0 0.0
  %3853 = vmatprep.subr.mxu0 0.0
  %3854 = vmatpush2.msra.mxu0 0.0
  %3855 = vmatprep.subr.mxu0 0.0
  %3856 = vmatpush2.msra.mxu0 0.0
  %3857 = vmatprep.subr.mxu0 0.0
  %3858 = vmatpush2.msra.mxu0 0.0
  %3859 = vmatprep.subr.mxu0 0.0
  %3860 = vmatpush2.msra.mxu0 0.0
  %3861 = vmatprep.subr.mxu0 0.0
  %3862 = vmatpush2.msra.mxu0 0.0
  %3863 = vmatprep.subr.mxu0 0.0
  %3864 = vmatpush2.msra.mxu0 0.0
  %3865 = vmatprep.subr.mxu0 0.0
  %3866 = vmatpush2.msra.mxu0 0.0
  %3867 = vmatprep.subr.mxu0 0.0
  %3868 = vmatpush2.msra.mxu0 0.0
  %3869 = vmatprep.subr.mxu0 0.0
  %3870 = vmatpush2.msra.mxu0 0.0
  %3871 = vmatprep.mubr.f32.mxu0 0.0
  %3872 = vmatmul.mubr.f32.gmra.mxu0 %v3805
  %v3873 = vpop.f32.mrf.mxu0
  %v3874 = vadd.f32 0.0, %v3873
  %v3875 = vpop.f32.mrf.mxu0
  %v3876 = vadd.f32 0.0, %v3875
  %3877 = vdwg.mxu0
  %3878 = vmatprep.subr.mxu0 0.0
  %3879 = vmatpush1.msra.mxu0 %v3803
  %3880 = vmatprep.subr.mxu0 0.0
  %3881 = vmatpush1.msra.mxu0 %v3800
  %3882 = vmatprep.subr.mxu0 0.0
  %3883 = vmatpush1.msra.mxu0 %v3797
  %3884 = vmatprep.subr.mxu0 0.0
  %3885 = vmatpush1.msra.mxu0 %v3794
  %3886 = vmatprep.subr.mxu0 0.0
  %3887 = vmatpush1.msra.mxu0 %v3791
  %3888 = vmatprep.subr.mxu0 0.0
  %3889 = vmatpush1.msra.mxu0 %v3788
  %3890 = vmatprep.subr.mxu0 0.0
  %3891 = vmatpush1.msra.mxu0 %v3785
  %3892 = vmatprep.subr.mxu0 0.0
  %3893 = vmatpush1.msra.mxu0 %v3782
  %3894 = vmatprep.subr.mxu0 0.0
  %3895 = vmatpush1.msra.mxu0 %v3779
  %3896 = vmatprep.subr.mxu0 0.0
  %3897 = vmatpush1.msra.mxu0 %v3776
  %3898 = vmatprep.subr.mxu0 0.0
  %3899 = vmatpush1.msra.mxu0 %v3773
  %3900 = vmatprep.subr.mxu0 0.0
  %3901 = vmatpush1.msra.mxu0 %v3770
  %3902 = vmatprep.subr.mxu0 0.0
  %3903 = vmatpush1.msra.mxu0 %v3767
  %3904 = vmatprep.subr.mxu0 0.0
  %3905 = vmatpush1.msra.mxu0 %v3764
  %3906 = vmatprep.subr.mxu0 0.0
  %3907 = vmatpush1.msra.mxu0 %v3761
  %3908 = vmatprep.subr.mxu0 0.0
  %3909 = vmatpush1.msra.mxu0 %v3758
  %3910 = vmatprep.subr.mxu0 0.0
  %3911 = vmatpush2.msra.mxu0 0.0
  %3912 = vmatprep.subr.mxu0 0.0
  %3913 = vmatpush2.msra.mxu0 0.0
  %3914 = vmatprep.subr.mxu0 0.0
  %3915 = vmatpush2.msra.mxu0 0.0
  %3916 = vmatprep.subr.mxu0 0.0
  %3917 = vmatpush2.msra.mxu0 0.0
  %3918 = vmatprep.subr.mxu0 0.0
  %3919 = vmatpush2.msra.mxu0 0.0
  %3920 = vmatprep.subr.mxu0 0.0
  %3921 = vmatpush2.msra.mxu0 0.0
  %3922 = vmatprep.subr.mxu0 0.0
  %3923 = vmatpush2.msra.mxu0 0.0
  %3924 = vmatprep.subr.mxu0 0.0
  %3925 = vmatpush2.msra.mxu0 0.0
  %3926 = vmatprep.subr.mxu0 0.0
  %3927 = vmatpush2.msra.mxu0 0.0
  %3928 = vmatprep.subr.mxu0 0.0
  %3929 = vmatpush2.msra.mxu0 0.0
  %3930 = vmatprep.subr.mxu0 0.0
  %3931 = vmatpush2.msra.mxu0 0.0
  %3932 = vmatprep.subr.mxu0 0.0
  %3933 = vmatpush2.msra.mxu0 0.0
  %3934 = vmatprep.subr.mxu0 0.0
  %3935 = vmatpush2.msra.mxu0 0.0
  %3936 = vmatprep.subr.mxu0 0.0
  %3937 = vmatpush2.msra.mxu0 0.0
  %3938 = vmatprep.subr.mxu0 0.0
  %3939 = vmatpush2.msra.mxu0 0.0
  %3940 = vmatprep.subr.mxu0 0.0
  %3941 = vmatpush2.msra.mxu0 0.0
  %3942 = vmatprep.mubr.f32.mxu0 0.0
  %3943 = vmatmul.mubr.f32.gmra.mxu0 %v3805
  %v3944 = vpop.f32.mrf.mxu0
  %v3945 = vadd.f32 0.0, %v3944
  %v3946 = vpop.f32.mrf.mxu0
  %3947 = vdwg.mxu0
  %v3948 = vadd.f32 %v3528, %v3874
  %v3949 = vxor.u32 %v3948, 2147483648
  %v3950 = vmul.f32 %v3949, 1.442695
  %v3951 = vpow.pop %v3950
  %v3952 = vadd.f32 %v3951, 1.0
  %v3953 = vrcp.pop %v3952
  %v3954 = vmul.f32 1.0, %v3953
  %v3955 = vadd.f32 %v3529, %v3876
  %v3956 = vxor.u32 %v3955, 2147483648
  %v3957 = vmul.f32 %v3956, 1.442695
  %v3958 = vpow.pop %v3957
  %v3959 = vadd.f32 %v3958, 1.0
  %v3960 = vrcp.pop %v3959
  %v3961 = vmul.f32 1.0, %v3960
  %v3962 = vadd.f32 %v3945, %v790
  %v3963 = vmul.f32 %v3954, %v3962
  %v3964 = vadd.f32 %v3530, %v3963
  %v3965 = vtanh.pop %v3964
  %v3966 = vsub.f32 1.0, %v3961
  %v3967 = vmul.f32 %v3966, %v3965
  %v3968 = vmul.f32 %v3961, %v3805
  %v3969 = vadd.f32 %v3967, %v3968
  %3970 = vst [vmem:[#allocation3 + $0x10] sm:$0xc0] %v3755
  %3971 = vst [vmem:[#allocation3 + $0x8] sm:$0x3] %v3969
  %v3972 = vld [vmem:[#allocation3] sm:$0xff]
  %v3973 = vld [vmem:[#allocation3 + $0x8] sm:$0xff]
  %v3974 = vld [vmem:[#allocation3 + $0x10] sm:$0xff]
  %v3975 = vld [vmem:[#allocation3 + $0x18] sm:$0xff]
  %v3976 = vld [vmem:[%s6] sm:$0xff]
  %v3977 = vld [vmem:[%s6 + $0x8] sm:$0xff]
  %v3978 = vld [vmem:[%s6 + $0x10] sm:$0xff]
  %v3979 = vld [vmem:[%s6 + $0x18] sm:$0xff]
  %v3980 = vld [vmem:[%s6 + $0x20] sm:$0xff]
  %v3981 = vld [vmem:[%s6 + $0x28] sm:$0xff]
  %v3982 = vld [vmem:[%s6 + $0x30] sm:$0xff]
  %v3983 = vld [vmem:[%s6 + $0x38] sm:$0xff]
  %v3984 = vld [vmem:[%s6 + $0x40] sm:$0xff]
  %v3985 = vld [vmem:[%s6 + $0x48] sm:$0xff]
  %v3986 = vld [vmem:[%s6 + $0x50] sm:$0xff]
  %v3987 = vld [vmem:[%s6 + $0x58] sm:$0xff]
  %v3988 = vld [vmem:[%s6 + $0x60] sm:$0xff]
  %v3989 = vld [vmem:[%s6 + $0x68] sm:$0xff]
  %v3990 = vld [vmem:[%s6 + $0x70] sm:$0xff]
  %v3991 = vld [vmem:[%s6 + $0x78] sm:$0xff]
  %v3992 = vld [vmem:[%s6 + $0x80] sm:$0xff]
  %v3993 = vld [vmem:[%s6 + $0x88] sm:$0xff]
  %v3994 = vld [vmem:[%s6 + $0x90] sm:$0xff]
  %v3995 = vld [vmem:[%s6 + $0x98] sm:$0xff]
  %v3996 = vld [vmem:[%s6 + $0xa0] sm:$0xff]
  %v3997 = vld [vmem:[%s6 + $0xa8] sm:$0xff]
  %v3998 = vld [vmem:[%s6 + $0xb0] sm:$0xff]
  %v3999 = vld [vmem:[%s6 + $0xb8] sm:$0xff]
  %v4000 = vld [vmem:[%s6 + $0xc0] sm:$0xff]
  %v4001 = vld [vmem:[%s6 + $0xc8] sm:$0xff]
  %v4002 = vld [vmem:[%s6 + $0xd0] sm:$0xff]
  %v4003 = vld [vmem:[%s6 + $0xd8] sm:$0xff]
  %v4004 = vld [vmem:[%s6 + $0xe0] sm:$0xff]
  %v4005 = vld [vmem:[%s6 + $0xe8] sm:$0xff]
  %v4006 = vld [vmem:[%s6 + $0xf0] sm:$0xff]
  %v4007 = vld [vmem:[%s6 + $0xf8] sm:$0xff]
  %v4008 = vld [vmem:[%s6 + $0x100] sm:$0xff]
  %v4009 = vld [vmem:[%s6 + $0x108] sm:$0xff]
  %v4010 = vld [vmem:[%s6 + $0x110] sm:$0xff]
  %v4011 = vld [vmem:[%s6 + $0x118] sm:$0xff]
  %v4012 = vld [vmem:[%s6 + $0x120] sm:$0xff]
  %v4013 = vld [vmem:[%s6 + $0x128] sm:$0xff]
  %v4014 = vld [vmem:[%s6 + $0x130] sm:$0xff]
  %v4015 = vld [vmem:[%s6 + $0x138] sm:$0xff]
  %v4016 = vld [vmem:[%s6 + $0x140] sm:$0xff]
  %v4017 = vld [vmem:[%s6 + $0x148] sm:$0xff]
  %v4018 = vld [vmem:[%s6 + $0x150] sm:$0xff]
  %v4019 = vld [vmem:[%s6 + $0x158] sm:$0xff]
  %v4020 = vld [vmem:[%s6 + $0x160] sm:$0xff]
  %v4021 = vld [vmem:[%s6 + $0x168] sm:$0xff]
  %v4022 = vld [vmem:[%s6 + $0x170] sm:$0xff]
  %v4023 = vld [vmem:[%s6 + $0x178] sm:$0xff]
  %v4024 = vld [vmem:[%s6 + $0x180] sm:$0xff]
  %v4025 = vld [vmem:[%s6 + $0x188] sm:$0xff]
  %v4026 = vld [vmem:[%s6 + $0x190] sm:$0xff]
  %v4027 = vld [vmem:[%s6 + $0x198] sm:$0xff]
  %v4028 = vld [vmem:[%s6 + $0x1a0] sm:$0xff]
  %v4029 = vld [vmem:[%s6 + $0x1a8] sm:$0xff]
  %v4030 = vld [vmem:[%s6 + $0x1b0] sm:$0xff]
  %v4031 = vld [vmem:[%s6 + $0x1b8] sm:$0xff]
  %v4032 = vld [vmem:[%s6 + $0x1c0] sm:$0xff]
  %v4033 = vld [vmem:[%s6 + $0x1c8] sm:$0xff]
  %v4034 = vld [vmem:[%s6 + $0x1d0] sm:$0xff]
  %v4035 = vld [vmem:[%s6 + $0x1d8] sm:$0xff]
  %v4036 = vld [vmem:[%s6 + $0x1e0] sm:$0xff]
  %v4037 = vld [vmem:[%s6 + $0x1e8] sm:$0xff]
  %v4038 = vld [vmem:[%s6 + $0x1f0] sm:$0xff]
  %v4039 = vld [vmem:[%s6 + $0x1f8] sm:$0xff]
  %v4040 = vld [vmem:[%s6 + $0x200] sm:$0xff]
  %v4041 = vld [vmem:[%s6 + $0x208] sm:$0xff]
  %v4042 = vld [vmem:[%s6 + $0x210] sm:$0xff]
  %v4043 = vld [vmem:[%s6 + $0x218] sm:$0xff]
  %v4044 = vld [vmem:[%s6 + $0x220] sm:$0xff]
  %v4045 = vld [vmem:[%s6 + $0x228] sm:$0xff]
  %v4046 = vld [vmem:[%s6 + $0x230] sm:$0xff]
  %v4047 = vld [vmem:[%s6 + $0x238] sm:$0xff]
  %v4048 = vld [vmem:[%s6 + $0x240] sm:$0xff]
  %v4049 = vld [vmem:[%s6 + $0x248] sm:$0xff]
  %v4050 = vld [vmem:[%s6 + $0x250] sm:$0xff]
  %v4051 = vld [vmem:[%s6 + $0x258] sm:$0xff]
  %v4052 = vld [vmem:[%s6 + $0x260] sm:$0xff]
  %v4053 = vld [vmem:[%s6 + $0x268] sm:$0xff]
  %v4054 = vld [vmem:[%s6 + $0x270] sm:$0xff]
  %v4055 = vld [vmem:[%s6 + $0x278] sm:$0xff]
  %v4056 = vld [vmem:[%s6 + $0x280] sm:$0xff]
  %v4057 = vld [vmem:[%s6 + $0x288] sm:$0xff]
  %v4058 = vld [vmem:[%s6 + $0x290] sm:$0xff]
  %v4059 = vld [vmem:[%s6 + $0x298] sm:$0xff]
  %v4060 = vld [vmem:[%s6 + $0x2a0] sm:$0xff]
  %v4061 = vld [vmem:[%s6 + $0x2a8] sm:$0xff]
  %v4062 = vld [vmem:[%s6 + $0x2b0] sm:$0xff]
  %v4063 = vld [vmem:[%s6 + $0x2b8] sm:$0xff]
  %v4064 = vld [vmem:[%s6 + $0x2c0] sm:$0xff]
  %v4065 = vld [vmem:[%s6 + $0x2c8] sm:$0xff]
  %v4066 = vld [vmem:[%s6 + $0x2d0] sm:$0xff]
  %v4067 = vld [vmem:[%s6 + $0x2d8] sm:$0xff]
  %v4068 = vld [vmem:[%s6 + $0x2e0] sm:$0xff]
  %v4069 = vld [vmem:[%s6 + $0x2e8] sm:$0xff]
  %v4070 = vld [vmem:[%s6 + $0x2f0] sm:$0xff]
  %v4071 = vld [vmem:[%s6 + $0x2f8] sm:$0xff]
  %v4072 = vld [vmem:[%s6 + $0x300] sm:$0xff]
  %v4073 = vld [vmem:[%s6 + $0x308] sm:$0xff]
  %v4074 = vld [vmem:[%s6 + $0x310] sm:$0xff]
  %v4075 = vld [vmem:[%s6 + $0x318] sm:$0xff]
  %v4076 = vld [vmem:[%s6 + $0x320] sm:$0xff]
  %v4077 = vld [vmem:[%s6 + $0x328] sm:$0xff]
  %v4078 = vld [vmem:[%s6 + $0x330] sm:$0xff]
  %v4079 = vld [vmem:[%s6 + $0x338] sm:$0xff]
  %v4080 = vld [vmem:[%s6 + $0x340] sm:$0xff]
  %v4081 = vld [vmem:[%s6 + $0x348] sm:$0xff]
  %v4082 = vld [vmem:[%s6 + $0x350] sm:$0xff]
  %v4083 = vld [vmem:[%s6 + $0x358] sm:$0xff]
  %v4084 = vld [vmem:[%s6 + $0x360] sm:$0xff]
  %v4085 = vld [vmem:[%s6 + $0x368] sm:$0xff]
  %v4086 = vld [vmem:[%s6 + $0x370] sm:$0xff]
  %v4087 = vld [vmem:[%s6 + $0x378] sm:$0xff]
  %v4088 = vld [vmem:[%s6 + $0x380] sm:$0xff]
  %v4089 = vld [vmem:[%s6 + $0x388] sm:$0xff]
  %v4090 = vld [vmem:[%s6 + $0x390] sm:$0xff]
  %v4091 = vld [vmem:[%s6 + $0x398] sm:$0xff]
  %v4092 = vld [vmem:[%s6 + $0x3a0] sm:$0xff]
  %v4093 = vld [vmem:[%s6 + $0x3a8] sm:$0xff]
  %v4094 = vld [vmem:[%s6 + $0x3b0] sm:$0xff]
  %v4095 = vld [vmem:[%s6 + $0x3b8] sm:$0xff]
  %v4096 = vld [vmem:[%s6 + $0x3c0] sm:$0xff]
  %v4097 = vld [vmem:[%s6 + $0x3c8] sm:$0xff]
  %v4098 = vld [vmem:[%s6 + $0x3d0] sm:$0xff]
  %v4099 = vld [vmem:[%s6 + $0x3d8] sm:$0xff]
  %v4100 = vld [vmem:[%s6 + $0x3e0] sm:$0xff]
  %v4101 = vld [vmem:[%s6 + $0x3e8] sm:$0xff]
  %v4102 = vld [vmem:[%s6 + $0x3f0] sm:$0xff]
  %v4103 = vld [vmem:[%s6 + $0x3f8] sm:$0xff]
  %v4104 = vld [vmem:[%s6 + $0x400] sm:$0xff]
  %v4105 = vld [vmem:[%s6 + $0x408] sm:$0xff]
  %v4106 = vld [vmem:[%s6 + $0x410] sm:$0xff]
  %v4107 = vld [vmem:[%s6 + $0x418] sm:$0xff]
  %v4108 = vld [vmem:[%s6 + $0x420] sm:$0xff]
  %v4109 = vld [vmem:[%s6 + $0x428] sm:$0xff]
  %v4110 = vld [vmem:[%s6 + $0x430] sm:$0xff]
  %v4111 = vld [vmem:[%s6 + $0x438] sm:$0xff]
  %v4112 = vld [vmem:[%s6 + $0x440] sm:$0xff]
  %v4113 = vld [vmem:[%s6 + $0x448] sm:$0xff]
  %v4114 = vld [vmem:[%s6 + $0x450] sm:$0xff]
  %v4115 = vld [vmem:[%s6 + $0x458] sm:$0xff]
  %v4116 = vld [vmem:[%s6 + $0x460] sm:$0xff]
  %v4117 = vld [vmem:[%s6 + $0x468] sm:$0xff]
  %v4118 = vld [vmem:[%s6 + $0x470] sm:$0xff]
  %v4119 = vld [vmem:[%s6 + $0x478] sm:$0xff]
  %v4120 = vld [vmem:[%s6 + $0x480] sm:$0xff]
  %v4121 = vld [vmem:[%s6 + $0x488] sm:$0xff]
  %v4122 = vld [vmem:[%s6 + $0x490] sm:$0xff]
  %v4123 = vld [vmem:[%s6 + $0x498] sm:$0xff]
  %v4124 = vld [vmem:[%s6 + $0x4a0] sm:$0xff]
  %v4125 = vld [vmem:[%s6 + $0x4a8] sm:$0xff]
  %v4126 = vld [vmem:[%s6 + $0x4b0] sm:$0xff]
  %v4127 = vld [vmem:[%s6 + $0x4b8] sm:$0xff]
  %v4128 = vld [vmem:[%s6 + $0x4c0] sm:$0xff]
  %v4129 = vld [vmem:[%s6 + $0x4c8] sm:$0xff]
  %v4130 = vld [vmem:[%s6 + $0x4d0] sm:$0xff]
  %v4131 = vld [vmem:[%s6 + $0x4d8] sm:$0xff]
  %v4132 = vld [vmem:[%s6 + $0x4e0] sm:$0xff]
  %v4133 = vld [vmem:[%s6 + $0x4e8] sm:$0xff]
  %v4134 = vld [vmem:[%s6 + $0x4f0] sm:$0xff]
  %v4135 = vld [vmem:[%s6 + $0x4f8] sm:$0xff]
  %v4136 = vld [vmem:[%s6 + $0x500] sm:$0xff]
  %v4137 = vld [vmem:[%s6 + $0x508] sm:$0xff]
  %v4138 = vld [vmem:[%s6 + $0x510] sm:$0xff]
  %v4139 = vld [vmem:[%s6 + $0x518] sm:$0xff]
  %v4140 = vld [vmem:[%s6 + $0x520] sm:$0xff]
  %v4141 = vld [vmem:[%s6 + $0x528] sm:$0xff]
  %v4142 = vld [vmem:[%s6 + $0x530] sm:$0xff]
  %v4143 = vld [vmem:[%s6 + $0x538] sm:$0xff]
  %v4144 = vld [vmem:[%s6 + $0x540] sm:$0xff]
  %v4145 = vld [vmem:[%s6 + $0x548] sm:$0xff]
  %v4146 = vld [vmem:[%s6 + $0x550] sm:$0xff]
  %v4147 = vld [vmem:[%s6 + $0x558] sm:$0xff]
  %v4148 = vld [vmem:[%s6 + $0x560] sm:$0xff]
  %v4149 = vld [vmem:[%s6 + $0x568] sm:$0xff]
  %v4150 = vld [vmem:[%s6 + $0x570] sm:$0xff]
  %v4151 = vld [vmem:[%s6 + $0x578] sm:$0xff]
  %v4152 = vld [vmem:[%s6 + $0x580] sm:$0xff]
  %v4153 = vld [vmem:[%s6 + $0x588] sm:$0xff]
  %v4154 = vld [vmem:[%s6 + $0x590] sm:$0xff]
  %v4155 = vld [vmem:[%s6 + $0x598] sm:$0xff]
  %v4156 = vld [vmem:[%s6 + $0x5a0] sm:$0xff]
  %v4157 = vld [vmem:[%s6 + $0x5a8] sm:$0xff]
  %v4158 = vld [vmem:[%s6 + $0x5b0] sm:$0xff]
  %v4159 = vld [vmem:[%s6 + $0x5b8] sm:$0xff]
  %v4160 = vld [vmem:[%s6 + $0x5c0] sm:$0xff]
  %v4161 = vld [vmem:[%s6 + $0x5c8] sm:$0xff]
  %v4162 = vld [vmem:[%s6 + $0x5d0] sm:$0xff]
  %v4163 = vld [vmem:[%s6 + $0x5d8] sm:$0xff]
  %v4164 = vld [vmem:[%s6 + $0x5e0] sm:$0xff]
  %v4165 = vld [vmem:[%s6 + $0x5e8] sm:$0xff]
  %v4166 = vld [vmem:[%s6 + $0x5f0] sm:$0xff]
  %v4167 = vld [vmem:[%s6 + $0x5f8] sm:$0xff]
  %v4168 = vld [vmem:[%s9] sm:$0x3f]
  %v4170 = vlaneseq
  %v4171 = vshrl.u32 %v4170, 7
  %v4172 = vsub.s32 0, %v4171
  %v4173 = vrot.slane %v4168, %v4172
  %v4174 = vlaneseq
  %v4175 = vshrl.u32 %v4174, 7
  %v4176 = vsub.s32 1, %v4175
  %v4177 = vrot.slane %v4168, %v4176
  %v4178 = vlaneseq
  %v4179 = vshrl.u32 %v4178, 7
  %v4180 = vsub.s32 2, %v4179
  %v4181 = vrot.slane %v4168, %v4180
  %v4182 = vlaneseq
  %v4183 = vshrl.u32 %v4182, 7
  %v4184 = vsub.s32 3, %v4183
  %v4185 = vrot.slane %v4168, %v4184
  %v4186 = vlaneseq
  %v4187 = vshrl.u32 %v4186, 7
  %v4188 = vsub.s32 4, %v4187
  %v4189 = vrot.slane %v4168, %v4188
  %v4190 = vlaneseq
  %v4191 = vshrl.u32 %v4190, 7
  %v4192 = vsub.s32 5, %v4191
  %v4193 = vrot.slane %v4168, %v4192
  %4200 = vmatprep.subr.mxu0 %v4067
  %4201 = vmatpush1.msra.mxu0 %v4066
  %4202 = vmatprep.subr.mxu0 %v4061
  %4203 = vmatpush1.msra.mxu0 %v4060
  %4204 = vmatprep.subr.mxu0 %v4055
  %4205 = vmatpush1.msra.mxu0 %v4054
  %4206 = vmatprep.subr.mxu0 %v4049
  %4207 = vmatpush1.msra.mxu0 %v4048
  %4208 = vmatprep.subr.mxu0 %v4043
  %4209 = vmatpush1.msra.mxu0 %v4042
  %4210 = vmatprep.subr.mxu0 %v4037
  %4211 = vmatpush1.msra.mxu0 %v4036
  %4212 = vmatprep.subr.mxu0 %v4031
  %4213 = vmatpush1.msra.mxu0 %v4030
  %4214 = vmatprep.subr.mxu0 %v4025
  %4215 = vmatpush1.msra.mxu0 %v4024
  %4216 = vmatprep.subr.mxu0 %v4019
  %4217 = vmatpush1.msra.mxu0 %v4018
  %4218 = vmatprep.subr.mxu0 %v4013
  %4219 = vmatpush1.msra.mxu0 %v4012
  %4220 = vmatprep.subr.mxu0 %v4007
  %4221 = vmatpush1.msra.mxu0 %v4006
  %4222 = vmatprep.subr.mxu0 %v4001
  %4223 = vmatpush1.msra.mxu0 %v4000
  %4224 = vmatprep.subr.mxu0 %v3995
  %4225 = vmatpush1.msra.mxu0 %v3994
  %4226 = vmatprep.subr.mxu0 %v3989
  %4227 = vmatpush1.msra.mxu0 %v3988
  %4228 = vmatprep.subr.mxu0 %v3983
  %4229 = vmatpush1.msra.mxu0 %v3982
  %4230 = vmatprep.subr.mxu0 %v3977
  %4231 = vmatpush1.msra.mxu0 %v3976
  %4232 = vmatprep.subr.mxu0 %v4163
  %4233 = vmatpush2.msra.mxu0 %v4162
  %4234 = vmatprep.subr.mxu0 %v4157
  %4235 = vmatpush2.msra.mxu0 %v4156
  %4236 = vmatprep.subr.mxu0 %v4151
  %4237 = vmatpush2.msra.mxu0 %v4150
  %4238 = vmatprep.subr.mxu0 %v4145
  %4239 = vmatpush2.msra.mxu0 %v4144
  %4240 = vmatprep.subr.mxu0 %v4139
  %4241 = vmatpush2.msra.mxu0 %v4138
  %4242 = vmatprep.subr.mxu0 %v4133
  %4243 = vmatpush2.msra.mxu0 %v4132
  %4244 = vmatprep.subr.mxu0 %v4127
  %4245 = vmatpush2.msra.mxu0 %v4126
  %4246 = vmatprep.subr.mxu0 %v4121
  %4247 = vmatpush2.msra.mxu0 %v4120
  %4248 = vmatprep.subr.mxu0 %v4115
  %4249 = vmatpush2.msra.mxu0 %v4114
  %4250 = vmatprep.subr.mxu0 %v4109
  %4251 = vmatpush2.msra.mxu0 %v4108
  %4252 = vmatprep.subr.mxu0 %v4103
  %4253 = vmatpush2.msra.mxu0 %v4102
  %4254 = vmatprep.subr.mxu0 %v4097
  %4255 = vmatpush2.msra.mxu0 %v4096
  %4256 = vmatprep.subr.mxu0 %v4091
  %4257 = vmatpush2.msra.mxu0 %v4090
  %4258 = vmatprep.subr.mxu0 %v4085
  %4259 = vmatpush2.msra.mxu0 %v4084
  %4260 = vmatprep.subr.mxu0 %v4079
  %4261 = vmatpush2.msra.mxu0 %v4078
  %4262 = vmatprep.subr.mxu0 %v4073
  %4263 = vmatpush2.msra.mxu0 %v4072
  %4264 = vmatprep.mubr.f32.mxu0 %v3973
  %4265 = vmatmul.mubr.f32.gmra.mxu0 %v3972
  %v4266 = vpop.f32.mrf.mxu0
  %v4267 = vadd.f32 %v4173, %v4266
  %v4268 = vpop.f32.mrf.mxu0
  %v4269 = vadd.f32 %v4177, %v4268
  %4270 = vmatprep.mubr.f32.mxu0 %v3975
  %4271 = vmatmul.mubr.f32.gmra.mxu0 %v3974
  %v4272 = vpop.f32.mrf.mxu0
  %v4273 = vadd.f32 %v4173, %v4272
  %v4274 = vpop.f32.mrf.mxu0
  %v4275 = vadd.f32 %v4177, %v4274
  %4276 = vdwg.mxu0
  %4277 = vmatprep.subr.mxu0 %v4069
  %4278 = vmatpush1.msra.mxu0 %v4068
  %4279 = vmatprep.subr.mxu0 %v4063
  %4280 = vmatpush1.msra.mxu0 %v4062
  %4281 = vmatprep.subr.mxu0 %v4057
  %4282 = vmatpush1.msra.mxu0 %v4056
  %4283 = vmatprep.subr.mxu0 %v4051
  %4284 = vmatpush1.msra.mxu0 %v4050
  %4285 = vmatprep.subr.mxu0 %v4045
  %4286 = vmatpush1.msra.mxu0 %v4044
  %4287 = vmatprep.subr.mxu0 %v4039
  %4288 = vmatpush1.msra.mxu0 %v4038
  %4289 = vmatprep.subr.mxu0 %v4033
  %4290 = vmatpush1.msra.mxu0 %v4032
  %4291 = vmatprep.subr.mxu0 %v4027
  %4292 = vmatpush1.msra.mxu0 %v4026
  %4293 = vmatprep.subr.mxu0 %v4021
  %4294 = vmatpush1.msra.mxu0 %v4020
  %4295 = vmatprep.subr.mxu0 %v4015
  %4296 = vmatpush1.msra.mxu0 %v4014
  %4297 = vmatprep.subr.mxu0 %v4009
  %4298 = vmatpush1.msra.mxu0 %v4008
  %4299 = vmatprep.subr.mxu0 %v4003
  %4300 = vmatpush1.msra.mxu0 %v4002
  %4301 = vmatprep.subr.mxu0 %v3997
  %4302 = vmatpush1.msra.mxu0 %v3996
  %4303 = vmatprep.subr.mxu0 %v3991
  %4304 = vmatpush1.msra.mxu0 %v3990
  %4305 = vmatprep.subr.mxu0 %v3985
  %4306 = vmatpush1.msra.mxu0 %v3984
  %4307 = vmatprep.subr.mxu0 %v3979
  %4308 = vmatpush1.msra.mxu0 %v3978
  %4309 = vmatprep.subr.mxu0 %v4165
  %4310 = vmatpush2.msra.mxu0 %v4164
  %4311 = vmatprep.subr.mxu0 %v4159
  %4312 = vmatpush2.msra.mxu0 %v4158
  %4313 = vmatprep.subr.mxu0 %v4153
  %4314 = vmatpush2.msra.mxu0 %v4152
  %4315 = vmatprep.subr.mxu0 %v4147
  %4316 = vmatpush2.msra.mxu0 %v4146
  %4317 = vmatprep.subr.mxu0 %v4141
  %4318 = vmatpush2.msra.mxu0 %v4140
  %4319 = vmatprep.subr.mxu0 %v4135
  %4320 = vmatpush2.msra.mxu0 %v4134
  %4321 = vmatprep.subr.mxu0 %v4129
  %4322 = vmatpush2.msra.mxu0 %v4128
  %4323 = vmatprep.subr.mxu0 %v4123
  %4324 = vmatpush2.msra.mxu0 %v4122
  %4325 = vmatprep.subr.mxu0 %v4117
  %4326 = vmatpush2.msra.mxu0 %v4116
  %4327 = vmatprep.subr.mxu0 %v4111
  %4328 = vmatpush2.msra.mxu0 %v4110
  %4329 = vmatprep.subr.mxu0 %v4105
  %4330 = vmatpush2.msra.mxu0 %v4104
  %4331 = vmatprep.subr.mxu0 %v4099
  %4332 = vmatpush2.msra.mxu0 %v4098
  %4333 = vmatprep.subr.mxu0 %v4093
  %4334 = vmatpush2.msra.mxu0 %v4092
  %4335 = vmatprep.subr.mxu0 %v4087
  %4336 = vmatpush2.msra.mxu0 %v4086
  %4337 = vmatprep.subr.mxu0 %v4081
  %4338 = vmatpush2.msra.mxu0 %v4080
  %4339 = vmatprep.subr.mxu0 %v4075
  %4340 = vmatpush2.msra.mxu0 %v4074
  %4341 = vmatprep.mubr.f32.mxu0 %v3973
  %4342 = vmatmul.mubr.f32.gmra.mxu0 %v3972
  %v4343 = vpop.f32.mrf.mxu0
  %v4344 = vadd.f32 %v4181, %v4343
  %v4345 = vpop.f32.mrf.mxu0
  %v4346 = vadd.f32 %v4185, %v4345
  %4347 = vmatprep.mubr.f32.mxu0 %v3975
  %4348 = vmatmul.mubr.f32.gmra.mxu0 %v3974
  %v4349 = vpop.f32.mrf.mxu0
  %v4350 = vadd.f32 %v4181, %v4349
  %v4351 = vpop.f32.mrf.mxu0
  %v4352 = vadd.f32 %v4185, %v4351
  %4353 = vdwg.mxu0
  %4354 = vmatprep.subr.mxu0 %v4071
  %4355 = vmatpush1.msra.mxu0 %v4070
  %4356 = vmatprep.subr.mxu0 %v4065
  %4357 = vmatpush1.msra.mxu0 %v4064
  %4358 = vmatprep.subr.mxu0 %v4059
  %4359 = vmatpush1.msra.mxu0 %v4058
  %4360 = vmatprep.subr.mxu0 %v4053
  %4361 = vmatpush1.msra.mxu0 %v4052
  %4362 = vmatprep.subr.mxu0 %v4047
  %4363 = vmatpush1.msra.mxu0 %v4046
  %4364 = vmatprep.subr.mxu0 %v4041
  %4365 = vmatpush1.msra.mxu0 %v4040
  %4366 = vmatprep.subr.mxu0 %v4035
  %4367 = vmatpush1.msra.mxu0 %v4034
  %4368 = vmatprep.subr.mxu0 %v4029
  %4369 = vmatpush1.msra.mxu0 %v4028
  %4370 = vmatprep.subr.mxu0 %v4023
  %4371 = vmatpush1.msra.mxu0 %v4022
  %4372 = vmatprep.subr.mxu0 %v4017
  %4373 = vmatpush1.msra.mxu0 %v4016
  %4374 = vmatprep.subr.mxu0 %v4011
  %4375 = vmatpush1.msra.mxu0 %v4010
  %4376 = vmatprep.subr.mxu0 %v4005
  %4377 = vmatpush1.msra.mxu0 %v4004
  %4378 = vmatprep.subr.mxu0 %v3999
  %4379 = vmatpush1.msra.mxu0 %v3998
  %4380 = vmatprep.subr.mxu0 %v3993
  %4381 = vmatpush1.msra.mxu0 %v3992
  %4382 = vmatprep.subr.mxu0 %v3987
  %4383 = vmatpush1.msra.mxu0 %v3986
  %4384 = vmatprep.subr.mxu0 %v3981
  %4385 = vmatpush1.msra.mxu0 %v3980
  %4386 = vmatprep.subr.mxu0 %v4167
  %4387 = vmatpush2.msra.mxu0 %v4166
  %4388 = vmatprep.subr.mxu0 %v4161
  %4389 = vmatpush2.msra.mxu0 %v4160
  %4390 = vmatprep.subr.mxu0 %v4155
  %4391 = vmatpush2.msra.mxu0 %v4154
  %4392 = vmatprep.subr.mxu0 %v4149
  %4393 = vmatpush2.msra.mxu0 %v4148
  %4394 = vmatprep.subr.mxu0 %v4143
  %4395 = vmatpush2.msra.mxu0 %v4142
  %4396 = vmatprep.subr.mxu0 %v4137
  %4397 = vmatpush2.msra.mxu0 %v4136
  %4398 = vmatprep.subr.mxu0 %v4131
  %4399 = vmatpush2.msra.mxu0 %v4130
  %4400 = vmatprep.subr.mxu0 %v4125
  %4401 = vmatpush2.msra.mxu0 %v4124
  %4402 = vmatprep.subr.mxu0 %v4119
  %4403 = vmatpush2.msra.mxu0 %v4118
  %4404 = vmatprep.subr.mxu0 %v4113
  %4405 = vmatpush2.msra.mxu0 %v4112
  %4406 = vmatprep.subr.mxu0 %v4107
  %4407 = vmatpush2.msra.mxu0 %v4106
  %4408 = vmatprep.subr.mxu0 %v4101
  %4409 = vmatpush2.msra.mxu0 %v4100
  %4410 = vmatprep.subr.mxu0 %v4095
  %4411 = vmatpush2.msra.mxu0 %v4094
  %4412 = vmatprep.subr.mxu0 %v4089
  %4413 = vmatpush2.msra.mxu0 %v4088
  %4414 = vmatprep.subr.mxu0 %v4083
  %4415 = vmatpush2.msra.mxu0 %v4082
  %4416 = vmatprep.subr.mxu0 %v4077
  %4417 = vmatpush2.msra.mxu0 %v4076
  %4418 = vmatprep.mubr.f32.mxu0 %v3973
  %4419 = vmatmul.mubr.f32.gmra.mxu0 %v3972
  %v4420 = vpop.f32.mrf.mxu0
  %v4421 = vadd.f32 %v4189, %v4420
  %v4422 = vpop.f32.mrf.mxu0
  %v4423 = vadd.f32 %v4193, %v4422
  %4424 = vmatprep.mubr.f32.mxu0 %v3975
  %4425 = vmatmul.mubr.f32.gmra.mxu0 %v3974
  %v4426 = vpop.f32.mrf.mxu0
  %v4427 = vadd.f32 %v4189, %v4426
  %v4428 = vpop.f32.mrf.mxu0
  %v4429 = vadd.f32 %v4193, %v4428
  %4430 = vdwg.mxu0
  %4431 = vst [vmem:[#allocation2] sm:$0xff] %v4267
  %4432 = vst [vmem:[#allocation2 + $0x8] sm:$0xff] %v4269
  %4433 = vst [vmem:[#allocation2 + $0x10] sm:$0xff] %v4344
  %4434 = vst [vmem:[#allocation2 + $0x18] sm:$0xff] %v4346
  %4435 = vst [vmem:[#allocation2 + $0x20] sm:$0xff] %v4421
  %4436 = vst [vmem:[#allocation2 + $0x28] sm:$0xff] %v4423
  %4437 = vst [vmem:[#allocation2 + $0x30] sm:$0xff] %v4273
  %4438 = vst [vmem:[#allocation2 + $0x38] sm:$0xff] %v4275
  %4439 = vst [vmem:[#allocation2 + $0x40] sm:$0xff] %v4350
  %4440 = vst [vmem:[#allocation2 + $0x48] sm:$0xff] %v4352
  %4441 = vst [vmem:[#allocation2 + $0x50] sm:$0xff] %v4427
  %4442 = vst [vmem:[#allocation2 + $0x58] sm:$0xff] %v4429
  %v4443 = vld [vmem:[%s10] sm:$0x1]
  %v4444 = vld [vmem:[%s10 + $0x1] sm:$0x1]
  %v4445 = vld [vmem:[#allocation2] sm:$0x3]
  %v4446 = vld [vmem:[#allocation2 + $0x8] sm:$0x3]
  %v4447 = vld [vmem:[#allocation2 + $0x10] sm:$0x3]
  %v4448 = vld [vmem:[#allocation2 + $0x48] sm:$0xc0]
  %v4449 = vld [vmem:[#allocation2 + $0x50] sm:$0xc0]
  %v4450 = vld [vmem:[#allocation2 + $0x58] sm:$0xc0]
  %v4451 = vld [vmem:[%s7] sm:$0xff]
  %v4452 = vld [vmem:[%s7 + $0x8] sm:$0xff]
  %v4453 = vld [vmem:[%s7 + $0x10] sm:$0xff]
  %v4454 = vld [vmem:[%s7 + $0x18] sm:$0xff]
  %v4455 = vld [vmem:[%s7 + $0x20] sm:$0xff]
  %v4456 = vld [vmem:[%s7 + $0x28] sm:$0xff]
  %v4457 = vld [vmem:[%s7 + $0x30] sm:$0xff]
  %v4458 = vld [vmem:[%s7 + $0x38] sm:$0xff]
  %v4459 = vld [vmem:[%s7 + $0x40] sm:$0xff]
  %v4460 = vld [vmem:[%s7 + $0x48] sm:$0xff]
  %v4461 = vld [vmem:[%s7 + $0x50] sm:$0xff]
  %v4462 = vld [vmem:[%s7 + $0x58] sm:$0xff]
  %v4463 = vld [vmem:[%s7 + $0x60] sm:$0xff]
  %v4464 = vld [vmem:[%s7 + $0x68] sm:$0xff]
  %v4465 = vld [vmem:[%s7 + $0x70] sm:$0xff]
  %v4466 = vld [vmem:[%s7 + $0x78] sm:$0xff]
  %v4467 = vld [vmem:[%s7 + $0x80] sm:$0xff]
  %v4468 = vld [vmem:[%s7 + $0x88] sm:$0xff]
  %v4469 = vld [vmem:[%s7 + $0x90] sm:$0xff]
  %v4470 = vld [vmem:[%s7 + $0x98] sm:$0xff]
  %v4471 = vld [vmem:[%s7 + $0xa0] sm:$0xff]
  %v4472 = vld [vmem:[%s7 + $0xa8] sm:$0xff]
  %v4473 = vld [vmem:[%s7 + $0xb0] sm:$0xff]
  %v4474 = vld [vmem:[%s7 + $0xb8] sm:$0xff]
  %v4475 = vld [vmem:[%s7 + $0xc0] sm:$0xff]
  %v4476 = vld [vmem:[%s7 + $0xc8] sm:$0xff]
  %v4477 = vld [vmem:[%s7 + $0xd0] sm:$0xff]
  %v4478 = vld [vmem:[%s7 + $0xd8] sm:$0xff]
  %v4479 = vld [vmem:[%s7 + $0xe0] sm:$0xff]
  %v4480 = vld [vmem:[%s7 + $0xe8] sm:$0xff]
  %v4481 = vld [vmem:[%s7 + $0xf0] sm:$0xff]
  %v4482 = vld [vmem:[%s7 + $0xf8] sm:$0xff]
  %v4483 = vld [vmem:[%s7 + $0x100] sm:$0xff]
  %v4484 = vld [vmem:[%s7 + $0x108] sm:$0xff]
  %v4485 = vld [vmem:[%s7 + $0x110] sm:$0xff]
  %v4486 = vld [vmem:[%s7 + $0x118] sm:$0xff]
  %v4487 = vld [vmem:[%s7 + $0x120] sm:$0xff]
  %v4488 = vld [vmem:[%s7 + $0x128] sm:$0xff]
  %v4489 = vld [vmem:[%s7 + $0x130] sm:$0xff]
  %v4490 = vld [vmem:[%s7 + $0x138] sm:$0xff]
  %v4491 = vld [vmem:[%s7 + $0x140] sm:$0xff]
  %v4492 = vld [vmem:[%s7 + $0x148] sm:$0xff]
  %v4493 = vld [vmem:[%s7 + $0x150] sm:$0xff]
  %v4494 = vld [vmem:[%s7 + $0x158] sm:$0xff]
  %v4495 = vld [vmem:[%s7 + $0x160] sm:$0xff]
  %v4496 = vld [vmem:[%s7 + $0x168] sm:$0xff]
  %v4497 = vld [vmem:[%s7 + $0x170] sm:$0xff]
  %v4498 = vld [vmem:[%s7 + $0x178] sm:$0xff]
  %4499 = vmatprep.subr.mxu0 %v4497
  %4500 = vmatpush1.msra.mxu0 %v4496
  %4501 = vmatprep.subr.mxu0 %v4494
  %4502 = vmatpush1.msra.mxu0 %v4493
  %4503 = vmatprep.subr.mxu0 %v4491
  %4504 = vmatpush1.msra.mxu0 %v4490
  %4505 = vmatprep.subr.mxu0 %v4488
  %4506 = vmatpush1.msra.mxu0 %v4487
  %4507 = vmatprep.subr.mxu0 %v4485
  %4508 = vmatpush1.msra.mxu0 %v4484
  %4509 = vmatprep.subr.mxu0 %v4482
  %4510 = vmatpush1.msra.mxu0 %v4481
  %4511 = vmatprep.subr.mxu0 %v4479
  %4512 = vmatpush1.msra.mxu0 %v4478
  %4513 = vmatprep.subr.mxu0 %v4476
  %4514 = vmatpush1.msra.mxu0 %v4475
  %4515 = vmatprep.subr.mxu0 %v4473
  %4516 = vmatpush1.msra.mxu0 %v4472
  %4517 = vmatprep.subr.mxu0 %v4470
  %4518 = vmatpush1.msra.mxu0 %v4469
  %4519 = vmatprep.subr.mxu0 %v4467
  %4520 = vmatpush1.msra.mxu0 %v4466
  %4521 = vmatprep.subr.mxu0 %v4464
  %4522 = vmatpush1.msra.mxu0 %v4463
  %4523 = vmatprep.subr.mxu0 %v4461
  %4524 = vmatpush1.msra.mxu0 %v4460
  %4525 = vmatprep.subr.mxu0 %v4458
  %4526 = vmatpush1.msra.mxu0 %v4457
  %4527 = vmatprep.subr.mxu0 %v4455
  %4528 = vmatpush1.msra.mxu0 %v4454
  %4529 = vmatprep.subr.mxu0 %v4452
  %4530 = vmatpush1.msra.mxu0 %v4451
  %4531 = vmatprep.subr.mxu0 0.0
  %4532 = vmatpush2.msra.mxu0 0.0
  %4533 = vmatprep.subr.mxu0 0.0
  %4534 = vmatpush2.msra.mxu0 0.0
  %4535 = vmatprep.subr.mxu0 0.0
  %4536 = vmatpush2.msra.mxu0 0.0
  %4537 = vmatprep.subr.mxu0 0.0
  %4538 = vmatpush2.msra.mxu0 0.0
  %4539 = vmatprep.subr.mxu0 0.0
  %4540 = vmatpush2.msra.mxu0 0.0
  %4541 = vmatprep.subr.mxu0 0.0
  %4542 = vmatpush2.msra.mxu0 0.0
  %4543 = vmatprep.subr.mxu0 0.0
  %4544 = vmatpush2.msra.mxu0 0.0
  %4545 = vmatprep.subr.mxu0 0.0
  %4546 = vmatpush2.msra.mxu0 0.0
  %4547 = vmatprep.subr.mxu0 0.0
  %4548 = vmatpush2.msra.mxu0 0.0
  %4549 = vmatprep.subr.mxu0 0.0
  %4550 = vmatpush2.msra.mxu0 0.0
  %4551 = vmatprep.subr.mxu0 0.0
  %4552 = vmatpush2.msra.mxu0 0.0
  %4553 = vmatprep.subr.mxu0 0.0
  %4554 = vmatpush2.msra.mxu0 0.0
  %4555 = vmatprep.subr.mxu0 0.0
  %4556 = vmatpush2.msra.mxu0 0.0
  %4557 = vmatprep.subr.mxu0 0.0
  %4558 = vmatpush2.msra.mxu0 0.0
  %4559 = vmatprep.subr.mxu0 0.0
  %4560 = vmatpush2.msra.mxu0 0.0
  %4561 = vmatprep.subr.mxu0 0.0
  %4562 = vmatpush2.msra.mxu0 0.0
  %4563 = vmatprep.mubr.f32.mxu0 0.0
  %4564 = vmatmul.mubr.f32.gmra.mxu0 0.0
  %v4565 = vpop.f32.mrf.mxu0
  %v4566 = vadd.f32 0.0, %v4565
  %v4567 = vpop.f32.mrf.mxu0
  %v4568 = vadd.f32 0.0, %v4567
  %4569 = vdwg.mxu0
  %4570 = vmatprep.subr.mxu0 0.0
  %4571 = vmatpush1.msra.mxu0 %v4498
  %4572 = vmatprep.subr.mxu0 0.0
  %4573 = vmatpush1.msra.mxu0 %v4495
  %4574 = vmatprep.subr.mxu0 0.0
  %4575 = vmatpush1.msra.mxu0 %v4492
  %4576 = vmatprep.subr.mxu0 0.0
  %4577 = vmatpush1.msra.mxu0 %v4489
  %4578 = vmatprep.subr.mxu0 0.0
  %4579 = vmatpush1.msra.mxu0 %v4486
  %4580 = vmatprep.subr.mxu0 0.0
  %4581 = vmatpush1.msra.mxu0 %v4483
  %4582 = vmatprep.subr.mxu0 0.0
  %4583 = vmatpush1.msra.mxu0 %v4480
  %4584 = vmatprep.subr.mxu0 0.0
  %4585 = vmatpush1.msra.mxu0 %v4477
  %4586 = vmatprep.subr.mxu0 0.0
  %4587 = vmatpush1.msra.mxu0 %v4474
  %4588 = vmatprep.subr.mxu0 0.0
  %4589 = vmatpush1.msra.mxu0 %v4471
  %4590 = vmatprep.subr.mxu0 0.0
  %4591 = vmatpush1.msra.mxu0 %v4468
  %4592 = vmatprep.subr.mxu0 0.0
  %4593 = vmatpush1.msra.mxu0 %v4465
  %4594 = vmatprep.subr.mxu0 0.0
  %4595 = vmatpush1.msra.mxu0 %v4462
  %4596 = vmatprep.subr.mxu0 0.0
  %4597 = vmatpush1.msra.mxu0 %v4459
  %4598 = vmatprep.subr.mxu0 0.0
  %4599 = vmatpush1.msra.mxu0 %v4456
  %4600 = vmatprep.subr.mxu0 0.0
  %4601 = vmatpush1.msra.mxu0 %v4453
  %4602 = vmatprep.subr.mxu0 0.0
  %4603 = vmatpush2.msra.mxu0 0.0
  %4604 = vmatprep.subr.mxu0 0.0
  %4605 = vmatpush2.msra.mxu0 0.0
  %4606 = vmatprep.subr.mxu0 0.0
  %4607 = vmatpush2.msra.mxu0 0.0
  %4608 = vmatprep.subr.mxu0 0.0
  %4609 = vmatpush2.msra.mxu0 0.0
  %4610 = vmatprep.subr.mxu0 0.0
  %4611 = vmatpush2.msra.mxu0 0.0
  %4612 = vmatprep.subr.mxu0 0.0
  %4613 = vmatpush2.msra.mxu0 0.0
  %4614 = vmatprep.subr.mxu0 0.0
  %4615 = vmatpush2.msra.mxu0 0.0
  %4616 = vmatprep.subr.mxu0 0.0
  %4617 = vmatpush2.msra.mxu0 0.0
  %4618 = vmatprep.subr.mxu0 0.0
  %4619 = vmatpush2.msra.mxu0 0.0
  %4620 = vmatprep.subr.mxu0 0.0
  %4621 = vmatpush2.msra.mxu0 0.0
  %4622 = vmatprep.subr.mxu0 0.0
  %4623 = vmatpush2.msra.mxu0 0.0
  %4624 = vmatprep.subr.mxu0 0.0
  %4625 = vmatpush2.msra.mxu0 0.0
  %4626 = vmatprep.subr.mxu0 0.0
  %4627 = vmatpush2.msra.mxu0 0.0
  %4628 = vmatprep.subr.mxu0 0.0
  %4629 = vmatpush2.msra.mxu0 0.0
  %4630 = vmatprep.subr.mxu0 0.0
  %4631 = vmatpush2.msra.mxu0 0.0
  %4632 = vmatprep.subr.mxu0 0.0
  %4633 = vmatpush2.msra.mxu0 0.0
  %4634 = vmatprep.mubr.f32.mxu0 0.0
  %4635 = vmatmul.mubr.f32.gmra.mxu0 0.0
  %v4636 = vpop.f32.mrf.mxu0
  %v4637 = vadd.f32 0.0, %v4636
  %v4638 = vpop.f32.mrf.mxu0
  %4639 = vdwg.mxu0
  %v4640 = vadd.f32 %v4445, %v4566
  %v4641 = vxor.u32 %v4640, 2147483648
  %v4642 = vmul.f32 %v4641, 1.442695
  %v4643 = vpow.pop %v4642
  %v4644 = vadd.f32 %v4643, 1.0
  %v4645 = vrcp.pop %v4644
  %v4646 = vmul.f32 1.0, %v4645
  %v4647 = vadd.f32 %v4446, %v4568
  %v4648 = vxor.u32 %v4647, 2147483648
  %v4649 = vmul.f32 %v4648, 1.442695
  %v4650 = vpow.pop %v4649
  %v4651 = vadd.f32 %v4650, 1.0
  %v4652 = vrcp.pop %v4651
  %v4653 = vmul.f32 1.0, %v4652
  %v4655 = vlaneseq
  %v4656 = vshrl.u32 %v4655, 7
  %v4657 = vsub.s32 0, %v4656
  %v4658 = vrot.slane %v4443, %v4657
  %v4660 = vadd.f32 %v4637, %v4658
  %v4661 = vmul.f32 %v4646, %v4660
  %v4662 = vadd.f32 %v4447, %v4661
  %v4663 = vtanh.pop %v4662
  %v4664 = vsub.f32 1.0, %v4653
  %v4665 = vmul.f32 %v4664, %v4663
  %v4666 = vmul.f32 %v4653, 0.0
  %v4667 = vadd.f32 %v4665, %v4666
  %v4668 = vld [vmem:[%s8] sm:$0xff]
  %v4669 = vld [vmem:[%s8 + $0x8] sm:$0xff]
  %v4670 = vld [vmem:[%s8 + $0x10] sm:$0xff]
  %v4671 = vld [vmem:[%s8 + $0x18] sm:$0xff]
  %v4672 = vld [vmem:[%s8 + $0x20] sm:$0xff]
  %v4673 = vld [vmem:[%s8 + $0x28] sm:$0xff]
  %v4674 = vld [vmem:[%s8 + $0x30] sm:$0xff]
  %v4675 = vld [vmem:[%s8 + $0x38] sm:$0xff]
  %v4676 = vld [vmem:[%s8 + $0x40] sm:$0xff]
  %v4677 = vld [vmem:[%s8 + $0x48] sm:$0xff]
  %v4678 = vld [vmem:[%s8 + $0x50] sm:$0xff]
  %v4679 = vld [vmem:[%s8 + $0x58] sm:$0xff]
  %v4680 = vld [vmem:[%s8 + $0x60] sm:$0xff]
  %v4681 = vld [vmem:[%s8 + $0x68] sm:$0xff]
  %v4682 = vld [vmem:[%s8 + $0x70] sm:$0xff]
  %v4683 = vld [vmem:[%s8 + $0x78] sm:$0xff]
  %v4684 = vld [vmem:[%s8 + $0x80] sm:$0xff]
  %v4685 = vld [vmem:[%s8 + $0x88] sm:$0xff]
  %v4686 = vld [vmem:[%s8 + $0x90] sm:$0xff]
  %v4687 = vld [vmem:[%s8 + $0x98] sm:$0xff]
  %v4688 = vld [vmem:[%s8 + $0xa0] sm:$0xff]
  %v4689 = vld [vmem:[%s8 + $0xa8] sm:$0xff]
  %v4690 = vld [vmem:[%s8 + $0xb0] sm:$0xff]
  %v4691 = vld [vmem:[%s8 + $0xb8] sm:$0xff]
  %v4692 = vld [vmem:[%s8 + $0xc0] sm:$0xff]
  %v4693 = vld [vmem:[%s8 + $0xc8] sm:$0xff]
  %v4694 = vld [vmem:[%s8 + $0xd0] sm:$0xff]
  %v4695 = vld [vmem:[%s8 + $0xd8] sm:$0xff]
  %v4696 = vld [vmem:[%s8 + $0xe0] sm:$0xff]
  %v4697 = vld [vmem:[%s8 + $0xe8] sm:$0xff]
  %v4698 = vld [vmem:[%s8 + $0xf0] sm:$0xff]
  %v4699 = vld [vmem:[%s8 + $0xf8] sm:$0xff]
  %v4700 = vld [vmem:[%s8 + $0x100] sm:$0xff]
  %v4701 = vld [vmem:[%s8 + $0x108] sm:$0xff]
  %v4702 = vld [vmem:[%s8 + $0x110] sm:$0xff]
  %v4703 = vld [vmem:[%s8 + $0x118] sm:$0xff]
  %v4704 = vld [vmem:[%s8 + $0x120] sm:$0xff]
  %v4705 = vld [vmem:[%s8 + $0x128] sm:$0xff]
  %v4706 = vld [vmem:[%s8 + $0x130] sm:$0xff]
  %v4707 = vld [vmem:[%s8 + $0x138] sm:$0xff]
  %v4708 = vld [vmem:[%s8 + $0x140] sm:$0xff]
  %v4709 = vld [vmem:[%s8 + $0x148] sm:$0xff]
  %v4710 = vld [vmem:[%s8 + $0x150] sm:$0xff]
  %v4711 = vld [vmem:[%s8 + $0x158] sm:$0xff]
  %v4712 = vld [vmem:[%s8 + $0x160] sm:$0xff]
  %v4713 = vld [vmem:[%s8 + $0x168] sm:$0xff]
  %v4714 = vld [vmem:[%s8 + $0x170] sm:$0xff]
  %v4715 = vld [vmem:[%s8 + $0x178] sm:$0xff]
  %4716 = vmatprep.subr.mxu0 %v4714
  %4717 = vmatpush1.msra.mxu0 %v4713
  %4718 = vmatprep.subr.mxu0 %v4711
  %4719 = vmatpush1.msra.mxu0 %v4710
  %4720 = vmatprep.subr.mxu0 %v4708
  %4721 = vmatpush1.msra.mxu0 %v4707
  %4722 = vmatprep.subr.mxu0 %v4705
  %4723 = vmatpush1.msra.mxu0 %v4704
  %4724 = vmatprep.subr.mxu0 %v4702
  %4725 = vmatpush1.msra.mxu0 %v4701
  %4726 = vmatprep.subr.mxu0 %v4699
  %4727 = vmatpush1.msra.mxu0 %v4698
  %4728 = vmatprep.subr.mxu0 %v4696
  %4729 = vmatpush1.msra.mxu0 %v4695
  %4730 = vmatprep.subr.mxu0 %v4693
  %4731 = vmatpush1.msra.mxu0 %v4692
  %4732 = vmatprep.subr.mxu0 %v4690
  %4733 = vmatpush1.msra.mxu0 %v4689
  %4734 = vmatprep.subr.mxu0 %v4687
  %4735 = vmatpush1.msra.mxu0 %v4686
  %4736 = vmatprep.subr.mxu0 %v4684
  %4737 = vmatpush1.msra.mxu0 %v4683
  %4738 = vmatprep.subr.mxu0 %v4681
  %4739 = vmatpush1.msra.mxu0 %v4680
  %4740 = vmatprep.subr.mxu0 %v4678
  %4741 = vmatpush1.msra.mxu0 %v4677
  %4742 = vmatprep.subr.mxu0 %v4675
  %4743 = vmatpush1.msra.mxu0 %v4674
  %4744 = vmatprep.subr.mxu0 %v4672
  %4745 = vmatpush1.msra.mxu0 %v4671
  %4746 = vmatprep.subr.mxu0 %v4669
  %4747 = vmatpush1.msra.mxu0 %v4668
  %4748 = vmatprep.subr.mxu0 0.0
  %4749 = vmatpush2.msra.mxu0 0.0
  %4750 = vmatprep.subr.mxu0 0.0
  %4751 = vmatpush2.msra.mxu0 0.0
  %4752 = vmatprep.subr.mxu0 0.0
  %4753 = vmatpush2.msra.mxu0 0.0
  %4754 = vmatprep.subr.mxu0 0.0
  %4755 = vmatpush2.msra.mxu0 0.0
  %4756 = vmatprep.subr.mxu0 0.0
  %4757 = vmatpush2.msra.mxu0 0.0
  %4758 = vmatprep.subr.mxu0 0.0
  %4759 = vmatpush2.msra.mxu0 0.0
  %4760 = vmatprep.subr.mxu0 0.0
  %4761 = vmatpush2.msra.mxu0 0.0
  %4762 = vmatprep.subr.mxu0 0.0
  %4763 = vmatpush2.msra.mxu0 0.0
  %4764 = vmatprep.subr.mxu0 0.0
  %4765 = vmatpush2.msra.mxu0 0.0
  %4766 = vmatprep.subr.mxu0 0.0
  %4767 = vmatpush2.msra.mxu0 0.0
  %4768 = vmatprep.subr.mxu0 0.0
  %4769 = vmatpush2.msra.mxu0 0.0
  %4770 = vmatprep.subr.mxu0 0.0
  %4771 = vmatpush2.msra.mxu0 0.0
  %4772 = vmatprep.subr.mxu0 0.0
  %4773 = vmatpush2.msra.mxu0 0.0
  %4774 = vmatprep.subr.mxu0 0.0
  %4775 = vmatpush2.msra.mxu0 0.0
  %4776 = vmatprep.subr.mxu0 0.0
  %4777 = vmatpush2.msra.mxu0 0.0
  %4778 = vmatprep.subr.mxu0 0.0
  %4779 = vmatpush2.msra.mxu0 0.0
  %4780 = vmatprep.mubr.f32.mxu0 0.0
  %4781 = vmatmul.mubr.f32.gmra.mxu0 0.0
  %v4782 = vpop.f32.mrf.mxu0
  %v4783 = vadd.f32 0.0, %v4782
  %v4784 = vpop.f32.mrf.mxu0
  %v4785 = vadd.f32 0.0, %v4784
  %4786 = vdwg.mxu0
  %4787 = vmatprep.subr.mxu0 0.0
  %4788 = vmatpush1.msra.mxu0 %v4715
  %4789 = vmatprep.subr.mxu0 0.0
  %4790 = vmatpush1.msra.mxu0 %v4712
  %4791 = vmatprep.subr.mxu0 0.0
  %4792 = vmatpush1.msra.mxu0 %v4709
  %4793 = vmatprep.subr.mxu0 0.0
  %4794 = vmatpush1.msra.mxu0 %v4706
  %4795 = vmatprep.subr.mxu0 0.0
  %4796 = vmatpush1.msra.mxu0 %v4703
  %4797 = vmatprep.subr.mxu0 0.0
  %4798 = vmatpush1.msra.mxu0 %v4700
  %4799 = vmatprep.subr.mxu0 0.0
  %4800 = vmatpush1.msra.mxu0 %v4697
  %4801 = vmatprep.subr.mxu0 0.0
  %4802 = vmatpush1.msra.mxu0 %v4694
  %4803 = vmatprep.subr.mxu0 0.0
  %4804 = vmatpush1.msra.mxu0 %v4691
  %4805 = vmatprep.subr.mxu0 0.0
  %4806 = vmatpush1.msra.mxu0 %v4688
  %4807 = vmatprep.subr.mxu0 0.0
  %4808 = vmatpush1.msra.mxu0 %v4685
  %4809 = vmatprep.subr.mxu0 0.0
  %4810 = vmatpush1.msra.mxu0 %v4682
  %4811 = vmatprep.subr.mxu0 0.0
  %4812 = vmatpush1.msra.mxu0 %v4679
  %4813 = vmatprep.subr.mxu0 0.0
  %4814 = vmatpush1.msra.mxu0 %v4676
  %4815 = vmatprep.subr.mxu0 0.0
  %4816 = vmatpush1.msra.mxu0 %v4673
  %4817 = vmatprep.subr.mxu0 0.0
  %4818 = vmatpush1.msra.mxu0 %v4670
  %4819 = vmatprep.subr.mxu0 0.0
  %4820 = vmatpush2.msra.mxu0 0.0
  %4821 = vmatprep.subr.mxu0 0.0
  %4822 = vmatpush2.msra.mxu0 0.0
  %4823 = vmatprep.subr.mxu0 0.0
  %4824 = vmatpush2.msra.mxu0 0.0
  %4825 = vmatprep.subr.mxu0 0.0
  %4826 = vmatpush2.msra.mxu0 0.0
  %4827 = vmatprep.subr.mxu0 0.0
  %4828 = vmatpush2.msra.mxu0 0.0
  %4829 = vmatprep.subr.mxu0 0.0
  %4830 = vmatpush2.msra.mxu0 0.0
  %4831 = vmatprep.subr.mxu0 0.0
  %4832 = vmatpush2.msra.mxu0 0.0
  %4833 = vmatprep.subr.mxu0 0.0
  %4834 = vmatpush2.msra.mxu0 0.0
  %4835 = vmatprep.subr.mxu0 0.0
  %4836 = vmatpush2.msra.mxu0 0.0
  %4837 = vmatprep.subr.mxu0 0.0
  %4838 = vmatpush2.msra.mxu0 0.0
  %4839 = vmatprep.subr.mxu0 0.0
  %4840 = vmatpush2.msra.mxu0 0.0
  %4841 = vmatprep.subr.mxu0 0.0
  %4842 = vmatpush2.msra.mxu0 0.0
  %4843 = vmatprep.subr.mxu0 0.0
  %4844 = vmatpush2.msra.mxu0 0.0
  %4845 = vmatprep.subr.mxu0 0.0
  %4846 = vmatpush2.msra.mxu0 0.0
  %4847 = vmatprep.subr.mxu0 0.0
  %4848 = vmatpush2.msra.mxu0 0.0
  %4849 = vmatprep.subr.mxu0 0.0
  %4850 = vmatpush2.msra.mxu0 0.0
  %4851 = vmatprep.mubr.f32.mxu0 0.0
  %4852 = vmatmul.mubr.f32.gmra.mxu0 0.0
  %v4853 = vpop.f32.mrf.mxu0
  %v4854 = vadd.f32 0.0, %v4853
  %v4855 = vpop.f32.mrf.mxu0
  %4856 = vdwg.mxu0
  %v4858 = vrot.slane %v4783, 2
  %v4860 = vadd.f32 %v4448, %v4858
  %v4861 = vxor.u32 %v4860, 2147483648
  %v4862 = vmul.f32 %v4861, 1.442695
  %v4863 = vpow.pop %v4862
  %v4864 = vadd.f32 %v4863, 1.0
  %v4865 = vrcp.pop %v4864
  %v4866 = vmul.f32 1.0, %v4865
  %v4868 = vrot.slane %v4785, 2
  %v4870 = vadd.f32 %v4449, %v4868
  %v4871 = vxor.u32 %v4870, 2147483648
  %v4872 = vmul.f32 %v4871, 1.442695
  %v4873 = vpow.pop %v4872
  %v4874 = vadd.f32 %v4873, 1.0
  %v4875 = vrcp.pop %v4874
  %v4876 = vmul.f32 1.0, %v4875
  %v4878 = vlaneseq
  %v4879 = vshrl.u32 %v4878, 7
  %v4880 = vsub.s32 0, %v4879
  %v4881 = vrot.slane %v4444, %v4880
  %v4883 = vadd.f32 %v4854, %v4881
  %v4885 = vrot.slane %v4883, 2
  %v4887 = vmul.f32 %v4866, %v4885
  %v4888 = vadd.f32 %v4450, %v4887
  %v4889 = vtanh.pop %v4888
  %v4890 = vsub.f32 1.0, %v4876
  %v4891 = vmul.f32 %v4890, %v4889
  %v4892 = vmul.f32 %v4876, 0.0
  %v4893 = vadd.f32 %v4891, %v4892
  %4894 = vst [vmem:[#allocation4] sm:$0x3] %v4667
  %4895 = vst [vmem:[#allocation4 + $0x18] sm:$0xc0] %v4893
  %v4896 = vld [vmem:[#allocation2] sm:$0xc]
  %v4897 = vld [vmem:[#allocation2 + $0x8] sm:$0xc]
  %v4898 = vld [vmem:[#allocation2 + $0x10] sm:$0xc]
  %v4899 = vld [vmem:[#allocation2 + $0x48] sm:$0x30]
  %v4900 = vld [vmem:[#allocation2 + $0x50] sm:$0x30]
  %v4901 = vld [vmem:[#allocation2 + $0x58] sm:$0x30]
  %v4902 = vld [vmem:[%s7] sm:$0xff]
  %v4903 = vld [vmem:[%s7 + $0x8] sm:$0xff]
  %v4904 = vld [vmem:[%s7 + $0x10] sm:$0xff]
  %v4905 = vld [vmem:[%s7 + $0x18] sm:$0xff]
  %v4906 = vld [vmem:[%s7 + $0x20] sm:$0xff]
  %v4907 = vld [vmem:[%s7 + $0x28] sm:$0xff]
  %v4908 = vld [vmem:[%s7 + $0x30] sm:$0xff]
  %v4909 = vld [vmem:[%s7 + $0x38] sm:$0xff]
  %v4910 = vld [vmem:[%s7 + $0x40] sm:$0xff]
  %v4911 = vld [vmem:[%s7 + $0x48] sm:$0xff]
  %v4912 = vld [vmem:[%s7 + $0x50] sm:$0xff]
  %v4913 = vld [vmem:[%s7 + $0x58] sm:$0xff]
  %v4914 = vld [vmem:[%s7 + $0x60] sm:$0xff]
  %v4915 = vld [vmem:[%s7 + $0x68] sm:$0xff]
  %v4916 = vld [vmem:[%s7 + $0x70] sm:$0xff]
  %v4917 = vld [vmem:[%s7 + $0x78] sm:$0xff]
  %v4918 = vld [vmem:[%s7 + $0x80] sm:$0xff]
  %v4919 = vld [vmem:[%s7 + $0x88] sm:$0xff]
  %v4920 = vld [vmem:[%s7 + $0x90] sm:$0xff]
  %v4921 = vld [vmem:[%s7 + $0x98] sm:$0xff]
  %v4922 = vld [vmem:[%s7 + $0xa0] sm:$0xff]
  %v4923 = vld [vmem:[%s7 + $0xa8] sm:$0xff]
  %v4924 = vld [vmem:[%s7 + $0xb0] sm:$0xff]
  %v4925 = vld [vmem:[%s7 + $0xb8] sm:$0xff]
  %v4926 = vld [vmem:[%s7 + $0xc0] sm:$0xff]
  %v4927 = vld [vmem:[%s7 + $0xc8] sm:$0xff]
  %v4928 = vld [vmem:[%s7 + $0xd0] sm:$0xff]
  %v4929 = vld [vmem:[%s7 + $0xd8] sm:$0xff]
  %v4930 = vld [vmem:[%s7 + $0xe0] sm:$0xff]
  %v4931 = vld [vmem:[%s7 + $0xe8] sm:$0xff]
  %v4932 = vld [vmem:[%s7 + $0xf0] sm:$0xff]
  %v4933 = vld [vmem:[%s7 + $0xf8] sm:$0xff]
  %v4934 = vld [vmem:[%s7 + $0x100] sm:$0xff]
  %v4935 = vld [vmem:[%s7 + $0x108] sm:$0xff]
  %v4936 = vld [vmem:[%s7 + $0x110] sm:$0xff]
  %v4937 = vld [vmem:[%s7 + $0x118] sm:$0xff]
  %v4938 = vld [vmem:[%s7 + $0x120] sm:$0xff]
  %v4939 = vld [vmem:[%s7 + $0x128] sm:$0xff]
  %v4940 = vld [vmem:[%s7 + $0x130] sm:$0xff]
  %v4941 = vld [vmem:[%s7 + $0x138] sm:$0xff]
  %v4942 = vld [vmem:[%s7 + $0x140] sm:$0xff]
  %v4943 = vld [vmem:[%s7 + $0x148] sm:$0xff]
  %v4944 = vld [vmem:[%s7 + $0x150] sm:$0xff]
  %v4945 = vld [vmem:[%s7 + $0x158] sm:$0xff]
  %v4946 = vld [vmem:[%s7 + $0x160] sm:$0xff]
  %v4947 = vld [vmem:[%s7 + $0x168] sm:$0xff]
  %v4948 = vld [vmem:[%s7 + $0x170] sm:$0xff]
  %v4949 = vld [vmem:[%s7 + $0x178] sm:$0xff]
  %4950 = vmatprep.subr.mxu0 %v4948
  %4951 = vmatpush1.msra.mxu0 %v4947
  %4952 = vmatprep.subr.mxu0 %v4945
  %4953 = vmatpush1.msra.mxu0 %v4944
  %4954 = vmatprep.subr.mxu0 %v4942
  %4955 = vmatpush1.msra.mxu0 %v4941
  %4956 = vmatprep.subr.mxu0 %v4939
  %4957 = vmatpush1.msra.mxu0 %v4938
  %4958 = vmatprep.subr.mxu0 %v4936
  %4959 = vmatpush1.msra.mxu0 %v4935
  %4960 = vmatprep.subr.mxu0 %v4933
  %4961 = vmatpush1.msra.mxu0 %v4932
  %4962 = vmatprep.subr.mxu0 %v4930
  %4963 = vmatpush1.msra.mxu0 %v4929
  %4964 = vmatprep.subr.mxu0 %v4927
  %4965 = vmatpush1.msra.mxu0 %v4926
  %4966 = vmatprep.subr.mxu0 %v4924
  %4967 = vmatpush1.msra.mxu0 %v4923
  %4968 = vmatprep.subr.mxu0 %v4921
  %4969 = vmatpush1.msra.mxu0 %v4920
  %4970 = vmatprep.subr.mxu0 %v4918
  %4971 = vmatpush1.msra.mxu0 %v4917
  %4972 = vmatprep.subr.mxu0 %v4915
  %4973 = vmatpush1.msra.mxu0 %v4914
  %4974 = vmatprep.subr.mxu0 %v4912
  %4975 = vmatpush1.msra.mxu0 %v4911
  %4976 = vmatprep.subr.mxu0 %v4909
  %4977 = vmatpush1.msra.mxu0 %v4908
  %4978 = vmatprep.subr.mxu0 %v4906
  %4979 = vmatpush1.msra.mxu0 %v4905
  %4980 = vmatprep.subr.mxu0 %v4903
  %4981 = vmatpush1.msra.mxu0 %v4902
  %4982 = vmatprep.subr.mxu0 0.0
  %4983 = vmatpush2.msra.mxu0 0.0
  %4984 = vmatprep.subr.mxu0 0.0
  %4985 = vmatpush2.msra.mxu0 0.0
  %4986 = vmatprep.subr.mxu0 0.0
  %4987 = vmatpush2.msra.mxu0 0.0
  %4988 = vmatprep.subr.mxu0 0.0
  %4989 = vmatpush2.msra.mxu0 0.0
  %4990 = vmatprep.subr.mxu0 0.0
  %4991 = vmatpush2.msra.mxu0 0.0
  %4992 = vmatprep.subr.mxu0 0.0
  %4993 = vmatpush2.msra.mxu0 0.0
  %4994 = vmatprep.subr.mxu0 0.0
  %4995 = vmatpush2.msra.mxu0 0.0
  %4996 = vmatprep.subr.mxu0 0.0
  %4997 = vmatpush2.msra.mxu0 0.0
  %4998 = vmatprep.subr.mxu0 0.0
  %4999 = vmatpush2.msra.mxu0 0.0
  %5000 = vmatprep.subr.mxu0 0.0
  %5001 = vmatpush2.msra.mxu0 0.0
  %5002 = vmatprep.subr.mxu0 0.0
  %5003 = vmatpush2.msra.mxu0 0.0
  %5004 = vmatprep.subr.mxu0 0.0
  %5005 = vmatpush2.msra.mxu0 0.0
  %5006 = vmatprep.subr.mxu0 0.0
  %5007 = vmatpush2.msra.mxu0 0.0
  %5008 = vmatprep.subr.mxu0 0.0
  %5009 = vmatpush2.msra.mxu0 0.0
  %5010 = vmatprep.subr.mxu0 0.0
  %5011 = vmatpush2.msra.mxu0 0.0
  %5012 = vmatprep.subr.mxu0 0.0
  %5013 = vmatpush2.msra.mxu0 0.0
  %5014 = vmatprep.mubr.f32.mxu0 0.0
  %5015 = vmatmul.mubr.f32.gmra.mxu0 %v4667
  %v5016 = vpop.f32.mrf.mxu0
  %v5017 = vadd.f32 0.0, %v5016
  %v5018 = vpop.f32.mrf.mxu0
  %v5019 = vadd.f32 0.0, %v5018
  %5020 = vdwg.mxu0
  %5021 = vmatprep.subr.mxu0 0.0
  %5022 = vmatpush1.msra.mxu0 %v4949
  %5023 = vmatprep.subr.mxu0 0.0
  %5024 = vmatpush1.msra.mxu0 %v4946
  %5025 = vmatprep.subr.mxu0 0.0
  %5026 = vmatpush1.msra.mxu0 %v4943
  %5027 = vmatprep.subr.mxu0 0.0
  %5028 = vmatpush1.msra.mxu0 %v4940
  %5029 = vmatprep.subr.mxu0 0.0
  %5030 = vmatpush1.msra.mxu0 %v4937
  %5031 = vmatprep.subr.mxu0 0.0
  %5032 = vmatpush1.msra.mxu0 %v4934
  %5033 = vmatprep.subr.mxu0 0.0
  %5034 = vmatpush1.msra.mxu0 %v4931
  %5035 = vmatprep.subr.mxu0 0.0
  %5036 = vmatpush1.msra.mxu0 %v4928
  %5037 = vmatprep.subr.mxu0 0.0
  %5038 = vmatpush1.msra.mxu0 %v4925
  %5039 = vmatprep.subr.mxu0 0.0
  %5040 = vmatpush1.msra.mxu0 %v4922
  %5041 = vmatprep.subr.mxu0 0.0
  %5042 = vmatpush1.msra.mxu0 %v4919
  %5043 = vmatprep.subr.mxu0 0.0
  %5044 = vmatpush1.msra.mxu0 %v4916
  %5045 = vmatprep.subr.mxu0 0.0
  %5046 = vmatpush1.msra.mxu0 %v4913
  %5047 = vmatprep.subr.mxu0 0.0
  %5048 = vmatpush1.msra.mxu0 %v4910
  %5049 = vmatprep.subr.mxu0 0.0
  %5050 = vmatpush1.msra.mxu0 %v4907
  %5051 = vmatprep.subr.mxu0 0.0
  %5052 = vmatpush1.msra.mxu0 %v4904
  %5053 = vmatprep.subr.mxu0 0.0
  %5054 = vmatpush2.msra.mxu0 0.0
  %5055 = vmatprep.subr.mxu0 0.0
  %5056 = vmatpush2.msra.mxu0 0.0
  %5057 = vmatprep.subr.mxu0 0.0
  %5058 = vmatpush2.msra.mxu0 0.0
  %5059 = vmatprep.subr.mxu0 0.0
  %5060 = vmatpush2.msra.mxu0 0.0
  %5061 = vmatprep.subr.mxu0 0.0
  %5062 = vmatpush2.msra.mxu0 0.0
  %5063 = vmatprep.subr.mxu0 0.0
  %5064 = vmatpush2.msra.mxu0 0.0
  %5065 = vmatprep.subr.mxu0 0.0
  %5066 = vmatpush2.msra.mxu0 0.0
  %5067 = vmatprep.subr.mxu0 0.0
  %5068 = vmatpush2.msra.mxu0 0.0
  %5069 = vmatprep.subr.mxu0 0.0
  %5070 = vmatpush2.msra.mxu0 0.0
  %5071 = vmatprep.subr.mxu0 0.0
  %5072 = vmatpush2.msra.mxu0 0.0
  %5073 = vmatprep.subr.mxu0 0.0
  %5074 = vmatpush2.msra.mxu0 0.0
  %5075 = vmatprep.subr.mxu0 0.0
  %5076 = vmatpush2.msra.mxu0 0.0
  %5077 = vmatprep.subr.mxu0 0.0
  %5078 = vmatpush2.msra.mxu0 0.0
  %5079 = vmatprep.subr.mxu0 0.0
  %5080 = vmatpush2.msra.mxu0 0.0
  %5081 = vmatprep.subr.mxu0 0.0
  %5082 = vmatpush2.msra.mxu0 0.0
  %5083 = vmatprep.subr.mxu0 0.0
  %5084 = vmatpush2.msra.mxu0 0.0
  %5085 = vmatprep.mubr.f32.mxu0 0.0
  %5086 = vmatmul.mubr.f32.gmra.mxu0 %v4667
  %v5087 = vpop.f32.mrf.mxu0
  %v5088 = vadd.f32 0.0, %v5087
  %v5089 = vpop.f32.mrf.mxu0
  %5090 = vdwg.mxu0
  %v5092 = vrot.slane %v5017, 6
  %v5094 = vadd.f32 %v4896, %v5092
  %v5095 = vxor.u32 %v5094, 2147483648
  %v5096 = vmul.f32 %v5095, 1.442695
  %v5097 = vpow.pop %v5096
  %v5098 = vadd.f32 %v5097, 1.0
  %v5099 = vrcp.pop %v5098
  %v5100 = vmul.f32 1.0, %v5099
  %v5102 = vrot.slane %v5019, 6
  %v5104 = vadd.f32 %v4897, %v5102
  %v5105 = vxor.u32 %v5104, 2147483648
  %v5106 = vmul.f32 %v5105, 1.442695
  %v5107 = vpow.pop %v5106
  %v5108 = vadd.f32 %v5107, 1.0
  %v5109 = vrcp.pop %v5108
  %v5110 = vmul.f32 1.0, %v5109
  %v5111 = vadd.f32 %v5088, %v4658
  %v5113 = vrot.slane %v5111, 6
  %v5115 = vmul.f32 %v5100, %v5113
  %v5116 = vadd.f32 %v4898, %v5115
  %v5117 = vtanh.pop %v5116
  %v5118 = vsub.f32 1.0, %v5110
  %v5119 = vmul.f32 %v5118, %v5117
  %v5121 = vrot.slane %v4667, 6
  %v5123 = vmul.f32 %v5110, %v5121
  %v5124 = vadd.f32 %v5119, %v5123
  %v5125 = vld [vmem:[%s8] sm:$0xff]
  %v5126 = vld [vmem:[%s8 + $0x8] sm:$0xff]
  %v5127 = vld [vmem:[%s8 + $0x10] sm:$0xff]
  %v5128 = vld [vmem:[%s8 + $0x18] sm:$0xff]
  %v5129 = vld [vmem:[%s8 + $0x20] sm:$0xff]
  %v5130 = vld [vmem:[%s8 + $0x28] sm:$0xff]
  %v5131 = vld [vmem:[%s8 + $0x30] sm:$0xff]
  %v5132 = vld [vmem:[%s8 + $0x38] sm:$0xff]
  %v5133 = vld [vmem:[%s8 + $0x40] sm:$0xff]
  %v5134 = vld [vmem:[%s8 + $0x48] sm:$0xff]
  %v5135 = vld [vmem:[%s8 + $0x50] sm:$0xff]
  %v5136 = vld [vmem:[%s8 + $0x58] sm:$0xff]
  %v5137 = vld [vmem:[%s8 + $0x60] sm:$0xff]
  %v5138 = vld [vmem:[%s8 + $0x68] sm:$0xff]
  %v5139 = vld [vmem:[%s8 + $0x70] sm:$0xff]
  %v5140 = vld [vmem:[%s8 + $0x78] sm:$0xff]
  %v5141 = vld [vmem:[%s8 + $0x80] sm:$0xff]
  %v5142 = vld [vmem:[%s8 + $0x88] sm:$0xff]
  %v5143 = vld [vmem:[%s8 + $0x90] sm:$0xff]
  %v5144 = vld [vmem:[%s8 + $0x98] sm:$0xff]
  %v5145 = vld [vmem:[%s8 + $0xa0] sm:$0xff]
  %v5146 = vld [vmem:[%s8 + $0xa8] sm:$0xff]
  %v5147 = vld [vmem:[%s8 + $0xb0] sm:$0xff]
  %v5148 = vld [vmem:[%s8 + $0xb8] sm:$0xff]
  %v5149 = vld [vmem:[%s8 + $0xc0] sm:$0xff]
  %v5150 = vld [vmem:[%s8 + $0xc8] sm:$0xff]
  %v5151 = vld [vmem:[%s8 + $0xd0] sm:$0xff]
  %v5152 = vld [vmem:[%s8 + $0xd8] sm:$0xff]
  %v5153 = vld [vmem:[%s8 + $0xe0] sm:$0xff]
  %v5154 = vld [vmem:[%s8 + $0xe8] sm:$0xff]
  %v5155 = vld [vmem:[%s8 + $0xf0] sm:$0xff]
  %v5156 = vld [vmem:[%s8 + $0xf8] sm:$0xff]
  %v5157 = vld [vmem:[%s8 + $0x100] sm:$0xff]
  %v5158 = vld [vmem:[%s8 + $0x108] sm:$0xff]
  %v5159 = vld [vmem:[%s8 + $0x110] sm:$0xff]
  %v5160 = vld [vmem:[%s8 + $0x118] sm:$0xff]
  %v5161 = vld [vmem:[%s8 + $0x120] sm:$0xff]
  %v5162 = vld [vmem:[%s8 + $0x128] sm:$0xff]
  %v5163 = vld [vmem:[%s8 + $0x130] sm:$0xff]
  %v5164 = vld [vmem:[%s8 + $0x138] sm:$0xff]
  %v5165 = vld [vmem:[%s8 + $0x140] sm:$0xff]
  %v5166 = vld [vmem:[%s8 + $0x148] sm:$0xff]
  %v5167 = vld [vmem:[%s8 + $0x150] sm:$0xff]
  %v5168 = vld [vmem:[%s8 + $0x158] sm:$0xff]
  %v5169 = vld [vmem:[%s8 + $0x160] sm:$0xff]
  %v5170 = vld [vmem:[%s8 + $0x168] sm:$0xff]
  %v5171 = vld [vmem:[%s8 + $0x170] sm:$0xff]
  %v5172 = vld [vmem:[%s8 + $0x178] sm:$0xff]
  %v5174 = vrot.slane %v4893, 6
  %5176 = vmatprep.subr.mxu0 %v5171
  %5177 = vmatpush1.msra.mxu0 %v5170
  %5178 = vmatprep.subr.mxu0 %v5168
  %5179 = vmatpush1.msra.mxu0 %v5167
  %5180 = vmatprep.subr.mxu0 %v5165
  %5181 = vmatpush1.msra.mxu0 %v5164
  %5182 = vmatprep.subr.mxu0 %v5162
  %5183 = vmatpush1.msra.mxu0 %v5161
  %5184 = vmatprep.subr.mxu0 %v5159
  %5185 = vmatpush1.msra.mxu0 %v5158
  %5186 = vmatprep.subr.mxu0 %v5156
  %5187 = vmatpush1.msra.mxu0 %v5155
  %5188 = vmatprep.subr.mxu0 %v5153
  %5189 = vmatpush1.msra.mxu0 %v5152
  %5190 = vmatprep.subr.mxu0 %v5150
  %5191 = vmatpush1.msra.mxu0 %v5149
  %5192 = vmatprep.subr.mxu0 %v5147
  %5193 = vmatpush1.msra.mxu0 %v5146
  %5194 = vmatprep.subr.mxu0 %v5144
  %5195 = vmatpush1.msra.mxu0 %v5143
  %5196 = vmatprep.subr.mxu0 %v5141
  %5197 = vmatpush1.msra.mxu0 %v5140
  %5198 = vmatprep.subr.mxu0 %v5138
  %5199 = vmatpush1.msra.mxu0 %v5137
  %5200 = vmatprep.subr.mxu0 %v5135
  %5201 = vmatpush1.msra.mxu0 %v5134
  %5202 = vmatprep.subr.mxu0 %v5132
  %5203 = vmatpush1.msra.mxu0 %v5131
  %5204 = vmatprep.subr.mxu0 %v5129
  %5205 = vmatpush1.msra.mxu0 %v5128
  %5206 = vmatprep.subr.mxu0 %v5126
  %5207 = vmatpush1.msra.mxu0 %v5125
  %5208 = vmatprep.subr.mxu0 0.0
  %5209 = vmatpush2.msra.mxu0 0.0
  %5210 = vmatprep.subr.mxu0 0.0
  %5211 = vmatpush2.msra.mxu0 0.0
  %5212 = vmatprep.subr.mxu0 0.0
  %5213 = vmatpush2.msra.mxu0 0.0
  %5214 = vmatprep.subr.mxu0 0.0
  %5215 = vmatpush2.msra.mxu0 0.0
  %5216 = vmatprep.subr.mxu0 0.0
  %5217 = vmatpush2.msra.mxu0 0.0
  %5218 = vmatprep.subr.mxu0 0.0
  %5219 = vmatpush2.msra.mxu0 0.0
  %5220 = vmatprep.subr.mxu0 0.0
  %5221 = vmatpush2.msra.mxu0 0.0
  %5222 = vmatprep.subr.mxu0 0.0
  %5223 = vmatpush2.msra.mxu0 0.0
  %5224 = vmatprep.subr.mxu0 0.0
  %5225 = vmatpush2.msra.mxu0 0.0
  %5226 = vmatprep.subr.mxu0 0.0
  %5227 = vmatpush2.msra.mxu0 0.0
  %5228 = vmatprep.subr.mxu0 0.0
  %5229 = vmatpush2.msra.mxu0 0.0
  %5230 = vmatprep.subr.mxu0 0.0
  %5231 = vmatpush2.msra.mxu0 0.0
  %5232 = vmatprep.subr.mxu0 0.0
  %5233 = vmatpush2.msra.mxu0 0.0
  %5234 = vmatprep.subr.mxu0 0.0
  %5235 = vmatpush2.msra.mxu0 0.0
  %5236 = vmatprep.subr.mxu0 0.0
  %5237 = vmatpush2.msra.mxu0 0.0
  %5238 = vmatprep.subr.mxu0 0.0
  %5239 = vmatpush2.msra.mxu0 0.0
  %5240 = vmatprep.mubr.f32.mxu0 0.0
  %5241 = vmatmul.mubr.f32.gmra.mxu0 %v5174
  %v5242 = vpop.f32.mrf.mxu0
  %v5243 = vadd.f32 0.0, %v5242
  %v5244 = vpop.f32.mrf.mxu0
  %v5245 = vadd.f32 0.0, %v5244
  %5246 = vdwg.mxu0
  %5247 = vmatprep.subr.mxu0 0.0
  %5248 = vmatpush1.msra.mxu0 %v5172
  %5249 = vmatprep.subr.mxu0 0.0
  %5250 = vmatpush1.msra.mxu0 %v5169
  %5251 = vmatprep.subr.mxu0 0.0
  %5252 = vmatpush1.msra.mxu0 %v5166
  %5253 = vmatprep.subr.mxu0 0.0
  %5254 = vmatpush1.msra.mxu0 %v5163
  %5255 = vmatprep.subr.mxu0 0.0
  %5256 = vmatpush1.msra.mxu0 %v5160
  %5257 = vmatprep.subr.mxu0 0.0
  %5258 = vmatpush1.msra.mxu0 %v5157
  %5259 = vmatprep.subr.mxu0 0.0
  %5260 = vmatpush1.msra.mxu0 %v5154
  %5261 = vmatprep.subr.mxu0 0.0
  %5262 = vmatpush1.msra.mxu0 %v5151
  %5263 = vmatprep.subr.mxu0 0.0
  %5264 = vmatpush1.msra.mxu0 %v5148
  %5265 = vmatprep.subr.mxu0 0.0
  %5266 = vmatpush1.msra.mxu0 %v5145
  %5267 = vmatprep.subr.mxu0 0.0
  %5268 = vmatpush1.msra.mxu0 %v5142
  %5269 = vmatprep.subr.mxu0 0.0
  %5270 = vmatpush1.msra.mxu0 %v5139
  %5271 = vmatprep.subr.mxu0 0.0
  %5272 = vmatpush1.msra.mxu0 %v5136
  %5273 = vmatprep.subr.mxu0 0.0
  %5274 = vmatpush1.msra.mxu0 %v5133
  %5275 = vmatprep.subr.mxu0 0.0
  %5276 = vmatpush1.msra.mxu0 %v5130
  %5277 = vmatprep.subr.mxu0 0.0
  %5278 = vmatpush1.msra.mxu0 %v5127
  %5279 = vmatprep.subr.mxu0 0.0
  %5280 = vmatpush2.msra.mxu0 0.0
  %5281 = vmatprep.subr.mxu0 0.0
  %5282 = vmatpush2.msra.mxu0 0.0
  %5283 = vmatprep.subr.mxu0 0.0
  %5284 = vmatpush2.msra.mxu0 0.0
  %5285 = vmatprep.subr.mxu0 0.0
  %5286 = vmatpush2.msra.mxu0 0.0
  %5287 = vmatprep.subr.mxu0 0.0
  %5288 = vmatpush2.msra.mxu0 0.0
  %5289 = vmatprep.subr.mxu0 0.0
  %5290 = vmatpush2.msra.mxu0 0.0
  %5291 = vmatprep.subr.mxu0 0.0
  %5292 = vmatpush2.msra.mxu0 0.0
  %5293 = vmatprep.subr.mxu0 0.0
  %5294 = vmatpush2.msra.mxu0 0.0
  %5295 = vmatprep.subr.mxu0 0.0
  %5296 = vmatpush2.msra.mxu0 0.0
  %5297 = vmatprep.subr.mxu0 0.0
  %5298 = vmatpush2.msra.mxu0 0.0
  %5299 = vmatprep.subr.mxu0 0.0
  %5300 = vmatpush2.msra.mxu0 0.0
  %5301 = vmatprep.subr.mxu0 0.0
  %5302 = vmatpush2.msra.mxu0 0.0
  %5303 = vmatprep.subr.mxu0 0.0
  %5304 = vmatpush2.msra.mxu0 0.0
  %5305 = vmatprep.subr.mxu0 0.0
  %5306 = vmatpush2.msra.mxu0 0.0
  %5307 = vmatprep.subr.mxu0 0.0
  %5308 = vmatpush2.msra.mxu0 0.0
  %5309 = vmatprep.subr.mxu0 0.0
  %5310 = vmatpush2.msra.mxu0 0.0
  %5311 = vmatprep.mubr.f32.mxu0 0.0
  %5312 = vmatmul.mubr.f32.gmra.mxu0 %v5174
  %v5313 = vpop.f32.mrf.mxu0
  %v5314 = vadd.f32 0.0, %v5313
  %v5315 = vpop.f32.mrf.mxu0
  %5316 = vdwg.mxu0
  %v5318 = vrot.slane %v5243, 4
  %v5320 = vadd.f32 %v4899, %v5318
  %v5321 = vxor.u32 %v5320, 2147483648
  %v5322 = vmul.f32 %v5321, 1.442695
  %v5323 = vpow.pop %v5322
  %v5324 = vadd.f32 %v5323, 1.0
  %v5325 = vrcp.pop %v5324
  %v5326 = vmul.f32 1.0, %v5325
  %v5328 = vrot.slane %v5245, 4
  %v5330 = vadd.f32 %v4900, %v5328
  %v5331 = vxor.u32 %v5330, 2147483648
  %v5332 = vmul.f32 %v5331, 1.442695
  %v5333 = vpow.pop %v5332
  %v5334 = vadd.f32 %v5333, 1.0
  %v5335 = vrcp.pop %v5334
  %v5336 = vmul.f32 1.0, %v5335
  %v5337 = vadd.f32 %v5314, %v4881
  %v5339 = vrot.slane %v5337, 4
  %v5341 = vmul.f32 %v5326, %v5339
  %v5342 = vadd.f32 %v4901, %v5341
  %v5343 = vtanh.pop %v5342
  %v5344 = vsub.f32 1.0, %v5336
  %v5345 = vmul.f32 %v5344, %v5343
  %v5346 = vrot.slane %v4893, 2
  %v5348 = vmul.f32 %v5336, %v5346
  %v5349 = vadd.f32 %v5345, %v5348
  %5350 = vst [vmem:[#allocation4] sm:$0xc] %v5124
  %5351 = vst [vmem:[#allocation4 + $0x18] sm:$0x30] %v5349
  %v5352 = vld [vmem:[#allocation2] sm:$0x30]
  %v5353 = vld [vmem:[#allocation2 + $0x8] sm:$0x30]
  %v5354 = vld [vmem:[#allocation2 + $0x10] sm:$0x30]
  %v5355 = vld [vmem:[#allocation2 + $0x48] sm:$0xc]
  %v5356 = vld [vmem:[#allocation2 + $0x50] sm:$0xc]
  %v5357 = vld [vmem:[#allocation2 + $0x58] sm:$0xc]
  %v5358 = vld [vmem:[%s7] sm:$0xff]
  %v5359 = vld [vmem:[%s7 + $0x8] sm:$0xff]
  %v5360 = vld [vmem:[%s7 + $0x10] sm:$0xff]
  %v5361 = vld [vmem:[%s7 + $0x18] sm:$0xff]
  %v5362 = vld [vmem:[%s7 + $0x20] sm:$0xff]
  %v5363 = vld [vmem:[%s7 + $0x28] sm:$0xff]
  %v5364 = vld [vmem:[%s7 + $0x30] sm:$0xff]
  %v5365 = vld [vmem:[%s7 + $0x38] sm:$0xff]
  %v5366 = vld [vmem:[%s7 + $0x40] sm:$0xff]
  %v5367 = vld [vmem:[%s7 + $0x48] sm:$0xff]
  %v5368 = vld [vmem:[%s7 + $0x50] sm:$0xff]
  %v5369 = vld [vmem:[%s7 + $0x58] sm:$0xff]
  %v5370 = vld [vmem:[%s7 + $0x60] sm:$0xff]
  %v5371 = vld [vmem:[%s7 + $0x68] sm:$0xff]
  %v5372 = vld [vmem:[%s7 + $0x70] sm:$0xff]
  %v5373 = vld [vmem:[%s7 + $0x78] sm:$0xff]
  %v5374 = vld [vmem:[%s7 + $0x80] sm:$0xff]
  %v5375 = vld [vmem:[%s7 + $0x88] sm:$0xff]
  %v5376 = vld [vmem:[%s7 + $0x90] sm:$0xff]
  %v5377 = vld [vmem:[%s7 + $0x98] sm:$0xff]
  %v5378 = vld [vmem:[%s7 + $0xa0] sm:$0xff]
  %v5379 = vld [vmem:[%s7 + $0xa8] sm:$0xff]
  %v5380 = vld [vmem:[%s7 + $0xb0] sm:$0xff]
  %v5381 = vld [vmem:[%s7 + $0xb8] sm:$0xff]
  %v5382 = vld [vmem:[%s7 + $0xc0] sm:$0xff]
  %v5383 = vld [vmem:[%s7 + $0xc8] sm:$0xff]
  %v5384 = vld [vmem:[%s7 + $0xd0] sm:$0xff]
  %v5385 = vld [vmem:[%s7 + $0xd8] sm:$0xff]
  %v5386 = vld [vmem:[%s7 + $0xe0] sm:$0xff]
  %v5387 = vld [vmem:[%s7 + $0xe8] sm:$0xff]
  %v5388 = vld [vmem:[%s7 + $0xf0] sm:$0xff]
  %v5389 = vld [vmem:[%s7 + $0xf8] sm:$0xff]
  %v5390 = vld [vmem:[%s7 + $0x100] sm:$0xff]
  %v5391 = vld [vmem:[%s7 + $0x108] sm:$0xff]
  %v5392 = vld [vmem:[%s7 + $0x110] sm:$0xff]
  %v5393 = vld [vmem:[%s7 + $0x118] sm:$0xff]
  %v5394 = vld [vmem:[%s7 + $0x120] sm:$0xff]
  %v5395 = vld [vmem:[%s7 + $0x128] sm:$0xff]
  %v5396 = vld [vmem:[%s7 + $0x130] sm:$0xff]
  %v5397 = vld [vmem:[%s7 + $0x138] sm:$0xff]
  %v5398 = vld [vmem:[%s7 + $0x140] sm:$0xff]
  %v5399 = vld [vmem:[%s7 + $0x148] sm:$0xff]
  %v5400 = vld [vmem:[%s7 + $0x150] sm:$0xff]
  %v5401 = vld [vmem:[%s7 + $0x158] sm:$0xff]
  %v5402 = vld [vmem:[%s7 + $0x160] sm:$0xff]
  %v5403 = vld [vmem:[%s7 + $0x168] sm:$0xff]
  %v5404 = vld [vmem:[%s7 + $0x170] sm:$0xff]
  %v5405 = vld [vmem:[%s7 + $0x178] sm:$0xff]
  %v5407 = vrot.slane %v5124, 2
  %5409 = vmatprep.subr.mxu0 %v5404
  %5410 = vmatpush1.msra.mxu0 %v5403
  %5411 = vmatprep.subr.mxu0 %v5401
  %5412 = vmatpush1.msra.mxu0 %v5400
  %5413 = vmatprep.subr.mxu0 %v5398
  %5414 = vmatpush1.msra.mxu0 %v5397
  %5415 = vmatprep.subr.mxu0 %v5395
  %5416 = vmatpush1.msra.mxu0 %v5394
  %5417 = vmatprep.subr.mxu0 %v5392
  %5418 = vmatpush1.msra.mxu0 %v5391
  %5419 = vmatprep.subr.mxu0 %v5389
  %5420 = vmatpush1.msra.mxu0 %v5388
  %5421 = vmatprep.subr.mxu0 %v5386
  %5422 = vmatpush1.msra.mxu0 %v5385
  %5423 = vmatprep.subr.mxu0 %v5383
  %5424 = vmatpush1.msra.mxu0 %v5382
  %5425 = vmatprep.subr.mxu0 %v5380
  %5426 = vmatpush1.msra.mxu0 %v5379
  %5427 = vmatprep.subr.mxu0 %v5377
  %5428 = vmatpush1.msra.mxu0 %v5376
  %5429 = vmatprep.subr.mxu0 %v5374
  %5430 = vmatpush1.msra.mxu0 %v5373
  %5431 = vmatprep.subr.mxu0 %v5371
  %5432 = vmatpush1.msra.mxu0 %v5370
  %5433 = vmatprep.subr.mxu0 %v5368
  %5434 = vmatpush1.msra.mxu0 %v5367
  %5435 = vmatprep.subr.mxu0 %v5365
  %5436 = vmatpush1.msra.mxu0 %v5364
  %5437 = vmatprep.subr.mxu0 %v5362
  %5438 = vmatpush1.msra.mxu0 %v5361
  %5439 = vmatprep.subr.mxu0 %v5359
  %5440 = vmatpush1.msra.mxu0 %v5358
  %5441 = vmatprep.subr.mxu0 0.0
  %5442 = vmatpush2.msra.mxu0 0.0
  %5443 = vmatprep.subr.mxu0 0.0
  %5444 = vmatpush2.msra.mxu0 0.0
  %5445 = vmatprep.subr.mxu0 0.0
  %5446 = vmatpush2.msra.mxu0 0.0
  %5447 = vmatprep.subr.mxu0 0.0
  %5448 = vmatpush2.msra.mxu0 0.0
  %5449 = vmatprep.subr.mxu0 0.0
  %5450 = vmatpush2.msra.mxu0 0.0
  %5451 = vmatprep.subr.mxu0 0.0
  %5452 = vmatpush2.msra.mxu0 0.0
  %5453 = vmatprep.subr.mxu0 0.0
  %5454 = vmatpush2.msra.mxu0 0.0
  %5455 = vmatprep.subr.mxu0 0.0
  %5456 = vmatpush2.msra.mxu0 0.0
  %5457 = vmatprep.subr.mxu0 0.0
  %5458 = vmatpush2.msra.mxu0 0.0
  %5459 = vmatprep.subr.mxu0 0.0
  %5460 = vmatpush2.msra.mxu0 0.0
  %5461 = vmatprep.subr.mxu0 0.0
  %5462 = vmatpush2.msra.mxu0 0.0
  %5463 = vmatprep.subr.mxu0 0.0
  %5464 = vmatpush2.msra.mxu0 0.0
  %5465 = vmatprep.subr.mxu0 0.0
  %5466 = vmatpush2.msra.mxu0 0.0
  %5467 = vmatprep.subr.mxu0 0.0
  %5468 = vmatpush2.msra.mxu0 0.0
  %5469 = vmatprep.subr.mxu0 0.0
  %5470 = vmatpush2.msra.mxu0 0.0
  %5471 = vmatprep.subr.mxu0 0.0
  %5472 = vmatpush2.msra.mxu0 0.0
  %5473 = vmatprep.mubr.f32.mxu0 0.0
  %5474 = vmatmul.mubr.f32.gmra.mxu0 %v5407
  %v5475 = vpop.f32.mrf.mxu0
  %v5476 = vadd.f32 0.0, %v5475
  %v5477 = vpop.f32.mrf.mxu0
  %v5478 = vadd.f32 0.0, %v5477
  %5479 = vdwg.mxu0
  %5480 = vmatprep.subr.mxu0 0.0
  %5481 = vmatpush1.msra.mxu0 %v5405
  %5482 = vmatprep.subr.mxu0 0.0
  %5483 = vmatpush1.msra.mxu0 %v5402
  %5484 = vmatprep.subr.mxu0 0.0
  %5485 = vmatpush1.msra.mxu0 %v5399
  %5486 = vmatprep.subr.mxu0 0.0
  %5487 = vmatpush1.msra.mxu0 %v5396
  %5488 = vmatprep.subr.mxu0 0.0
  %5489 = vmatpush1.msra.mxu0 %v5393
  %5490 = vmatprep.subr.mxu0 0.0
  %5491 = vmatpush1.msra.mxu0 %v5390
  %5492 = vmatprep.subr.mxu0 0.0
  %5493 = vmatpush1.msra.mxu0 %v5387
  %5494 = vmatprep.subr.mxu0 0.0
  %5495 = vmatpush1.msra.mxu0 %v5384
  %5496 = vmatprep.subr.mxu0 0.0
  %5497 = vmatpush1.msra.mxu0 %v5381
  %5498 = vmatprep.subr.mxu0 0.0
  %5499 = vmatpush1.msra.mxu0 %v5378
  %5500 = vmatprep.subr.mxu0 0.0
  %5501 = vmatpush1.msra.mxu0 %v5375
  %5502 = vmatprep.subr.mxu0 0.0
  %5503 = vmatpush1.msra.mxu0 %v5372
  %5504 = vmatprep.subr.mxu0 0.0
  %5505 = vmatpush1.msra.mxu0 %v5369
  %5506 = vmatprep.subr.mxu0 0.0
  %5507 = vmatpush1.msra.mxu0 %v5366
  %5508 = vmatprep.subr.mxu0 0.0
  %5509 = vmatpush1.msra.mxu0 %v5363
  %5510 = vmatprep.subr.mxu0 0.0
  %5511 = vmatpush1.msra.mxu0 %v5360
  %5512 = vmatprep.subr.mxu0 0.0
  %5513 = vmatpush2.msra.mxu0 0.0
  %5514 = vmatprep.subr.mxu0 0.0
  %5515 = vmatpush2.msra.mxu0 0.0
  %5516 = vmatprep.subr.mxu0 0.0
  %5517 = vmatpush2.msra.mxu0 0.0
  %5518 = vmatprep.subr.mxu0 0.0
  %5519 = vmatpush2.msra.mxu0 0.0
  %5520 = vmatprep.subr.mxu0 0.0
  %5521 = vmatpush2.msra.mxu0 0.0
  %5522 = vmatprep.subr.mxu0 0.0
  %5523 = vmatpush2.msra.mxu0 0.0
  %5524 = vmatprep.subr.mxu0 0.0
  %5525 = vmatpush2.msra.mxu0 0.0
  %5526 = vmatprep.subr.mxu0 0.0
  %5527 = vmatpush2.msra.mxu0 0.0
  %5528 = vmatprep.subr.mxu0 0.0
  %5529 = vmatpush2.msra.mxu0 0.0
  %5530 = vmatprep.subr.mxu0 0.0
  %5531 = vmatpush2.msra.mxu0 0.0
  %5532 = vmatprep.subr.mxu0 0.0
  %5533 = vmatpush2.msra.mxu0 0.0
  %5534 = vmatprep.subr.mxu0 0.0
  %5535 = vmatpush2.msra.mxu0 0.0
  %5536 = vmatprep.subr.mxu0 0.0
  %5537 = vmatpush2.msra.mxu0 0.0
  %5538 = vmatprep.subr.mxu0 0.0
  %5539 = vmatpush2.msra.mxu0 0.0
  %5540 = vmatprep.subr.mxu0 0.0
  %5541 = vmatpush2.msra.mxu0 0.0
  %5542 = vmatprep.subr.mxu0 0.0
  %5543 = vmatpush2.msra.mxu0 0.0
  %5544 = vmatprep.mubr.f32.mxu0 0.0
  %5545 = vmatmul.mubr.f32.gmra.mxu0 %v5407
  %v5546 = vpop.f32.mrf.mxu0
  %v5547 = vadd.f32 0.0, %v5546
  %v5548 = vpop.f32.mrf.mxu0
  %5549 = vdwg.mxu0
  %v5551 = vrot.slane %v5476, 4
  %v5553 = vadd.f32 %v5352, %v5551
  %v5554 = vxor.u32 %v5553, 2147483648
  %v5555 = vmul.f32 %v5554, 1.442695
  %v5556 = vpow.pop %v5555
  %v5557 = vadd.f32 %v5556, 1.0
  %v5558 = vrcp.pop %v5557
  %v5559 = vmul.f32 1.0, %v5558
  %v5561 = vrot.slane %v5478, 4
  %v5563 = vadd.f32 %v5353, %v5561
  %v5564 = vxor.u32 %v5563, 2147483648
  %v5565 = vmul.f32 %v5564, 1.442695
  %v5566 = vpow.pop %v5565
  %v5567 = vadd.f32 %v5566, 1.0
  %v5568 = vrcp.pop %v5567
  %v5569 = vmul.f32 1.0, %v5568
  %v5570 = vadd.f32 %v5547, %v4658
  %v5572 = vrot.slane %v5570, 4
  %v5574 = vmul.f32 %v5559, %v5572
  %v5575 = vadd.f32 %v5354, %v5574
  %v5576 = vtanh.pop %v5575
  %v5577 = vsub.f32 1.0, %v5569
  %v5578 = vmul.f32 %v5577, %v5576
  %v5579 = vrot.slane %v5124, 6
  %v5581 = vmul.f32 %v5569, %v5579
  %v5582 = vadd.f32 %v5578, %v5581
  %v5583 = vld [vmem:[%s8] sm:$0xff]
  %v5584 = vld [vmem:[%s8 + $0x8] sm:$0xff]
  %v5585 = vld [vmem:[%s8 + $0x10] sm:$0xff]
  %v5586 = vld [vmem:[%s8 + $0x18] sm:$0xff]
  %v5587 = vld [vmem:[%s8 + $0x20] sm:$0xff]
  %v5588 = vld [vmem:[%s8 + $0x28] sm:$0xff]
  %v5589 = vld [vmem:[%s8 + $0x30] sm:$0xff]
  %v5590 = vld [vmem:[%s8 + $0x38] sm:$0xff]
  %v5591 = vld [vmem:[%s8 + $0x40] sm:$0xff]
  %v5592 = vld [vmem:[%s8 + $0x48] sm:$0xff]
  %v5593 = vld [vmem:[%s8 + $0x50] sm:$0xff]
  %v5594 = vld [vmem:[%s8 + $0x58] sm:$0xff]
  %v5595 = vld [vmem:[%s8 + $0x60] sm:$0xff]
  %v5596 = vld [vmem:[%s8 + $0x68] sm:$0xff]
  %v5597 = vld [vmem:[%s8 + $0x70] sm:$0xff]
  %v5598 = vld [vmem:[%s8 + $0x78] sm:$0xff]
  %v5599 = vld [vmem:[%s8 + $0x80] sm:$0xff]
  %v5600 = vld [vmem:[%s8 + $0x88] sm:$0xff]
  %v5601 = vld [vmem:[%s8 + $0x90] sm:$0xff]
  %v5602 = vld [vmem:[%s8 + $0x98] sm:$0xff]
  %v5603 = vld [vmem:[%s8 + $0xa0] sm:$0xff]
  %v5604 = vld [vmem:[%s8 + $0xa8] sm:$0xff]
  %v5605 = vld [vmem:[%s8 + $0xb0] sm:$0xff]
  %v5606 = vld [vmem:[%s8 + $0xb8] sm:$0xff]
  %v5607 = vld [vmem:[%s8 + $0xc0] sm:$0xff]
  %v5608 = vld [vmem:[%s8 + $0xc8] sm:$0xff]
  %v5609 = vld [vmem:[%s8 + $0xd0] sm:$0xff]
  %v5610 = vld [vmem:[%s8 + $0xd8] sm:$0xff]
  %v5611 = vld [vmem:[%s8 + $0xe0] sm:$0xff]
  %v5612 = vld [vmem:[%s8 + $0xe8] sm:$0xff]
  %v5613 = vld [vmem:[%s8 + $0xf0] sm:$0xff]
  %v5614 = vld [vmem:[%s8 + $0xf8] sm:$0xff]
  %v5615 = vld [vmem:[%s8 + $0x100] sm:$0xff]
  %v5616 = vld [vmem:[%s8 + $0x108] sm:$0xff]
  %v5617 = vld [vmem:[%s8 + $0x110] sm:$0xff]
  %v5618 = vld [vmem:[%s8 + $0x118] sm:$0xff]
  %v5619 = vld [vmem:[%s8 + $0x120] sm:$0xff]
  %v5620 = vld [vmem:[%s8 + $0x128] sm:$0xff]
  %v5621 = vld [vmem:[%s8 + $0x130] sm:$0xff]
  %v5622 = vld [vmem:[%s8 + $0x138] sm:$0xff]
  %v5623 = vld [vmem:[%s8 + $0x140] sm:$0xff]
  %v5624 = vld [vmem:[%s8 + $0x148] sm:$0xff]
  %v5625 = vld [vmem:[%s8 + $0x150] sm:$0xff]
  %v5626 = vld [vmem:[%s8 + $0x158] sm:$0xff]
  %v5627 = vld [vmem:[%s8 + $0x160] sm:$0xff]
  %v5628 = vld [vmem:[%s8 + $0x168] sm:$0xff]
  %v5629 = vld [vmem:[%s8 + $0x170] sm:$0xff]
  %v5630 = vld [vmem:[%s8 + $0x178] sm:$0xff]
  %v5632 = vrot.slane %v5349, 4
  %5634 = vmatprep.subr.mxu0 %v5629
  %5635 = vmatpush1.msra.mxu0 %v5628
  %5636 = vmatprep.subr.mxu0 %v5626
  %5637 = vmatpush1.msra.mxu0 %v5625
  %5638 = vmatprep.subr.mxu0 %v5623
  %5639 = vmatpush1.msra.mxu0 %v5622
  %5640 = vmatprep.subr.mxu0 %v5620
  %5641 = vmatpush1.msra.mxu0 %v5619
  %5642 = vmatprep.subr.mxu0 %v5617
  %5643 = vmatpush1.msra.mxu0 %v5616
  %5644 = vmatprep.subr.mxu0 %v5614
  %5645 = vmatpush1.msra.mxu0 %v5613
  %5646 = vmatprep.subr.mxu0 %v5611
  %5647 = vmatpush1.msra.mxu0 %v5610
  %5648 = vmatprep.subr.mxu0 %v5608
  %5649 = vmatpush1.msra.mxu0 %v5607
  %5650 = vmatprep.subr.mxu0 %v5605
  %5651 = vmatpush1.msra.mxu0 %v5604
  %5652 = vmatprep.subr.mxu0 %v5602
  %5653 = vmatpush1.msra.mxu0 %v5601
  %5654 = vmatprep.subr.mxu0 %v5599
  %5655 = vmatpush1.msra.mxu0 %v5598
  %5656 = vmatprep.subr.mxu0 %v5596
  %5657 = vmatpush1.msra.mxu0 %v5595
  %5658 = vmatprep.subr.mxu0 %v5593
  %5659 = vmatpush1.msra.mxu0 %v5592
  %5660 = vmatprep.subr.mxu0 %v5590
  %5661 = vmatpush1.msra.mxu0 %v5589
  %5662 = vmatprep.subr.mxu0 %v5587
  %5663 = vmatpush1.msra.mxu0 %v5586
  %5664 = vmatprep.subr.mxu0 %v5584
  %5665 = vmatpush1.msra.mxu0 %v5583
  %5666 = vmatprep.subr.mxu0 0.0
  %5667 = vmatpush2.msra.mxu0 0.0
  %5668 = vmatprep.subr.mxu0 0.0
  %5669 = vmatpush2.msra.mxu0 0.0
  %5670 = vmatprep.subr.mxu0 0.0
  %5671 = vmatpush2.msra.mxu0 0.0
  %5672 = vmatprep.subr.mxu0 0.0
  %5673 = vmatpush2.msra.mxu0 0.0
  %5674 = vmatprep.subr.mxu0 0.0
  %5675 = vmatpush2.msra.mxu0 0.0
  %5676 = vmatprep.subr.mxu0 0.0
  %5677 = vmatpush2.msra.mxu0 0.0
  %5678 = vmatprep.subr.mxu0 0.0
  %5679 = vmatpush2.msra.mxu0 0.0
  %5680 = vmatprep.subr.mxu0 0.0
  %5681 = vmatpush2.msra.mxu0 0.0
  %5682 = vmatprep.subr.mxu0 0.0
  %5683 = vmatpush2.msra.mxu0 0.0
  %5684 = vmatprep.subr.mxu0 0.0
  %5685 = vmatpush2.msra.mxu0 0.0
  %5686 = vmatprep.subr.mxu0 0.0
  %5687 = vmatpush2.msra.mxu0 0.0
  %5688 = vmatprep.subr.mxu0 0.0
  %5689 = vmatpush2.msra.mxu0 0.0
  %5690 = vmatprep.subr.mxu0 0.0
  %5691 = vmatpush2.msra.mxu0 0.0
  %5692 = vmatprep.subr.mxu0 0.0
  %5693 = vmatpush2.msra.mxu0 0.0
  %5694 = vmatprep.subr.mxu0 0.0
  %5695 = vmatpush2.msra.mxu0 0.0
  %5696 = vmatprep.subr.mxu0 0.0
  %5697 = vmatpush2.msra.mxu0 0.0
  %5698 = vmatprep.mubr.f32.mxu0 0.0
  %5699 = vmatmul.mubr.f32.gmra.mxu0 %v5632
  %v5700 = vpop.f32.mrf.mxu0
  %v5701 = vadd.f32 0.0, %v5700
  %v5702 = vpop.f32.mrf.mxu0
  %v5703 = vadd.f32 0.0, %v5702
  %5704 = vdwg.mxu0
  %5705 = vmatprep.subr.mxu0 0.0
  %5706 = vmatpush1.msra.mxu0 %v5630
  %5707 = vmatprep.subr.mxu0 0.0
  %5708 = vmatpush1.msra.mxu0 %v5627
  %5709 = vmatprep.subr.mxu0 0.0
  %5710 = vmatpush1.msra.mxu0 %v5624
  %5711 = vmatprep.subr.mxu0 0.0
  %5712 = vmatpush1.msra.mxu0 %v5621
  %5713 = vmatprep.subr.mxu0 0.0
  %5714 = vmatpush1.msra.mxu0 %v5618
  %5715 = vmatprep.subr.mxu0 0.0
  %5716 = vmatpush1.msra.mxu0 %v5615
  %5717 = vmatprep.subr.mxu0 0.0
  %5718 = vmatpush1.msra.mxu0 %v5612
  %5719 = vmatprep.subr.mxu0 0.0
  %5720 = vmatpush1.msra.mxu0 %v5609
  %5721 = vmatprep.subr.mxu0 0.0
  %5722 = vmatpush1.msra.mxu0 %v5606
  %5723 = vmatprep.subr.mxu0 0.0
  %5724 = vmatpush1.msra.mxu0 %v5603
  %5725 = vmatprep.subr.mxu0 0.0
  %5726 = vmatpush1.msra.mxu0 %v5600
  %5727 = vmatprep.subr.mxu0 0.0
  %5728 = vmatpush1.msra.mxu0 %v5597
  %5729 = vmatprep.subr.mxu0 0.0
  %5730 = vmatpush1.msra.mxu0 %v5594
  %5731 = vmatprep.subr.mxu0 0.0
  %5732 = vmatpush1.msra.mxu0 %v5591
  %5733 = vmatprep.subr.mxu0 0.0
  %5734 = vmatpush1.msra.mxu0 %v5588
  %5735 = vmatprep.subr.mxu0 0.0
  %5736 = vmatpush1.msra.mxu0 %v5585
  %5737 = vmatprep.subr.mxu0 0.0
  %5738 = vmatpush2.msra.mxu0 0.0
  %5739 = vmatprep.subr.mxu0 0.0
  %5740 = vmatpush2.msra.mxu0 0.0
  %5741 = vmatprep.subr.mxu0 0.0
  %5742 = vmatpush2.msra.mxu0 0.0
  %5743 = vmatprep.subr.mxu0 0.0
  %5744 = vmatpush2.msra.mxu0 0.0
  %5745 = vmatprep.subr.mxu0 0.0
  %5746 = vmatpush2.msra.mxu0 0.0
  %5747 = vmatprep.subr.mxu0 0.0
  %5748 = vmatpush2.msra.mxu0 0.0
  %5749 = vmatprep.subr.mxu0 0.0
  %5750 = vmatpush2.msra.mxu0 0.0
  %5751 = vmatprep.subr.mxu0 0.0
  %5752 = vmatpush2.msra.mxu0 0.0
  %5753 = vmatprep.subr.mxu0 0.0
  %5754 = vmatpush2.msra.mxu0 0.0
  %5755 = vmatprep.subr.mxu0 0.0
  %5756 = vmatpush2.msra.mxu0 0.0
  %5757 = vmatprep.subr.mxu0 0.0
  %5758 = vmatpush2.msra.mxu0 0.0
  %5759 = vmatprep.subr.mxu0 0.0
  %5760 = vmatpush2.msra.mxu0 0.0
  %5761 = vmatprep.subr.mxu0 0.0
  %5762 = vmatpush2.msra.mxu0 0.0
  %5763 = vmatprep.subr.mxu0 0.0
  %5764 = vmatpush2.msra.mxu0 0.0
  %5765 = vmatprep.subr.mxu0 0.0
  %5766 = vmatpush2.msra.mxu0 0.0
  %5767 = vmatprep.subr.mxu0 0.0
  %5768 = vmatpush2.msra.mxu0 0.0
  %5769 = vmatprep.mubr.f32.mxu0 0.0
  %5770 = vmatmul.mubr.f32.gmra.mxu0 %v5632
  %v5771 = vpop.f32.mrf.mxu0
  %v5772 = vadd.f32 0.0, %v5771
  %v5773 = vpop.f32.mrf.mxu0
  %5774 = vdwg.mxu0
  %v5776 = vrot.slane %v5701, 6
  %v5778 = vadd.f32 %v5355, %v5776
  %v5779 = vxor.u32 %v5778, 2147483648
  %v5780 = vmul.f32 %v5779, 1.442695
  %v5781 = vpow.pop %v5780
  %v5782 = vadd.f32 %v5781, 1.0
  %v5783 = vrcp.pop %v5782
  %v5784 = vmul.f32 1.0, %v5783
  %v5786 = vrot.slane %v5703, 6
  %v5788 = vadd.f32 %v5356, %v5786
  %v5789 = vxor.u32 %v5788, 2147483648
  %v5790 = vmul.f32 %v5789, 1.442695
  %v5791 = vpow.pop %v5790
  %v5792 = vadd.f32 %v5791, 1.0
  %v5793 = vrcp.pop %v5792
  %v5794 = vmul.f32 1.0, %v5793
  %v5795 = vadd.f32 %v5772, %v4881
  %v5797 = vrot.slane %v5795, 6
  %v5799 = vmul.f32 %v5784, %v5797
  %v5800 = vadd.f32 %v5357, %v5799
  %v5801 = vtanh.pop %v5800
  %v5802 = vsub.f32 1.0, %v5794
  %v5803 = vmul.f32 %v5802, %v5801
  %v5804 = vrot.slane %v5349, 2
  %v5806 = vmul.f32 %v5794, %v5804
  %v5807 = vadd.f32 %v5803, %v5806
  %5808 = vst [vmem:[#allocation4] sm:$0x30] %v5582
  %5809 = vst [vmem:[#allocation4 + $0x18] sm:$0xc] %v5807
  %v5810 = vld [vmem:[#allocation2] sm:$0xc0]
  %v5811 = vld [vmem:[#allocation2 + $0x8] sm:$0xc0]
  %v5812 = vld [vmem:[#allocation2 + $0x10] sm:$0xc0]
  %v5813 = vld [vmem:[#allocation2 + $0x48] sm:$0x3]
  %v5814 = vld [vmem:[#allocation2 + $0x50] sm:$0x3]
  %v5815 = vld [vmem:[#allocation2 + $0x58] sm:$0x3]
  %v5816 = vld [vmem:[%s7] sm:$0xff]
  %v5817 = vld [vmem:[%s7 + $0x8] sm:$0xff]
  %v5818 = vld [vmem:[%s7 + $0x10] sm:$0xff]
  %v5819 = vld [vmem:[%s7 + $0x18] sm:$0xff]
  %v5820 = vld [vmem:[%s7 + $0x20] sm:$0xff]
  %v5821 = vld [vmem:[%s7 + $0x28] sm:$0xff]
  %v5822 = vld [vmem:[%s7 + $0x30] sm:$0xff]
  %v5823 = vld [vmem:[%s7 + $0x38] sm:$0xff]
  %v5824 = vld [vmem:[%s7 + $0x40] sm:$0xff]
  %v5825 = vld [vmem:[%s7 + $0x48] sm:$0xff]
  %v5826 = vld [vmem:[%s7 + $0x50] sm:$0xff]
  %v5827 = vld [vmem:[%s7 + $0x58] sm:$0xff]
  %v5828 = vld [vmem:[%s7 + $0x60] sm:$0xff]
  %v5829 = vld [vmem:[%s7 + $0x68] sm:$0xff]
  %v5830 = vld [vmem:[%s7 + $0x70] sm:$0xff]
  %v5831 = vld [vmem:[%s7 + $0x78] sm:$0xff]
  %v5832 = vld [vmem:[%s7 + $0x80] sm:$0xff]
  %v5833 = vld [vmem:[%s7 + $0x88] sm:$0xff]
  %v5834 = vld [vmem:[%s7 + $0x90] sm:$0xff]
  %v5835 = vld [vmem:[%s7 + $0x98] sm:$0xff]
  %v5836 = vld [vmem:[%s7 + $0xa0] sm:$0xff]
  %v5837 = vld [vmem:[%s7 + $0xa8] sm:$0xff]
  %v5838 = vld [vmem:[%s7 + $0xb0] sm:$0xff]
  %v5839 = vld [vmem:[%s7 + $0xb8] sm:$0xff]
  %v5840 = vld [vmem:[%s7 + $0xc0] sm:$0xff]
  %v5841 = vld [vmem:[%s7 + $0xc8] sm:$0xff]
  %v5842 = vld [vmem:[%s7 + $0xd0] sm:$0xff]
  %v5843 = vld [vmem:[%s7 + $0xd8] sm:$0xff]
  %v5844 = vld [vmem:[%s7 + $0xe0] sm:$0xff]
  %v5845 = vld [vmem:[%s7 + $0xe8] sm:$0xff]
  %v5846 = vld [vmem:[%s7 + $0xf0] sm:$0xff]
  %v5847 = vld [vmem:[%s7 + $0xf8] sm:$0xff]
  %v5848 = vld [vmem:[%s7 + $0x100] sm:$0xff]
  %v5849 = vld [vmem:[%s7 + $0x108] sm:$0xff]
  %v5850 = vld [vmem:[%s7 + $0x110] sm:$0xff]
  %v5851 = vld [vmem:[%s7 + $0x118] sm:$0xff]
  %v5852 = vld [vmem:[%s7 + $0x120] sm:$0xff]
  %v5853 = vld [vmem:[%s7 + $0x128] sm:$0xff]
  %v5854 = vld [vmem:[%s7 + $0x130] sm:$0xff]
  %v5855 = vld [vmem:[%s7 + $0x138] sm:$0xff]
  %v5856 = vld [vmem:[%s7 + $0x140] sm:$0xff]
  %v5857 = vld [vmem:[%s7 + $0x148] sm:$0xff]
  %v5858 = vld [vmem:[%s7 + $0x150] sm:$0xff]
  %v5859 = vld [vmem:[%s7 + $0x158] sm:$0xff]
  %v5860 = vld [vmem:[%s7 + $0x160] sm:$0xff]
  %v5861 = vld [vmem:[%s7 + $0x168] sm:$0xff]
  %v5862 = vld [vmem:[%s7 + $0x170] sm:$0xff]
  %v5863 = vld [vmem:[%s7 + $0x178] sm:$0xff]
  %v5865 = vrot.slane %v5582, 4
  %5867 = vmatprep.subr.mxu0 %v5862
  %5868 = vmatpush1.msra.mxu0 %v5861
  %5869 = vmatprep.subr.mxu0 %v5859
  %5870 = vmatpush1.msra.mxu0 %v5858
  %5871 = vmatprep.subr.mxu0 %v5856
  %5872 = vmatpush1.msra.mxu0 %v5855
  %5873 = vmatprep.subr.mxu0 %v5853
  %5874 = vmatpush1.msra.mxu0 %v5852
  %5875 = vmatprep.subr.mxu0 %v5850
  %5876 = vmatpush1.msra.mxu0 %v5849
  %5877 = vmatprep.subr.mxu0 %v5847
  %5878 = vmatpush1.msra.mxu0 %v5846
  %5879 = vmatprep.subr.mxu0 %v5844
  %5880 = vmatpush1.msra.mxu0 %v5843
  %5881 = vmatprep.subr.mxu0 %v5841
  %5882 = vmatpush1.msra.mxu0 %v5840
  %5883 = vmatprep.subr.mxu0 %v5838
  %5884 = vmatpush1.msra.mxu0 %v5837
  %5885 = vmatprep.subr.mxu0 %v5835
  %5886 = vmatpush1.msra.mxu0 %v5834
  %5887 = vmatprep.subr.mxu0 %v5832
  %5888 = vmatpush1.msra.mxu0 %v5831
  %5889 = vmatprep.subr.mxu0 %v5829
  %5890 = vmatpush1.msra.mxu0 %v5828
  %5891 = vmatprep.subr.mxu0 %v5826
  %5892 = vmatpush1.msra.mxu0 %v5825
  %5893 = vmatprep.subr.mxu0 %v5823
  %5894 = vmatpush1.msra.mxu0 %v5822
  %5895 = vmatprep.subr.mxu0 %v5820
  %5896 = vmatpush1.msra.mxu0 %v5819
  %5897 = vmatprep.subr.mxu0 %v5817
  %5898 = vmatpush1.msra.mxu0 %v5816
  %5899 = vmatprep.subr.mxu0 0.0
  %5900 = vmatpush2.msra.mxu0 0.0
  %5901 = vmatprep.subr.mxu0 0.0
  %5902 = vmatpush2.msra.mxu0 0.0
  %5903 = vmatprep.subr.mxu0 0.0
  %5904 = vmatpush2.msra.mxu0 0.0
  %5905 = vmatprep.subr.mxu0 0.0
  %5906 = vmatpush2.msra.mxu0 0.0
  %5907 = vmatprep.subr.mxu0 0.0
  %5908 = vmatpush2.msra.mxu0 0.0
  %5909 = vmatprep.subr.mxu0 0.0
  %5910 = vmatpush2.msra.mxu0 0.0
  %5911 = vmatprep.subr.mxu0 0.0
  %5912 = vmatpush2.msra.mxu0 0.0
  %5913 = vmatprep.subr.mxu0 0.0
  %5914 = vmatpush2.msra.mxu0 0.0
  %5915 = vmatprep.subr.mxu0 0.0
  %5916 = vmatpush2.msra.mxu0 0.0
  %5917 = vmatprep.subr.mxu0 0.0
  %5918 = vmatpush2.msra.mxu0 0.0
  %5919 = vmatprep.subr.mxu0 0.0
  %5920 = vmatpush2.msra.mxu0 0.0
  %5921 = vmatprep.subr.mxu0 0.0
  %5922 = vmatpush2.msra.mxu0 0.0
  %5923 = vmatprep.subr.mxu0 0.0
  %5924 = vmatpush2.msra.mxu0 0.0
  %5925 = vmatprep.subr.mxu0 0.0
  %5926 = vmatpush2.msra.mxu0 0.0
  %5927 = vmatprep.subr.mxu0 0.0
  %5928 = vmatpush2.msra.mxu0 0.0
  %5929 = vmatprep.subr.mxu0 0.0
  %5930 = vmatpush2.msra.mxu0 0.0
  %5931 = vmatprep.mubr.f32.mxu0 0.0
  %5932 = vmatmul.mubr.f32.gmra.mxu0 %v5865
  %v5933 = vpop.f32.mrf.mxu0
  %v5934 = vadd.f32 0.0, %v5933
  %v5935 = vpop.f32.mrf.mxu0
  %v5936 = vadd.f32 0.0, %v5935
  %5937 = vdwg.mxu0
  %5938 = vmatprep.subr.mxu0 0.0
  %5939 = vmatpush1.msra.mxu0 %v5863
  %5940 = vmatprep.subr.mxu0 0.0
  %5941 = vmatpush1.msra.mxu0 %v5860
  %5942 = vmatprep.subr.mxu0 0.0
  %5943 = vmatpush1.msra.mxu0 %v5857
  %5944 = vmatprep.subr.mxu0 0.0
  %5945 = vmatpush1.msra.mxu0 %v5854
  %5946 = vmatprep.subr.mxu0 0.0
  %5947 = vmatpush1.msra.mxu0 %v5851
  %5948 = vmatprep.subr.mxu0 0.0
  %5949 = vmatpush1.msra.mxu0 %v5848
  %5950 = vmatprep.subr.mxu0 0.0
  %5951 = vmatpush1.msra.mxu0 %v5845
  %5952 = vmatprep.subr.mxu0 0.0
  %5953 = vmatpush1.msra.mxu0 %v5842
  %5954 = vmatprep.subr.mxu0 0.0
  %5955 = vmatpush1.msra.mxu0 %v5839
  %5956 = vmatprep.subr.mxu0 0.0
  %5957 = vmatpush1.msra.mxu0 %v5836
  %5958 = vmatprep.subr.mxu0 0.0
  %5959 = vmatpush1.msra.mxu0 %v5833
  %5960 = vmatprep.subr.mxu0 0.0
  %5961 = vmatpush1.msra.mxu0 %v5830
  %5962 = vmatprep.subr.mxu0 0.0
  %5963 = vmatpush1.msra.mxu0 %v5827
  %5964 = vmatprep.subr.mxu0 0.0
  %5965 = vmatpush1.msra.mxu0 %v5824
  %5966 = vmatprep.subr.mxu0 0.0
  %5967 = vmatpush1.msra.mxu0 %v5821
  %5968 = vmatprep.subr.mxu0 0.0
  %5969 = vmatpush1.msra.mxu0 %v5818
  %5970 = vmatprep.subr.mxu0 0.0
  %5971 = vmatpush2.msra.mxu0 0.0
  %5972 = vmatprep.subr.mxu0 0.0
  %5973 = vmatpush2.msra.mxu0 0.0
  %5974 = vmatprep.subr.mxu0 0.0
  %5975 = vmatpush2.msra.mxu0 0.0
  %5976 = vmatprep.subr.mxu0 0.0
  %5977 = vmatpush2.msra.mxu0 0.0
  %5978 = vmatprep.subr.mxu0 0.0
  %5979 = vmatpush2.msra.mxu0 0.0
  %5980 = vmatprep.subr.mxu0 0.0
  %5981 = vmatpush2.msra.mxu0 0.0
  %5982 = vmatprep.subr.mxu0 0.0
  %5983 = vmatpush2.msra.mxu0 0.0
  %5984 = vmatprep.subr.mxu0 0.0
  %5985 = vmatpush2.msra.mxu0 0.0
  %5986 = vmatprep.subr.mxu0 0.0
  %5987 = vmatpush2.msra.mxu0 0.0
  %5988 = vmatprep.subr.mxu0 0.0
  %5989 = vmatpush2.msra.mxu0 0.0
  %5990 = vmatprep.subr.mxu0 0.0
  %5991 = vmatpush2.msra.mxu0 0.0
  %5992 = vmatprep.subr.mxu0 0.0
  %5993 = vmatpush2.msra.mxu0 0.0
  %5994 = vmatprep.subr.mxu0 0.0
  %5995 = vmatpush2.msra.mxu0 0.0
  %5996 = vmatprep.subr.mxu0 0.0
  %5997 = vmatpush2.msra.mxu0 0.0
  %5998 = vmatprep.subr.mxu0 0.0
  %5999 = vmatpush2.msra.mxu0 0.0
  %6000 = vmatprep.subr.mxu0 0.0
  %6001 = vmatpush2.msra.mxu0 0.0
  %6002 = vmatprep.mubr.f32.mxu0 0.0
  %6003 = vmatmul.mubr.f32.gmra.mxu0 %v5865
  %v6004 = vpop.f32.mrf.mxu0
  %v6005 = vadd.f32 0.0, %v6004
  %v6006 = vpop.f32.mrf.mxu0
  %6007 = vdwg.mxu0
  %v6009 = vrot.slane %v5934, 2
  %v6011 = vadd.f32 %v5810, %v6009
  %v6012 = vxor.u32 %v6011, 2147483648
  %v6013 = vmul.f32 %v6012, 1.442695
  %v6014 = vpow.pop %v6013
  %v6015 = vadd.f32 %v6014, 1.0
  %v6016 = vrcp.pop %v6015
  %v6017 = vmul.f32 1.0, %v6016
  %v6019 = vrot.slane %v5936, 2
  %v6021 = vadd.f32 %v5811, %v6019
  %v6022 = vxor.u32 %v6021, 2147483648
  %v6023 = vmul.f32 %v6022, 1.442695
  %v6024 = vpow.pop %v6023
  %v6025 = vadd.f32 %v6024, 1.0
  %v6026 = vrcp.pop %v6025
  %v6027 = vmul.f32 1.0, %v6026
  %v6028 = vadd.f32 %v6005, %v4658
  %v6030 = vrot.slane %v6028, 2
  %v6032 = vmul.f32 %v6017, %v6030
  %v6033 = vadd.f32 %v5812, %v6032
  %v6034 = vtanh.pop %v6033
  %v6035 = vsub.f32 1.0, %v6027
  %v6036 = vmul.f32 %v6035, %v6034
  %v6037 = vrot.slane %v5582, 6
  %v6039 = vmul.f32 %v6027, %v6037
  %v6040 = vadd.f32 %v6036, %v6039
  %v6041 = vld [vmem:[%s8] sm:$0xff]
  %v6042 = vld [vmem:[%s8 + $0x8] sm:$0xff]
  %v6043 = vld [vmem:[%s8 + $0x10] sm:$0xff]
  %v6044 = vld [vmem:[%s8 + $0x18] sm:$0xff]
  %v6045 = vld [vmem:[%s8 + $0x20] sm:$0xff]
  %v6046 = vld [vmem:[%s8 + $0x28] sm:$0xff]
  %v6047 = vld [vmem:[%s8 + $0x30] sm:$0xff]
  %v6048 = vld [vmem:[%s8 + $0x38] sm:$0xff]
  %v6049 = vld [vmem:[%s8 + $0x40] sm:$0xff]
  %v6050 = vld [vmem:[%s8 + $0x48] sm:$0xff]
  %v6051 = vld [vmem:[%s8 + $0x50] sm:$0xff]
  %v6052 = vld [vmem:[%s8 + $0x58] sm:$0xff]
  %v6053 = vld [vmem:[%s8 + $0x60] sm:$0xff]
  %v6054 = vld [vmem:[%s8 + $0x68] sm:$0xff]
  %v6055 = vld [vmem:[%s8 + $0x70] sm:$0xff]
  %v6056 = vld [vmem:[%s8 + $0x78] sm:$0xff]
  %v6057 = vld [vmem:[%s8 + $0x80] sm:$0xff]
  %v6058 = vld [vmem:[%s8 + $0x88] sm:$0xff]
  %v6059 = vld [vmem:[%s8 + $0x90] sm:$0xff]
  %v6060 = vld [vmem:[%s8 + $0x98] sm:$0xff]
  %v6061 = vld [vmem:[%s8 + $0xa0] sm:$0xff]
  %v6062 = vld [vmem:[%s8 + $0xa8] sm:$0xff]
  %v6063 = vld [vmem:[%s8 + $0xb0] sm:$0xff]
  %v6064 = vld [vmem:[%s8 + $0xb8] sm:$0xff]
  %v6065 = vld [vmem:[%s8 + $0xc0] sm:$0xff]
  %v6066 = vld [vmem:[%s8 + $0xc8] sm:$0xff]
  %v6067 = vld [vmem:[%s8 + $0xd0] sm:$0xff]
  %v6068 = vld [vmem:[%s8 + $0xd8] sm:$0xff]
  %v6069 = vld [vmem:[%s8 + $0xe0] sm:$0xff]
  %v6070 = vld [vmem:[%s8 + $0xe8] sm:$0xff]
  %v6071 = vld [vmem:[%s8 + $0xf0] sm:$0xff]
  %v6072 = vld [vmem:[%s8 + $0xf8] sm:$0xff]
  %v6073 = vld [vmem:[%s8 + $0x100] sm:$0xff]
  %v6074 = vld [vmem:[%s8 + $0x108] sm:$0xff]
  %v6075 = vld [vmem:[%s8 + $0x110] sm:$0xff]
  %v6076 = vld [vmem:[%s8 + $0x118] sm:$0xff]
  %v6077 = vld [vmem:[%s8 + $0x120] sm:$0xff]
  %v6078 = vld [vmem:[%s8 + $0x128] sm:$0xff]
  %v6079 = vld [vmem:[%s8 + $0x130] sm:$0xff]
  %v6080 = vld [vmem:[%s8 + $0x138] sm:$0xff]
  %v6081 = vld [vmem:[%s8 + $0x140] sm:$0xff]
  %v6082 = vld [vmem:[%s8 + $0x148] sm:$0xff]
  %v6083 = vld [vmem:[%s8 + $0x150] sm:$0xff]
  %v6084 = vld [vmem:[%s8 + $0x158] sm:$0xff]
  %v6085 = vld [vmem:[%s8 + $0x160] sm:$0xff]
  %v6086 = vld [vmem:[%s8 + $0x168] sm:$0xff]
  %v6087 = vld [vmem:[%s8 + $0x170] sm:$0xff]
  %v6088 = vld [vmem:[%s8 + $0x178] sm:$0xff]
  %v6090 = vrot.slane %v5807, 2
  %6092 = vmatprep.subr.mxu0 %v6087
  %6093 = vmatpush1.msra.mxu0 %v6086
  %6094 = vmatprep.subr.mxu0 %v6084
  %6095 = vmatpush1.msra.mxu0 %v6083
  %6096 = vmatprep.subr.mxu0 %v6081
  %6097 = vmatpush1.msra.mxu0 %v6080
  %6098 = vmatprep.subr.mxu0 %v6078
  %6099 = vmatpush1.msra.mxu0 %v6077
  %6100 = vmatprep.subr.mxu0 %v6075
  %6101 = vmatpush1.msra.mxu0 %v6074
  %6102 = vmatprep.subr.mxu0 %v6072
  %6103 = vmatpush1.msra.mxu0 %v6071
  %6104 = vmatprep.subr.mxu0 %v6069
  %6105 = vmatpush1.msra.mxu0 %v6068
  %6106 = vmatprep.subr.mxu0 %v6066
  %6107 = vmatpush1.msra.mxu0 %v6065
  %6108 = vmatprep.subr.mxu0 %v6063
  %6109 = vmatpush1.msra.mxu0 %v6062
  %6110 = vmatprep.subr.mxu0 %v6060
  %6111 = vmatpush1.msra.mxu0 %v6059
  %6112 = vmatprep.subr.mxu0 %v6057
  %6113 = vmatpush1.msra.mxu0 %v6056
  %6114 = vmatprep.subr.mxu0 %v6054
  %6115 = vmatpush1.msra.mxu0 %v6053
  %6116 = vmatprep.subr.mxu0 %v6051
  %6117 = vmatpush1.msra.mxu0 %v6050
  %6118 = vmatprep.subr.mxu0 %v6048
  %6119 = vmatpush1.msra.mxu0 %v6047
  %6120 = vmatprep.subr.mxu0 %v6045
  %6121 = vmatpush1.msra.mxu0 %v6044
  %6122 = vmatprep.subr.mxu0 %v6042
  %6123 = vmatpush1.msra.mxu0 %v6041
  %6124 = vmatprep.subr.mxu0 0.0
  %6125 = vmatpush2.msra.mxu0 0.0
  %6126 = vmatprep.subr.mxu0 0.0
  %6127 = vmatpush2.msra.mxu0 0.0
  %6128 = vmatprep.subr.mxu0 0.0
  %6129 = vmatpush2.msra.mxu0 0.0
  %6130 = vmatprep.subr.mxu0 0.0
  %6131 = vmatpush2.msra.mxu0 0.0
  %6132 = vmatprep.subr.mxu0 0.0
  %6133 = vmatpush2.msra.mxu0 0.0
  %6134 = vmatprep.subr.mxu0 0.0
  %6135 = vmatpush2.msra.mxu0 0.0
  %6136 = vmatprep.subr.mxu0 0.0
  %6137 = vmatpush2.msra.mxu0 0.0
  %6138 = vmatprep.subr.mxu0 0.0
  %6139 = vmatpush2.msra.mxu0 0.0
  %6140 = vmatprep.subr.mxu0 0.0
  %6141 = vmatpush2.msra.mxu0 0.0
  %6142 = vmatprep.subr.mxu0 0.0
  %6143 = vmatpush2.msra.mxu0 0.0
  %6144 = vmatprep.subr.mxu0 0.0
  %6145 = vmatpush2.msra.mxu0 0.0
  %6146 = vmatprep.subr.mxu0 0.0
  %6147 = vmatpush2.msra.mxu0 0.0
  %6148 = vmatprep.subr.mxu0 0.0
  %6149 = vmatpush2.msra.mxu0 0.0
  %6150 = vmatprep.subr.mxu0 0.0
  %6151 = vmatpush2.msra.mxu0 0.0
  %6152 = vmatprep.subr.mxu0 0.0
  %6153 = vmatpush2.msra.mxu0 0.0
  %6154 = vmatprep.subr.mxu0 0.0
  %6155 = vmatpush2.msra.mxu0 0.0
  %6156 = vmatprep.mubr.f32.mxu0 0.0
  %6157 = vmatmul.mubr.f32.gmra.mxu0 %v6090
  %v6158 = vpop.f32.mrf.mxu0
  %v6159 = vadd.f32 0.0, %v6158
  %v6160 = vpop.f32.mrf.mxu0
  %v6161 = vadd.f32 0.0, %v6160
  %6162 = vdwg.mxu0
  %6163 = vmatprep.subr.mxu0 0.0
  %6164 = vmatpush1.msra.mxu0 %v6088
  %6165 = vmatprep.subr.mxu0 0.0
  %6166 = vmatpush1.msra.mxu0 %v6085
  %6167 = vmatprep.subr.mxu0 0.0
  %6168 = vmatpush1.msra.mxu0 %v6082
  %6169 = vmatprep.subr.mxu0 0.0
  %6170 = vmatpush1.msra.mxu0 %v6079
  %6171 = vmatprep.subr.mxu0 0.0
  %6172 = vmatpush1.msra.mxu0 %v6076
  %6173 = vmatprep.subr.mxu0 0.0
  %6174 = vmatpush1.msra.mxu0 %v6073
  %6175 = vmatprep.subr.mxu0 0.0
  %6176 = vmatpush1.msra.mxu0 %v6070
  %6177 = vmatprep.subr.mxu0 0.0
  %6178 = vmatpush1.msra.mxu0 %v6067
  %6179 = vmatprep.subr.mxu0 0.0
  %6180 = vmatpush1.msra.mxu0 %v6064
  %6181 = vmatprep.subr.mxu0 0.0
  %6182 = vmatpush1.msra.mxu0 %v6061
  %6183 = vmatprep.subr.mxu0 0.0
  %6184 = vmatpush1.msra.mxu0 %v6058
  %6185 = vmatprep.subr.mxu0 0.0
  %6186 = vmatpush1.msra.mxu0 %v6055
  %6187 = vmatprep.subr.mxu0 0.0
  %6188 = vmatpush1.msra.mxu0 %v6052
  %6189 = vmatprep.subr.mxu0 0.0
  %6190 = vmatpush1.msra.mxu0 %v6049
  %6191 = vmatprep.subr.mxu0 0.0
  %6192 = vmatpush1.msra.mxu0 %v6046
  %6193 = vmatprep.subr.mxu0 0.0
  %6194 = vmatpush1.msra.mxu0 %v6043
  %6195 = vmatprep.subr.mxu0 0.0
  %6196 = vmatpush2.msra.mxu0 0.0
  %6197 = vmatprep.subr.mxu0 0.0
  %6198 = vmatpush2.msra.mxu0 0.0
  %6199 = vmatprep.subr.mxu0 0.0
  %6200 = vmatpush2.msra.mxu0 0.0
  %6201 = vmatprep.subr.mxu0 0.0
  %6202 = vmatpush2.msra.mxu0 0.0
  %6203 = vmatprep.subr.mxu0 0.0
  %6204 = vmatpush2.msra.mxu0 0.0
  %6205 = vmatprep.subr.mxu0 0.0
  %6206 = vmatpush2.msra.mxu0 0.0
  %6207 = vmatprep.subr.mxu0 0.0
  %6208 = vmatpush2.msra.mxu0 0.0
  %6209 = vmatprep.subr.mxu0 0.0
  %6210 = vmatpush2.msra.mxu0 0.0
  %6211 = vmatprep.subr.mxu0 0.0
  %6212 = vmatpush2.msra.mxu0 0.0
  %6213 = vmatprep.subr.mxu0 0.0
  %6214 = vmatpush2.msra.mxu0 0.0
  %6215 = vmatprep.subr.mxu0 0.0
  %6216 = vmatpush2.msra.mxu0 0.0
  %6217 = vmatprep.subr.mxu0 0.0
  %6218 = vmatpush2.msra.mxu0 0.0
  %6219 = vmatprep.subr.mxu0 0.0
  %6220 = vmatpush2.msra.mxu0 0.0
  %6221 = vmatprep.subr.mxu0 0.0
  %6222 = vmatpush2.msra.mxu0 0.0
  %6223 = vmatprep.subr.mxu0 0.0
  %6224 = vmatpush2.msra.mxu0 0.0
  %6225 = vmatprep.subr.mxu0 0.0
  %6226 = vmatpush2.msra.mxu0 0.0
  %6227 = vmatprep.mubr.f32.mxu0 0.0
  %6228 = vmatmul.mubr.f32.gmra.mxu0 %v6090
  %v6229 = vpop.f32.mrf.mxu0
  %v6230 = vadd.f32 0.0, %v6229
  %v6231 = vpop.f32.mrf.mxu0
  %6232 = vdwg.mxu0
  %v6233 = vadd.f32 %v5813, %v6159
  %v6234 = vxor.u32 %v6233, 2147483648
  %v6235 = vmul.f32 %v6234, 1.442695
  %v6236 = vpow.pop %v6235
  %v6237 = vadd.f32 %v6236, 1.0
  %v6238 = vrcp.pop %v6237
  %v6239 = vmul.f32 1.0, %v6238
  %v6240 = vadd.f32 %v5814, %v6161
  %v6241 = vxor.u32 %v6240, 2147483648
  %v6242 = vmul.f32 %v6241, 1.442695
  %v6243 = vpow.pop %v6242
  %v6244 = vadd.f32 %v6243, 1.0
  %v6245 = vrcp.pop %v6244
  %v6246 = vmul.f32 1.0, %v6245
  %v6247 = vadd.f32 %v6230, %v4881
  %v6248 = vmul.f32 %v6239, %v6247
  %v6249 = vadd.f32 %v5815, %v6248
  %v6250 = vtanh.pop %v6249
  %v6251 = vsub.f32 1.0, %v6246
  %v6252 = vmul.f32 %v6251, %v6250
  %v6253 = vmul.f32 %v6246, %v6090
  %v6254 = vadd.f32 %v6252, %v6253
  %6255 = vst [vmem:[#allocation4] sm:$0xc0] %v6040
  %6256 = vst [vmem:[#allocation4 + $0x18] sm:$0x3] %v6254
  %v6257 = vld [vmem:[#allocation2 + $0x30] sm:$0x3]
  %v6258 = vld [vmem:[#allocation2 + $0x38] sm:$0x3]
  %v6259 = vld [vmem:[#allocation2 + $0x40] sm:$0x3]
  %v6260 = vld [vmem:[#allocation2 + $0x18] sm:$0xc0]
  %v6261 = vld [vmem:[#allocation2 + $0x20] sm:$0xc0]
  %v6262 = vld [vmem:[#allocation2 + $0x28] sm:$0xc0]
  %v6263 = vld [vmem:[%s7] sm:$0xff]
  %v6264 = vld [vmem:[%s7 + $0x8] sm:$0xff]
  %v6265 = vld [vmem:[%s7 + $0x10] sm:$0xff]
  %v6266 = vld [vmem:[%s7 + $0x18] sm:$0xff]
  %v6267 = vld [vmem:[%s7 + $0x20] sm:$0xff]
  %v6268 = vld [vmem:[%s7 + $0x28] sm:$0xff]
  %v6269 = vld [vmem:[%s7 + $0x30] sm:$0xff]
  %v6270 = vld [vmem:[%s7 + $0x38] sm:$0xff]
  %v6271 = vld [vmem:[%s7 + $0x40] sm:$0xff]
  %v6272 = vld [vmem:[%s7 + $0x48] sm:$0xff]
  %v6273 = vld [vmem:[%s7 + $0x50] sm:$0xff]
  %v6274 = vld [vmem:[%s7 + $0x58] sm:$0xff]
  %v6275 = vld [vmem:[%s7 + $0x60] sm:$0xff]
  %v6276 = vld [vmem:[%s7 + $0x68] sm:$0xff]
  %v6277 = vld [vmem:[%s7 + $0x70] sm:$0xff]
  %v6278 = vld [vmem:[%s7 + $0x78] sm:$0xff]
  %v6279 = vld [vmem:[%s7 + $0x80] sm:$0xff]
  %v6280 = vld [vmem:[%s7 + $0x88] sm:$0xff]
  %v6281 = vld [vmem:[%s7 + $0x90] sm:$0xff]
  %v6282 = vld [vmem:[%s7 + $0x98] sm:$0xff]
  %v6283 = vld [vmem:[%s7 + $0xa0] sm:$0xff]
  %v6284 = vld [vmem:[%s7 + $0xa8] sm:$0xff]
  %v6285 = vld [vmem:[%s7 + $0xb0] sm:$0xff]
  %v6286 = vld [vmem:[%s7 + $0xb8] sm:$0xff]
  %v6287 = vld [vmem:[%s7 + $0xc0] sm:$0xff]
  %v6288 = vld [vmem:[%s7 + $0xc8] sm:$0xff]
  %v6289 = vld [vmem:[%s7 + $0xd0] sm:$0xff]
  %v6290 = vld [vmem:[%s7 + $0xd8] sm:$0xff]
  %v6291 = vld [vmem:[%s7 + $0xe0] sm:$0xff]
  %v6292 = vld [vmem:[%s7 + $0xe8] sm:$0xff]
  %v6293 = vld [vmem:[%s7 + $0xf0] sm:$0xff]
  %v6294 = vld [vmem:[%s7 + $0xf8] sm:$0xff]
  %v6295 = vld [vmem:[%s7 + $0x100] sm:$0xff]
  %v6296 = vld [vmem:[%s7 + $0x108] sm:$0xff]
  %v6297 = vld [vmem:[%s7 + $0x110] sm:$0xff]
  %v6298 = vld [vmem:[%s7 + $0x118] sm:$0xff]
  %v6299 = vld [vmem:[%s7 + $0x120] sm:$0xff]
  %v6300 = vld [vmem:[%s7 + $0x128] sm:$0xff]
  %v6301 = vld [vmem:[%s7 + $0x130] sm:$0xff]
  %v6302 = vld [vmem:[%s7 + $0x138] sm:$0xff]
  %v6303 = vld [vmem:[%s7 + $0x140] sm:$0xff]
  %v6304 = vld [vmem:[%s7 + $0x148] sm:$0xff]
  %v6305 = vld [vmem:[%s7 + $0x150] sm:$0xff]
  %v6306 = vld [vmem:[%s7 + $0x158] sm:$0xff]
  %v6307 = vld [vmem:[%s7 + $0x160] sm:$0xff]
  %v6308 = vld [vmem:[%s7 + $0x168] sm:$0xff]
  %v6309 = vld [vmem:[%s7 + $0x170] sm:$0xff]
  %v6310 = vld [vmem:[%s7 + $0x178] sm:$0xff]
  %v6312 = vrot.slane %v6040, 6
  %6314 = vmatprep.subr.mxu0 %v6309
  %6315 = vmatpush1.msra.mxu0 %v6308
  %6316 = vmatprep.subr.mxu0 %v6306
  %6317 = vmatpush1.msra.mxu0 %v6305
  %6318 = vmatprep.subr.mxu0 %v6303
  %6319 = vmatpush1.msra.mxu0 %v6302
  %6320 = vmatprep.subr.mxu0 %v6300
  %6321 = vmatpush1.msra.mxu0 %v6299
  %6322 = vmatprep.subr.mxu0 %v6297
  %6323 = vmatpush1.msra.mxu0 %v6296
  %6324 = vmatprep.subr.mxu0 %v6294
  %6325 = vmatpush1.msra.mxu0 %v6293
  %6326 = vmatprep.subr.mxu0 %v6291
  %6327 = vmatpush1.msra.mxu0 %v6290
  %6328 = vmatprep.subr.mxu0 %v6288
  %6329 = vmatpush1.msra.mxu0 %v6287
  %6330 = vmatprep.subr.mxu0 %v6285
  %6331 = vmatpush1.msra.mxu0 %v6284
  %6332 = vmatprep.subr.mxu0 %v6282
  %6333 = vmatpush1.msra.mxu0 %v6281
  %6334 = vmatprep.subr.mxu0 %v6279
  %6335 = vmatpush1.msra.mxu0 %v6278
  %6336 = vmatprep.subr.mxu0 %v6276
  %6337 = vmatpush1.msra.mxu0 %v6275
  %6338 = vmatprep.subr.mxu0 %v6273
  %6339 = vmatpush1.msra.mxu0 %v6272
  %6340 = vmatprep.subr.mxu0 %v6270
  %6341 = vmatpush1.msra.mxu0 %v6269
  %6342 = vmatprep.subr.mxu0 %v6267
  %6343 = vmatpush1.msra.mxu0 %v6266
  %6344 = vmatprep.subr.mxu0 %v6264
  %6345 = vmatpush1.msra.mxu0 %v6263
  %6346 = vmatprep.subr.mxu0 0.0
  %6347 = vmatpush2.msra.mxu0 0.0
  %6348 = vmatprep.subr.mxu0 0.0
  %6349 = vmatpush2.msra.mxu0 0.0
  %6350 = vmatprep.subr.mxu0 0.0
  %6351 = vmatpush2.msra.mxu0 0.0
  %6352 = vmatprep.subr.mxu0 0.0
  %6353 = vmatpush2.msra.mxu0 0.0
  %6354 = vmatprep.subr.mxu0 0.0
  %6355 = vmatpush2.msra.mxu0 0.0
  %6356 = vmatprep.subr.mxu0 0.0
  %6357 = vmatpush2.msra.mxu0 0.0
  %6358 = vmatprep.subr.mxu0 0.0
  %6359 = vmatpush2.msra.mxu0 0.0
  %6360 = vmatprep.subr.mxu0 0.0
  %6361 = vmatpush2.msra.mxu0 0.0
  %6362 = vmatprep.subr.mxu0 0.0
  %6363 = vmatpush2.msra.mxu0 0.0
  %6364 = vmatprep.subr.mxu0 0.0
  %6365 = vmatpush2.msra.mxu0 0.0
  %6366 = vmatprep.subr.mxu0 0.0
  %6367 = vmatpush2.msra.mxu0 0.0
  %6368 = vmatprep.subr.mxu0 0.0
  %6369 = vmatpush2.msra.mxu0 0.0
  %6370 = vmatprep.subr.mxu0 0.0
  %6371 = vmatpush2.msra.mxu0 0.0
  %6372 = vmatprep.subr.mxu0 0.0
  %6373 = vmatpush2.msra.mxu0 0.0
  %6374 = vmatprep.subr.mxu0 0.0
  %6375 = vmatpush2.msra.mxu0 0.0
  %6376 = vmatprep.subr.mxu0 0.0
  %6377 = vmatpush2.msra.mxu0 0.0
  %6378 = vmatprep.mubr.f32.mxu0 0.0
  %6379 = vmatmul.mubr.f32.gmra.mxu0 %v6312
  %v6380 = vpop.f32.mrf.mxu0
  %v6381 = vadd.f32 0.0, %v6380
  %v6382 = vpop.f32.mrf.mxu0
  %v6383 = vadd.f32 0.0, %v6382
  %6384 = vdwg.mxu0
  %6385 = vmatprep.subr.mxu0 0.0
  %6386 = vmatpush1.msra.mxu0 %v6310
  %6387 = vmatprep.subr.mxu0 0.0
  %6388 = vmatpush1.msra.mxu0 %v6307
  %6389 = vmatprep.subr.mxu0 0.0
  %6390 = vmatpush1.msra.mxu0 %v6304
  %6391 = vmatprep.subr.mxu0 0.0
  %6392 = vmatpush1.msra.mxu0 %v6301
  %6393 = vmatprep.subr.mxu0 0.0
  %6394 = vmatpush1.msra.mxu0 %v6298
  %6395 = vmatprep.subr.mxu0 0.0
  %6396 = vmatpush1.msra.mxu0 %v6295
  %6397 = vmatprep.subr.mxu0 0.0
  %6398 = vmatpush1.msra.mxu0 %v6292
  %6399 = vmatprep.subr.mxu0 0.0
  %6400 = vmatpush1.msra.mxu0 %v6289
  %6401 = vmatprep.subr.mxu0 0.0
  %6402 = vmatpush1.msra.mxu0 %v6286
  %6403 = vmatprep.subr.mxu0 0.0
  %6404 = vmatpush1.msra.mxu0 %v6283
  %6405 = vmatprep.subr.mxu0 0.0
  %6406 = vmatpush1.msra.mxu0 %v6280
  %6407 = vmatprep.subr.mxu0 0.0
  %6408 = vmatpush1.msra.mxu0 %v6277
  %6409 = vmatprep.subr.mxu0 0.0
  %6410 = vmatpush1.msra.mxu0 %v6274
  %6411 = vmatprep.subr.mxu0 0.0
  %6412 = vmatpush1.msra.mxu0 %v6271
  %6413 = vmatprep.subr.mxu0 0.0
  %6414 = vmatpush1.msra.mxu0 %v6268
  %6415 = vmatprep.subr.mxu0 0.0
  %6416 = vmatpush1.msra.mxu0 %v6265
  %6417 = vmatprep.subr.mxu0 0.0
  %6418 = vmatpush2.msra.mxu0 0.0
  %6419 = vmatprep.subr.mxu0 0.0
  %6420 = vmatpush2.msra.mxu0 0.0
  %6421 = vmatprep.subr.mxu0 0.0
  %6422 = vmatpush2.msra.mxu0 0.0
  %6423 = vmatprep.subr.mxu0 0.0
  %6424 = vmatpush2.msra.mxu0 0.0
  %6425 = vmatprep.subr.mxu0 0.0
  %6426 = vmatpush2.msra.mxu0 0.0
  %6427 = vmatprep.subr.mxu0 0.0
  %6428 = vmatpush2.msra.mxu0 0.0
  %6429 = vmatprep.subr.mxu0 0.0
  %6430 = vmatpush2.msra.mxu0 0.0
  %6431 = vmatprep.subr.mxu0 0.0
  %6432 = vmatpush2.msra.mxu0 0.0
  %6433 = vmatprep.subr.mxu0 0.0
  %6434 = vmatpush2.msra.mxu0 0.0
  %6435 = vmatprep.subr.mxu0 0.0
  %6436 = vmatpush2.msra.mxu0 0.0
  %6437 = vmatprep.subr.mxu0 0.0
  %6438 = vmatpush2.msra.mxu0 0.0
  %6439 = vmatprep.subr.mxu0 0.0
  %6440 = vmatpush2.msra.mxu0 0.0
  %6441 = vmatprep.subr.mxu0 0.0
  %6442 = vmatpush2.msra.mxu0 0.0
  %6443 = vmatprep.subr.mxu0 0.0
  %6444 = vmatpush2.msra.mxu0 0.0
  %6445 = vmatprep.subr.mxu0 0.0
  %6446 = vmatpush2.msra.mxu0 0.0
  %6447 = vmatprep.subr.mxu0 0.0
  %6448 = vmatpush2.msra.mxu0 0.0
  %6449 = vmatprep.mubr.f32.mxu0 0.0
  %6450 = vmatmul.mubr.f32.gmra.mxu0 %v6312
  %v6451 = vpop.f32.mrf.mxu0
  %v6452 = vadd.f32 0.0, %v6451
  %v6453 = vpop.f32.mrf.mxu0
  %6454 = vdwg.mxu0
  %v6455 = vadd.f32 %v6257, %v6381
  %v6456 = vxor.u32 %v6455, 2147483648
  %v6457 = vmul.f32 %v6456, 1.442695
  %v6458 = vpow.pop %v6457
  %v6459 = vadd.f32 %v6458, 1.0
  %v6460 = vrcp.pop %v6459
  %v6461 = vmul.f32 1.0, %v6460
  %v6462 = vadd.f32 %v6258, %v6383
  %v6463 = vxor.u32 %v6462, 2147483648
  %v6464 = vmul.f32 %v6463, 1.442695
  %v6465 = vpow.pop %v6464
  %v6466 = vadd.f32 %v6465, 1.0
  %v6467 = vrcp.pop %v6466
  %v6468 = vmul.f32 1.0, %v6467
  %v6469 = vadd.f32 %v6452, %v4658
  %v6470 = vmul.f32 %v6461, %v6469
  %v6471 = vadd.f32 %v6259, %v6470
  %v6472 = vtanh.pop %v6471
  %v6473 = vsub.f32 1.0, %v6468
  %v6474 = vmul.f32 %v6473, %v6472
  %v6475 = vmul.f32 %v6468, %v6312
  %v6476 = vadd.f32 %v6474, %v6475
  %v6477 = vld [vmem:[%s8] sm:$0xff]
  %v6478 = vld [vmem:[%s8 + $0x8] sm:$0xff]
  %v6479 = vld [vmem:[%s8 + $0x10] sm:$0xff]
  %v6480 = vld [vmem:[%s8 + $0x18] sm:$0xff]
  %v6481 = vld [vmem:[%s8 + $0x20] sm:$0xff]
  %v6482 = vld [vmem:[%s8 + $0x28] sm:$0xff]
  %v6483 = vld [vmem:[%s8 + $0x30] sm:$0xff]
  %v6484 = vld [vmem:[%s8 + $0x38] sm:$0xff]
  %v6485 = vld [vmem:[%s8 + $0x40] sm:$0xff]
  %v6486 = vld [vmem:[%s8 + $0x48] sm:$0xff]
  %v6487 = vld [vmem:[%s8 + $0x50] sm:$0xff]
  %v6488 = vld [vmem:[%s8 + $0x58] sm:$0xff]
  %v6489 = vld [vmem:[%s8 + $0x60] sm:$0xff]
  %v6490 = vld [vmem:[%s8 + $0x68] sm:$0xff]
  %v6491 = vld [vmem:[%s8 + $0x70] sm:$0xff]
  %v6492 = vld [vmem:[%s8 + $0x78] sm:$0xff]
  %v6493 = vld [vmem:[%s8 + $0x80] sm:$0xff]
  %v6494 = vld [vmem:[%s8 + $0x88] sm:$0xff]
  %v6495 = vld [vmem:[%s8 + $0x90] sm:$0xff]
  %v6496 = vld [vmem:[%s8 + $0x98] sm:$0xff]
  %v6497 = vld [vmem:[%s8 + $0xa0] sm:$0xff]
  %v6498 = vld [vmem:[%s8 + $0xa8] sm:$0xff]
  %v6499 = vld [vmem:[%s8 + $0xb0] sm:$0xff]
  %v6500 = vld [vmem:[%s8 + $0xb8] sm:$0xff]
  %v6501 = vld [vmem:[%s8 + $0xc0] sm:$0xff]
  %v6502 = vld [vmem:[%s8 + $0xc8] sm:$0xff]
  %v6503 = vld [vmem:[%s8 + $0xd0] sm:$0xff]
  %v6504 = vld [vmem:[%s8 + $0xd8] sm:$0xff]
  %v6505 = vld [vmem:[%s8 + $0xe0] sm:$0xff]
  %v6506 = vld [vmem:[%s8 + $0xe8] sm:$0xff]
  %v6507 = vld [vmem:[%s8 + $0xf0] sm:$0xff]
  %v6508 = vld [vmem:[%s8 + $0xf8] sm:$0xff]
  %v6509 = vld [vmem:[%s8 + $0x100] sm:$0xff]
  %v6510 = vld [vmem:[%s8 + $0x108] sm:$0xff]
  %v6511 = vld [vmem:[%s8 + $0x110] sm:$0xff]
  %v6512 = vld [vmem:[%s8 + $0x118] sm:$0xff]
  %v6513 = vld [vmem:[%s8 + $0x120] sm:$0xff]
  %v6514 = vld [vmem:[%s8 + $0x128] sm:$0xff]
  %v6515 = vld [vmem:[%s8 + $0x130] sm:$0xff]
  %v6516 = vld [vmem:[%s8 + $0x138] sm:$0xff]
  %v6517 = vld [vmem:[%s8 + $0x140] sm:$0xff]
  %v6518 = vld [vmem:[%s8 + $0x148] sm:$0xff]
  %v6519 = vld [vmem:[%s8 + $0x150] sm:$0xff]
  %v6520 = vld [vmem:[%s8 + $0x158] sm:$0xff]
  %v6521 = vld [vmem:[%s8 + $0x160] sm:$0xff]
  %v6522 = vld [vmem:[%s8 + $0x168] sm:$0xff]
  %v6523 = vld [vmem:[%s8 + $0x170] sm:$0xff]
  %v6524 = vld [vmem:[%s8 + $0x178] sm:$0xff]
  %6525 = vmatprep.subr.mxu0 %v6523
  %6526 = vmatpush1.msra.mxu0 %v6522
  %6527 = vmatprep.subr.mxu0 %v6520
  %6528 = vmatpush1.msra.mxu0 %v6519
  %6529 = vmatprep.subr.mxu0 %v6517
  %6530 = vmatpush1.msra.mxu0 %v6516
  %6531 = vmatprep.subr.mxu0 %v6514
  %6532 = vmatpush1.msra.mxu0 %v6513
  %6533 = vmatprep.subr.mxu0 %v6511
  %6534 = vmatpush1.msra.mxu0 %v6510
  %6535 = vmatprep.subr.mxu0 %v6508
  %6536 = vmatpush1.msra.mxu0 %v6507
  %6537 = vmatprep.subr.mxu0 %v6505
  %6538 = vmatpush1.msra.mxu0 %v6504
  %6539 = vmatprep.subr.mxu0 %v6502
  %6540 = vmatpush1.msra.mxu0 %v6501
  %6541 = vmatprep.subr.mxu0 %v6499
  %6542 = vmatpush1.msra.mxu0 %v6498
  %6543 = vmatprep.subr.mxu0 %v6496
  %6544 = vmatpush1.msra.mxu0 %v6495
  %6545 = vmatprep.subr.mxu0 %v6493
  %6546 = vmatpush1.msra.mxu0 %v6492
  %6547 = vmatprep.subr.mxu0 %v6490
  %6548 = vmatpush1.msra.mxu0 %v6489
  %6549 = vmatprep.subr.mxu0 %v6487
  %6550 = vmatpush1.msra.mxu0 %v6486
  %6551 = vmatprep.subr.mxu0 %v6484
  %6552 = vmatpush1.msra.mxu0 %v6483
  %6553 = vmatprep.subr.mxu0 %v6481
  %6554 = vmatpush1.msra.mxu0 %v6480
  %6555 = vmatprep.subr.mxu0 %v6478
  %6556 = vmatpush1.msra.mxu0 %v6477
  %6557 = vmatprep.subr.mxu0 0.0
  %6558 = vmatpush2.msra.mxu0 0.0
  %6559 = vmatprep.subr.mxu0 0.0
  %6560 = vmatpush2.msra.mxu0 0.0
  %6561 = vmatprep.subr.mxu0 0.0
  %6562 = vmatpush2.msra.mxu0 0.0
  %6563 = vmatprep.subr.mxu0 0.0
  %6564 = vmatpush2.msra.mxu0 0.0
  %6565 = vmatprep.subr.mxu0 0.0
  %6566 = vmatpush2.msra.mxu0 0.0
  %6567 = vmatprep.subr.mxu0 0.0
  %6568 = vmatpush2.msra.mxu0 0.0
  %6569 = vmatprep.subr.mxu0 0.0
  %6570 = vmatpush2.msra.mxu0 0.0
  %6571 = vmatprep.subr.mxu0 0.0
  %6572 = vmatpush2.msra.mxu0 0.0
  %6573 = vmatprep.subr.mxu0 0.0
  %6574 = vmatpush2.msra.mxu0 0.0
  %6575 = vmatprep.subr.mxu0 0.0
  %6576 = vmatpush2.msra.mxu0 0.0
  %6577 = vmatprep.subr.mxu0 0.0
  %6578 = vmatpush2.msra.mxu0 0.0
  %6579 = vmatprep.subr.mxu0 0.0
  %6580 = vmatpush2.msra.mxu0 0.0
  %6581 = vmatprep.subr.mxu0 0.0
  %6582 = vmatpush2.msra.mxu0 0.0
  %6583 = vmatprep.subr.mxu0 0.0
  %6584 = vmatpush2.msra.mxu0 0.0
  %6585 = vmatprep.subr.mxu0 0.0
  %6586 = vmatpush2.msra.mxu0 0.0
  %6587 = vmatprep.subr.mxu0 0.0
  %6588 = vmatpush2.msra.mxu0 0.0
  %6589 = vmatprep.mubr.f32.mxu0 0.0
  %6590 = vmatmul.mubr.f32.gmra.mxu0 %v6254
  %v6591 = vpop.f32.mrf.mxu0
  %v6592 = vadd.f32 0.0, %v6591
  %v6593 = vpop.f32.mrf.mxu0
  %v6594 = vadd.f32 0.0, %v6593
  %6595 = vdwg.mxu0
  %6596 = vmatprep.subr.mxu0 0.0
  %6597 = vmatpush1.msra.mxu0 %v6524
  %6598 = vmatprep.subr.mxu0 0.0
  %6599 = vmatpush1.msra.mxu0 %v6521
  %6600 = vmatprep.subr.mxu0 0.0
  %6601 = vmatpush1.msra.mxu0 %v6518
  %6602 = vmatprep.subr.mxu0 0.0
  %6603 = vmatpush1.msra.mxu0 %v6515
  %6604 = vmatprep.subr.mxu0 0.0
  %6605 = vmatpush1.msra.mxu0 %v6512
  %6606 = vmatprep.subr.mxu0 0.0
  %6607 = vmatpush1.msra.mxu0 %v6509
  %6608 = vmatprep.subr.mxu0 0.0
  %6609 = vmatpush1.msra.mxu0 %v6506
  %6610 = vmatprep.subr.mxu0 0.0
  %6611 = vmatpush1.msra.mxu0 %v6503
  %6612 = vmatprep.subr.mxu0 0.0
  %6613 = vmatpush1.msra.mxu0 %v6500
  %6614 = vmatprep.subr.mxu0 0.0
  %6615 = vmatpush1.msra.mxu0 %v6497
  %6616 = vmatprep.subr.mxu0 0.0
  %6617 = vmatpush1.msra.mxu0 %v6494
  %6618 = vmatprep.subr.mxu0 0.0
  %6619 = vmatpush1.msra.mxu0 %v6491
  %6620 = vmatprep.subr.mxu0 0.0
  %6621 = vmatpush1.msra.mxu0 %v6488
  %6622 = vmatprep.subr.mxu0 0.0
  %6623 = vmatpush1.msra.mxu0 %v6485
  %6624 = vmatprep.subr.mxu0 0.0
  %6625 = vmatpush1.msra.mxu0 %v6482
  %6626 = vmatprep.subr.mxu0 0.0
  %6627 = vmatpush1.msra.mxu0 %v6479
  %6628 = vmatprep.subr.mxu0 0.0
  %6629 = vmatpush2.msra.mxu0 0.0
  %6630 = vmatprep.subr.mxu0 0.0
  %6631 = vmatpush2.msra.mxu0 0.0
  %6632 = vmatprep.subr.mxu0 0.0
  %6633 = vmatpush2.msra.mxu0 0.0
  %6634 = vmatprep.subr.mxu0 0.0
  %6635 = vmatpush2.msra.mxu0 0.0
  %6636 = vmatprep.subr.mxu0 0.0
  %6637 = vmatpush2.msra.mxu0 0.0
  %6638 = vmatprep.subr.mxu0 0.0
  %6639 = vmatpush2.msra.mxu0 0.0
  %6640 = vmatprep.subr.mxu0 0.0
  %6641 = vmatpush2.msra.mxu0 0.0
  %6642 = vmatprep.subr.mxu0 0.0
  %6643 = vmatpush2.msra.mxu0 0.0
  %6644 = vmatprep.subr.mxu0 0.0
  %6645 = vmatpush2.msra.mxu0 0.0
  %6646 = vmatprep.subr.mxu0 0.0
  %6647 = vmatpush2.msra.mxu0 0.0
  %6648 = vmatprep.subr.mxu0 0.0
  %6649 = vmatpush2.msra.mxu0 0.0
  %6650 = vmatprep.subr.mxu0 0.0
  %6651 = vmatpush2.msra.mxu0 0.0
  %6652 = vmatprep.subr.mxu0 0.0
  %6653 = vmatpush2.msra.mxu0 0.0
  %6654 = vmatprep.subr.mxu0 0.0
  %6655 = vmatpush2.msra.mxu0 0.0
  %6656 = vmatprep.subr.mxu0 0.0
  %6657 = vmatpush2.msra.mxu0 0.0
  %6658 = vmatprep.subr.mxu0 0.0
  %6659 = vmatpush2.msra.mxu0 0.0
  %6660 = vmatprep.mubr.f32.mxu0 0.0
  %6661 = vmatmul.mubr.f32.gmra.mxu0 %v6254
  %v6662 = vpop.f32.mrf.mxu0
  %v6663 = vadd.f32 0.0, %v6662
  %v6664 = vpop.f32.mrf.mxu0
  %6665 = vdwg.mxu0
  %v6667 = vrot.slane %v6592, 2
  %v6669 = vadd.f32 %v6260, %v6667
  %v6670 = vxor.u32 %v6669, 2147483648
  %v6671 = vmul.f32 %v6670, 1.442695
  %v6672 = vpow.pop %v6671
  %v6673 = vadd.f32 %v6672, 1.0
  %v6674 = vrcp.pop %v6673
  %v6675 = vmul.f32 1.0, %v6674
  %v6677 = vrot.slane %v6594, 2
  %v6679 = vadd.f32 %v6261, %v6677
  %v6680 = vxor.u32 %v6679, 2147483648
  %v6681 = vmul.f32 %v6680, 1.442695
  %v6682 = vpow.pop %v6681
  %v6683 = vadd.f32 %v6682, 1.0
  %v6684 = vrcp.pop %v6683
  %v6685 = vmul.f32 1.0, %v6684
  %v6686 = vadd.f32 %v6663, %v4881
  %v6688 = vrot.slane %v6686, 2
  %v6690 = vmul.f32 %v6675, %v6688
  %v6691 = vadd.f32 %v6262, %v6690
  %v6692 = vtanh.pop %v6691
  %v6693 = vsub.f32 1.0, %v6685
  %v6694 = vmul.f32 %v6693, %v6692
  %v6696 = vrot.slane %v6254, 2
  %v6698 = vmul.f32 %v6685, %v6696
  %v6699 = vadd.f32 %v6694, %v6698
  %6700 = vst [vmem:[#allocation4 + $0x10] sm:$0x3] %v6476
  %6701 = vst [vmem:[#allocation4 + $0x8] sm:$0xc0] %v6699
  %v6702 = vld [vmem:[#allocation2 + $0x30] sm:$0xc]
  %v6703 = vld [vmem:[#allocation2 + $0x38] sm:$0xc]
  %v6704 = vld [vmem:[#allocation2 + $0x40] sm:$0xc]
  %v6705 = vld [vmem:[#allocation2 + $0x18] sm:$0x30]
  %v6706 = vld [vmem:[#allocation2 + $0x20] sm:$0x30]
  %v6707 = vld [vmem:[#allocation2 + $0x28] sm:$0x30]
  %v6708 = vld [vmem:[%s7] sm:$0xff]
  %v6709 = vld [vmem:[%s7 + $0x8] sm:$0xff]
  %v6710 = vld [vmem:[%s7 + $0x10] sm:$0xff]
  %v6711 = vld [vmem:[%s7 + $0x18] sm:$0xff]
  %v6712 = vld [vmem:[%s7 + $0x20] sm:$0xff]
  %v6713 = vld [vmem:[%s7 + $0x28] sm:$0xff]
  %v6714 = vld [vmem:[%s7 + $0x30] sm:$0xff]
  %v6715 = vld [vmem:[%s7 + $0x38] sm:$0xff]
  %v6716 = vld [vmem:[%s7 + $0x40] sm:$0xff]
  %v6717 = vld [vmem:[%s7 + $0x48] sm:$0xff]
  %v6718 = vld [vmem:[%s7 + $0x50] sm:$0xff]
  %v6719 = vld [vmem:[%s7 + $0x58] sm:$0xff]
  %v6720 = vld [vmem:[%s7 + $0x60] sm:$0xff]
  %v6721 = vld [vmem:[%s7 + $0x68] sm:$0xff]
  %v6722 = vld [vmem:[%s7 + $0x70] sm:$0xff]
  %v6723 = vld [vmem:[%s7 + $0x78] sm:$0xff]
  %v6724 = vld [vmem:[%s7 + $0x80] sm:$0xff]
  %v6725 = vld [vmem:[%s7 + $0x88] sm:$0xff]
  %v6726 = vld [vmem:[%s7 + $0x90] sm:$0xff]
  %v6727 = vld [vmem:[%s7 + $0x98] sm:$0xff]
  %v6728 = vld [vmem:[%s7 + $0xa0] sm:$0xff]
  %v6729 = vld [vmem:[%s7 + $0xa8] sm:$0xff]
  %v6730 = vld [vmem:[%s7 + $0xb0] sm:$0xff]
  %v6731 = vld [vmem:[%s7 + $0xb8] sm:$0xff]
  %v6732 = vld [vmem:[%s7 + $0xc0] sm:$0xff]
  %v6733 = vld [vmem:[%s7 + $0xc8] sm:$0xff]
  %v6734 = vld [vmem:[%s7 + $0xd0] sm:$0xff]
  %v6735 = vld [vmem:[%s7 + $0xd8] sm:$0xff]
  %v6736 = vld [vmem:[%s7 + $0xe0] sm:$0xff]
  %v6737 = vld [vmem:[%s7 + $0xe8] sm:$0xff]
  %v6738 = vld [vmem:[%s7 + $0xf0] sm:$0xff]
  %v6739 = vld [vmem:[%s7 + $0xf8] sm:$0xff]
  %v6740 = vld [vmem:[%s7 + $0x100] sm:$0xff]
  %v6741 = vld [vmem:[%s7 + $0x108] sm:$0xff]
  %v6742 = vld [vmem:[%s7 + $0x110] sm:$0xff]
  %v6743 = vld [vmem:[%s7 + $0x118] sm:$0xff]
  %v6744 = vld [vmem:[%s7 + $0x120] sm:$0xff]
  %v6745 = vld [vmem:[%s7 + $0x128] sm:$0xff]
  %v6746 = vld [vmem:[%s7 + $0x130] sm:$0xff]
  %v6747 = vld [vmem:[%s7 + $0x138] sm:$0xff]
  %v6748 = vld [vmem:[%s7 + $0x140] sm:$0xff]
  %v6749 = vld [vmem:[%s7 + $0x148] sm:$0xff]
  %v6750 = vld [vmem:[%s7 + $0x150] sm:$0xff]
  %v6751 = vld [vmem:[%s7 + $0x158] sm:$0xff]
  %v6752 = vld [vmem:[%s7 + $0x160] sm:$0xff]
  %v6753 = vld [vmem:[%s7 + $0x168] sm:$0xff]
  %v6754 = vld [vmem:[%s7 + $0x170] sm:$0xff]
  %v6755 = vld [vmem:[%s7 + $0x178] sm:$0xff]
  %6756 = vmatprep.subr.mxu0 %v6754
  %6757 = vmatpush1.msra.mxu0 %v6753
  %6758 = vmatprep.subr.mxu0 %v6751
  %6759 = vmatpush1.msra.mxu0 %v6750
  %6760 = vmatprep.subr.mxu0 %v6748
  %6761 = vmatpush1.msra.mxu0 %v6747
  %6762 = vmatprep.subr.mxu0 %v6745
  %6763 = vmatpush1.msra.mxu0 %v6744
  %6764 = vmatprep.subr.mxu0 %v6742
  %6765 = vmatpush1.msra.mxu0 %v6741
  %6766 = vmatprep.subr.mxu0 %v6739
  %6767 = vmatpush1.msra.mxu0 %v6738
  %6768 = vmatprep.subr.mxu0 %v6736
  %6769 = vmatpush1.msra.mxu0 %v6735
  %6770 = vmatprep.subr.mxu0 %v6733
  %6771 = vmatpush1.msra.mxu0 %v6732
  %6772 = vmatprep.subr.mxu0 %v6730
  %6773 = vmatpush1.msra.mxu0 %v6729
  %6774 = vmatprep.subr.mxu0 %v6727
  %6775 = vmatpush1.msra.mxu0 %v6726
  %6776 = vmatprep.subr.mxu0 %v6724
  %6777 = vmatpush1.msra.mxu0 %v6723
  %6778 = vmatprep.subr.mxu0 %v6721
  %6779 = vmatpush1.msra.mxu0 %v6720
  %6780 = vmatprep.subr.mxu0 %v6718
  %6781 = vmatpush1.msra.mxu0 %v6717
  %6782 = vmatprep.subr.mxu0 %v6715
  %6783 = vmatpush1.msra.mxu0 %v6714
  %6784 = vmatprep.subr.mxu0 %v6712
  %6785 = vmatpush1.msra.mxu0 %v6711
  %6786 = vmatprep.subr.mxu0 %v6709
  %6787 = vmatpush1.msra.mxu0 %v6708
  %6788 = vmatprep.subr.mxu0 0.0
  %6789 = vmatpush2.msra.mxu0 0.0
  %6790 = vmatprep.subr.mxu0 0.0
  %6791 = vmatpush2.msra.mxu0 0.0
  %6792 = vmatprep.subr.mxu0 0.0
  %6793 = vmatpush2.msra.mxu0 0.0
  %6794 = vmatprep.subr.mxu0 0.0
  %6795 = vmatpush2.msra.mxu0 0.0
  %6796 = vmatprep.subr.mxu0 0.0
  %6797 = vmatpush2.msra.mxu0 0.0
  %6798 = vmatprep.subr.mxu0 0.0
  %6799 = vmatpush2.msra.mxu0 0.0
  %6800 = vmatprep.subr.mxu0 0.0
  %6801 = vmatpush2.msra.mxu0 0.0
  %6802 = vmatprep.subr.mxu0 0.0
  %6803 = vmatpush2.msra.mxu0 0.0
  %6804 = vmatprep.subr.mxu0 0.0
  %6805 = vmatpush2.msra.mxu0 0.0
  %6806 = vmatprep.subr.mxu0 0.0
  %6807 = vmatpush2.msra.mxu0 0.0
  %6808 = vmatprep.subr.mxu0 0.0
  %6809 = vmatpush2.msra.mxu0 0.0
  %6810 = vmatprep.subr.mxu0 0.0
  %6811 = vmatpush2.msra.mxu0 0.0
  %6812 = vmatprep.subr.mxu0 0.0
  %6813 = vmatpush2.msra.mxu0 0.0
  %6814 = vmatprep.subr.mxu0 0.0
  %6815 = vmatpush2.msra.mxu0 0.0
  %6816 = vmatprep.subr.mxu0 0.0
  %6817 = vmatpush2.msra.mxu0 0.0
  %6818 = vmatprep.subr.mxu0 0.0
  %6819 = vmatpush2.msra.mxu0 0.0
  %6820 = vmatprep.mubr.f32.mxu0 0.0
  %6821 = vmatmul.mubr.f32.gmra.mxu0 %v6476
  %v6822 = vpop.f32.mrf.mxu0
  %v6823 = vadd.f32 0.0, %v6822
  %v6824 = vpop.f32.mrf.mxu0
  %v6825 = vadd.f32 0.0, %v6824
  %6826 = vdwg.mxu0
  %6827 = vmatprep.subr.mxu0 0.0
  %6828 = vmatpush1.msra.mxu0 %v6755
  %6829 = vmatprep.subr.mxu0 0.0
  %6830 = vmatpush1.msra.mxu0 %v6752
  %6831 = vmatprep.subr.mxu0 0.0
  %6832 = vmatpush1.msra.mxu0 %v6749
  %6833 = vmatprep.subr.mxu0 0.0
  %6834 = vmatpush1.msra.mxu0 %v6746
  %6835 = vmatprep.subr.mxu0 0.0
  %6836 = vmatpush1.msra.mxu0 %v6743
  %6837 = vmatprep.subr.mxu0 0.0
  %6838 = vmatpush1.msra.mxu0 %v6740
  %6839 = vmatprep.subr.mxu0 0.0
  %6840 = vmatpush1.msra.mxu0 %v6737
  %6841 = vmatprep.subr.mxu0 0.0
  %6842 = vmatpush1.msra.mxu0 %v6734
  %6843 = vmatprep.subr.mxu0 0.0
  %6844 = vmatpush1.msra.mxu0 %v6731
  %6845 = vmatprep.subr.mxu0 0.0
  %6846 = vmatpush1.msra.mxu0 %v6728
  %6847 = vmatprep.subr.mxu0 0.0
  %6848 = vmatpush1.msra.mxu0 %v6725
  %6849 = vmatprep.subr.mxu0 0.0
  %6850 = vmatpush1.msra.mxu0 %v6722
  %6851 = vmatprep.subr.mxu0 0.0
  %6852 = vmatpush1.msra.mxu0 %v6719
  %6853 = vmatprep.subr.mxu0 0.0
  %6854 = vmatpush1.msra.mxu0 %v6716
  %6855 = vmatprep.subr.mxu0 0.0
  %6856 = vmatpush1.msra.mxu0 %v6713
  %6857 = vmatprep.subr.mxu0 0.0
  %6858 = vmatpush1.msra.mxu0 %v6710
  %6859 = vmatprep.subr.mxu0 0.0
  %6860 = vmatpush2.msra.mxu0 0.0
  %6861 = vmatprep.subr.mxu0 0.0
  %6862 = vmatpush2.msra.mxu0 0.0
  %6863 = vmatprep.subr.mxu0 0.0
  %6864 = vmatpush2.msra.mxu0 0.0
  %6865 = vmatprep.subr.mxu0 0.0
  %6866 = vmatpush2.msra.mxu0 0.0
  %6867 = vmatprep.subr.mxu0 0.0
  %6868 = vmatpush2.msra.mxu0 0.0
  %6869 = vmatprep.subr.mxu0 0.0
  %6870 = vmatpush2.msra.mxu0 0.0
  %6871 = vmatprep.subr.mxu0 0.0
  %6872 = vmatpush2.msra.mxu0 0.0
  %6873 = vmatprep.subr.mxu0 0.0
  %6874 = vmatpush2.msra.mxu0 0.0
  %6875 = vmatprep.subr.mxu0 0.0
  %6876 = vmatpush2.msra.mxu0 0.0
  %6877 = vmatprep.subr.mxu0 0.0
  %6878 = vmatpush2.msra.mxu0 0.0
  %6879 = vmatprep.subr.mxu0 0.0
  %6880 = vmatpush2.msra.mxu0 0.0
  %6881 = vmatprep.subr.mxu0 0.0
  %6882 = vmatpush2.msra.mxu0 0.0
  %6883 = vmatprep.subr.mxu0 0.0
  %6884 = vmatpush2.msra.mxu0 0.0
  %6885 = vmatprep.subr.mxu0 0.0
  %6886 = vmatpush2.msra.mxu0 0.0
  %6887 = vmatprep.subr.mxu0 0.0
  %6888 = vmatpush2.msra.mxu0 0.0
  %6889 = vmatprep.subr.mxu0 0.0
  %6890 = vmatpush2.msra.mxu0 0.0
  %6891 = vmatprep.mubr.f32.mxu0 0.0
  %6892 = vmatmul.mubr.f32.gmra.mxu0 %v6476
  %v6893 = vpop.f32.mrf.mxu0
  %v6894 = vadd.f32 0.0, %v6893
  %v6895 = vpop.f32.mrf.mxu0
  %6896 = vdwg.mxu0
  %v6898 = vrot.slane %v6823, 6
  %v6900 = vadd.f32 %v6702, %v6898
  %v6901 = vxor.u32 %v6900, 2147483648
  %v6902 = vmul.f32 %v6901, 1.442695
  %v6903 = vpow.pop %v6902
  %v6904 = vadd.f32 %v6903, 1.0
  %v6905 = vrcp.pop %v6904
  %v6906 = vmul.f32 1.0, %v6905
  %v6908 = vrot.slane %v6825, 6
  %v6910 = vadd.f32 %v6703, %v6908
  %v6911 = vxor.u32 %v6910, 2147483648
  %v6912 = vmul.f32 %v6911, 1.442695
  %v6913 = vpow.pop %v6912
  %v6914 = vadd.f32 %v6913, 1.0
  %v6915 = vrcp.pop %v6914
  %v6916 = vmul.f32 1.0, %v6915
  %v6917 = vadd.f32 %v6894, %v4658
  %v6919 = vrot.slane %v6917, 6
  %v6921 = vmul.f32 %v6906, %v6919
  %v6922 = vadd.f32 %v6704, %v6921
  %v6923 = vtanh.pop %v6922
  %v6924 = vsub.f32 1.0, %v6916
  %v6925 = vmul.f32 %v6924, %v6923
  %v6927 = vrot.slane %v6476, 6
  %v6929 = vmul.f32 %v6916, %v6927
  %v6930 = vadd.f32 %v6925, %v6929
  %v6931 = vld [vmem:[%s8] sm:$0xff]
  %v6932 = vld [vmem:[%s8 + $0x8] sm:$0xff]
  %v6933 = vld [vmem:[%s8 + $0x10] sm:$0xff]
  %v6934 = vld [vmem:[%s8 + $0x18] sm:$0xff]
  %v6935 = vld [vmem:[%s8 + $0x20] sm:$0xff]
  %v6936 = vld [vmem:[%s8 + $0x28] sm:$0xff]
  %v6937 = vld [vmem:[%s8 + $0x30] sm:$0xff]
  %v6938 = vld [vmem:[%s8 + $0x38] sm:$0xff]
  %v6939 = vld [vmem:[%s8 + $0x40] sm:$0xff]
  %v6940 = vld [vmem:[%s8 + $0x48] sm:$0xff]
  %v6941 = vld [vmem:[%s8 + $0x50] sm:$0xff]
  %v6942 = vld [vmem:[%s8 + $0x58] sm:$0xff]
  %v6943 = vld [vmem:[%s8 + $0x60] sm:$0xff]
  %v6944 = vld [vmem:[%s8 + $0x68] sm:$0xff]
  %v6945 = vld [vmem:[%s8 + $0x70] sm:$0xff]
  %v6946 = vld [vmem:[%s8 + $0x78] sm:$0xff]
  %v6947 = vld [vmem:[%s8 + $0x80] sm:$0xff]
  %v6948 = vld [vmem:[%s8 + $0x88] sm:$0xff]
  %v6949 = vld [vmem:[%s8 + $0x90] sm:$0xff]
  %v6950 = vld [vmem:[%s8 + $0x98] sm:$0xff]
  %v6951 = vld [vmem:[%s8 + $0xa0] sm:$0xff]
  %v6952 = vld [vmem:[%s8 + $0xa8] sm:$0xff]
  %v6953 = vld [vmem:[%s8 + $0xb0] sm:$0xff]
  %v6954 = vld [vmem:[%s8 + $0xb8] sm:$0xff]
  %v6955 = vld [vmem:[%s8 + $0xc0] sm:$0xff]
  %v6956 = vld [vmem:[%s8 + $0xc8] sm:$0xff]
  %v6957 = vld [vmem:[%s8 + $0xd0] sm:$0xff]
  %v6958 = vld [vmem:[%s8 + $0xd8] sm:$0xff]
  %v6959 = vld [vmem:[%s8 + $0xe0] sm:$0xff]
  %v6960 = vld [vmem:[%s8 + $0xe8] sm:$0xff]
  %v6961 = vld [vmem:[%s8 + $0xf0] sm:$0xff]
  %v6962 = vld [vmem:[%s8 + $0xf8] sm:$0xff]
  %v6963 = vld [vmem:[%s8 + $0x100] sm:$0xff]
  %v6964 = vld [vmem:[%s8 + $0x108] sm:$0xff]
  %v6965 = vld [vmem:[%s8 + $0x110] sm:$0xff]
  %v6966 = vld [vmem:[%s8 + $0x118] sm:$0xff]
  %v6967 = vld [vmem:[%s8 + $0x120] sm:$0xff]
  %v6968 = vld [vmem:[%s8 + $0x128] sm:$0xff]
  %v6969 = vld [vmem:[%s8 + $0x130] sm:$0xff]
  %v6970 = vld [vmem:[%s8 + $0x138] sm:$0xff]
  %v6971 = vld [vmem:[%s8 + $0x140] sm:$0xff]
  %v6972 = vld [vmem:[%s8 + $0x148] sm:$0xff]
  %v6973 = vld [vmem:[%s8 + $0x150] sm:$0xff]
  %v6974 = vld [vmem:[%s8 + $0x158] sm:$0xff]
  %v6975 = vld [vmem:[%s8 + $0x160] sm:$0xff]
  %v6976 = vld [vmem:[%s8 + $0x168] sm:$0xff]
  %v6977 = vld [vmem:[%s8 + $0x170] sm:$0xff]
  %v6978 = vld [vmem:[%s8 + $0x178] sm:$0xff]
  %v6980 = vrot.slane %v6699, 6
  %6982 = vmatprep.subr.mxu0 %v6977
  %6983 = vmatpush1.msra.mxu0 %v6976
  %6984 = vmatprep.subr.mxu0 %v6974
  %6985 = vmatpush1.msra.mxu0 %v6973
  %6986 = vmatprep.subr.mxu0 %v6971
  %6987 = vmatpush1.msra.mxu0 %v6970
  %6988 = vmatprep.subr.mxu0 %v6968
  %6989 = vmatpush1.msra.mxu0 %v6967
  %6990 = vmatprep.subr.mxu0 %v6965
  %6991 = vmatpush1.msra.mxu0 %v6964
  %6992 = vmatprep.subr.mxu0 %v6962
  %6993 = vmatpush1.msra.mxu0 %v6961
  %6994 = vmatprep.subr.mxu0 %v6959
  %6995 = vmatpush1.msra.mxu0 %v6958
  %6996 = vmatprep.subr.mxu0 %v6956
  %6997 = vmatpush1.msra.mxu0 %v6955
  %6998 = vmatprep.subr.mxu0 %v6953
  %6999 = vmatpush1.msra.mxu0 %v6952
  %7000 = vmatprep.subr.mxu0 %v6950
  %7001 = vmatpush1.msra.mxu0 %v6949
  %7002 = vmatprep.subr.mxu0 %v6947
  %7003 = vmatpush1.msra.mxu0 %v6946
  %7004 = vmatprep.subr.mxu0 %v6944
  %7005 = vmatpush1.msra.mxu0 %v6943
  %7006 = vmatprep.subr.mxu0 %v6941
  %7007 = vmatpush1.msra.mxu0 %v6940
  %7008 = vmatprep.subr.mxu0 %v6938
  %7009 = vmatpush1.msra.mxu0 %v6937
  %7010 = vmatprep.subr.mxu0 %v6935
  %7011 = vmatpush1.msra.mxu0 %v6934
  %7012 = vmatprep.subr.mxu0 %v6932
  %7013 = vmatpush1.msra.mxu0 %v6931
  %7014 = vmatprep.subr.mxu0 0.0
  %7015 = vmatpush2.msra.mxu0 0.0
  %7016 = vmatprep.subr.mxu0 0.0
  %7017 = vmatpush2.msra.mxu0 0.0
  %7018 = vmatprep.subr.mxu0 0.0
  %7019 = vmatpush2.msra.mxu0 0.0
  %7020 = vmatprep.subr.mxu0 0.0
  %7021 = vmatpush2.msra.mxu0 0.0
  %7022 = vmatprep.subr.mxu0 0.0
  %7023 = vmatpush2.msra.mxu0 0.0
  %7024 = vmatprep.subr.mxu0 0.0
  %7025 = vmatpush2.msra.mxu0 0.0
  %7026 = vmatprep.subr.mxu0 0.0
  %7027 = vmatpush2.msra.mxu0 0.0
  %7028 = vmatprep.subr.mxu0 0.0
  %7029 = vmatpush2.msra.mxu0 0.0
  %7030 = vmatprep.subr.mxu0 0.0
  %7031 = vmatpush2.msra.mxu0 0.0
  %7032 = vmatprep.subr.mxu0 0.0
  %7033 = vmatpush2.msra.mxu0 0.0
  %7034 = vmatprep.subr.mxu0 0.0
  %7035 = vmatpush2.msra.mxu0 0.0
  %7036 = vmatprep.subr.mxu0 0.0
  %7037 = vmatpush2.msra.mxu0 0.0
  %7038 = vmatprep.subr.mxu0 0.0
  %7039 = vmatpush2.msra.mxu0 0.0
  %7040 = vmatprep.subr.mxu0 0.0
  %7041 = vmatpush2.msra.mxu0 0.0
  %7042 = vmatprep.subr.mxu0 0.0
  %7043 = vmatpush2.msra.mxu0 0.0
  %7044 = vmatprep.subr.mxu0 0.0
  %7045 = vmatpush2.msra.mxu0 0.0
  %7046 = vmatprep.mubr.f32.mxu0 0.0
  %7047 = vmatmul.mubr.f32.gmra.mxu0 %v6980
  %v7048 = vpop.f32.mrf.mxu0
  %v7049 = vadd.f32 0.0, %v7048
  %v7050 = vpop.f32.mrf.mxu0
  %v7051 = vadd.f32 0.0, %v7050
  %7052 = vdwg.mxu0
  %7053 = vmatprep.subr.mxu0 0.0
  %7054 = vmatpush1.msra.mxu0 %v6978
  %7055 = vmatprep.subr.mxu0 0.0
  %7056 = vmatpush1.msra.mxu0 %v6975
  %7057 = vmatprep.subr.mxu0 0.0
  %7058 = vmatpush1.msra.mxu0 %v6972
  %7059 = vmatprep.subr.mxu0 0.0
  %7060 = vmatpush1.msra.mxu0 %v6969
  %7061 = vmatprep.subr.mxu0 0.0
  %7062 = vmatpush1.msra.mxu0 %v6966
  %7063 = vmatprep.subr.mxu0 0.0
  %7064 = vmatpush1.msra.mxu0 %v6963
  %7065 = vmatprep.subr.mxu0 0.0
  %7066 = vmatpush1.msra.mxu0 %v6960
  %7067 = vmatprep.subr.mxu0 0.0
  %7068 = vmatpush1.msra.mxu0 %v6957
  %7069 = vmatprep.subr.mxu0 0.0
  %7070 = vmatpush1.msra.mxu0 %v6954
  %7071 = vmatprep.subr.mxu0 0.0
  %7072 = vmatpush1.msra.mxu0 %v6951
  %7073 = vmatprep.subr.mxu0 0.0
  %7074 = vmatpush1.msra.mxu0 %v6948
  %7075 = vmatprep.subr.mxu0 0.0
  %7076 = vmatpush1.msra.mxu0 %v6945
  %7077 = vmatprep.subr.mxu0 0.0
  %7078 = vmatpush1.msra.mxu0 %v6942
  %7079 = vmatprep.subr.mxu0 0.0
  %7080 = vmatpush1.msra.mxu0 %v6939
  %7081 = vmatprep.subr.mxu0 0.0
  %7082 = vmatpush1.msra.mxu0 %v6936
  %7083 = vmatprep.subr.mxu0 0.0
  %7084 = vmatpush1.msra.mxu0 %v6933
  %7085 = vmatprep.subr.mxu0 0.0
  %7086 = vmatpush2.msra.mxu0 0.0
  %7087 = vmatprep.subr.mxu0 0.0
  %7088 = vmatpush2.msra.mxu0 0.0
  %7089 = vmatprep.subr.mxu0 0.0
  %7090 = vmatpush2.msra.mxu0 0.0
  %7091 = vmatprep.subr.mxu0 0.0
  %7092 = vmatpush2.msra.mxu0 0.0
  %7093 = vmatprep.subr.mxu0 0.0
  %7094 = vmatpush2.msra.mxu0 0.0
  %7095 = vmatprep.subr.mxu0 0.0
  %7096 = vmatpush2.msra.mxu0 0.0
  %7097 = vmatprep.subr.mxu0 0.0
  %7098 = vmatpush2.msra.mxu0 0.0
  %7099 = vmatprep.subr.mxu0 0.0
  %7100 = vmatpush2.msra.mxu0 0.0
  %7101 = vmatprep.subr.mxu0 0.0
  %7102 = vmatpush2.msra.mxu0 0.0
  %7103 = vmatprep.subr.mxu0 0.0
  %7104 = vmatpush2.msra.mxu0 0.0
  %7105 = vmatprep.subr.mxu0 0.0
  %7106 = vmatpush2.msra.mxu0 0.0
  %7107 = vmatprep.subr.mxu0 0.0
  %7108 = vmatpush2.msra.mxu0 0.0
  %7109 = vmatprep.subr.mxu0 0.0
  %7110 = vmatpush2.msra.mxu0 0.0
  %7111 = vmatprep.subr.mxu0 0.0
  %7112 = vmatpush2.msra.mxu0 0.0
  %7113 = vmatprep.subr.mxu0 0.0
  %7114 = vmatpush2.msra.mxu0 0.0
  %7115 = vmatprep.subr.mxu0 0.0
  %7116 = vmatpush2.msra.mxu0 0.0
  %7117 = vmatprep.mubr.f32.mxu0 0.0
  %7118 = vmatmul.mubr.f32.gmra.mxu0 %v6980
  %v7119 = vpop.f32.mrf.mxu0
  %v7120 = vadd.f32 0.0, %v7119
  %v7121 = vpop.f32.mrf.mxu0
  %7122 = vdwg.mxu0
  %v7124 = vrot.slane %v7049, 4
  %v7126 = vadd.f32 %v6705, %v7124
  %v7127 = vxor.u32 %v7126, 2147483648
  %v7128 = vmul.f32 %v7127, 1.442695
  %v7129 = vpow.pop %v7128
  %v7130 = vadd.f32 %v7129, 1.0
  %v7131 = vrcp.pop %v7130
  %v7132 = vmul.f32 1.0, %v7131
  %v7134 = vrot.slane %v7051, 4
  %v7136 = vadd.f32 %v6706, %v7134
  %v7137 = vxor.u32 %v7136, 2147483648
  %v7138 = vmul.f32 %v7137, 1.442695
  %v7139 = vpow.pop %v7138
  %v7140 = vadd.f32 %v7139, 1.0
  %v7141 = vrcp.pop %v7140
  %v7142 = vmul.f32 1.0, %v7141
  %v7143 = vadd.f32 %v7120, %v4881
  %v7145 = vrot.slane %v7143, 4
  %v7147 = vmul.f32 %v7132, %v7145
  %v7148 = vadd.f32 %v6707, %v7147
  %v7149 = vtanh.pop %v7148
  %v7150 = vsub.f32 1.0, %v7142
  %v7151 = vmul.f32 %v7150, %v7149
  %v7152 = vrot.slane %v6699, 2
  %v7154 = vmul.f32 %v7142, %v7152
  %v7155 = vadd.f32 %v7151, %v7154
  %7156 = vst [vmem:[#allocation4 + $0x10] sm:$0xc] %v6930
  %7157 = vst [vmem:[#allocation4 + $0x8] sm:$0x30] %v7155
  %v7158 = vld [vmem:[#allocation2 + $0x30] sm:$0x30]
  %v7159 = vld [vmem:[#allocation2 + $0x38] sm:$0x30]
  %v7160 = vld [vmem:[#allocation2 + $0x40] sm:$0x30]
  %v7161 = vld [vmem:[#allocation2 + $0x18] sm:$0xc]
  %v7162 = vld [vmem:[#allocation2 + $0x20] sm:$0xc]
  %v7163 = vld [vmem:[#allocation2 + $0x28] sm:$0xc]
  %v7164 = vld [vmem:[%s7] sm:$0xff]
  %v7165 = vld [vmem:[%s7 + $0x8] sm:$0xff]
  %v7166 = vld [vmem:[%s7 + $0x10] sm:$0xff]
  %v7167 = vld [vmem:[%s7 + $0x18] sm:$0xff]
  %v7168 = vld [vmem:[%s7 + $0x20] sm:$0xff]
  %v7169 = vld [vmem:[%s7 + $0x28] sm:$0xff]
  %v7170 = vld [vmem:[%s7 + $0x30] sm:$0xff]
  %v7171 = vld [vmem:[%s7 + $0x38] sm:$0xff]
  %v7172 = vld [vmem:[%s7 + $0x40] sm:$0xff]
  %v7173 = vld [vmem:[%s7 + $0x48] sm:$0xff]
  %v7174 = vld [vmem:[%s7 + $0x50] sm:$0xff]
  %v7175 = vld [vmem:[%s7 + $0x58] sm:$0xff]
  %v7176 = vld [vmem:[%s7 + $0x60] sm:$0xff]
  %v7177 = vld [vmem:[%s7 + $0x68] sm:$0xff]
  %v7178 = vld [vmem:[%s7 + $0x70] sm:$0xff]
  %v7179 = vld [vmem:[%s7 + $0x78] sm:$0xff]
  %v7180 = vld [vmem:[%s7 + $0x80] sm:$0xff]
  %v7181 = vld [vmem:[%s7 + $0x88] sm:$0xff]
  %v7182 = vld [vmem:[%s7 + $0x90] sm:$0xff]
  %v7183 = vld [vmem:[%s7 + $0x98] sm:$0xff]
  %v7184 = vld [vmem:[%s7 + $0xa0] sm:$0xff]
  %v7185 = vld [vmem:[%s7 + $0xa8] sm:$0xff]
  %v7186 = vld [vmem:[%s7 + $0xb0] sm:$0xff]
  %v7187 = vld [vmem:[%s7 + $0xb8] sm:$0xff]
  %v7188 = vld [vmem:[%s7 + $0xc0] sm:$0xff]
  %v7189 = vld [vmem:[%s7 + $0xc8] sm:$0xff]
  %v7190 = vld [vmem:[%s7 + $0xd0] sm:$0xff]
  %v7191 = vld [vmem:[%s7 + $0xd8] sm:$0xff]
  %v7192 = vld [vmem:[%s7 + $0xe0] sm:$0xff]
  %v7193 = vld [vmem:[%s7 + $0xe8] sm:$0xff]
  %v7194 = vld [vmem:[%s7 + $0xf0] sm:$0xff]
  %v7195 = vld [vmem:[%s7 + $0xf8] sm:$0xff]
  %v7196 = vld [vmem:[%s7 + $0x100] sm:$0xff]
  %v7197 = vld [vmem:[%s7 + $0x108] sm:$0xff]
  %v7198 = vld [vmem:[%s7 + $0x110] sm:$0xff]
  %v7199 = vld [vmem:[%s7 + $0x118] sm:$0xff]
  %v7200 = vld [vmem:[%s7 + $0x120] sm:$0xff]
  %v7201 = vld [vmem:[%s7 + $0x128] sm:$0xff]
  %v7202 = vld [vmem:[%s7 + $0x130] sm:$0xff]
  %v7203 = vld [vmem:[%s7 + $0x138] sm:$0xff]
  %v7204 = vld [vmem:[%s7 + $0x140] sm:$0xff]
  %v7205 = vld [vmem:[%s7 + $0x148] sm:$0xff]
  %v7206 = vld [vmem:[%s7 + $0x150] sm:$0xff]
  %v7207 = vld [vmem:[%s7 + $0x158] sm:$0xff]
  %v7208 = vld [vmem:[%s7 + $0x160] sm:$0xff]
  %v7209 = vld [vmem:[%s7 + $0x168] sm:$0xff]
  %v7210 = vld [vmem:[%s7 + $0x170] sm:$0xff]
  %v7211 = vld [vmem:[%s7 + $0x178] sm:$0xff]
  %v7213 = vrot.slane %v6930, 2
  %7215 = vmatprep.subr.mxu0 %v7210
  %7216 = vmatpush1.msra.mxu0 %v7209
  %7217 = vmatprep.subr.mxu0 %v7207
  %7218 = vmatpush1.msra.mxu0 %v7206
  %7219 = vmatprep.subr.mxu0 %v7204
  %7220 = vmatpush1.msra.mxu0 %v7203
  %7221 = vmatprep.subr.mxu0 %v7201
  %7222 = vmatpush1.msra.mxu0 %v7200
  %7223 = vmatprep.subr.mxu0 %v7198
  %7224 = vmatpush1.msra.mxu0 %v7197
  %7225 = vmatprep.subr.mxu0 %v7195
  %7226 = vmatpush1.msra.mxu0 %v7194
  %7227 = vmatprep.subr.mxu0 %v7192
  %7228 = vmatpush1.msra.mxu0 %v7191
  %7229 = vmatprep.subr.mxu0 %v7189
  %7230 = vmatpush1.msra.mxu0 %v7188
  %7231 = vmatprep.subr.mxu0 %v7186
  %7232 = vmatpush1.msra.mxu0 %v7185
  %7233 = vmatprep.subr.mxu0 %v7183
  %7234 = vmatpush1.msra.mxu0 %v7182
  %7235 = vmatprep.subr.mxu0 %v7180
  %7236 = vmatpush1.msra.mxu0 %v7179
  %7237 = vmatprep.subr.mxu0 %v7177
  %7238 = vmatpush1.msra.mxu0 %v7176
  %7239 = vmatprep.subr.mxu0 %v7174
  %7240 = vmatpush1.msra.mxu0 %v7173
  %7241 = vmatprep.subr.mxu0 %v7171
  %7242 = vmatpush1.msra.mxu0 %v7170
  %7243 = vmatprep.subr.mxu0 %v7168
  %7244 = vmatpush1.msra.mxu0 %v7167
  %7245 = vmatprep.subr.mxu0 %v7165
  %7246 = vmatpush1.msra.mxu0 %v7164
  %7247 = vmatprep.subr.mxu0 0.0
  %7248 = vmatpush2.msra.mxu0 0.0
  %7249 = vmatprep.subr.mxu0 0.0
  %7250 = vmatpush2.msra.mxu0 0.0
  %7251 = vmatprep.subr.mxu0 0.0
  %7252 = vmatpush2.msra.mxu0 0.0
  %7253 = vmatprep.subr.mxu0 0.0
  %7254 = vmatpush2.msra.mxu0 0.0
  %7255 = vmatprep.subr.mxu0 0.0
  %7256 = vmatpush2.msra.mxu0 0.0
  %7257 = vmatprep.subr.mxu0 0.0
  %7258 = vmatpush2.msra.mxu0 0.0
  %7259 = vmatprep.subr.mxu0 0.0
  %7260 = vmatpush2.msra.mxu0 0.0
  %7261 = vmatprep.subr.mxu0 0.0
  %7262 = vmatpush2.msra.mxu0 0.0
  %7263 = vmatprep.subr.mxu0 0.0
  %7264 = vmatpush2.msra.mxu0 0.0
  %7265 = vmatprep.subr.mxu0 0.0
  %7266 = vmatpush2.msra.mxu0 0.0
  %7267 = vmatprep.subr.mxu0 0.0
  %7268 = vmatpush2.msra.mxu0 0.0
  %7269 = vmatprep.subr.mxu0 0.0
  %7270 = vmatpush2.msra.mxu0 0.0
  %7271 = vmatprep.subr.mxu0 0.0
  %7272 = vmatpush2.msra.mxu0 0.0
  %7273 = vmatprep.subr.mxu0 0.0
  %7274 = vmatpush2.msra.mxu0 0.0
  %7275 = vmatprep.subr.mxu0 0.0
  %7276 = vmatpush2.msra.mxu0 0.0
  %7277 = vmatprep.subr.mxu0 0.0
  %7278 = vmatpush2.msra.mxu0 0.0
  %7279 = vmatprep.mubr.f32.mxu0 0.0
  %7280 = vmatmul.mubr.f32.gmra.mxu0 %v7213
  %v7281 = vpop.f32.mrf.mxu0
  %v7282 = vadd.f32 0.0, %v7281
  %v7283 = vpop.f32.mrf.mxu0
  %v7284 = vadd.f32 0.0, %v7283
  %7285 = vdwg.mxu0
  %7286 = vmatprep.subr.mxu0 0.0
  %7287 = vmatpush1.msra.mxu0 %v7211
  %7288 = vmatprep.subr.mxu0 0.0
  %7289 = vmatpush1.msra.mxu0 %v7208
  %7290 = vmatprep.subr.mxu0 0.0
  %7291 = vmatpush1.msra.mxu0 %v7205
  %7292 = vmatprep.subr.mxu0 0.0
  %7293 = vmatpush1.msra.mxu0 %v7202
  %7294 = vmatprep.subr.mxu0 0.0
  %7295 = vmatpush1.msra.mxu0 %v7199
  %7296 = vmatprep.subr.mxu0 0.0
  %7297 = vmatpush1.msra.mxu0 %v7196
  %7298 = vmatprep.subr.mxu0 0.0
  %7299 = vmatpush1.msra.mxu0 %v7193
  %7300 = vmatprep.subr.mxu0 0.0
  %7301 = vmatpush1.msra.mxu0 %v7190
  %7302 = vmatprep.subr.mxu0 0.0
  %7303 = vmatpush1.msra.mxu0 %v7187
  %7304 = vmatprep.subr.mxu0 0.0
  %7305 = vmatpush1.msra.mxu0 %v7184
  %7306 = vmatprep.subr.mxu0 0.0
  %7307 = vmatpush1.msra.mxu0 %v7181
  %7308 = vmatprep.subr.mxu0 0.0
  %7309 = vmatpush1.msra.mxu0 %v7178
  %7310 = vmatprep.subr.mxu0 0.0
  %7311 = vmatpush1.msra.mxu0 %v7175
  %7312 = vmatprep.subr.mxu0 0.0
  %7313 = vmatpush1.msra.mxu0 %v7172
  %7314 = vmatprep.subr.mxu0 0.0
  %7315 = vmatpush1.msra.mxu0 %v7169
  %7316 = vmatprep.subr.mxu0 0.0
  %7317 = vmatpush1.msra.mxu0 %v7166
  %7318 = vmatprep.subr.mxu0 0.0
  %7319 = vmatpush2.msra.mxu0 0.0
  %7320 = vmatprep.subr.mxu0 0.0
  %7321 = vmatpush2.msra.mxu0 0.0
  %7322 = vmatprep.subr.mxu0 0.0
  %7323 = vmatpush2.msra.mxu0 0.0
  %7324 = vmatprep.subr.mxu0 0.0
  %7325 = vmatpush2.msra.mxu0 0.0
  %7326 = vmatprep.subr.mxu0 0.0
  %7327 = vmatpush2.msra.mxu0 0.0
  %7328 = vmatprep.subr.mxu0 0.0
  %7329 = vmatpush2.msra.mxu0 0.0
  %7330 = vmatprep.subr.mxu0 0.0
  %7331 = vmatpush2.msra.mxu0 0.0
  %7332 = vmatprep.subr.mxu0 0.0
  %7333 = vmatpush2.msra.mxu0 0.0
  %7334 = vmatprep.subr.mxu0 0.0
  %7335 = vmatpush2.msra.mxu0 0.0
  %7336 = vmatprep.subr.mxu0 0.0
  %7337 = vmatpush2.msra.mxu0 0.0
  %7338 = vmatprep.subr.mxu0 0.0
  %7339 = vmatpush2.msra.mxu0 0.0
  %7340 = vmatprep.subr.mxu0 0.0
  %7341 = vmatpush2.msra.mxu0 0.0
  %7342 = vmatprep.subr.mxu0 0.0
  %7343 = vmatpush2.msra.mxu0 0.0
  %7344 = vmatprep.subr.mxu0 0.0
  %7345 = vmatpush2.msra.mxu0 0.0
  %7346 = vmatprep.subr.mxu0 0.0
  %7347 = vmatpush2.msra.mxu0 0.0
  %7348 = vmatprep.subr.mxu0 0.0
  %7349 = vmatpush2.msra.mxu0 0.0
  %7350 = vmatprep.mubr.f32.mxu0 0.0
  %7351 = vmatmul.mubr.f32.gmra.mxu0 %v7213
  %v7352 = vpop.f32.mrf.mxu0
  %v7353 = vadd.f32 0.0, %v7352
  %v7354 = vpop.f32.mrf.mxu0
  %7355 = vdwg.mxu0
  %v7357 = vrot.slane %v7282, 4
  %v7359 = vadd.f32 %v7158, %v7357
  %v7360 = vxor.u32 %v7359, 2147483648
  %v7361 = vmul.f32 %v7360, 1.442695
  %v7362 = vpow.pop %v7361
  %v7363 = vadd.f32 %v7362, 1.0
  %v7364 = vrcp.pop %v7363
  %v7365 = vmul.f32 1.0, %v7364
  %v7367 = vrot.slane %v7284, 4
  %v7369 = vadd.f32 %v7159, %v7367
  %v7370 = vxor.u32 %v7369, 2147483648
  %v7371 = vmul.f32 %v7370, 1.442695
  %v7372 = vpow.pop %v7371
  %v7373 = vadd.f32 %v7372, 1.0
  %v7374 = vrcp.pop %v7373
  %v7375 = vmul.f32 1.0, %v7374
  %v7376 = vadd.f32 %v7353, %v4658
  %v7378 = vrot.slane %v7376, 4
  %v7380 = vmul.f32 %v7365, %v7378
  %v7381 = vadd.f32 %v7160, %v7380
  %v7382 = vtanh.pop %v7381
  %v7383 = vsub.f32 1.0, %v7375
  %v7384 = vmul.f32 %v7383, %v7382
  %v7385 = vrot.slane %v6930, 6
  %v7387 = vmul.f32 %v7375, %v7385
  %v7388 = vadd.f32 %v7384, %v7387
  %v7389 = vld [vmem:[%s8] sm:$0xff]
  %v7390 = vld [vmem:[%s8 + $0x8] sm:$0xff]
  %v7391 = vld [vmem:[%s8 + $0x10] sm:$0xff]
  %v7392 = vld [vmem:[%s8 + $0x18] sm:$0xff]
  %v7393 = vld [vmem:[%s8 + $0x20] sm:$0xff]
  %v7394 = vld [vmem:[%s8 + $0x28] sm:$0xff]
  %v7395 = vld [vmem:[%s8 + $0x30] sm:$0xff]
  %v7396 = vld [vmem:[%s8 + $0x38] sm:$0xff]
  %v7397 = vld [vmem:[%s8 + $0x40] sm:$0xff]
  %v7398 = vld [vmem:[%s8 + $0x48] sm:$0xff]
  %v7399 = vld [vmem:[%s8 + $0x50] sm:$0xff]
  %v7400 = vld [vmem:[%s8 + $0x58] sm:$0xff]
  %v7401 = vld [vmem:[%s8 + $0x60] sm:$0xff]
  %v7402 = vld [vmem:[%s8 + $0x68] sm:$0xff]
  %v7403 = vld [vmem:[%s8 + $0x70] sm:$0xff]
  %v7404 = vld [vmem:[%s8 + $0x78] sm:$0xff]
  %v7405 = vld [vmem:[%s8 + $0x80] sm:$0xff]
  %v7406 = vld [vmem:[%s8 + $0x88] sm:$0xff]
  %v7407 = vld [vmem:[%s8 + $0x90] sm:$0xff]
  %v7408 = vld [vmem:[%s8 + $0x98] sm:$0xff]
  %v7409 = vld [vmem:[%s8 + $0xa0] sm:$0xff]
  %v7410 = vld [vmem:[%s8 + $0xa8] sm:$0xff]
  %v7411 = vld [vmem:[%s8 + $0xb0] sm:$0xff]
  %v7412 = vld [vmem:[%s8 + $0xb8] sm:$0xff]
  %v7413 = vld [vmem:[%s8 + $0xc0] sm:$0xff]
  %v7414 = vld [vmem:[%s8 + $0xc8] sm:$0xff]
  %v7415 = vld [vmem:[%s8 + $0xd0] sm:$0xff]
  %v7416 = vld [vmem:[%s8 + $0xd8] sm:$0xff]
  %v7417 = vld [vmem:[%s8 + $0xe0] sm:$0xff]
  %v7418 = vld [vmem:[%s8 + $0xe8] sm:$0xff]
  %v7419 = vld [vmem:[%s8 + $0xf0] sm:$0xff]
  %v7420 = vld [vmem:[%s8 + $0xf8] sm:$0xff]
  %v7421 = vld [vmem:[%s8 + $0x100] sm:$0xff]
  %v7422 = vld [vmem:[%s8 + $0x108] sm:$0xff]
  %v7423 = vld [vmem:[%s8 + $0x110] sm:$0xff]
  %v7424 = vld [vmem:[%s8 + $0x118] sm:$0xff]
  %v7425 = vld [vmem:[%s8 + $0x120] sm:$0xff]
  %v7426 = vld [vmem:[%s8 + $0x128] sm:$0xff]
  %v7427 = vld [vmem:[%s8 + $0x130] sm:$0xff]
  %v7428 = vld [vmem:[%s8 + $0x138] sm:$0xff]
  %v7429 = vld [vmem:[%s8 + $0x140] sm:$0xff]
  %v7430 = vld [vmem:[%s8 + $0x148] sm:$0xff]
  %v7431 = vld [vmem:[%s8 + $0x150] sm:$0xff]
  %v7432 = vld [vmem:[%s8 + $0x158] sm:$0xff]
  %v7433 = vld [vmem:[%s8 + $0x160] sm:$0xff]
  %v7434 = vld [vmem:[%s8 + $0x168] sm:$0xff]
  %v7435 = vld [vmem:[%s8 + $0x170] sm:$0xff]
  %v7436 = vld [vmem:[%s8 + $0x178] sm:$0xff]
  %v7438 = vrot.slane %v7155, 4
  %7440 = vmatprep.subr.mxu0 %v7435
  %7441 = vmatpush1.msra.mxu0 %v7434
  %7442 = vmatprep.subr.mxu0 %v7432
  %7443 = vmatpush1.msra.mxu0 %v7431
  %7444 = vmatprep.subr.mxu0 %v7429
  %7445 = vmatpush1.msra.mxu0 %v7428
  %7446 = vmatprep.subr.mxu0 %v7426
  %7447 = vmatpush1.msra.mxu0 %v7425
  %7448 = vmatprep.subr.mxu0 %v7423
  %7449 = vmatpush1.msra.mxu0 %v7422
  %7450 = vmatprep.subr.mxu0 %v7420
  %7451 = vmatpush1.msra.mxu0 %v7419
  %7452 = vmatprep.subr.mxu0 %v7417
  %7453 = vmatpush1.msra.mxu0 %v7416
  %7454 = vmatprep.subr.mxu0 %v7414
  %7455 = vmatpush1.msra.mxu0 %v7413
  %7456 = vmatprep.subr.mxu0 %v7411
  %7457 = vmatpush1.msra.mxu0 %v7410
  %7458 = vmatprep.subr.mxu0 %v7408
  %7459 = vmatpush1.msra.mxu0 %v7407
  %7460 = vmatprep.subr.mxu0 %v7405
  %7461 = vmatpush1.msra.mxu0 %v7404
  %7462 = vmatprep.subr.mxu0 %v7402
  %7463 = vmatpush1.msra.mxu0 %v7401
  %7464 = vmatprep.subr.mxu0 %v7399
  %7465 = vmatpush1.msra.mxu0 %v7398
  %7466 = vmatprep.subr.mxu0 %v7396
  %7467 = vmatpush1.msra.mxu0 %v7395
  %7468 = vmatprep.subr.mxu0 %v7393
  %7469 = vmatpush1.msra.mxu0 %v7392
  %7470 = vmatprep.subr.mxu0 %v7390
  %7471 = vmatpush1.msra.mxu0 %v7389
  %7472 = vmatprep.subr.mxu0 0.0
  %7473 = vmatpush2.msra.mxu0 0.0
  %7474 = vmatprep.subr.mxu0 0.0
  %7475 = vmatpush2.msra.mxu0 0.0
  %7476 = vmatprep.subr.mxu0 0.0
  %7477 = vmatpush2.msra.mxu0 0.0
  %7478 = vmatprep.subr.mxu0 0.0
  %7479 = vmatpush2.msra.mxu0 0.0
  %7480 = vmatprep.subr.mxu0 0.0
  %7481 = vmatpush2.msra.mxu0 0.0
  %7482 = vmatprep.subr.mxu0 0.0
  %7483 = vmatpush2.msra.mxu0 0.0
  %7484 = vmatprep.subr.mxu0 0.0
  %7485 = vmatpush2.msra.mxu0 0.0
  %7486 = vmatprep.subr.mxu0 0.0
  %7487 = vmatpush2.msra.mxu0 0.0
  %7488 = vmatprep.subr.mxu0 0.0
  %7489 = vmatpush2.msra.mxu0 0.0
  %7490 = vmatprep.subr.mxu0 0.0
  %7491 = vmatpush2.msra.mxu0 0.0
  %7492 = vmatprep.subr.mxu0 0.0
  %7493 = vmatpush2.msra.mxu0 0.0
  %7494 = vmatprep.subr.mxu0 0.0
  %7495 = vmatpush2.msra.mxu0 0.0
  %7496 = vmatprep.subr.mxu0 0.0
  %7497 = vmatpush2.msra.mxu0 0.0
  %7498 = vmatprep.subr.mxu0 0.0
  %7499 = vmatpush2.msra.mxu0 0.0
  %7500 = vmatprep.subr.mxu0 0.0
  %7501 = vmatpush2.msra.mxu0 0.0
  %7502 = vmatprep.subr.mxu0 0.0
  %7503 = vmatpush2.msra.mxu0 0.0
  %7504 = vmatprep.mubr.f32.mxu0 0.0
  %7505 = vmatmul.mubr.f32.gmra.mxu0 %v7438
  %v7506 = vpop.f32.mrf.mxu0
  %v7507 = vadd.f32 0.0, %v7506
  %v7508 = vpop.f32.mrf.mxu0
  %v7509 = vadd.f32 0.0, %v7508
  %7510 = vdwg.mxu0
  %7511 = vmatprep.subr.mxu0 0.0
  %7512 = vmatpush1.msra.mxu0 %v7436
  %7513 = vmatprep.subr.mxu0 0.0
  %7514 = vmatpush1.msra.mxu0 %v7433
  %7515 = vmatprep.subr.mxu0 0.0
  %7516 = vmatpush1.msra.mxu0 %v7430
  %7517 = vmatprep.subr.mxu0 0.0
  %7518 = vmatpush1.msra.mxu0 %v7427
  %7519 = vmatprep.subr.mxu0 0.0
  %7520 = vmatpush1.msra.mxu0 %v7424
  %7521 = vmatprep.subr.mxu0 0.0
  %7522 = vmatpush1.msra.mxu0 %v7421
  %7523 = vmatprep.subr.mxu0 0.0
  %7524 = vmatpush1.msra.mxu0 %v7418
  %7525 = vmatprep.subr.mxu0 0.0
  %7526 = vmatpush1.msra.mxu0 %v7415
  %7527 = vmatprep.subr.mxu0 0.0
  %7528 = vmatpush1.msra.mxu0 %v7412
  %7529 = vmatprep.subr.mxu0 0.0
  %7530 = vmatpush1.msra.mxu0 %v7409
  %7531 = vmatprep.subr.mxu0 0.0
  %7532 = vmatpush1.msra.mxu0 %v7406
  %7533 = vmatprep.subr.mxu0 0.0
  %7534 = vmatpush1.msra.mxu0 %v7403
  %7535 = vmatprep.subr.mxu0 0.0
  %7536 = vmatpush1.msra.mxu0 %v7400
  %7537 = vmatprep.subr.mxu0 0.0
  %7538 = vmatpush1.msra.mxu0 %v7397
  %7539 = vmatprep.subr.mxu0 0.0
  %7540 = vmatpush1.msra.mxu0 %v7394
  %7541 = vmatprep.subr.mxu0 0.0
  %7542 = vmatpush1.msra.mxu0 %v7391
  %7543 = vmatprep.subr.mxu0 0.0
  %7544 = vmatpush2.msra.mxu0 0.0
  %7545 = vmatprep.subr.mxu0 0.0
  %7546 = vmatpush2.msra.mxu0 0.0
  %7547 = vmatprep.subr.mxu0 0.0
  %7548 = vmatpush2.msra.mxu0 0.0
  %7549 = vmatprep.subr.mxu0 0.0
  %7550 = vmatpush2.msra.mxu0 0.0
  %7551 = vmatprep.subr.mxu0 0.0
  %7552 = vmatpush2.msra.mxu0 0.0
  %7553 = vmatprep.subr.mxu0 0.0
  %7554 = vmatpush2.msra.mxu0 0.0
  %7555 = vmatprep.subr.mxu0 0.0
  %7556 = vmatpush2.msra.mxu0 0.0
  %7557 = vmatprep.subr.mxu0 0.0
  %7558 = vmatpush2.msra.mxu0 0.0
  %7559 = vmatprep.subr.mxu0 0.0
  %7560 = vmatpush2.msra.mxu0 0.0
  %7561 = vmatprep.subr.mxu0 0.0
  %7562 = vmatpush2.msra.mxu0 0.0
  %7563 = vmatprep.subr.mxu0 0.0
  %7564 = vmatpush2.msra.mxu0 0.0
  %7565 = vmatprep.subr.mxu0 0.0
  %7566 = vmatpush2.msra.mxu0 0.0
  %7567 = vmatprep.subr.mxu0 0.0
  %7568 = vmatpush2.msra.mxu0 0.0
  %7569 = vmatprep.subr.mxu0 0.0
  %7570 = vmatpush2.msra.mxu0 0.0
  %7571 = vmatprep.subr.mxu0 0.0
  %7572 = vmatpush2.msra.mxu0 0.0
  %7573 = vmatprep.subr.mxu0 0.0
  %7574 = vmatpush2.msra.mxu0 0.0
  %7575 = vmatprep.mubr.f32.mxu0 0.0
  %7576 = vmatmul.mubr.f32.gmra.mxu0 %v7438
  %v7577 = vpop.f32.mrf.mxu0
  %v7578 = vadd.f32 0.0, %v7577
  %v7579 = vpop.f32.mrf.mxu0
  %7580 = vdwg.mxu0
  %v7582 = vrot.slane %v7507, 6
  %v7584 = vadd.f32 %v7161, %v7582
  %v7585 = vxor.u32 %v7584, 2147483648
  %v7586 = vmul.f32 %v7585, 1.442695
  %v7587 = vpow.pop %v7586
  %v7588 = vadd.f32 %v7587, 1.0
  %v7589 = vrcp.pop %v7588
  %v7590 = vmul.f32 1.0, %v7589
  %v7592 = vrot.slane %v7509, 6
  %v7594 = vadd.f32 %v7162, %v7592
  %v7595 = vxor.u32 %v7594, 2147483648
  %v7596 = vmul.f32 %v7595, 1.442695
  %v7597 = vpow.pop %v7596
  %v7598 = vadd.f32 %v7597, 1.0
  %v7599 = vrcp.pop %v7598
  %v7600 = vmul.f32 1.0, %v7599
  %v7601 = vadd.f32 %v7578, %v4881
  %v7603 = vrot.slane %v7601, 6
  %v7605 = vmul.f32 %v7590, %v7603
  %v7606 = vadd.f32 %v7163, %v7605
  %v7607 = vtanh.pop %v7606
  %v7608 = vsub.f32 1.0, %v7600
  %v7609 = vmul.f32 %v7608, %v7607
  %v7610 = vrot.slane %v7155, 2
  %v7612 = vmul.f32 %v7600, %v7610
  %v7613 = vadd.f32 %v7609, %v7612
  %7614 = vst [vmem:[#allocation4 + $0x10] sm:$0x30] %v7388
  %7615 = vst [vmem:[#allocation4 + $0x8] sm:$0xc] %v7613
  %v7616 = vld [vmem:[#allocation2 + $0x30] sm:$0xc0]
  %v7617 = vld [vmem:[#allocation2 + $0x38] sm:$0xc0]
  %v7618 = vld [vmem:[#allocation2 + $0x40] sm:$0xc0]
  %v7619 = vld [vmem:[#allocation2 + $0x18] sm:$0x3]
  %v7620 = vld [vmem:[#allocation2 + $0x20] sm:$0x3]
  %v7621 = vld [vmem:[#allocation2 + $0x28] sm:$0x3]
  %v7622 = vld [vmem:[%s7] sm:$0xff]
  %v7623 = vld [vmem:[%s7 + $0x8] sm:$0xff]
  %v7624 = vld [vmem:[%s7 + $0x10] sm:$0xff]
  %v7625 = vld [vmem:[%s7 + $0x18] sm:$0xff]
  %v7626 = vld [vmem:[%s7 + $0x20] sm:$0xff]
  %v7627 = vld [vmem:[%s7 + $0x28] sm:$0xff]
  %v7628 = vld [vmem:[%s7 + $0x30] sm:$0xff]
  %v7629 = vld [vmem:[%s7 + $0x38] sm:$0xff]
  %v7630 = vld [vmem:[%s7 + $0x40] sm:$0xff]
  %v7631 = vld [vmem:[%s7 + $0x48] sm:$0xff]
  %v7632 = vld [vmem:[%s7 + $0x50] sm:$0xff]
  %v7633 = vld [vmem:[%s7 + $0x58] sm:$0xff]
  %v7634 = vld [vmem:[%s7 + $0x60] sm:$0xff]
  %v7635 = vld [vmem:[%s7 + $0x68] sm:$0xff]
  %v7636 = vld [vmem:[%s7 + $0x70] sm:$0xff]
  %v7637 = vld [vmem:[%s7 + $0x78] sm:$0xff]
  %v7638 = vld [vmem:[%s7 + $0x80] sm:$0xff]
  %v7639 = vld [vmem:[%s7 + $0x88] sm:$0xff]
  %v7640 = vld [vmem:[%s7 + $0x90] sm:$0xff]
  %v7641 = vld [vmem:[%s7 + $0x98] sm:$0xff]
  %v7642 = vld [vmem:[%s7 + $0xa0] sm:$0xff]
  %v7643 = vld [vmem:[%s7 + $0xa8] sm:$0xff]
  %v7644 = vld [vmem:[%s7 + $0xb0] sm:$0xff]
  %v7645 = vld [vmem:[%s7 + $0xb8] sm:$0xff]
  %v7646 = vld [vmem:[%s7 + $0xc0] sm:$0xff]
  %v7647 = vld [vmem:[%s7 + $0xc8] sm:$0xff]
  %v7648 = vld [vmem:[%s7 + $0xd0] sm:$0xff]
  %v7649 = vld [vmem:[%s7 + $0xd8] sm:$0xff]
  %v7650 = vld [vmem:[%s7 + $0xe0] sm:$0xff]
  %v7651 = vld [vmem:[%s7 + $0xe8] sm:$0xff]
  %v7652 = vld [vmem:[%s7 + $0xf0] sm:$0xff]
  %v7653 = vld [vmem:[%s7 + $0xf8] sm:$0xff]
  %v7654 = vld [vmem:[%s7 + $0x100] sm:$0xff]
  %v7655 = vld [vmem:[%s7 + $0x108] sm:$0xff]
  %v7656 = vld [vmem:[%s7 + $0x110] sm:$0xff]
  %v7657 = vld [vmem:[%s7 + $0x118] sm:$0xff]
  %v7658 = vld [vmem:[%s7 + $0x120] sm:$0xff]
  %v7659 = vld [vmem:[%s7 + $0x128] sm:$0xff]
  %v7660 = vld [vmem:[%s7 + $0x130] sm:$0xff]
  %v7661 = vld [vmem:[%s7 + $0x138] sm:$0xff]
  %v7662 = vld [vmem:[%s7 + $0x140] sm:$0xff]
  %v7663 = vld [vmem:[%s7 + $0x148] sm:$0xff]
  %v7664 = vld [vmem:[%s7 + $0x150] sm:$0xff]
  %v7665 = vld [vmem:[%s7 + $0x158] sm:$0xff]
  %v7666 = vld [vmem:[%s7 + $0x160] sm:$0xff]
  %v7667 = vld [vmem:[%s7 + $0x168] sm:$0xff]
  %v7668 = vld [vmem:[%s7 + $0x170] sm:$0xff]
  %v7669 = vld [vmem:[%s7 + $0x178] sm:$0xff]
  %v7671 = vrot.slane %v7388, 4
  %7673 = vmatprep.subr.mxu0 %v7668
  %7674 = vmatpush1.msra.mxu0 %v7667
  %7675 = vmatprep.subr.mxu0 %v7665
  %7676 = vmatpush1.msra.mxu0 %v7664
  %7677 = vmatprep.subr.mxu0 %v7662
  %7678 = vmatpush1.msra.mxu0 %v7661
  %7679 = vmatprep.subr.mxu0 %v7659
  %7680 = vmatpush1.msra.mxu0 %v7658
  %7681 = vmatprep.subr.mxu0 %v7656
  %7682 = vmatpush1.msra.mxu0 %v7655
  %7683 = vmatprep.subr.mxu0 %v7653
  %7684 = vmatpush1.msra.mxu0 %v7652
  %7685 = vmatprep.subr.mxu0 %v7650
  %7686 = vmatpush1.msra.mxu0 %v7649
  %7687 = vmatprep.subr.mxu0 %v7647
  %7688 = vmatpush1.msra.mxu0 %v7646
  %7689 = vmatprep.subr.mxu0 %v7644
  %7690 = vmatpush1.msra.mxu0 %v7643
  %7691 = vmatprep.subr.mxu0 %v7641
  %7692 = vmatpush1.msra.mxu0 %v7640
  %7693 = vmatprep.subr.mxu0 %v7638
  %7694 = vmatpush1.msra.mxu0 %v7637
  %7695 = vmatprep.subr.mxu0 %v7635
  %7696 = vmatpush1.msra.mxu0 %v7634
  %7697 = vmatprep.subr.mxu0 %v7632
  %7698 = vmatpush1.msra.mxu0 %v7631
  %7699 = vmatprep.subr.mxu0 %v7629
  %7700 = vmatpush1.msra.mxu0 %v7628
  %7701 = vmatprep.subr.mxu0 %v7626
  %7702 = vmatpush1.msra.mxu0 %v7625
  %7703 = vmatprep.subr.mxu0 %v7623
  %7704 = vmatpush1.msra.mxu0 %v7622
  %7705 = vmatprep.subr.mxu0 0.0
  %7706 = vmatpush2.msra.mxu0 0.0
  %7707 = vmatprep.subr.mxu0 0.0
  %7708 = vmatpush2.msra.mxu0 0.0
  %7709 = vmatprep.subr.mxu0 0.0
  %7710 = vmatpush2.msra.mxu0 0.0
  %7711 = vmatprep.subr.mxu0 0.0
  %7712 = vmatpush2.msra.mxu0 0.0
  %7713 = vmatprep.subr.mxu0 0.0
  %7714 = vmatpush2.msra.mxu0 0.0
  %7715 = vmatprep.subr.mxu0 0.0
  %7716 = vmatpush2.msra.mxu0 0.0
  %7717 = vmatprep.subr.mxu0 0.0
  %7718 = vmatpush2.msra.mxu0 0.0
  %7719 = vmatprep.subr.mxu0 0.0
  %7720 = vmatpush2.msra.mxu0 0.0
  %7721 = vmatprep.subr.mxu0 0.0
  %7722 = vmatpush2.msra.mxu0 0.0
  %7723 = vmatprep.subr.mxu0 0.0
  %7724 = vmatpush2.msra.mxu0 0.0
  %7725 = vmatprep.subr.mxu0 0.0
  %7726 = vmatpush2.msra.mxu0 0.0
  %7727 = vmatprep.subr.mxu0 0.0
  %7728 = vmatpush2.msra.mxu0 0.0
  %7729 = vmatprep.subr.mxu0 0.0
  %7730 = vmatpush2.msra.mxu0 0.0
  %7731 = vmatprep.subr.mxu0 0.0
  %7732 = vmatpush2.msra.mxu0 0.0
  %7733 = vmatprep.subr.mxu0 0.0
  %7734 = vmatpush2.msra.mxu0 0.0
  %7735 = vmatprep.subr.mxu0 0.0
  %7736 = vmatpush2.msra.mxu0 0.0
  %7737 = vmatprep.mubr.f32.mxu0 0.0
  %7738 = vmatmul.mubr.f32.gmra.mxu0 %v7671
  %v7739 = vpop.f32.mrf.mxu0
  %v7740 = vadd.f32 0.0, %v7739
  %v7741 = vpop.f32.mrf.mxu0
  %v7742 = vadd.f32 0.0, %v7741
  %7743 = vdwg.mxu0
  %7744 = vmatprep.subr.mxu0 0.0
  %7745 = vmatpush1.msra.mxu0 %v7669
  %7746 = vmatprep.subr.mxu0 0.0
  %7747 = vmatpush1.msra.mxu0 %v7666
  %7748 = vmatprep.subr.mxu0 0.0
  %7749 = vmatpush1.msra.mxu0 %v7663
  %7750 = vmatprep.subr.mxu0 0.0
  %7751 = vmatpush1.msra.mxu0 %v7660
  %7752 = vmatprep.subr.mxu0 0.0
  %7753 = vmatpush1.msra.mxu0 %v7657
  %7754 = vmatprep.subr.mxu0 0.0
  %7755 = vmatpush1.msra.mxu0 %v7654
  %7756 = vmatprep.subr.mxu0 0.0
  %7757 = vmatpush1.msra.mxu0 %v7651
  %7758 = vmatprep.subr.mxu0 0.0
  %7759 = vmatpush1.msra.mxu0 %v7648
  %7760 = vmatprep.subr.mxu0 0.0
  %7761 = vmatpush1.msra.mxu0 %v7645
  %7762 = vmatprep.subr.mxu0 0.0
  %7763 = vmatpush1.msra.mxu0 %v7642
  %7764 = vmatprep.subr.mxu0 0.0
  %7765 = vmatpush1.msra.mxu0 %v7639
  %7766 = vmatprep.subr.mxu0 0.0
  %7767 = vmatpush1.msra.mxu0 %v7636
  %7768 = vmatprep.subr.mxu0 0.0
  %7769 = vmatpush1.msra.mxu0 %v7633
  %7770 = vmatprep.subr.mxu0 0.0
  %7771 = vmatpush1.msra.mxu0 %v7630
  %7772 = vmatprep.subr.mxu0 0.0
  %7773 = vmatpush1.msra.mxu0 %v7627
  %7774 = vmatprep.subr.mxu0 0.0
  %7775 = vmatpush1.msra.mxu0 %v7624
  %7776 = vmatprep.subr.mxu0 0.0
  %7777 = vmatpush2.msra.mxu0 0.0
  %7778 = vmatprep.subr.mxu0 0.0
  %7779 = vmatpush2.msra.mxu0 0.0
  %7780 = vmatprep.subr.mxu0 0.0
  %7781 = vmatpush2.msra.mxu0 0.0
  %7782 = vmatprep.subr.mxu0 0.0
  %7783 = vmatpush2.msra.mxu0 0.0
  %7784 = vmatprep.subr.mxu0 0.0
  %7785 = vmatpush2.msra.mxu0 0.0
  %7786 = vmatprep.subr.mxu0 0.0
  %7787 = vmatpush2.msra.mxu0 0.0
  %7788 = vmatprep.subr.mxu0 0.0
  %7789 = vmatpush2.msra.mxu0 0.0
  %7790 = vmatprep.subr.mxu0 0.0
  %7791 = vmatpush2.msra.mxu0 0.0
  %7792 = vmatprep.subr.mxu0 0.0
  %7793 = vmatpush2.msra.mxu0 0.0
  %7794 = vmatprep.subr.mxu0 0.0
  %7795 = vmatpush2.msra.mxu0 0.0
  %7796 = vmatprep.subr.mxu0 0.0
  %7797 = vmatpush2.msra.mxu0 0.0
  %7798 = vmatprep.subr.mxu0 0.0
  %7799 = vmatpush2.msra.mxu0 0.0
  %7800 = vmatprep.subr.mxu0 0.0
  %7801 = vmatpush2.msra.mxu0 0.0
  %7802 = vmatprep.subr.mxu0 0.0
  %7803 = vmatpush2.msra.mxu0 0.0
  %7804 = vmatprep.subr.mxu0 0.0
  %7805 = vmatpush2.msra.mxu0 0.0
  %7806 = vmatprep.subr.mxu0 0.0
  %7807 = vmatpush2.msra.mxu0 0.0
  %7808 = vmatprep.mubr.f32.mxu0 0.0
  %7809 = vmatmul.mubr.f32.gmra.mxu0 %v7671
  %v7810 = vpop.f32.mrf.mxu0
  %v7811 = vadd.f32 0.0, %v7810
  %v7812 = vpop.f32.mrf.mxu0
  %7813 = vdwg.mxu0
  %v7815 = vrot.slane %v7740, 2
  %v7817 = vadd.f32 %v7616, %v7815
  %v7818 = vxor.u32 %v7817, 2147483648
  %v7819 = vmul.f32 %v7818, 1.442695
  %v7820 = vpow.pop %v7819
  %v7821 = vadd.f32 %v7820, 1.0
  %v7822 = vrcp.pop %v7821
  %v7823 = vmul.f32 1.0, %v7822
  %v7825 = vrot.slane %v7742, 2
  %v7827 = vadd.f32 %v7617, %v7825
  %v7828 = vxor.u32 %v7827, 2147483648
  %v7829 = vmul.f32 %v7828, 1.442695
  %v7830 = vpow.pop %v7829
  %v7831 = vadd.f32 %v7830, 1.0
  %v7832 = vrcp.pop %v7831
  %v7833 = vmul.f32 1.0, %v7832
  %v7834 = vadd.f32 %v7811, %v4658
  %v7836 = vrot.slane %v7834, 2
  %v7838 = vmul.f32 %v7823, %v7836
  %v7839 = vadd.f32 %v7618, %v7838
  %v7840 = vtanh.pop %v7839
  %v7841 = vsub.f32 1.0, %v7833
  %v7842 = vmul.f32 %v7841, %v7840
  %v7843 = vrot.slane %v7388, 6
  %v7845 = vmul.f32 %v7833, %v7843
  %v7846 = vadd.f32 %v7842, %v7845
  %v7847 = vld [vmem:[%s8] sm:$0xff]
  %v7848 = vld [vmem:[%s8 + $0x8] sm:$0xff]
  %v7849 = vld [vmem:[%s8 + $0x10] sm:$0xff]
  %v7850 = vld [vmem:[%s8 + $0x18] sm:$0xff]
  %v7851 = vld [vmem:[%s8 + $0x20] sm:$0xff]
  %v7852 = vld [vmem:[%s8 + $0x28] sm:$0xff]
  %v7853 = vld [vmem:[%s8 + $0x30] sm:$0xff]
  %v7854 = vld [vmem:[%s8 + $0x38] sm:$0xff]
  %v7855 = vld [vmem:[%s8 + $0x40] sm:$0xff]
  %v7856 = vld [vmem:[%s8 + $0x48] sm:$0xff]
  %v7857 = vld [vmem:[%s8 + $0x50] sm:$0xff]
  %v7858 = vld [vmem:[%s8 + $0x58] sm:$0xff]
  %v7859 = vld [vmem:[%s8 + $0x60] sm:$0xff]
  %v7860 = vld [vmem:[%s8 + $0x68] sm:$0xff]
  %v7861 = vld [vmem:[%s8 + $0x70] sm:$0xff]
  %v7862 = vld [vmem:[%s8 + $0x78] sm:$0xff]
  %v7863 = vld [vmem:[%s8 + $0x80] sm:$0xff]
  %v7864 = vld [vmem:[%s8 + $0x88] sm:$0xff]
  %v7865 = vld [vmem:[%s8 + $0x90] sm:$0xff]
  %v7866 = vld [vmem:[%s8 + $0x98] sm:$0xff]
  %v7867 = vld [vmem:[%s8 + $0xa0] sm:$0xff]
  %v7868 = vld [vmem:[%s8 + $0xa8] sm:$0xff]
  %v7869 = vld [vmem:[%s8 + $0xb0] sm:$0xff]
  %v7870 = vld [vmem:[%s8 + $0xb8] sm:$0xff]
  %v7871 = vld [vmem:[%s8 + $0xc0] sm:$0xff]
  %v7872 = vld [vmem:[%s8 + $0xc8] sm:$0xff]
  %v7873 = vld [vmem:[%s8 + $0xd0] sm:$0xff]
  %v7874 = vld [vmem:[%s8 + $0xd8] sm:$0xff]
  %v7875 = vld [vmem:[%s8 + $0xe0] sm:$0xff]
  %v7876 = vld [vmem:[%s8 + $0xe8] sm:$0xff]
  %v7877 = vld [vmem:[%s8 + $0xf0] sm:$0xff]
  %v7878 = vld [vmem:[%s8 + $0xf8] sm:$0xff]
  %v7879 = vld [vmem:[%s8 + $0x100] sm:$0xff]
  %v7880 = vld [vmem:[%s8 + $0x108] sm:$0xff]
  %v7881 = vld [vmem:[%s8 + $0x110] sm:$0xff]
  %v7882 = vld [vmem:[%s8 + $0x118] sm:$0xff]
  %v7883 = vld [vmem:[%s8 + $0x120] sm:$0xff]
  %v7884 = vld [vmem:[%s8 + $0x128] sm:$0xff]
  %v7885 = vld [vmem:[%s8 + $0x130] sm:$0xff]
  %v7886 = vld [vmem:[%s8 + $0x138] sm:$0xff]
  %v7887 = vld [vmem:[%s8 + $0x140] sm:$0xff]
  %v7888 = vld [vmem:[%s8 + $0x148] sm:$0xff]
  %v7889 = vld [vmem:[%s8 + $0x150] sm:$0xff]
  %v7890 = vld [vmem:[%s8 + $0x158] sm:$0xff]
  %v7891 = vld [vmem:[%s8 + $0x160] sm:$0xff]
  %v7892 = vld [vmem:[%s8 + $0x168] sm:$0xff]
  %v7893 = vld [vmem:[%s8 + $0x170] sm:$0xff]
  %v7894 = vld [vmem:[%s8 + $0x178] sm:$0xff]
  %v7896 = vrot.slane %v7613, 2
  %7898 = vmatprep.subr.mxu0 %v7893
  %7899 = vmatpush1.msra.mxu0 %v7892
  %7900 = vmatprep.subr.mxu0 %v7890
  %7901 = vmatpush1.msra.mxu0 %v7889
  %7902 = vmatprep.subr.mxu0 %v7887
  %7903 = vmatpush1.msra.mxu0 %v7886
  %7904 = vmatprep.subr.mxu0 %v7884
  %7905 = vmatpush1.msra.mxu0 %v7883
  %7906 = vmatprep.subr.mxu0 %v7881
  %7907 = vmatpush1.msra.mxu0 %v7880
  %7908 = vmatprep.subr.mxu0 %v7878
  %7909 = vmatpush1.msra.mxu0 %v7877
  %7910 = vmatprep.subr.mxu0 %v7875
  %7911 = vmatpush1.msra.mxu0 %v7874
  %7912 = vmatprep.subr.mxu0 %v7872
  %7913 = vmatpush1.msra.mxu0 %v7871
  %7914 = vmatprep.subr.mxu0 %v7869
  %7915 = vmatpush1.msra.mxu0 %v7868
  %7916 = vmatprep.subr.mxu0 %v7866
  %7917 = vmatpush1.msra.mxu0 %v7865
  %7918 = vmatprep.subr.mxu0 %v7863
  %7919 = vmatpush1.msra.mxu0 %v7862
  %7920 = vmatprep.subr.mxu0 %v7860
  %7921 = vmatpush1.msra.mxu0 %v7859
  %7922 = vmatprep.subr.mxu0 %v7857
  %7923 = vmatpush1.msra.mxu0 %v7856
  %7924 = vmatprep.subr.mxu0 %v7854
  %7925 = vmatpush1.msra.mxu0 %v7853
  %7926 = vmatprep.subr.mxu0 %v7851
  %7927 = vmatpush1.msra.mxu0 %v7850
  %7928 = vmatprep.subr.mxu0 %v7848
  %7929 = vmatpush1.msra.mxu0 %v7847
  %7930 = vmatprep.subr.mxu0 0.0
  %7931 = vmatpush2.msra.mxu0 0.0
  %7932 = vmatprep.subr.mxu0 0.0
  %7933 = vmatpush2.msra.mxu0 0.0
  %7934 = vmatprep.subr.mxu0 0.0
  %7935 = vmatpush2.msra.mxu0 0.0
  %7936 = vmatprep.subr.mxu0 0.0
  %7937 = vmatpush2.msra.mxu0 0.0
  %7938 = vmatprep.subr.mxu0 0.0
  %7939 = vmatpush2.msra.mxu0 0.0
  %7940 = vmatprep.subr.mxu0 0.0
  %7941 = vmatpush2.msra.mxu0 0.0
  %7942 = vmatprep.subr.mxu0 0.0
  %7943 = vmatpush2.msra.mxu0 0.0
  %7944 = vmatprep.subr.mxu0 0.0
  %7945 = vmatpush2.msra.mxu0 0.0
  %7946 = vmatprep.subr.mxu0 0.0
  %7947 = vmatpush2.msra.mxu0 0.0
  %7948 = vmatprep.subr.mxu0 0.0
  %7949 = vmatpush2.msra.mxu0 0.0
  %7950 = vmatprep.subr.mxu0 0.0
  %7951 = vmatpush2.msra.mxu0 0.0
  %7952 = vmatprep.subr.mxu0 0.0
  %7953 = vmatpush2.msra.mxu0 0.0
  %7954 = vmatprep.subr.mxu0 0.0
  %7955 = vmatpush2.msra.mxu0 0.0
  %7956 = vmatprep.subr.mxu0 0.0
  %7957 = vmatpush2.msra.mxu0 0.0
  %7958 = vmatprep.subr.mxu0 0.0
  %7959 = vmatpush2.msra.mxu0 0.0
  %7960 = vmatprep.subr.mxu0 0.0
  %7961 = vmatpush2.msra.mxu0 0.0
  %7962 = vmatprep.mubr.f32.mxu0 0.0
  %7963 = vmatmul.mubr.f32.gmra.mxu0 %v7896
  %v7964 = vpop.f32.mrf.mxu0
  %v7965 = vadd.f32 0.0, %v7964
  %v7966 = vpop.f32.mrf.mxu0
  %v7967 = vadd.f32 0.0, %v7966
  %7968 = vdwg.mxu0
  %7969 = vmatprep.subr.mxu0 0.0
  %7970 = vmatpush1.msra.mxu0 %v7894
  %7971 = vmatprep.subr.mxu0 0.0
  %7972 = vmatpush1.msra.mxu0 %v7891
  %7973 = vmatprep.subr.mxu0 0.0
  %7974 = vmatpush1.msra.mxu0 %v7888
  %7975 = vmatprep.subr.mxu0 0.0
  %7976 = vmatpush1.msra.mxu0 %v7885
  %7977 = vmatprep.subr.mxu0 0.0
  %7978 = vmatpush1.msra.mxu0 %v7882
  %7979 = vmatprep.subr.mxu0 0.0
  %7980 = vmatpush1.msra.mxu0 %v7879
  %7981 = vmatprep.subr.mxu0 0.0
  %7982 = vmatpush1.msra.mxu0 %v7876
  %7983 = vmatprep.subr.mxu0 0.0
  %7984 = vmatpush1.msra.mxu0 %v7873
  %7985 = vmatprep.subr.mxu0 0.0
  %7986 = vmatpush1.msra.mxu0 %v7870
  %7987 = vmatprep.subr.mxu0 0.0
  %7988 = vmatpush1.msra.mxu0 %v7867
  %7989 = vmatprep.subr.mxu0 0.0
  %7990 = vmatpush1.msra.mxu0 %v7864
  %7991 = vmatprep.subr.mxu0 0.0
  %7992 = vmatpush1.msra.mxu0 %v7861
  %7993 = vmatprep.subr.mxu0 0.0
  %7994 = vmatpush1.msra.mxu0 %v7858
  %7995 = vmatprep.subr.mxu0 0.0
  %7996 = vmatpush1.msra.mxu0 %v7855
  %7997 = vmatprep.subr.mxu0 0.0
  %7998 = vmatpush1.msra.mxu0 %v7852
  %7999 = vmatprep.subr.mxu0 0.0
  %8000 = vmatpush1.msra.mxu0 %v7849
  %8001 = vmatprep.subr.mxu0 0.0
  %8002 = vmatpush2.msra.mxu0 0.0
  %8003 = vmatprep.subr.mxu0 0.0
  %8004 = vmatpush2.msra.mxu0 0.0
  %8005 = vmatprep.subr.mxu0 0.0
  %8006 = vmatpush2.msra.mxu0 0.0
  %8007 = vmatprep.subr.mxu0 0.0
  %8008 = vmatpush2.msra.mxu0 0.0
  %8009 = vmatprep.subr.mxu0 0.0
  %8010 = vmatpush2.msra.mxu0 0.0
  %8011 = vmatprep.subr.mxu0 0.0
  %8012 = vmatpush2.msra.mxu0 0.0
  %8013 = vmatprep.subr.mxu0 0.0
  %8014 = vmatpush2.msra.mxu0 0.0
  %8015 = vmatprep.subr.mxu0 0.0
  %8016 = vmatpush2.msra.mxu0 0.0
  %8017 = vmatprep.subr.mxu0 0.0
  %8018 = vmatpush2.msra.mxu0 0.0
  %8019 = vmatprep.subr.mxu0 0.0
  %8020 = vmatpush2.msra.mxu0 0.0
  %8021 = vmatprep.subr.mxu0 0.0
  %8022 = vmatpush2.msra.mxu0 0.0
  %8023 = vmatprep.subr.mxu0 0.0
  %8024 = vmatpush2.msra.mxu0 0.0
  %8025 = vmatprep.subr.mxu0 0.0
  %8026 = vmatpush2.msra.mxu0 0.0
  %8027 = vmatprep.subr.mxu0 0.0
  %8028 = vmatpush2.msra.mxu0 0.0
  %8029 = vmatprep.subr.mxu0 0.0
  %8030 = vmatpush2.msra.mxu0 0.0
  %8031 = vmatprep.subr.mxu0 0.0
  %8032 = vmatpush2.msra.mxu0 0.0
  %8033 = vmatprep.mubr.f32.mxu0 0.0
  %8034 = vmatmul.mubr.f32.gmra.mxu0 %v7896
  %v8035 = vpop.f32.mrf.mxu0
  %v8036 = vadd.f32 0.0, %v8035
  %v8037 = vpop.f32.mrf.mxu0
  %8038 = vdwg.mxu0
  %v8039 = vadd.f32 %v7619, %v7965
  %v8040 = vxor.u32 %v8039, 2147483648
  %v8041 = vmul.f32 %v8040, 1.442695
  %v8042 = vpow.pop %v8041
  %v8043 = vadd.f32 %v8042, 1.0
  %v8044 = vrcp.pop %v8043
  %v8045 = vmul.f32 1.0, %v8044
  %v8046 = vadd.f32 %v7620, %v7967
  %v8047 = vxor.u32 %v8046, 2147483648
  %v8048 = vmul.f32 %v8047, 1.442695
  %v8049 = vpow.pop %v8048
  %v8050 = vadd.f32 %v8049, 1.0
  %v8051 = vrcp.pop %v8050
  %v8052 = vmul.f32 1.0, %v8051
  %v8053 = vadd.f32 %v8036, %v4881
  %v8054 = vmul.f32 %v8045, %v8053
  %v8055 = vadd.f32 %v7621, %v8054
  %v8056 = vtanh.pop %v8055
  %v8057 = vsub.f32 1.0, %v8052
  %v8058 = vmul.f32 %v8057, %v8056
  %v8059 = vmul.f32 %v8052, %v7896
  %v8060 = vadd.f32 %v8058, %v8059
  %8061 = vst [vmem:[#allocation4 + $0x10] sm:$0xc0] %v7846
  %8062 = vst [vmem:[#allocation4 + $0x8] sm:$0x3] %v8060
  %v8063 = vld [vmem:[#allocation4] sm:$0xff]
  %v8064 = vld [vmem:[#allocation4 + $0x8] sm:$0xff]
  %v8065 = vld [vmem:[#allocation4 + $0x10] sm:$0xff]
  %v8066 = vld [vmem:[#allocation4 + $0x18] sm:$0xff]
  %v8067 = vld [vmem:[%s11] sm:$0xff]
  %v8068 = vld [vmem:[%s11 + $0x8] sm:$0xff]
  %v8069 = vld [vmem:[%s11 + $0x10] sm:$0xff]
  %v8070 = vld [vmem:[%s11 + $0x18] sm:$0xff]
  %v8071 = vld [vmem:[%s11 + $0x20] sm:$0xff]
  %v8072 = vld [vmem:[%s11 + $0x28] sm:$0xff]
  %v8073 = vld [vmem:[%s11 + $0x30] sm:$0xff]
  %v8074 = vld [vmem:[%s11 + $0x38] sm:$0xff]
  %v8075 = vld [vmem:[%s11 + $0x40] sm:$0xff]
  %v8076 = vld [vmem:[%s11 + $0x48] sm:$0xff]
  %v8077 = vld [vmem:[%s11 + $0x50] sm:$0xff]
  %v8078 = vld [vmem:[%s11 + $0x58] sm:$0xff]
  %v8079 = vld [vmem:[%s11 + $0x60] sm:$0xff]
  %v8080 = vld [vmem:[%s11 + $0x68] sm:$0xff]
  %v8081 = vld [vmem:[%s11 + $0x70] sm:$0xff]
  %v8082 = vld [vmem:[%s11 + $0x78] sm:$0xff]
  %v8083 = vld [vmem:[%s11 + $0x80] sm:$0xff]
  %v8084 = vld [vmem:[%s11 + $0x88] sm:$0xff]
  %v8085 = vld [vmem:[%s11 + $0x90] sm:$0xff]
  %v8086 = vld [vmem:[%s11 + $0x98] sm:$0xff]
  %v8087 = vld [vmem:[%s11 + $0xa0] sm:$0xff]
  %v8088 = vld [vmem:[%s11 + $0xa8] sm:$0xff]
  %v8089 = vld [vmem:[%s11 + $0xb0] sm:$0xff]
  %v8090 = vld [vmem:[%s11 + $0xb8] sm:$0xff]
  %v8091 = vld [vmem:[%s11 + $0xc0] sm:$0xff]
  %v8092 = vld [vmem:[%s11 + $0xc8] sm:$0xff]
  %v8093 = vld [vmem:[%s11 + $0xd0] sm:$0xff]
  %v8094 = vld [vmem:[%s11 + $0xd8] sm:$0xff]
  %v8095 = vld [vmem:[%s11 + $0xe0] sm:$0xff]
  %v8096 = vld [vmem:[%s11 + $0xe8] sm:$0xff]
  %v8097 = vld [vmem:[%s11 + $0xf0] sm:$0xff]
  %v8098 = vld [vmem:[%s11 + $0xf8] sm:$0xff]
  %v8099 = vld [vmem:[%s12] sm:$0x1]
  %v8101 = vlaneseq
  %v8102 = vshrl.u32 %v8101, 7
  %v8103 = vsub.s32 0, %v8102
  %v8104 = vrot.slane %v8099, %v8103
  %8106 = vmatprep.subr.mxu0 0.0
  %8107 = vmatpush1.msra.mxu0 %v8082
  %8108 = vmatprep.subr.mxu0 0.0
  %8109 = vmatpush1.msra.mxu0 %v8081
  %8110 = vmatprep.subr.mxu0 0.0
  %8111 = vmatpush1.msra.mxu0 %v8080
  %8112 = vmatprep.subr.mxu0 0.0
  %8113 = vmatpush1.msra.mxu0 %v8079
  %8114 = vmatprep.subr.mxu0 0.0
  %8115 = vmatpush1.msra.mxu0 %v8078
  %8116 = vmatprep.subr.mxu0 0.0
  %8117 = vmatpush1.msra.mxu0 %v8077
  %8118 = vmatprep.subr.mxu0 0.0
  %8119 = vmatpush1.msra.mxu0 %v8076
  %8120 = vmatprep.subr.mxu0 0.0
  %8121 = vmatpush1.msra.mxu0 %v8075
  %8122 = vmatprep.subr.mxu0 0.0
  %8123 = vmatpush1.msra.mxu0 %v8074
  %8124 = vmatprep.subr.mxu0 0.0
  %8125 = vmatpush1.msra.mxu0 %v8073
  %8126 = vmatprep.subr.mxu0 0.0
  %8127 = vmatpush1.msra.mxu0 %v8072
  %8128 = vmatprep.subr.mxu0 0.0
  %8129 = vmatpush1.msra.mxu0 %v8071
  %8130 = vmatprep.subr.mxu0 0.0
  %8131 = vmatpush1.msra.mxu0 %v8070
  %8132 = vmatprep.subr.mxu0 0.0
  %8133 = vmatpush1.msra.mxu0 %v8069
  %8134 = vmatprep.subr.mxu0 0.0
  %8135 = vmatpush1.msra.mxu0 %v8068
  %8136 = vmatprep.subr.mxu0 0.0
  %8137 = vmatpush1.msra.mxu0 %v8067
  %8138 = vmatprep.subr.mxu0 0.0
  %8139 = vmatpush2.msra.mxu0 %v8098
  %8140 = vmatprep.subr.mxu0 0.0
  %8141 = vmatpush2.msra.mxu0 %v8097
  %8142 = vmatprep.subr.mxu0 0.0
  %8143 = vmatpush2.msra.mxu0 %v8096
  %8144 = vmatprep.subr.mxu0 0.0
  %8145 = vmatpush2.msra.mxu0 %v8095
  %8146 = vmatprep.subr.mxu0 0.0
  %8147 = vmatpush2.msra.mxu0 %v8094
  %8148 = vmatprep.subr.mxu0 0.0
  %8149 = vmatpush2.msra.mxu0 %v8093
  %8150 = vmatprep.subr.mxu0 0.0
  %8151 = vmatpush2.msra.mxu0 %v8092
  %8152 = vmatprep.subr.mxu0 0.0
  %8153 = vmatpush2.msra.mxu0 %v8091
  %8154 = vmatprep.subr.mxu0 0.0
  %8155 = vmatpush2.msra.mxu0 %v8090
  %8156 = vmatprep.subr.mxu0 0.0
  %8157 = vmatpush2.msra.mxu0 %v8089
  %8158 = vmatprep.subr.mxu0 0.0
  %8159 = vmatpush2.msra.mxu0 %v8088
  %8160 = vmatprep.subr.mxu0 0.0
  %8161 = vmatpush2.msra.mxu0 %v8087
  %8162 = vmatprep.subr.mxu0 0.0
  %8163 = vmatpush2.msra.mxu0 %v8086
  %8164 = vmatprep.subr.mxu0 0.0
  %8165 = vmatpush2.msra.mxu0 %v8085
  %8166 = vmatprep.subr.mxu0 0.0
  %8167 = vmatpush2.msra.mxu0 %v8084
  %8168 = vmatprep.subr.mxu0 0.0
  %8169 = vmatpush2.msra.mxu0 %v8083
  %8170 = vmatprep.mubr.f32.mxu0 %v8064
  %8171 = vmatmul.mubr.f32.gmra.mxu0 %v8063
  %v8172 = vpop.f32.mrf.mxu0
  %v8173 = vadd.f32 %v8104, %v8172
  %v8174 = vpop.f32.mrf.mxu0
  %8175 = vmatprep.mubr.f32.mxu0 %v8066
  %8176 = vmatmul.mubr.f32.gmra.mxu0 %v8065
  %v8177 = vpop.f32.mrf.mxu0
  %v8178 = vadd.f32 %v8104, %v8177
  %v8179 = vpop.f32.mrf.mxu0
  %8180 = vdwg.mxu0
  %vm8181 = vcmask 80896
  %8182 = vst.msk [vmem:[%s13] sm:$0xff] %vm8181, %v8173
  %8183 = vst.msk [vmem:[%s13 + $0x8] sm:$0xff] %vm8181, %v8178
  // Predicated region
  $region54: #{bigru_forward.1} parent=0 // pred_check
    _
  $region55: #{bigru_forward.1} parent=0 // pred_check_branch
    %8185 = sbr.rel (0) target = $region57
  $region56: #{bigru_forward.1} parent=0 // pred_region
    _
  $region57: #{bigru_forward.1} parent=0 // pred_fallthru
    _
  // Predicated region
  $region58: #{bigru_forward.1} parent=0 // pred_check
    _
  $region59: #{bigru_forward.1} parent=0 // pred_check_branch
    %8187 = sbr.rel (0) target = $region61
  $region60: #{bigru_forward.1} parent=0 // pred_region
    _
  $region61: #{bigru_forward.1} parent=0 // pred_fallthru
    _

</llo_original>
